<compile_context>
chip_gen: v6e
topology: v6e:2x2x1
jax: 0.10.0
libtpu: 0.0.40
codegen_flags: <defaults>
</compile_context>

<pallas_src>
import functools

import jax
import jax.numpy as jnp
from jax import lax
from jax.experimental import pallas as pl
from jax.experimental.pallas import tpu as pltpu


def dual_memory_lstm_kernel(
    x_ref,            # (TB*S, F)   batch-major flat input rows (row = b*S + t), matmul dtype
    w_ih_s_ref,       # (F, 4*Hs)   short LSTM input weights (transposed, PyTorch gate order i,f,g,o)
    w_hh_s_ref,       # (Hs, 4*Hs)  short LSTM hidden weights (transposed)
    b_s_ref,          # (1, 4*Hs)   b_ih + b_hh combined (f32)
    in_proj_w_ref,    # (Hs, 3*Hs)  MHA in-proj (transposed)
    in_proj_b_ref,    # (1, 3*Hs)
    out_proj_w_ref,   # (Hs, Hs)    MHA out-proj (transposed)
    out_proj_b_ref,   # (1, Hs)
    ln_s_g_ref,       # (1, Hs)
    ln_s_b_ref,       # (1, Hs)
    w_ih_l_ref,       # (Hs, 4*Hl)  long LSTM input weights (transposed)
    w_hh_l_ref,       # (Hl, 4*Hl)
    b_l_ref,          # (1, 4*Hl)
    ln_l_g_ref,       # (1, Hl)
    ln_l_b_ref,       # (1, Hl)
    pred_w_ref,       # (1, Hl)     Linear(long_units, 1) weight row
    pred_b_ref,       # (1, 1)
    y_ref,            # out (TB*S, 1) f32
    *,
    seq_len: int,
    num_heads: int,
):
    S = seq_len
    rows = x_ref.shape[0]
    TB = rows // S                     # batch elements handled by this grid tile
    Hs = w_hh_s_ref.shape[0]
    Hl = w_hh_l_ref.shape[0]
    hd = Hs // num_heads
    mm = w_hh_s_ref.dtype              # matmul operand dtype (bf16 by default)
    f32 = jnp.float32
    eps = 1e-5

    def gather_step(arr, t):
        # rows {b*S + t} of a batch-major flat slab -> (TB, cols).
        # Static slices, independent of h => off the serial recurrence chain.
        return jnp.concatenate(
            [arr[b * S + t:b * S + t + 1, :] for b in range(TB)], axis=0)

    def scatter_steps(outs):
        # per-step (TB, H) list -> batch-major flat (TB*S, H)
        return jnp.concatenate(
            [jnp.concatenate([outs[t][b:b + 1, :] for t in range(S)], axis=0)
             for b in range(TB)], axis=0)

    def run_lstm(x_proj, w_hh, H):
        # x_proj: (TB*S, 4H) in mm, already contains x @ W_ih + (b_ih + b_hh).
        # Lane-aligned gates: split W_hh / x_proj ONCE into per-gate slabs so
        # every per-step gate result starts at lane 0 (no XLU rotates on the
        # serial h->gate->h chain).
        whh = [w_hh[:, g * H:(g + 1) * H] for g in range(4)]   # i, f, g, o
        xp = [x_proj[:, g * H:(g + 1) * H] for g in range(4)]
        h = jnp.zeros((TB, H), mm)      # carried in matmul dtype (no per-step cast of the lhs)
        c = jnp.zeros((TB, H), f32)
        outs = []
        # TODO(synk): keep W_hh resident in the MXU across the recurrence via
        # pltpu.matmul_push_rhs / matmul_acc_lhs / matmul_pop; not used here because
        # its staging/accumulator semantics at (TB, H)-sized tiles are not verifiable
        # without hardware, and a non-running kernel is worth nothing.
        # TODO(synk): for large S replace the fully-unrolled loop with
        # lax.fori_loop(..., unroll=k) + a VMEM scratch so live ranges stay bounded.
        for t in range(S):
            gi = gather_step(xp[0], t) + jnp.dot(h, whh[0], preferred_element_type=f32)
            gf = gather_step(xp[1], t) + jnp.dot(h, whh[1], preferred_element_type=f32)
            gg = gather_step(xp[2], t) + jnp.dot(h, whh[2], preferred_element_type=f32)
            go = gather_step(xp[3], t) + jnp.dot(h, whh[3], preferred_element_type=f32)
            i_g = jax.nn.sigmoid(gi)
            f_g = jax.nn.sigmoid(gf)
            g_g = jnp.tanh(gg)
            o_g = jax.nn.sigmoid(go)
            c = f_g * c + i_g * g_g
            h = (o_g * jnp.tanh(c)).astype(mm)
            outs.append(h)
        return scatter_steps(outs)      # (TB*S, H) mm

    def layer_norm(v, g_ref, b_ref):
        v = v.astype(f32)
        mu = jnp.mean(v, axis=-1, keepdims=True)
        var = jnp.mean(jnp.square(v - mu), axis=-1, keepdims=True)
        return (v - mu) * lax.rsqrt(var + eps) * g_ref[...] + b_ref[...]

    # ---- short (daily) LSTM: hoisted input projection + unrolled recurrence ----
    x_proj_s = (jnp.dot(x_ref[...], w_ih_s_ref[...], preferred_element_type=f32)
                + b_s_ref[...]).astype(mm)                 # bf16 storage halves the live footprint
    hs = run_lstm(x_proj_s, w_hh_s_ref[...], Hs)            # (rows, Hs) mm

    # ---- multihead self-attention (eval: attn dropout = identity) --------------
    qkv = (jnp.dot(hs, in_proj_w_ref[...], preferred_element_type=f32)
           + in_proj_b_ref[...])                             # (rows, 3Hs) f32
    scale = 1.0 / (float(hd) ** 0.5)
    ctx_rows = []
    # Batch-major layout: per (batch, head) slice both contractions are plain 2D
    # dots contracting the LAST dim of each operand -> no per-head XLU transposes.
    # TODO(synk): for large TB*num_heads fold this loop into one leading-batch
    # batched dot_general ('bqd,bkd->bqk') after a single relayout.
    for b in range(TB):
        qkv_b = qkv[b * S:(b + 1) * S, :]                    # contiguous (S, 3Hs) slice
        q_b = qkv_b[:, 0:Hs].astype(mm)
        k_b = qkv_b[:, Hs:2 * Hs].astype(mm)
        v_b = qkv_b[:, 2 * Hs:3 * Hs].astype(mm)
        heads = []
        for hh in range(num_heads):
            lo, hi = hh * hd, (hh + 1) * hd
            q_h, k_h, v_h = q_b[:, lo:hi], k_b[:, lo:hi], v_b[:, lo:hi]
            s_bh = lax.dot_general(q_h, k_h, (((1,), (1,)), ((), ())),
                                   preferred_element_type=f32) * scale   # q @ k^T
            s_bh = s_bh - jnp.max(s_bh, axis=-1, keepdims=True)
            p = jnp.exp(s_bh)
            # approx reciprocal (EUP slot) deviates ~1e-3 rel; set approx=False for
            # exact parity with the PyTorch softmax if required.
            p = p * pl.reciprocal(jnp.sum(p, axis=-1, keepdims=True), approx=True)
            heads.append(jnp.dot(p.astype(mm), v_h, preferred_element_type=f32))
        ctx_rows.append(jnp.concatenate(heads, axis=-1))     # (S, Hs)
    ctx = jnp.concatenate(ctx_rows, axis=0).astype(mm)       # (rows, Hs)
    attn_out = (jnp.dot(ctx, out_proj_w_ref[...], preferred_element_type=f32)
                + out_proj_b_ref[...])                       # (rows, Hs) f32

    # ---- residual + (dropout = identity) + LayerNorm ---------------------------
    short = layer_norm(hs.astype(f32) + attn_out, ln_s_g_ref, ln_s_b_ref)

    # ---- long (weekly) LSTM -----------------------------------------------------
    x_proj_l = (jnp.dot(short.astype(mm), w_ih_l_ref[...], preferred_element_type=f32)
                + b_l_ref[...]).astype(mm)
    hl = run_lstm(x_proj_l, w_hh_l_ref[...], Hl)             # (rows, Hl) mm

    # ---- (dropout = identity) + LayerNorm + linear head ------------------------
    long_ln = layer_norm(hl, ln_l_g_ref, ln_l_b_ref)
    y = jnp.sum(long_ln * pred_w_ref[...], axis=-1, keepdims=True) + pred_b_ref[...]
    y_ref[...] = y.astype(y_ref.dtype)


def make_params(key, n_feats, short_units, long_units):
    """Deterministic synthetic parameters (PyTorch-default-like uniform init)."""
    ks = jax.random.split(key, 12)
    Hs, Hl, F = short_units, long_units, n_feats
    sc_s = 1.0 / (Hs ** 0.5)
    sc_l = 1.0 / (Hl ** 0.5)

    def u(k, shape, scale):
        return jax.random.uniform(k, shape, jnp.float32, -scale, scale)

    return dict(
        w_ih_s=u(ks[0], (F, 4 * Hs), sc_s),           # transposed weight_ih_l0
        w_hh_s=u(ks[1], (Hs, 4 * Hs), sc_s),          # transposed weight_hh_l0
        b_s=u(ks[2], (1, 4 * Hs), sc_s) + u(ks[3], (1, 4 * Hs), sc_s),
        in_proj_w=u(ks[4], (Hs, 3 * Hs), sc_s),       # transposed in_proj_weight
        in_proj_b=jnp.zeros((1, 3 * Hs), jnp.float32),
        out_proj_w=u(ks[5], (Hs, Hs), sc_s),          # transposed out_proj.weight
        out_proj_b=jnp.zeros((1, Hs), jnp.float32),
        ln_s_g=jnp.ones((1, Hs), jnp.float32),
        ln_s_b=jnp.zeros((1, Hs), jnp.float32),
        w_ih_l=u(ks[6], (Hs, 4 * Hl), sc_l),
        w_hh_l=u(ks[7], (Hl, 4 * Hl), sc_l),
        b_l=u(ks[8], (1, 4 * Hl), sc_l) + u(ks[9], (1, 4 * Hl), sc_l),
        ln_l_g=jnp.ones((1, Hl), jnp.float32),
        ln_l_b=jnp.zeros((1, Hl), jnp.float32),
        pred_w=u(ks[10], (1, Hl), sc_l),              # Linear(long_units, 1).weight
        pred_b=u(ks[11], (1, 1), sc_l),
    )


def dual_memory_lstm_forward(x, params, *, num_heads=4,
                             matmul_dtype=jnp.bfloat16, batch_tile=None):
    """JAX wrapper: layout glue + one batch-tiled pallas_call.

    x: (B, S, F) batch-first (extra leading dims / transposed channel axis are
    normalized exactly like the PyTorch module's forward).  Returns (B, S, 1).

    matmul_dtype: bf16 MXU operands by default on ALL TPU generations (v5e's
    MXU is bf16-native; only gate/softmax/LN math needs f32 and stays f32).
    Pass jnp.float32 for strict-parity runs.
    """
    n_feats = params['w_ih_s'].shape[0]
    if x.ndim > 3:
        S, F = x.shape[-2], x.shape[-1]
        x = x.reshape(-1, S, F)
    if x.ndim == 3 and x.shape[-1] != n_feats:
        # NOTE: mirrors the PyTorch heuristic; ambiguous when S == n_feats.
        x = jnp.swapaxes(x, 1, 2)
    B, S, F = x.shape
    mm = matmul_dtype
    f32 = jnp.float32

    if batch_tile is None:
        batch_tile = min(B, 16)
    assert B % batch_tile == 0, "batch_tile must divide the batch size"
    num_tiles = B // batch_tile
    rows_per_tile = batch_tile * S
    if num_tiles > 1 and rows_per_tile % 8 != 0:
        # Sub-full blocks need an 8-aligned sublane extent; fall back to one tile.
        batch_tile, num_tiles, rows_per_tile = B, 1, B * S

    # Batch-major flattened input (row = b*S + t): no transpose needed, and the
    # per-(batch, head) attention slices inside the kernel stay contiguous.
    x_flat = x.reshape(B * S, F).astype(mm)

    weights = [
        params['w_ih_s'].astype(mm),
        params['w_hh_s'].astype(mm),
        params['b_s'].astype(f32),
        params['in_proj_w'].astype(mm),
        params['in_proj_b'].astype(f32),
        params['out_proj_w'].astype(mm),
        params['out_proj_b'].astype(f32),
        params['ln_s_g'].astype(f32),
        params['ln_s_b'].astype(f32),
        params['w_ih_l'].astype(mm),
        params['w_hh_l'].astype(mm),
        params['b_l'].astype(f32),
        params['ln_l_g'].astype(f32),
        params['ln_l_b'].astype(f32),
        params['pred_w'].astype(f32),
        params['pred_b'].astype(f32),
    ]

    def full_spec(a):
        # Weights: full-array blocks, same block index every step -> stay resident.
        return pl.BlockSpec(a.shape, lambda i: (0, 0))

    in_specs = ([pl.BlockSpec((rows_per_tile, F), lambda i: (i, 0))]
                + [full_spec(w) for w in weights])
    out_spec = pl.BlockSpec((rows_per_tile, 1), lambda i: (i, 0))

    y_flat = pl.pallas_call(
        functools.partial(dual_memory_lstm_kernel, seq_len=S, num_heads=num_heads),
        out_shape=jax.ShapeDtypeStruct((B * S, 1), jnp.float32),
        grid=(num_tiles,),
        in_specs=in_specs,
        out_specs=out_spec,
        compiler_params=pltpu.CompilerParams(
            dimension_semantics=("parallel",),        # batch tiles -> both TCs on v7x
            vmem_limit_bytes=32 * 1024 * 1024),
    )(x_flat, *weights)
    # TODO(synk): cross-call hidden-state carry (reset_short / reset_long) is host-side
    # bookkeeping; this kernel uses freshly-initialized zero states like _init_states.
    return y_flat.reshape(B, S, 1)


if __name__ == "__main__":
    # small shapes consistent with the module's forward: (B, S, F)
    B, S, F = 2, 8, 8
    short_units, long_units, att_heads = 32, 32, 4

    key = jax.random.PRNGKey(0)
    kx, kp = jax.random.split(key)
    x = jax.random.normal(kx, (B, S, F), jnp.float32)
    params = make_params(kp, F, short_units, long_units)

    # single batch tile (grid=(1,))
    y = dual_memory_lstm_forward(x, params, num_heads=att_heads)
    y = jax.block_until_ready(y)
    assert y.shape == (B, S, 1), y.shape
    assert bool(jnp.all(jnp.isfinite(y)))

    # exercise the batch-tiled grid path (grid=(2,), parallel tiles)
    y_tiled = dual_memory_lstm_forward(x, params, num_heads=att_heads, batch_tile=1)
    y_tiled = jax.block_until_ready(y_tiled)
    assert y_tiled.shape == (B, S, 1), y_tiled.shape
    assert bool(jnp.allclose(y, y_tiled, atol=1e-2, rtol=1e-2))

    print("KERNEL_OK")
</pallas_src>

<mosaic_0001>
module attributes {stable_mosaic.version = 11 : i64} {
  func.func @dual_memory_lstm_kernel(%arg0: i32, %arg1: memref<16x8xbf16, #tpu.memory_space<vmem>>, %arg2: memref<8x128xbf16, #tpu.memory_space<vmem>>, %arg3: memref<32x128xbf16, #tpu.memory_space<vmem>>, %arg4: memref<1x128xf32, #tpu.memory_space<vmem>>, %arg5: memref<32x96xbf16, #tpu.memory_space<vmem>>, %arg6: memref<1x96xf32, #tpu.memory_space<vmem>>, %arg7: memref<32x32xbf16, #tpu.memory_space<vmem>>, %arg8: memref<1x32xf32, #tpu.memory_space<vmem>>, %arg9: memref<1x32xf32, #tpu.memory_space<vmem>>, %arg10: memref<1x32xf32, #tpu.memory_space<vmem>>, %arg11: memref<32x128xbf16, #tpu.memory_space<vmem>>, %arg12: memref<32x128xbf16, #tpu.memory_space<vmem>>, %arg13: memref<1x128xf32, #tpu.memory_space<vmem>>, %arg14: memref<1x32xf32, #tpu.memory_space<vmem>>, %arg15: memref<1x32xf32, #tpu.memory_space<vmem>>, %arg16: memref<1x32xf32, #tpu.memory_space<vmem>>, %arg17: memref<1x1xf32, #tpu.memory_space<vmem>>, %arg18: memref<16x1xf32, #tpu.memory_space<vmem>>) attributes {dimension_semantics = [#tpu.dimension_semantics<parallel>], iteration_bounds = array<i64: 1>, scalar_prefetch = 0 : i64, scratch_operands = 0 : i64, tpu.core_type = #tpu.core_type<tc>, window_params = [{transform_indices = @transform_0, window_bounds = array<i64: 16, 8>}, {pipeline_mode = #tpu.pipeline_mode<synchronous>, transform_indices = @transform_1, window_bounds = array<i64: 8, 128>}, {pipeline_mode = #tpu.pipeline_mode<synchronous>, transform_indices = @transform_2, window_bounds = array<i64: 32, 128>}, {pipeline_mode = #tpu.pipeline_mode<synchronous>, transform_indices = @transform_3, window_bounds = array<i64: 1, 128>}, {pipeline_mode = #tpu.pipeline_mode<synchronous>, transform_indices = @transform_4, window_bounds = array<i64: 32, 96>}, {pipeline_mode = #tpu.pipeline_mode<synchronous>, transform_indices = @transform_5, window_bounds = array<i64: 1, 96>}, {pipeline_mode = #tpu.pipeline_mode<synchronous>, transform_indices = @transform_6, window_bounds = array<i64: 32, 32>}, {pipeline_mode = #tpu.pipeline_mode<synchronous>, transform_indices = @transform_7, window_bounds = array<i64: 1, 32>}, {pipeline_mode = #tpu.pipeline_mode<synchronous>, transform_indices = @transform_8, window_bounds = array<i64: 1, 32>}, {pipeline_mode = #tpu.pipeline_mode<synchronous>, transform_indices = @transform_9, window_bounds = array<i64: 1, 32>}, {pipeline_mode = #tpu.pipeline_mode<synchronous>, transform_indices = @transform_10, window_bounds = array<i64: 32, 128>}, {pipeline_mode = #tpu.pipeline_mode<synchronous>, transform_indices = @transform_11, window_bounds = array<i64: 32, 128>}, {pipeline_mode = #tpu.pipeline_mode<synchronous>, transform_indices = @transform_12, window_bounds = array<i64: 1, 128>}, {pipeline_mode = #tpu.pipeline_mode<synchronous>, transform_indices = @transform_13, window_bounds = array<i64: 1, 32>}, {pipeline_mode = #tpu.pipeline_mode<synchronous>, transform_indices = @transform_14, window_bounds = array<i64: 1, 32>}, {pipeline_mode = #tpu.pipeline_mode<synchronous>, transform_indices = @transform_15, window_bounds = array<i64: 1, 32>}, {pipeline_mode = #tpu.pipeline_mode<synchronous>, transform_indices = @transform_16, window_bounds = array<i64: 1, 1>}, {transform_indices = @transform_17, window_bounds = array<i64: 16, 1>}]} {
    %c0 = arith.constant 0 : index
    %c0_0 = arith.constant 0 : index
    %0 = vector.load %arg1[%c0, %c0_0] : memref<16x8xbf16, #tpu.memory_space<vmem>>, vector<16x8xbf16>
    %c0_1 = arith.constant 0 : index
    %c0_2 = arith.constant 0 : index
    %1 = vector.load %arg2[%c0_1, %c0_2] : memref<8x128xbf16, #tpu.memory_space<vmem>>, vector<8x128xbf16>
    %cst = arith.constant dense<0.000000e+00> : vector<16x128xf32>
    %2 = tpu.matmul %0, %1, %cst {dimension_numbers = #tpu.dot_dimension_numbers<[1], [0], [0], [1], [0, 0, 1, 1], [], []>} : vector<16x8xbf16>, vector<8x128xbf16>, vector<16x128xf32> -> vector<16x128xf32>
    %c0_3 = arith.constant 0 : index
    %c0_4 = arith.constant 0 : index
    %3 = vector.load %arg4[%c0_3, %c0_4] : memref<1x128xf32, #tpu.memory_space<vmem>>, vector<1x128xf32>
    %4 = vector.broadcast %3 : vector<1x128xf32> to vector<16x128xf32>
    %5 = arith.addf %2, %4 : vector<16x128xf32>
    %6 = arith.truncf %5 : vector<16x128xf32> to vector<16x128xbf16>
    %c0_5 = arith.constant 0 : index
    %c0_6 = arith.constant 0 : index
    %7 = vector.load %arg3[%c0_5, %c0_6] : memref<32x128xbf16, #tpu.memory_space<vmem>>, vector<32x128xbf16>
    %8 = vector.extract_strided_slice %7 {offsets = [0, 0], sizes = [32, 32], strides = [1, 1]} : vector<32x128xbf16> to vector<32x32xbf16>
    %9 = vector.extract_strided_slice %7 {offsets = [0, 32], sizes = [32, 32], strides = [1, 1]} : vector<32x128xbf16> to vector<32x32xbf16>
    %10 = vector.extract_strided_slice %7 {offsets = [0, 64], sizes = [32, 32], strides = [1, 1]} : vector<32x128xbf16> to vector<32x32xbf16>
    %11 = vector.extract_strided_slice %7 {offsets = [0, 96], sizes = [32, 32], strides = [1, 1]} : vector<32x128xbf16> to vector<32x32xbf16>
    %12 = vector.extract_strided_slice %6 {offsets = [0, 0], sizes = [16, 32], strides = [1, 1]} : vector<16x128xbf16> to vector<16x32xbf16>
    %13 = vector.extract_strided_slice %6 {offsets = [0, 32], sizes = [16, 32], strides = [1, 1]} : vector<16x128xbf16> to vector<16x32xbf16>
    %14 = vector.extract_strided_slice %6 {offsets = [0, 64], sizes = [16, 32], strides = [1, 1]} : vector<16x128xbf16> to vector<16x32xbf16>
    %15 = vector.extract_strided_slice %6 {offsets = [0, 96], sizes = [16, 32], strides = [1, 1]} : vector<16x128xbf16> to vector<16x32xbf16>
    %cst_7 = arith.constant 0.000000e+00 : bf16
    %16 = vector.broadcast %cst_7 : bf16 to vector<2x32xbf16>
    %cst_8 = arith.constant 0.000000e+00 : f32
    %17 = vector.broadcast %cst_8 : f32 to vector<2x32xf32>
    %18 = vector.extract_strided_slice %12 {offsets = [0, 0], sizes = [1, 32], strides = [1, 1]} : vector<16x32xbf16> to vector<1x32xbf16>
    %19 = vector.extract_strided_slice %12 {offsets = [8, 0], sizes = [1, 32], strides = [1, 1]} : vector<16x32xbf16> to vector<1x32xbf16>
    %20 = tpu.concatenate %18, %19 in 0 : vector<1x32xbf16>, vector<1x32xbf16> -> vector<2x32xbf16>
    %cst_9 = arith.constant dense<0.000000e+00> : vector<2x32xf32>
    %21 = tpu.matmul %16, %8, %cst_9 {dimension_numbers = #tpu.dot_dimension_numbers<[1], [0], [0], [1], [0, 0, 1, 1], [], []>} : vector<2x32xbf16>, vector<32x32xbf16>, vector<2x32xf32> -> vector<2x32xf32>
    %22 = arith.extf %20 : vector<2x32xbf16> to vector<2x32xf32>
    %23 = arith.addf %22, %21 : vector<2x32xf32>
    %24 = vector.extract_strided_slice %13 {offsets = [0, 0], sizes = [1, 32], strides = [1, 1]} : vector<16x32xbf16> to vector<1x32xbf16>
    %25 = vector.extract_strided_slice %13 {offsets = [8, 0], sizes = [1, 32], strides = [1, 1]} : vector<16x32xbf16> to vector<1x32xbf16>
    %26 = tpu.concatenate %24, %25 in 0 : vector<1x32xbf16>, vector<1x32xbf16> -> vector<2x32xbf16>
    %cst_10 = arith.constant dense<0.000000e+00> : vector<2x32xf32>
    %27 = tpu.matmul %16, %9, %cst_10 {dimension_numbers = #tpu.dot_dimension_numbers<[1], [0], [0], [1], [0, 0, 1, 1], [], []>} : vector<2x32xbf16>, vector<32x32xbf16>, vector<2x32xf32> -> vector<2x32xf32>
    %28 = arith.extf %26 : vector<2x32xbf16> to vector<2x32xf32>
    %29 = arith.addf %28, %27 : vector<2x32xf32>
    %30 = vector.extract_strided_slice %14 {offsets = [0, 0], sizes = [1, 32], strides = [1, 1]} : vector<16x32xbf16> to vector<1x32xbf16>
    %31 = vector.extract_strided_slice %14 {offsets = [8, 0], sizes = [1, 32], strides = [1, 1]} : vector<16x32xbf16> to vector<1x32xbf16>
    %32 = tpu.concatenate %30, %31 in 0 : vector<1x32xbf16>, vector<1x32xbf16> -> vector<2x32xbf16>
    %cst_11 = arith.constant dense<0.000000e+00> : vector<2x32xf32>
    %33 = tpu.matmul %16, %10, %cst_11 {dimension_numbers = #tpu.dot_dimension_numbers<[1], [0], [0], [1], [0, 0, 1, 1], [], []>} : vector<2x32xbf16>, vector<32x32xbf16>, vector<2x32xf32> -> vector<2x32xf32>
    %34 = arith.extf %32 : vector<2x32xbf16> to vector<2x32xf32>
    %35 = arith.addf %34, %33 : vector<2x32xf32>
    %36 = vector.extract_strided_slice %15 {offsets = [0, 0], sizes = [1, 32], strides = [1, 1]} : vector<16x32xbf16> to vector<1x32xbf16>
    %37 = vector.extract_strided_slice %15 {offsets = [8, 0], sizes = [1, 32], strides = [1, 1]} : vector<16x32xbf16> to vector<1x32xbf16>
    %38 = tpu.concatenate %36, %37 in 0 : vector<1x32xbf16>, vector<1x32xbf16> -> vector<2x32xbf16>
    %cst_12 = arith.constant dense<0.000000e+00> : vector<2x32xf32>
    %39 = tpu.matmul %16, %11, %cst_12 {dimension_numbers = #tpu.dot_dimension_numbers<[1], [0], [0], [1], [0, 0, 1, 1], [], []>} : vector<2x32xbf16>, vector<32x32xbf16>, vector<2x32xf32> -> vector<2x32xf32>
    %40 = arith.extf %38 : vector<2x32xbf16> to vector<2x32xf32>
    %41 = arith.addf %40, %39 : vector<2x32xf32>
    %42 = arith.negf %23 : vector<2x32xf32>
    %43 = math.exp %42 : vector<2x32xf32>
    %cst_13 = arith.constant 1.000000e+00 : f32
    %44 = vector.broadcast %cst_13 : f32 to vector<2x32xf32>
    %45 = arith.addf %44, %43 : vector<2x32xf32>
    %46 = arith.divf %44, %45 : vector<2x32xf32>
    %47 = arith.negf %29 : vector<2x32xf32>
    %48 = math.exp %47 : vector<2x32xf32>
    %cst_14 = arith.constant 1.000000e+00 : f32
    %49 = vector.broadcast %cst_14 : f32 to vector<2x32xf32>
    %50 = arith.addf %49, %48 : vector<2x32xf32>
    %51 = arith.divf %49, %50 : vector<2x32xf32>
    %52 = math.tanh %35 : vector<2x32xf32>
    %53 = arith.negf %41 : vector<2x32xf32>
    %54 = math.exp %53 : vector<2x32xf32>
    %cst_15 = arith.constant 1.000000e+00 : f32
    %55 = vector.broadcast %cst_15 : f32 to vector<2x32xf32>
    %56 = arith.addf %55, %54 : vector<2x32xf32>
    %57 = arith.divf %55, %56 : vector<2x32xf32>
    %58 = arith.mulf %51, %17 : vector<2x32xf32>
    %59 = arith.mulf %46, %52 : vector<2x32xf32>
    %60 = arith.addf %58, %59 : vector<2x32xf32>
    %61 = math.tanh %60 : vector<2x32xf32>
    %62 = arith.mulf %57, %61 : vector<2x32xf32>
    %63 = arith.truncf %62 : vector<2x32xf32> to vector<2x32xbf16>
    %64 = vector.extract_strided_slice %12 {offsets = [1, 0], sizes = [1, 32], strides = [1, 1]} : vector<16x32xbf16> to vector<1x32xbf16>
    %65 = vector.extract_strided_slice %12 {offsets = [9, 0], sizes = [1, 32], strides = [1, 1]} : vector<16x32xbf16> to vector<1x32xbf16>
    %66 = tpu.concatenate %64, %65 in 0 : vector<1x32xbf16>, vector<1x32xbf16> -> vector<2x32xbf16>
    %cst_16 = arith.constant dense<0.000000e+00> : vector<2x32xf32>
    %67 = tpu.matmul %63, %8, %cst_16 {dimension_numbers = #tpu.dot_dimension_numbers<[1], [0], [0], [1], [0, 0, 1, 1], [], []>} : vector<2x32xbf16>, vector<32x32xbf16>, vector<2x32xf32> -> vector<2x32xf32>
    %68 = arith.extf %66 : vector<2x32xbf16> to vector<2x32xf32>
    %69 = arith.addf %68, %67 : vector<2x32xf32>
    %70 = vector.extract_strided_slice %13 {offsets = [1, 0], sizes = [1, 32], strides = [1, 1]} : vector<16x32xbf16> to vector<1x32xbf16>
    %71 = vector.extract_strided_slice %13 {offsets = [9, 0], sizes = [1, 32], strides = [1, 1]} : vector<16x32xbf16> to vector<1x32xbf16>
    %72 = tpu.concatenate %70, %71 in 0 : vector<1x32xbf16>, vector<1x32xbf16> -> vector<2x32xbf16>
    %cst_17 = arith.constant dense<0.000000e+00> : vector<2x32xf32>
    %73 = tpu.matmul %63, %9, %cst_17 {dimension_numbers = #tpu.dot_dimension_numbers<[1], [0], [0], [1], [0, 0, 1, 1], [], []>} : vector<2x32xbf16>, vector<32x32xbf16>, vector<2x32xf32> -> vector<2x32xf32>
    %74 = arith.extf %72 : vector<2x32xbf16> to vector<2x32xf32>
    %75 = arith.addf %74, %73 : vector<2x32xf32>
    %76 = vector.extract_strided_slice %14 {offsets = [1, 0], sizes = [1, 32], strides = [1, 1]} : vector<16x32xbf16> to vector<1x32xbf16>
    %77 = vector.extract_strided_slice %14 {offsets = [9, 0], sizes = [1, 32], strides = [1, 1]} : vector<16x32xbf16> to vector<1x32xbf16>
    %78 = tpu.concatenate %76, %77 in 0 : vector<1x32xbf16>, vector<1x32xbf16> -> vector<2x32xbf16>
    %cst_18 = arith.constant dense<0.000000e+00> : vector<2x32xf32>
    %79 = tpu.matmul %63, %10, %cst_18 {dimension_numbers = #tpu.dot_dimension_numbers<[1], [0], [0], [1], [0, 0, 1, 1], [], []>} : vector<2x32xbf16>, vector<32x32xbf16>, vector<2x32xf32> -> vector<2x32xf32>
    %80 = arith.extf %78 : vector<2x32xbf16> to vector<2x32xf32>
    %81 = arith.addf %80, %79 : vector<2x32xf32>
    %82 = vector.extract_strided_slice %15 {offsets = [1, 0], sizes = [1, 32], strides = [1, 1]} : vector<16x32xbf16> to vector<1x32xbf16>
    %83 = vector.extract_strided_slice %15 {offsets = [9, 0], sizes = [1, 32], strides = [1, 1]} : vector<16x32xbf16> to vector<1x32xbf16>
    %84 = tpu.concatenate %82, %83 in 0 : vector<1x32xbf16>, vector<1x32xbf16> -> vector<2x32xbf16>
    %cst_19 = arith.constant dense<0.000000e+00> : vector<2x32xf32>
    %85 = tpu.matmul %63, %11, %cst_19 {dimension_numbers = #tpu.dot_dimension_numbers<[1], [0], [0], [1], [0, 0, 1, 1], [], []>} : vector<2x32xbf16>, vector<32x32xbf16>, vector<2x32xf32> -> vector<2x32xf32>
    %86 = arith.extf %84 : vector<2x32xbf16> to vector<2x32xf32>
    %87 = arith.addf %86, %85 : vector<2x32xf32>
    %88 = arith.negf %69 : vector<2x32xf32>
    %89 = math.exp %88 : vector<2x32xf32>
    %cst_20 = arith.constant 1.000000e+00 : f32
    %90 = vector.broadcast %cst_20 : f32 to vector<2x32xf32>
    %91 = arith.addf %90, %89 : vector<2x32xf32>
    %92 = arith.divf %90, %91 : vector<2x32xf32>
    %93 = arith.negf %75 : vector<2x32xf32>
    %94 = math.exp %93 : vector<2x32xf32>
    %cst_21 = arith.constant 1.000000e+00 : f32
    %95 = vector.broadcast %cst_21 : f32 to vector<2x32xf32>
    %96 = arith.addf %95, %94 : vector<2x32xf32>
    %97 = arith.divf %95, %96 : vector<2x32xf32>
    %98 = math.tanh %81 : vector<2x32xf32>
    %99 = arith.negf %87 : vector<2x32xf32>
    %100 = math.exp %99 : vector<2x32xf32>
    %cst_22 = arith.constant 1.000000e+00 : f32
    %101 = vector.broadcast %cst_22 : f32 to vector<2x32xf32>
    %102 = arith.addf %101, %100 : vector<2x32xf32>
    %103 = arith.divf %101, %102 : vector<2x32xf32>
    %104 = arith.mulf %97, %60 : vector<2x32xf32>
    %105 = arith.mulf %92, %98 : vector<2x32xf32>
    %106 = arith.addf %104, %105 : vector<2x32xf32>
    %107 = math.tanh %106 : vector<2x32xf32>
    %108 = arith.mulf %103, %107 : vector<2x32xf32>
    %109 = arith.truncf %108 : vector<2x32xf32> to vector<2x32xbf16>
    %110 = vector.extract_strided_slice %12 {offsets = [2, 0], sizes = [1, 32], strides = [1, 1]} : vector<16x32xbf16> to vector<1x32xbf16>
    %111 = vector.extract_strided_slice %12 {offsets = [10, 0], sizes = [1, 32], strides = [1, 1]} : vector<16x32xbf16> to vector<1x32xbf16>
    %112 = tpu.concatenate %110, %111 in 0 : vector<1x32xbf16>, vector<1x32xbf16> -> vector<2x32xbf16>
    %cst_23 = arith.constant dense<0.000000e+00> : vector<2x32xf32>
    %113 = tpu.matmul %109, %8, %cst_23 {dimension_numbers = #tpu.dot_dimension_numbers<[1], [0], [0], [1], [0, 0, 1, 1], [], []>} : vector<2x32xbf16>, vector<32x32xbf16>, vector<2x32xf32> -> vector<2x32xf32>
    %114 = arith.extf %112 : vector<2x32xbf16> to vector<2x32xf32>
    %115 = arith.addf %114, %113 : vector<2x32xf32>
    %116 = vector.extract_strided_slice %13 {offsets = [2, 0], sizes = [1, 32], strides = [1, 1]} : vector<16x32xbf16> to vector<1x32xbf16>
    %117 = vector.extract_strided_slice %13 {offsets = [10, 0], sizes = [1, 32], strides = [1, 1]} : vector<16x32xbf16> to vector<1x32xbf16>
    %118 = tpu.concatenate %116, %117 in 0 : vector<1x32xbf16>, vector<1x32xbf16> -> vector<2x32xbf16>
    %cst_24 = arith.constant dense<0.000000e+00> : vector<2x32xf32>
    %119 = tpu.matmul %109, %9, %cst_24 {dimension_numbers = #tpu.dot_dimension_numbers<[1], [0], [0], [1], [0, 0, 1, 1], [], []>} : vector<2x32xbf16>, vector<32x32xbf16>, vector<2x32xf32> -> vector<2x32xf32>
    %120 = arith.extf %118 : vector<2x32xbf16> to vector<2x32xf32>
    %121 = arith.addf %120, %119 : vector<2x32xf32>
    %122 = vector.extract_strided_slice %14 {offsets = [2, 0], sizes = [1, 32], strides = [1, 1]} : vector<16x32xbf16> to vector<1x32xbf16>
    %123 = vector.extract_strided_slice %14 {offsets = [10, 0], sizes = [1, 32], strides = [1, 1]} : vector<16x32xbf16> to vector<1x32xbf16>
    %124 = tpu.concatenate %122, %123 in 0 : vector<1x32xbf16>, vector<1x32xbf16> -> vector<2x32xbf16>
    %cst_25 = arith.constant dense<0.000000e+00> : vector<2x32xf32>
    %125 = tpu.matmul %109, %10, %cst_25 {dimension_numbers = #tpu.dot_dimension_numbers<[1], [0], [0], [1], [0, 0, 1, 1], [], []>} : vector<2x32xbf16>, vector<32x32xbf16>, vector<2x32xf32> -> vector<2x32xf32>
    %126 = arith.extf %124 : vector<2x32xbf16> to vector<2x32xf32>
    %127 = arith.addf %126, %125 : vector<2x32xf32>
    %128 = vector.extract_strided_slice %15 {offsets = [2, 0], sizes = [1, 32], strides = [1, 1]} : vector<16x32xbf16> to vector<1x32xbf16>
    %129 = vector.extract_strided_slice %15 {offsets = [10, 0], sizes = [1, 32], strides = [1, 1]} : vector<16x32xbf16> to vector<1x32xbf16>
    %130 = tpu.concatenate %128, %129 in 0 : vector<1x32xbf16>, vector<1x32xbf16> -> vector<2x32xbf16>
    %cst_26 = arith.constant dense<0.000000e+00> : vector<2x32xf32>
    %131 = tpu.matmul %109, %11, %cst_26 {dimension_numbers = #tpu.dot_dimension_numbers<[1], [0], [0], [1], [0, 0, 1, 1], [], []>} : vector<2x32xbf16>, vector<32x32xbf16>, vector<2x32xf32> -> vector<2x32xf32>
    %132 = arith.extf %130 : vector<2x32xbf16> to vector<2x32xf32>
    %133 = arith.addf %132, %131 : vector<2x32xf32>
    %134 = arith.negf %115 : vector<2x32xf32>
    %135 = math.exp %134 : vector<2x32xf32>
    %cst_27 = arith.constant 1.000000e+00 : f32
    %136 = vector.broadcast %cst_27 : f32 to vector<2x32xf32>
    %137 = arith.addf %136, %135 : vector<2x32xf32>
    %138 = arith.divf %136, %137 : vector<2x32xf32>
    %139 = arith.negf %121 : vector<2x32xf32>
    %140 = math.exp %139 : vector<2x32xf32>
    %cst_28 = arith.constant 1.000000e+00 : f32
    %141 = vector.broadcast %cst_28 : f32 to vector<2x32xf32>
    %142 = arith.addf %141, %140 : vector<2x32xf32>
    %143 = arith.divf %141, %142 : vector<2x32xf32>
    %144 = math.tanh %127 : vector<2x32xf32>
    %145 = arith.negf %133 : vector<2x32xf32>
    %146 = math.exp %145 : vector<2x32xf32>
    %cst_29 = arith.constant 1.000000e+00 : f32
    %147 = vector.broadcast %cst_29 : f32 to vector<2x32xf32>
    %148 = arith.addf %147, %146 : vector<2x32xf32>
    %149 = arith.divf %147, %148 : vector<2x32xf32>
    %150 = arith.mulf %143, %106 : vector<2x32xf32>
    %151 = arith.mulf %138, %144 : vector<2x32xf32>
    %152 = arith.addf %150, %151 : vector<2x32xf32>
    %153 = math.tanh %152 : vector<2x32xf32>
    %154 = arith.mulf %149, %153 : vector<2x32xf32>
    %155 = arith.truncf %154 : vector<2x32xf32> to vector<2x32xbf16>
    %156 = vector.extract_strided_slice %12 {offsets = [3, 0], sizes = [1, 32], strides = [1, 1]} : vector<16x32xbf16> to vector<1x32xbf16>
    %157 = vector.extract_strided_slice %12 {offsets = [11, 0], sizes = [1, 32], strides = [1, 1]} : vector<16x32xbf16> to vector<1x32xbf16>
    %158 = tpu.concatenate %156, %157 in 0 : vector<1x32xbf16>, vector<1x32xbf16> -> vector<2x32xbf16>
    %cst_30 = arith.constant dense<0.000000e+00> : vector<2x32xf32>
    %159 = tpu.matmul %155, %8, %cst_30 {dimension_numbers = #tpu.dot_dimension_numbers<[1], [0], [0], [1], [0, 0, 1, 1], [], []>} : vector<2x32xbf16>, vector<32x32xbf16>, vector<2x32xf32> -> vector<2x32xf32>
    %160 = arith.extf %158 : vector<2x32xbf16> to vector<2x32xf32>
    %161 = arith.addf %160, %159 : vector<2x32xf32>
    %162 = vector.extract_strided_slice %13 {offsets = [3, 0], sizes = [1, 32], strides = [1, 1]} : vector<16x32xbf16> to vector<1x32xbf16>
    %163 = vector.extract_strided_slice %13 {offsets = [11, 0], sizes = [1, 32], strides = [1, 1]} : vector<16x32xbf16> to vector<1x32xbf16>
    %164 = tpu.concatenate %162, %163 in 0 : vector<1x32xbf16>, vector<1x32xbf16> -> vector<2x32xbf16>
    %cst_31 = arith.constant dense<0.000000e+00> : vector<2x32xf32>
    %165 = tpu.matmul %155, %9, %cst_31 {dimension_numbers = #tpu.dot_dimension_numbers<[1], [0], [0], [1], [0, 0, 1, 1], [], []>} : vector<2x32xbf16>, vector<32x32xbf16>, vector<2x32xf32> -> vector<2x32xf32>
    %166 = arith.extf %164 : vector<2x32xbf16> to vector<2x32xf32>
    %167 = arith.addf %166, %165 : vector<2x32xf32>
    %168 = vector.extract_strided_slice %14 {offsets = [3, 0], sizes = [1, 32], strides = [1, 1]} : vector<16x32xbf16> to vector<1x32xbf16>
    %169 = vector.extract_strided_slice %14 {offsets = [11, 0], sizes = [1, 32], strides = [1, 1]} : vector<16x32xbf16> to vector<1x32xbf16>
    %170 = tpu.concatenate %168, %169 in 0 : vector<1x32xbf16>, vector<1x32xbf16> -> vector<2x32xbf16>
    %cst_32 = arith.constant dense<0.000000e+00> : vector<2x32xf32>
    %171 = tpu.matmul %155, %10, %cst_32 {dimension_numbers = #tpu.dot_dimension_numbers<[1], [0], [0], [1], [0, 0, 1, 1], [], []>} : vector<2x32xbf16>, vector<32x32xbf16>, vector<2x32xf32> -> vector<2x32xf32>
    %172 = arith.extf %170 : vector<2x32xbf16> to vector<2x32xf32>
    %173 = arith.addf %172, %171 : vector<2x32xf32>
    %174 = vector.extract_strided_slice %15 {offsets = [3, 0], sizes = [1, 32], strides = [1, 1]} : vector<16x32xbf16> to vector<1x32xbf16>
    %175 = vector.extract_strided_slice %15 {offsets = [11, 0], sizes = [1, 32], strides = [1, 1]} : vector<16x32xbf16> to vector<1x32xbf16>
    %176 = tpu.concatenate %174, %175 in 0 : vector<1x32xbf16>, vector<1x32xbf16> -> vector<2x32xbf16>
    %cst_33 = arith.constant dense<0.000000e+00> : vector<2x32xf32>
    %177 = tpu.matmul %155, %11, %cst_33 {dimension_numbers = #tpu.dot_dimension_numbers<[1], [0], [0], [1], [0, 0, 1, 1], [], []>} : vector<2x32xbf16>, vector<32x32xbf16>, vector<2x32xf32> -> vector<2x32xf32>
    %178 = arith.extf %176 : vector<2x32xbf16> to vector<2x32xf32>
    %179 = arith.addf %178, %177 : vector<2x32xf32>
    %180 = arith.negf %161 : vector<2x32xf32>
    %181 = math.exp %180 : vector<2x32xf32>
    %cst_34 = arith.constant 1.000000e+00 : f32
    %182 = vector.broadcast %cst_34 : f32 to vector<2x32xf32>
    %183 = arith.addf %182, %181 : vector<2x32xf32>
    %184 = arith.divf %182, %183 : vector<2x32xf32>
    %185 = arith.negf %167 : vector<2x32xf32>
    %186 = math.exp %185 : vector<2x32xf32>
    %cst_35 = arith.constant 1.000000e+00 : f32
    %187 = vector.broadcast %cst_35 : f32 to vector<2x32xf32>
    %188 = arith.addf %187, %186 : vector<2x32xf32>
    %189 = arith.divf %187, %188 : vector<2x32xf32>
    %190 = math.tanh %173 : vector<2x32xf32>
    %191 = arith.negf %179 : vector<2x32xf32>
    %192 = math.exp %191 : vector<2x32xf32>
    %cst_36 = arith.constant 1.000000e+00 : f32
    %193 = vector.broadcast %cst_36 : f32 to vector<2x32xf32>
    %194 = arith.addf %193, %192 : vector<2x32xf32>
    %195 = arith.divf %193, %194 : vector<2x32xf32>
    %196 = arith.mulf %189, %152 : vector<2x32xf32>
    %197 = arith.mulf %184, %190 : vector<2x32xf32>
    %198 = arith.addf %196, %197 : vector<2x32xf32>
    %199 = math.tanh %198 : vector<2x32xf32>
    %200 = arith.mulf %195, %199 : vector<2x32xf32>
    %201 = arith.truncf %200 : vector<2x32xf32> to vector<2x32xbf16>
    %202 = vector.extract_strided_slice %12 {offsets = [4, 0], sizes = [1, 32], strides = [1, 1]} : vector<16x32xbf16> to vector<1x32xbf16>
    %203 = vector.extract_strided_slice %12 {offsets = [12, 0], sizes = [1, 32], strides = [1, 1]} : vector<16x32xbf16> to vector<1x32xbf16>
    %204 = tpu.concatenate %202, %203 in 0 : vector<1x32xbf16>, vector<1x32xbf16> -> vector<2x32xbf16>
    %cst_37 = arith.constant dense<0.000000e+00> : vector<2x32xf32>
    %205 = tpu.matmul %201, %8, %cst_37 {dimension_numbers = #tpu.dot_dimension_numbers<[1], [0], [0], [1], [0, 0, 1, 1], [], []>} : vector<2x32xbf16>, vector<32x32xbf16>, vector<2x32xf32> -> vector<2x32xf32>
    %206 = arith.extf %204 : vector<2x32xbf16> to vector<2x32xf32>
    %207 = arith.addf %206, %205 : vector<2x32xf32>
    %208 = vector.extract_strided_slice %13 {offsets = [4, 0], sizes = [1, 32], strides = [1, 1]} : vector<16x32xbf16> to vector<1x32xbf16>
    %209 = vector.extract_strided_slice %13 {offsets = [12, 0], sizes = [1, 32], strides = [1, 1]} : vector<16x32xbf16> to vector<1x32xbf16>
    %210 = tpu.concatenate %208, %209 in 0 : vector<1x32xbf16>, vector<1x32xbf16> -> vector<2x32xbf16>
    %cst_38 = arith.constant dense<0.000000e+00> : vector<2x32xf32>
    %211 = tpu.matmul %201, %9, %cst_38 {dimension_numbers = #tpu.dot_dimension_numbers<[1], [0], [0], [1], [0, 0, 1, 1], [], []>} : vector<2x32xbf16>, vector<32x32xbf16>, vector<2x32xf32> -> vector<2x32xf32>
    %212 = arith.extf %210 : vector<2x32xbf16> to vector<2x32xf32>
    %213 = arith.addf %212, %211 : vector<2x32xf32>
    %214 = vector.extract_strided_slice %14 {offsets = [4, 0], sizes = [1, 32], strides = [1, 1]} : vector<16x32xbf16> to vector<1x32xbf16>
    %215 = vector.extract_strided_slice %14 {offsets = [12, 0], sizes = [1, 32], strides = [1, 1]} : vector<16x32xbf16> to vector<1x32xbf16>
    %216 = tpu.concatenate %214, %215 in 0 : vector<1x32xbf16>, vector<1x32xbf16> -> vector<2x32xbf16>
    %cst_39 = arith.constant dense<0.000000e+00> : vector<2x32xf32>
    %217 = tpu.matmul %201, %10, %cst_39 {dimension_numbers = #tpu.dot_dimension_numbers<[1], [0], [0], [1], [0, 0, 1, 1], [], []>} : vector<2x32xbf16>, vector<32x32xbf16>, vector<2x32xf32> -> vector<2x32xf32>
    %218 = arith.extf %216 : vector<2x32xbf16> to vector<2x32xf32>
    %219 = arith.addf %218, %217 : vector<2x32xf32>
    %220 = vector.extract_strided_slice %15 {offsets = [4, 0], sizes = [1, 32], strides = [1, 1]} : vector<16x32xbf16> to vector<1x32xbf16>
    %221 = vector.extract_strided_slice %15 {offsets = [12, 0], sizes = [1, 32], strides = [1, 1]} : vector<16x32xbf16> to vector<1x32xbf16>
    %222 = tpu.concatenate %220, %221 in 0 : vector<1x32xbf16>, vector<1x32xbf16> -> vector<2x32xbf16>
    %cst_40 = arith.constant dense<0.000000e+00> : vector<2x32xf32>
    %223 = tpu.matmul %201, %11, %cst_40 {dimension_numbers = #tpu.dot_dimension_numbers<[1], [0], [0], [1], [0, 0, 1, 1], [], []>} : vector<2x32xbf16>, vector<32x32xbf16>, vector<2x32xf32> -> vector<2x32xf32>
    %224 = arith.extf %222 : vector<2x32xbf16> to vector<2x32xf32>
    %225 = arith.addf %224, %223 : vector<2x32xf32>
    %226 = arith.negf %207 : vector<2x32xf32>
    %227 = math.exp %226 : vector<2x32xf32>
    %cst_41 = arith.constant 1.000000e+00 : f32
    %228 = vector.broadcast %cst_41 : f32 to vector<2x32xf32>
    %229 = arith.addf %228, %227 : vector<2x32xf32>
    %230 = arith.divf %228, %229 : vector<2x32xf32>
    %231 = arith.negf %213 : vector<2x32xf32>
    %232 = math.exp %231 : vector<2x32xf32>
    %cst_42 = arith.constant 1.000000e+00 : f32
    %233 = vector.broadcast %cst_42 : f32 to vector<2x32xf32>
    %234 = arith.addf %233, %232 : vector<2x32xf32>
    %235 = arith.divf %233, %234 : vector<2x32xf32>
    %236 = math.tanh %219 : vector<2x32xf32>
    %237 = arith.negf %225 : vector<2x32xf32>
    %238 = math.exp %237 : vector<2x32xf32>
    %cst_43 = arith.constant 1.000000e+00 : f32
    %239 = vector.broadcast %cst_43 : f32 to vector<2x32xf32>
    %240 = arith.addf %239, %238 : vector<2x32xf32>
    %241 = arith.divf %239, %240 : vector<2x32xf32>
    %242 = arith.mulf %235, %198 : vector<2x32xf32>
    %243 = arith.mulf %230, %236 : vector<2x32xf32>
    %244 = arith.addf %242, %243 : vector<2x32xf32>
    %245 = math.tanh %244 : vector<2x32xf32>
    %246 = arith.mulf %241, %245 : vector<2x32xf32>
    %247 = arith.truncf %246 : vector<2x32xf32> to vector<2x32xbf16>
    %248 = vector.extract_strided_slice %12 {offsets = [5, 0], sizes = [1, 32], strides = [1, 1]} : vector<16x32xbf16> to vector<1x32xbf16>
    %249 = vector.extract_strided_slice %12 {offsets = [13, 0], sizes = [1, 32], strides = [1, 1]} : vector<16x32xbf16> to vector<1x32xbf16>
    %250 = tpu.concatenate %248, %249 in 0 : vector<1x32xbf16>, vector<1x32xbf16> -> vector<2x32xbf16>
    %cst_44 = arith.constant dense<0.000000e+00> : vector<2x32xf32>
    %251 = tpu.matmul %247, %8, %cst_44 {dimension_numbers = #tpu.dot_dimension_numbers<[1], [0], [0], [1], [0, 0, 1, 1], [], []>} : vector<2x32xbf16>, vector<32x32xbf16>, vector<2x32xf32> -> vector<2x32xf32>
    %252 = arith.extf %250 : vector<2x32xbf16> to vector<2x32xf32>
    %253 = arith.addf %252, %251 : vector<2x32xf32>
    %254 = vector.extract_strided_slice %13 {offsets = [5, 0], sizes = [1, 32], strides = [1, 1]} : vector<16x32xbf16> to vector<1x32xbf16>
    %255 = vector.extract_strided_slice %13 {offsets = [13, 0], sizes = [1, 32], strides = [1, 1]} : vector<16x32xbf16> to vector<1x32xbf16>
    %256 = tpu.concatenate %254, %255 in 0 : vector<1x32xbf16>, vector<1x32xbf16> -> vector<2x32xbf16>
    %cst_45 = arith.constant dense<0.000000e+00> : vector<2x32xf32>
    %257 = tpu.matmul %247, %9, %cst_45 {dimension_numbers = #tpu.dot_dimension_numbers<[1], [0], [0], [1], [0, 0, 1, 1], [], []>} : vector<2x32xbf16>, vector<32x32xbf16>, vector<2x32xf32> -> vector<2x32xf32>
    %258 = arith.extf %256 : vector<2x32xbf16> to vector<2x32xf32>
    %259 = arith.addf %258, %257 : vector<2x32xf32>
    %260 = vector.extract_strided_slice %14 {offsets = [5, 0], sizes = [1, 32], strides = [1, 1]} : vector<16x32xbf16> to vector<1x32xbf16>
    %261 = vector.extract_strided_slice %14 {offsets = [13, 0], sizes = [1, 32], strides = [1, 1]} : vector<16x32xbf16> to vector<1x32xbf16>
    %262 = tpu.concatenate %260, %261 in 0 : vector<1x32xbf16>, vector<1x32xbf16> -> vector<2x32xbf16>
    %cst_46 = arith.constant dense<0.000000e+00> : vector<2x32xf32>
    %263 = tpu.matmul %247, %10, %cst_46 {dimension_numbers = #tpu.dot_dimension_numbers<[1], [0], [0], [1], [0, 0, 1, 1], [], []>} : vector<2x32xbf16>, vector<32x32xbf16>, vector<2x32xf32> -> vector<2x32xf32>
    %264 = arith.extf %262 : vector<2x32xbf16> to vector<2x32xf32>
    %265 = arith.addf %264, %263 : vector<2x32xf32>
    %266 = vector.extract_strided_slice %15 {offsets = [5, 0], sizes = [1, 32], strides = [1, 1]} : vector<16x32xbf16> to vector<1x32xbf16>
    %267 = vector.extract_strided_slice %15 {offsets = [13, 0], sizes = [1, 32], strides = [1, 1]} : vector<16x32xbf16> to vector<1x32xbf16>
    %268 = tpu.concatenate %266, %267 in 0 : vector<1x32xbf16>, vector<1x32xbf16> -> vector<2x32xbf16>
    %cst_47 = arith.constant dense<0.000000e+00> : vector<2x32xf32>
    %269 = tpu.matmul %247, %11, %cst_47 {dimension_numbers = #tpu.dot_dimension_numbers<[1], [0], [0], [1], [0, 0, 1, 1], [], []>} : vector<2x32xbf16>, vector<32x32xbf16>, vector<2x32xf32> -> vector<2x32xf32>
    %270 = arith.extf %268 : vector<2x32xbf16> to vector<2x32xf32>
    %271 = arith.addf %270, %269 : vector<2x32xf32>
    %272 = arith.negf %253 : vector<2x32xf32>
    %273 = math.exp %272 : vector<2x32xf32>
    %cst_48 = arith.constant 1.000000e+00 : f32
    %274 = vector.broadcast %cst_48 : f32 to vector<2x32xf32>
    %275 = arith.addf %274, %273 : vector<2x32xf32>
    %276 = arith.divf %274, %275 : vector<2x32xf32>
    %277 = arith.negf %259 : vector<2x32xf32>
    %278 = math.exp %277 : vector<2x32xf32>
    %cst_49 = arith.constant 1.000000e+00 : f32
    %279 = vector.broadcast %cst_49 : f32 to vector<2x32xf32>
    %280 = arith.addf %279, %278 : vector<2x32xf32>
    %281 = arith.divf %279, %280 : vector<2x32xf32>
    %282 = math.tanh %265 : vector<2x32xf32>
    %283 = arith.negf %271 : vector<2x32xf32>
    %284 = math.exp %283 : vector<2x32xf32>
    %cst_50 = arith.constant 1.000000e+00 : f32
    %285 = vector.broadcast %cst_50 : f32 to vector<2x32xf32>
    %286 = arith.addf %285, %284 : vector<2x32xf32>
    %287 = arith.divf %285, %286 : vector<2x32xf32>
    %288 = arith.mulf %281, %244 : vector<2x32xf32>
    %289 = arith.mulf %276, %282 : vector<2x32xf32>
    %290 = arith.addf %288, %289 : vector<2x32xf32>
    %291 = math.tanh %290 : vector<2x32xf32>
    %292 = arith.mulf %287, %291 : vector<2x32xf32>
    %293 = arith.truncf %292 : vector<2x32xf32> to vector<2x32xbf16>
    %294 = vector.extract_strided_slice %12 {offsets = [6, 0], sizes = [1, 32], strides = [1, 1]} : vector<16x32xbf16> to vector<1x32xbf16>
    %295 = vector.extract_strided_slice %12 {offsets = [14, 0], sizes = [1, 32], strides = [1, 1]} : vector<16x32xbf16> to vector<1x32xbf16>
    %296 = tpu.concatenate %294, %295 in 0 : vector<1x32xbf16>, vector<1x32xbf16> -> vector<2x32xbf16>
    %cst_51 = arith.constant dense<0.000000e+00> : vector<2x32xf32>
    %297 = tpu.matmul %293, %8, %cst_51 {dimension_numbers = #tpu.dot_dimension_numbers<[1], [0], [0], [1], [0, 0, 1, 1], [], []>} : vector<2x32xbf16>, vector<32x32xbf16>, vector<2x32xf32> -> vector<2x32xf32>
    %298 = arith.extf %296 : vector<2x32xbf16> to vector<2x32xf32>
    %299 = arith.addf %298, %297 : vector<2x32xf32>
    %300 = vector.extract_strided_slice %13 {offsets = [6, 0], sizes = [1, 32], strides = [1, 1]} : vector<16x32xbf16> to vector<1x32xbf16>
    %301 = vector.extract_strided_slice %13 {offsets = [14, 0], sizes = [1, 32], strides = [1, 1]} : vector<16x32xbf16> to vector<1x32xbf16>
    %302 = tpu.concatenate %300, %301 in 0 : vector<1x32xbf16>, vector<1x32xbf16> -> vector<2x32xbf16>
    %cst_52 = arith.constant dense<0.000000e+00> : vector<2x32xf32>
    %303 = tpu.matmul %293, %9, %cst_52 {dimension_numbers = #tpu.dot_dimension_numbers<[1], [0], [0], [1], [0, 0, 1, 1], [], []>} : vector<2x32xbf16>, vector<32x32xbf16>, vector<2x32xf32> -> vector<2x32xf32>
    %304 = arith.extf %302 : vector<2x32xbf16> to vector<2x32xf32>
    %305 = arith.addf %304, %303 : vector<2x32xf32>
    %306 = vector.extract_strided_slice %14 {offsets = [6, 0], sizes = [1, 32], strides = [1, 1]} : vector<16x32xbf16> to vector<1x32xbf16>
    %307 = vector.extract_strided_slice %14 {offsets = [14, 0], sizes = [1, 32], strides = [1, 1]} : vector<16x32xbf16> to vector<1x32xbf16>
    %308 = tpu.concatenate %306, %307 in 0 : vector<1x32xbf16>, vector<1x32xbf16> -> vector<2x32xbf16>
    %cst_53 = arith.constant dense<0.000000e+00> : vector<2x32xf32>
    %309 = tpu.matmul %293, %10, %cst_53 {dimension_numbers = #tpu.dot_dimension_numbers<[1], [0], [0], [1], [0, 0, 1, 1], [], []>} : vector<2x32xbf16>, vector<32x32xbf16>, vector<2x32xf32> -> vector<2x32xf32>
    %310 = arith.extf %308 : vector<2x32xbf16> to vector<2x32xf32>
    %311 = arith.addf %310, %309 : vector<2x32xf32>
    %312 = vector.extract_strided_slice %15 {offsets = [6, 0], sizes = [1, 32], strides = [1, 1]} : vector<16x32xbf16> to vector<1x32xbf16>
    %313 = vector.extract_strided_slice %15 {offsets = [14, 0], sizes = [1, 32], strides = [1, 1]} : vector<16x32xbf16> to vector<1x32xbf16>
    %314 = tpu.concatenate %312, %313 in 0 : vector<1x32xbf16>, vector<1x32xbf16> -> vector<2x32xbf16>
    %cst_54 = arith.constant dense<0.000000e+00> : vector<2x32xf32>
    %315 = tpu.matmul %293, %11, %cst_54 {dimension_numbers = #tpu.dot_dimension_numbers<[1], [0], [0], [1], [0, 0, 1, 1], [], []>} : vector<2x32xbf16>, vector<32x32xbf16>, vector<2x32xf32> -> vector<2x32xf32>
    %316 = arith.extf %314 : vector<2x32xbf16> to vector<2x32xf32>
    %317 = arith.addf %316, %315 : vector<2x32xf32>
    %318 = arith.negf %299 : vector<2x32xf32>
    %319 = math.exp %318 : vector<2x32xf32>
    %cst_55 = arith.constant 1.000000e+00 : f32
    %320 = vector.broadcast %cst_55 : f32 to vector<2x32xf32>
    %321 = arith.addf %320, %319 : vector<2x32xf32>
    %322 = arith.divf %320, %321 : vector<2x32xf32>
    %323 = arith.negf %305 : vector<2x32xf32>
    %324 = math.exp %323 : vector<2x32xf32>
    %cst_56 = arith.constant 1.000000e+00 : f32
    %325 = vector.broadcast %cst_56 : f32 to vector<2x32xf32>
    %326 = arith.addf %325, %324 : vector<2x32xf32>
    %327 = arith.divf %325, %326 : vector<2x32xf32>
    %328 = math.tanh %311 : vector<2x32xf32>
    %329 = arith.negf %317 : vector<2x32xf32>
    %330 = math.exp %329 : vector<2x32xf32>
    %cst_57 = arith.constant 1.000000e+00 : f32
    %331 = vector.broadcast %cst_57 : f32 to vector<2x32xf32>
    %332 = arith.addf %331, %330 : vector<2x32xf32>
    %333 = arith.divf %331, %332 : vector<2x32xf32>
    %334 = arith.mulf %327, %290 : vector<2x32xf32>
    %335 = arith.mulf %322, %328 : vector<2x32xf32>
    %336 = arith.addf %334, %335 : vector<2x32xf32>
    %337 = math.tanh %336 : vector<2x32xf32>
    %338 = arith.mulf %333, %337 : vector<2x32xf32>
    %339 = arith.truncf %338 : vector<2x32xf32> to vector<2x32xbf16>
    %340 = vector.extract_strided_slice %12 {offsets = [7, 0], sizes = [1, 32], strides = [1, 1]} : vector<16x32xbf16> to vector<1x32xbf16>
    %341 = vector.extract_strided_slice %12 {offsets = [15, 0], sizes = [1, 32], strides = [1, 1]} : vector<16x32xbf16> to vector<1x32xbf16>
    %342 = tpu.concatenate %340, %341 in 0 : vector<1x32xbf16>, vector<1x32xbf16> -> vector<2x32xbf16>
    %cst_58 = arith.constant dense<0.000000e+00> : vector<2x32xf32>
    %343 = tpu.matmul %339, %8, %cst_58 {dimension_numbers = #tpu.dot_dimension_numbers<[1], [0], [0], [1], [0, 0, 1, 1], [], []>} : vector<2x32xbf16>, vector<32x32xbf16>, vector<2x32xf32> -> vector<2x32xf32>
    %344 = arith.extf %342 : vector<2x32xbf16> to vector<2x32xf32>
    %345 = arith.addf %344, %343 : vector<2x32xf32>
    %346 = vector.extract_strided_slice %13 {offsets = [7, 0], sizes = [1, 32], strides = [1, 1]} : vector<16x32xbf16> to vector<1x32xbf16>
    %347 = vector.extract_strided_slice %13 {offsets = [15, 0], sizes = [1, 32], strides = [1, 1]} : vector<16x32xbf16> to vector<1x32xbf16>
    %348 = tpu.concatenate %346, %347 in 0 : vector<1x32xbf16>, vector<1x32xbf16> -> vector<2x32xbf16>
    %cst_59 = arith.constant dense<0.000000e+00> : vector<2x32xf32>
    %349 = tpu.matmul %339, %9, %cst_59 {dimension_numbers = #tpu.dot_dimension_numbers<[1], [0], [0], [1], [0, 0, 1, 1], [], []>} : vector<2x32xbf16>, vector<32x32xbf16>, vector<2x32xf32> -> vector<2x32xf32>
    %350 = arith.extf %348 : vector<2x32xbf16> to vector<2x32xf32>
    %351 = arith.addf %350, %349 : vector<2x32xf32>
    %352 = vector.extract_strided_slice %14 {offsets = [7, 0], sizes = [1, 32], strides = [1, 1]} : vector<16x32xbf16> to vector<1x32xbf16>
    %353 = vector.extract_strided_slice %14 {offsets = [15, 0], sizes = [1, 32], strides = [1, 1]} : vector<16x32xbf16> to vector<1x32xbf16>
    %354 = tpu.concatenate %352, %353 in 0 : vector<1x32xbf16>, vector<1x32xbf16> -> vector<2x32xbf16>
    %cst_60 = arith.constant dense<0.000000e+00> : vector<2x32xf32>
    %355 = tpu.matmul %339, %10, %cst_60 {dimension_numbers = #tpu.dot_dimension_numbers<[1], [0], [0], [1], [0, 0, 1, 1], [], []>} : vector<2x32xbf16>, vector<32x32xbf16>, vector<2x32xf32> -> vector<2x32xf32>
    %356 = arith.extf %354 : vector<2x32xbf16> to vector<2x32xf32>
    %357 = arith.addf %356, %355 : vector<2x32xf32>
    %358 = vector.extract_strided_slice %15 {offsets = [7, 0], sizes = [1, 32], strides = [1, 1]} : vector<16x32xbf16> to vector<1x32xbf16>
    %359 = vector.extract_strided_slice %15 {offsets = [15, 0], sizes = [1, 32], strides = [1, 1]} : vector<16x32xbf16> to vector<1x32xbf16>
    %360 = tpu.concatenate %358, %359 in 0 : vector<1x32xbf16>, vector<1x32xbf16> -> vector<2x32xbf16>
    %cst_61 = arith.constant dense<0.000000e+00> : vector<2x32xf32>
    %361 = tpu.matmul %339, %11, %cst_61 {dimension_numbers = #tpu.dot_dimension_numbers<[1], [0], [0], [1], [0, 0, 1, 1], [], []>} : vector<2x32xbf16>, vector<32x32xbf16>, vector<2x32xf32> -> vector<2x32xf32>
    %362 = arith.extf %360 : vector<2x32xbf16> to vector<2x32xf32>
    %363 = arith.addf %362, %361 : vector<2x32xf32>
    %364 = arith.negf %345 : vector<2x32xf32>
    %365 = math.exp %364 : vector<2x32xf32>
    %cst_62 = arith.constant 1.000000e+00 : f32
    %366 = vector.broadcast %cst_62 : f32 to vector<2x32xf32>
    %367 = arith.addf %366, %365 : vector<2x32xf32>
    %368 = arith.divf %366, %367 : vector<2x32xf32>
    %369 = arith.negf %351 : vector<2x32xf32>
    %370 = math.exp %369 : vector<2x32xf32>
    %cst_63 = arith.constant 1.000000e+00 : f32
    %371 = vector.broadcast %cst_63 : f32 to vector<2x32xf32>
    %372 = arith.addf %371, %370 : vector<2x32xf32>
    %373 = arith.divf %371, %372 : vector<2x32xf32>
    %374 = math.tanh %357 : vector<2x32xf32>
    %375 = arith.negf %363 : vector<2x32xf32>
    %376 = math.exp %375 : vector<2x32xf32>
    %cst_64 = arith.constant 1.000000e+00 : f32
    %377 = vector.broadcast %cst_64 : f32 to vector<2x32xf32>
    %378 = arith.addf %377, %376 : vector<2x32xf32>
    %379 = arith.divf %377, %378 : vector<2x32xf32>
    %380 = arith.mulf %373, %336 : vector<2x32xf32>
    %381 = arith.mulf %368, %374 : vector<2x32xf32>
    %382 = arith.addf %380, %381 : vector<2x32xf32>
    %383 = math.tanh %382 : vector<2x32xf32>
    %384 = arith.mulf %379, %383 : vector<2x32xf32>
    %385 = arith.truncf %384 : vector<2x32xf32> to vector<2x32xbf16>
    %386 = vector.extract_strided_slice %63 {offsets = [0, 0], sizes = [1, 32], strides = [1, 1]} : vector<2x32xbf16> to vector<1x32xbf16>
    %387 = vector.extract_strided_slice %109 {offsets = [0, 0], sizes = [1, 32], strides = [1, 1]} : vector<2x32xbf16> to vector<1x32xbf16>
    %388 = vector.extract_strided_slice %155 {offsets = [0, 0], sizes = [1, 32], strides = [1, 1]} : vector<2x32xbf16> to vector<1x32xbf16>
    %389 = vector.extract_strided_slice %201 {offsets = [0, 0], sizes = [1, 32], strides = [1, 1]} : vector<2x32xbf16> to vector<1x32xbf16>
    %390 = vector.extract_strided_slice %247 {offsets = [0, 0], sizes = [1, 32], strides = [1, 1]} : vector<2x32xbf16> to vector<1x32xbf16>
    %391 = vector.extract_strided_slice %293 {offsets = [0, 0], sizes = [1, 32], strides = [1, 1]} : vector<2x32xbf16> to vector<1x32xbf16>
    %392 = vector.extract_strided_slice %339 {offsets = [0, 0], sizes = [1, 32], strides = [1, 1]} : vector<2x32xbf16> to vector<1x32xbf16>
    %393 = vector.extract_strided_slice %385 {offsets = [0, 0], sizes = [1, 32], strides = [1, 1]} : vector<2x32xbf16> to vector<1x32xbf16>
    %394 = tpu.concatenate %386, %387, %388, %389, %390, %391, %392, %393 in 0 : vector<1x32xbf16>, vector<1x32xbf16>, vector<1x32xbf16>, vector<1x32xbf16>, vector<1x32xbf16>, vector<1x32xbf16>, vector<1x32xbf16>, vector<1x32xbf16> -> vector<8x32xbf16>
    %395 = vector.extract_strided_slice %63 {offsets = [1, 0], sizes = [1, 32], strides = [1, 1]} : vector<2x32xbf16> to vector<1x32xbf16>
    %396 = vector.extract_strided_slice %109 {offsets = [1, 0], sizes = [1, 32], strides = [1, 1]} : vector<2x32xbf16> to vector<1x32xbf16>
    %397 = vector.extract_strided_slice %155 {offsets = [1, 0], sizes = [1, 32], strides = [1, 1]} : vector<2x32xbf16> to vector<1x32xbf16>
    %398 = vector.extract_strided_slice %201 {offsets = [1, 0], sizes = [1, 32], strides = [1, 1]} : vector<2x32xbf16> to vector<1x32xbf16>
    %399 = vector.extract_strided_slice %247 {offsets = [1, 0], sizes = [1, 32], strides = [1, 1]} : vector<2x32xbf16> to vector<1x32xbf16>
    %400 = vector.extract_strided_slice %293 {offsets = [1, 0], sizes = [1, 32], strides = [1, 1]} : vector<2x32xbf16> to vector<1x32xbf16>
    %401 = vector.extract_strided_slice %339 {offsets = [1, 0], sizes = [1, 32], strides = [1, 1]} : vector<2x32xbf16> to vector<1x32xbf16>
    %402 = vector.extract_strided_slice %385 {offsets = [1, 0], sizes = [1, 32], strides = [1, 1]} : vector<2x32xbf16> to vector<1x32xbf16>
    %403 = tpu.concatenate %395, %396, %397, %398, %399, %400, %401, %402 in 0 : vector<1x32xbf16>, vector<1x32xbf16>, vector<1x32xbf16>, vector<1x32xbf16>, vector<1x32xbf16>, vector<1x32xbf16>, vector<1x32xbf16>, vector<1x32xbf16> -> vector<8x32xbf16>
    %404 = tpu.concatenate %394, %403 in 0 : vector<8x32xbf16>, vector<8x32xbf16> -> vector<16x32xbf16>
    %c0_65 = arith.constant 0 : index
    %c0_66 = arith.constant 0 : index
    %405 = vector.load %arg5[%c0_65, %c0_66] : memref<32x96xbf16, #tpu.memory_space<vmem>>, vector<32x96xbf16>
    %cst_67 = arith.constant dense<0.000000e+00> : vector<16x96xf32>
    %406 = tpu.matmul %404, %405, %cst_67 {dimension_numbers = #tpu.dot_dimension_numbers<[1], [0], [0], [1], [0, 0, 1, 1], [], []>} : vector<16x32xbf16>, vector<32x96xbf16>, vector<16x96xf32> -> vector<16x96xf32>
    %c0_68 = arith.constant 0 : index
    %c0_69 = arith.constant 0 : index
    %407 = vector.load %arg6[%c0_68, %c0_69] : memref<1x96xf32, #tpu.memory_space<vmem>>, vector<1x96xf32>
    %408 = vector.broadcast %407 : vector<1x96xf32> to vector<16x96xf32>
    %409 = arith.addf %406, %408 : vector<16x96xf32>
    %410 = vector.extract_strided_slice %409 {offsets = [0, 0], sizes = [8, 96], strides = [1, 1]} : vector<16x96xf32> to vector<8x96xf32>
    %411 = vector.extract_strided_slice %410 {offsets = [0, 0], sizes = [8, 32], strides = [1, 1]} : vector<8x96xf32> to vector<8x32xf32>
    %412 = arith.truncf %411 : vector<8x32xf32> to vector<8x32xbf16>
    %413 = vector.extract_strided_slice %410 {offsets = [0, 32], sizes = [8, 32], strides = [1, 1]} : vector<8x96xf32> to vector<8x32xf32>
    %414 = arith.truncf %413 : vector<8x32xf32> to vector<8x32xbf16>
    %415 = vector.extract_strided_slice %410 {offsets = [0, 64], sizes = [8, 32], strides = [1, 1]} : vector<8x96xf32> to vector<8x32xf32>
    %416 = arith.truncf %415 : vector<8x32xf32> to vector<8x32xbf16>
    %417 = vector.extract_strided_slice %412 {offsets = [0, 0], sizes = [8, 8], strides = [1, 1]} : vector<8x32xbf16> to vector<8x8xbf16>
    %418 = vector.extract_strided_slice %414 {offsets = [0, 0], sizes = [8, 8], strides = [1, 1]} : vector<8x32xbf16> to vector<8x8xbf16>
    %419 = vector.extract_strided_slice %416 {offsets = [0, 0], sizes = [8, 8], strides = [1, 1]} : vector<8x32xbf16> to vector<8x8xbf16>
    %cst_70 = arith.constant dense<0.000000e+00> : vector<8x8xf32>
    %420 = tpu.matmul %417, %418, %cst_70 {dimension_numbers = #tpu.dot_dimension_numbers<[1], [1], [0], [0], [0, 0, 1, 0], [], []>} : vector<8x8xbf16>, vector<8x8xbf16>, vector<8x8xf32> -> vector<8x8xf32>
    %cst_71 = arith.constant 0.353553385 : f32
    %421 = vector.broadcast %cst_71 : f32 to vector<8x8xf32>
    %422 = arith.mulf %420, %421 : vector<8x8xf32>
    %cst_72 = arith.constant dense<0xFF800000> : vector<8xf32>
    %423 = vector.multi_reduction <maximumf>, %422, %cst_72 [1] : vector<8x8xf32> to vector<8xf32>
    %424 = vector.shape_cast %423 : vector<8xf32> to vector<8x1xf32>
    %425 = vector.broadcast %424 : vector<8x1xf32> to vector<8x8xf32>
    %426 = arith.subf %422, %425 : vector<8x8xf32>
    %427 = math.exp %426 : vector<8x8xf32>
    %cst_73 = arith.constant dense<0.000000e+00> : vector<8xf32>
    %428 = vector.multi_reduction <add>, %427, %cst_73 [1] : vector<8x8xf32> to vector<8xf32>
    %429 = vector.shape_cast %428 : vector<8xf32> to vector<8x1xf32>
    %430 = tpu.reciprocal %429 {approx = true} : vector<8x1xf32> -> vector<8x1xf32>
    %431 = vector.broadcast %430 : vector<8x1xf32> to vector<8x8xf32>
    %432 = arith.mulf %427, %431 : vector<8x8xf32>
    %433 = arith.truncf %432 : vector<8x8xf32> to vector<8x8xbf16>
    %cst_74 = arith.constant dense<0.000000e+00> : vector<8x8xf32>
    %434 = tpu.matmul %433, %419, %cst_74 {dimension_numbers = #tpu.dot_dimension_numbers<[1], [0], [0], [1], [0, 0, 1, 1], [], []>} : vector<8x8xbf16>, vector<8x8xbf16>, vector<8x8xf32> -> vector<8x8xf32>
    %435 = vector.extract_strided_slice %412 {offsets = [0, 8], sizes = [8, 8], strides = [1, 1]} : vector<8x32xbf16> to vector<8x8xbf16>
    %436 = vector.extract_strided_slice %414 {offsets = [0, 8], sizes = [8, 8], strides = [1, 1]} : vector<8x32xbf16> to vector<8x8xbf16>
    %437 = vector.extract_strided_slice %416 {offsets = [0, 8], sizes = [8, 8], strides = [1, 1]} : vector<8x32xbf16> to vector<8x8xbf16>
    %cst_75 = arith.constant dense<0.000000e+00> : vector<8x8xf32>
    %438 = tpu.matmul %435, %436, %cst_75 {dimension_numbers = #tpu.dot_dimension_numbers<[1], [1], [0], [0], [0, 0, 1, 0], [], []>} : vector<8x8xbf16>, vector<8x8xbf16>, vector<8x8xf32> -> vector<8x8xf32>
    %cst_76 = arith.constant 0.353553385 : f32
    %439 = vector.broadcast %cst_76 : f32 to vector<8x8xf32>
    %440 = arith.mulf %438, %439 : vector<8x8xf32>
    %cst_77 = arith.constant dense<0xFF800000> : vector<8xf32>
    %441 = vector.multi_reduction <maximumf>, %440, %cst_77 [1] : vector<8x8xf32> to vector<8xf32>
    %442 = vector.shape_cast %441 : vector<8xf32> to vector<8x1xf32>
    %443 = vector.broadcast %442 : vector<8x1xf32> to vector<8x8xf32>
    %444 = arith.subf %440, %443 : vector<8x8xf32>
    %445 = math.exp %444 : vector<8x8xf32>
    %cst_78 = arith.constant dense<0.000000e+00> : vector<8xf32>
    %446 = vector.multi_reduction <add>, %445, %cst_78 [1] : vector<8x8xf32> to vector<8xf32>
    %447 = vector.shape_cast %446 : vector<8xf32> to vector<8x1xf32>
    %448 = tpu.reciprocal %447 {approx = true} : vector<8x1xf32> -> vector<8x1xf32>
    %449 = vector.broadcast %448 : vector<8x1xf32> to vector<8x8xf32>
    %450 = arith.mulf %445, %449 : vector<8x8xf32>
    %451 = arith.truncf %450 : vector<8x8xf32> to vector<8x8xbf16>
    %cst_79 = arith.constant dense<0.000000e+00> : vector<8x8xf32>
    %452 = tpu.matmul %451, %437, %cst_79 {dimension_numbers = #tpu.dot_dimension_numbers<[1], [0], [0], [1], [0, 0, 1, 1], [], []>} : vector<8x8xbf16>, vector<8x8xbf16>, vector<8x8xf32> -> vector<8x8xf32>
    %453 = vector.extract_strided_slice %412 {offsets = [0, 16], sizes = [8, 8], strides = [1, 1]} : vector<8x32xbf16> to vector<8x8xbf16>
    %454 = vector.extract_strided_slice %414 {offsets = [0, 16], sizes = [8, 8], strides = [1, 1]} : vector<8x32xbf16> to vector<8x8xbf16>
    %455 = vector.extract_strided_slice %416 {offsets = [0, 16], sizes = [8, 8], strides = [1, 1]} : vector<8x32xbf16> to vector<8x8xbf16>
    %cst_80 = arith.constant dense<0.000000e+00> : vector<8x8xf32>
    %456 = tpu.matmul %453, %454, %cst_80 {dimension_numbers = #tpu.dot_dimension_numbers<[1], [1], [0], [0], [0, 0, 1, 0], [], []>} : vector<8x8xbf16>, vector<8x8xbf16>, vector<8x8xf32> -> vector<8x8xf32>
    %cst_81 = arith.constant 0.353553385 : f32
    %457 = vector.broadcast %cst_81 : f32 to vector<8x8xf32>
    %458 = arith.mulf %456, %457 : vector<8x8xf32>
    %cst_82 = arith.constant dense<0xFF800000> : vector<8xf32>
    %459 = vector.multi_reduction <maximumf>, %458, %cst_82 [1] : vector<8x8xf32> to vector<8xf32>
    %460 = vector.shape_cast %459 : vector<8xf32> to vector<8x1xf32>
    %461 = vector.broadcast %460 : vector<8x1xf32> to vector<8x8xf32>
    %462 = arith.subf %458, %461 : vector<8x8xf32>
    %463 = math.exp %462 : vector<8x8xf32>
    %cst_83 = arith.constant dense<0.000000e+00> : vector<8xf32>
    %464 = vector.multi_reduction <add>, %463, %cst_83 [1] : vector<8x8xf32> to vector<8xf32>
    %465 = vector.shape_cast %464 : vector<8xf32> to vector<8x1xf32>
    %466 = tpu.reciprocal %465 {approx = true} : vector<8x1xf32> -> vector<8x1xf32>
    %467 = vector.broadcast %466 : vector<8x1xf32> to vector<8x8xf32>
    %468 = arith.mulf %463, %467 : vector<8x8xf32>
    %469 = arith.truncf %468 : vector<8x8xf32> to vector<8x8xbf16>
    %cst_84 = arith.constant dense<0.000000e+00> : vector<8x8xf32>
    %470 = tpu.matmul %469, %455, %cst_84 {dimension_numbers = #tpu.dot_dimension_numbers<[1], [0], [0], [1], [0, 0, 1, 1], [], []>} : vector<8x8xbf16>, vector<8x8xbf16>, vector<8x8xf32> -> vector<8x8xf32>
    %471 = vector.extract_strided_slice %412 {offsets = [0, 24], sizes = [8, 8], strides = [1, 1]} : vector<8x32xbf16> to vector<8x8xbf16>
    %472 = vector.extract_strided_slice %414 {offsets = [0, 24], sizes = [8, 8], strides = [1, 1]} : vector<8x32xbf16> to vector<8x8xbf16>
    %473 = vector.extract_strided_slice %416 {offsets = [0, 24], sizes = [8, 8], strides = [1, 1]} : vector<8x32xbf16> to vector<8x8xbf16>
    %cst_85 = arith.constant dense<0.000000e+00> : vector<8x8xf32>
    %474 = tpu.matmul %471, %472, %cst_85 {dimension_numbers = #tpu.dot_dimension_numbers<[1], [1], [0], [0], [0, 0, 1, 0], [], []>} : vector<8x8xbf16>, vector<8x8xbf16>, vector<8x8xf32> -> vector<8x8xf32>
    %cst_86 = arith.constant 0.353553385 : f32
    %475 = vector.broadcast %cst_86 : f32 to vector<8x8xf32>
    %476 = arith.mulf %474, %475 : vector<8x8xf32>
    %cst_87 = arith.constant dense<0xFF800000> : vector<8xf32>
    %477 = vector.multi_reduction <maximumf>, %476, %cst_87 [1] : vector<8x8xf32> to vector<8xf32>
    %478 = vector.shape_cast %477 : vector<8xf32> to vector<8x1xf32>
    %479 = vector.broadcast %478 : vector<8x1xf32> to vector<8x8xf32>
    %480 = arith.subf %476, %479 : vector<8x8xf32>
    %481 = math.exp %480 : vector<8x8xf32>
    %cst_88 = arith.constant dense<0.000000e+00> : vector<8xf32>
    %482 = vector.multi_reduction <add>, %481, %cst_88 [1] : vector<8x8xf32> to vector<8xf32>
    %483 = vector.shape_cast %482 : vector<8xf32> to vector<8x1xf32>
    %484 = tpu.reciprocal %483 {approx = true} : vector<8x1xf32> -> vector<8x1xf32>
    %485 = vector.broadcast %484 : vector<8x1xf32> to vector<8x8xf32>
    %486 = arith.mulf %481, %485 : vector<8x8xf32>
    %487 = arith.truncf %486 : vector<8x8xf32> to vector<8x8xbf16>
    %cst_89 = arith.constant dense<0.000000e+00> : vector<8x8xf32>
    %488 = tpu.matmul %487, %473, %cst_89 {dimension_numbers = #tpu.dot_dimension_numbers<[1], [0], [0], [1], [0, 0, 1, 1], [], []>} : vector<8x8xbf16>, vector<8x8xbf16>, vector<8x8xf32> -> vector<8x8xf32>
    %489 = tpu.concatenate %434, %452, %470, %488 in 1 : vector<8x8xf32>, vector<8x8xf32>, vector<8x8xf32>, vector<8x8xf32> -> vector<8x32xf32>
    %490 = vector.extract_strided_slice %409 {offsets = [8, 0], sizes = [8, 96], strides = [1, 1]} : vector<16x96xf32> to vector<8x96xf32>
    %491 = vector.extract_strided_slice %490 {offsets = [0, 0], sizes = [8, 32], strides = [1, 1]} : vector<8x96xf32> to vector<8x32xf32>
    %492 = arith.truncf %491 : vector<8x32xf32> to vector<8x32xbf16>
    %493 = vector.extract_strided_slice %490 {offsets = [0, 32], sizes = [8, 32], strides = [1, 1]} : vector<8x96xf32> to vector<8x32xf32>
    %494 = arith.truncf %493 : vector<8x32xf32> to vector<8x32xbf16>
    %495 = vector.extract_strided_slice %490 {offsets = [0, 64], sizes = [8, 32], strides = [1, 1]} : vector<8x96xf32> to vector<8x32xf32>
    %496 = arith.truncf %495 : vector<8x32xf32> to vector<8x32xbf16>
    %497 = vector.extract_strided_slice %492 {offsets = [0, 0], sizes = [8, 8], strides = [1, 1]} : vector<8x32xbf16> to vector<8x8xbf16>
    %498 = vector.extract_strided_slice %494 {offsets = [0, 0], sizes = [8, 8], strides = [1, 1]} : vector<8x32xbf16> to vector<8x8xbf16>
    %499 = vector.extract_strided_slice %496 {offsets = [0, 0], sizes = [8, 8], strides = [1, 1]} : vector<8x32xbf16> to vector<8x8xbf16>
    %cst_90 = arith.constant dense<0.000000e+00> : vector<8x8xf32>
    %500 = tpu.matmul %497, %498, %cst_90 {dimension_numbers = #tpu.dot_dimension_numbers<[1], [1], [0], [0], [0, 0, 1, 0], [], []>} : vector<8x8xbf16>, vector<8x8xbf16>, vector<8x8xf32> -> vector<8x8xf32>
    %cst_91 = arith.constant 0.353553385 : f32
    %501 = vector.broadcast %cst_91 : f32 to vector<8x8xf32>
    %502 = arith.mulf %500, %501 : vector<8x8xf32>
    %cst_92 = arith.constant dense<0xFF800000> : vector<8xf32>
    %503 = vector.multi_reduction <maximumf>, %502, %cst_92 [1] : vector<8x8xf32> to vector<8xf32>
    %504 = vector.shape_cast %503 : vector<8xf32> to vector<8x1xf32>
    %505 = vector.broadcast %504 : vector<8x1xf32> to vector<8x8xf32>
    %506 = arith.subf %502, %505 : vector<8x8xf32>
    %507 = math.exp %506 : vector<8x8xf32>
    %cst_93 = arith.constant dense<0.000000e+00> : vector<8xf32>
    %508 = vector.multi_reduction <add>, %507, %cst_93 [1] : vector<8x8xf32> to vector<8xf32>
    %509 = vector.shape_cast %508 : vector<8xf32> to vector<8x1xf32>
    %510 = tpu.reciprocal %509 {approx = true} : vector<8x1xf32> -> vector<8x1xf32>
    %511 = vector.broadcast %510 : vector<8x1xf32> to vector<8x8xf32>
    %512 = arith.mulf %507, %511 : vector<8x8xf32>
    %513 = arith.truncf %512 : vector<8x8xf32> to vector<8x8xbf16>
    %cst_94 = arith.constant dense<0.000000e+00> : vector<8x8xf32>
    %514 = tpu.matmul %513, %499, %cst_94 {dimension_numbers = #tpu.dot_dimension_numbers<[1], [0], [0], [1], [0, 0, 1, 1], [], []>} : vector<8x8xbf16>, vector<8x8xbf16>, vector<8x8xf32> -> vector<8x8xf32>
    %515 = vector.extract_strided_slice %492 {offsets = [0, 8], sizes = [8, 8], strides = [1, 1]} : vector<8x32xbf16> to vector<8x8xbf16>
    %516 = vector.extract_strided_slice %494 {offsets = [0, 8], sizes = [8, 8], strides = [1, 1]} : vector<8x32xbf16> to vector<8x8xbf16>
    %517 = vector.extract_strided_slice %496 {offsets = [0, 8], sizes = [8, 8], strides = [1, 1]} : vector<8x32xbf16> to vector<8x8xbf16>
    %cst_95 = arith.constant dense<0.000000e+00> : vector<8x8xf32>
    %518 = tpu.matmul %515, %516, %cst_95 {dimension_numbers = #tpu.dot_dimension_numbers<[1], [1], [0], [0], [0, 0, 1, 0], [], []>} : vector<8x8xbf16>, vector<8x8xbf16>, vector<8x8xf32> -> vector<8x8xf32>
    %cst_96 = arith.constant 0.353553385 : f32
    %519 = vector.broadcast %cst_96 : f32 to vector<8x8xf32>
    %520 = arith.mulf %518, %519 : vector<8x8xf32>
    %cst_97 = arith.constant dense<0xFF800000> : vector<8xf32>
    %521 = vector.multi_reduction <maximumf>, %520, %cst_97 [1] : vector<8x8xf32> to vector<8xf32>
    %522 = vector.shape_cast %521 : vector<8xf32> to vector<8x1xf32>
    %523 = vector.broadcast %522 : vector<8x1xf32> to vector<8x8xf32>
    %524 = arith.subf %520, %523 : vector<8x8xf32>
    %525 = math.exp %524 : vector<8x8xf32>
    %cst_98 = arith.constant dense<0.000000e+00> : vector<8xf32>
    %526 = vector.multi_reduction <add>, %525, %cst_98 [1] : vector<8x8xf32> to vector<8xf32>
    %527 = vector.shape_cast %526 : vector<8xf32> to vector<8x1xf32>
    %528 = tpu.reciprocal %527 {approx = true} : vector<8x1xf32> -> vector<8x1xf32>
    %529 = vector.broadcast %528 : vector<8x1xf32> to vector<8x8xf32>
    %530 = arith.mulf %525, %529 : vector<8x8xf32>
    %531 = arith.truncf %530 : vector<8x8xf32> to vector<8x8xbf16>
    %cst_99 = arith.constant dense<0.000000e+00> : vector<8x8xf32>
    %532 = tpu.matmul %531, %517, %cst_99 {dimension_numbers = #tpu.dot_dimension_numbers<[1], [0], [0], [1], [0, 0, 1, 1], [], []>} : vector<8x8xbf16>, vector<8x8xbf16>, vector<8x8xf32> -> vector<8x8xf32>
    %533 = vector.extract_strided_slice %492 {offsets = [0, 16], sizes = [8, 8], strides = [1, 1]} : vector<8x32xbf16> to vector<8x8xbf16>
    %534 = vector.extract_strided_slice %494 {offsets = [0, 16], sizes = [8, 8], strides = [1, 1]} : vector<8x32xbf16> to vector<8x8xbf16>
    %535 = vector.extract_strided_slice %496 {offsets = [0, 16], sizes = [8, 8], strides = [1, 1]} : vector<8x32xbf16> to vector<8x8xbf16>
    %cst_100 = arith.constant dense<0.000000e+00> : vector<8x8xf32>
    %536 = tpu.matmul %533, %534, %cst_100 {dimension_numbers = #tpu.dot_dimension_numbers<[1], [1], [0], [0], [0, 0, 1, 0], [], []>} : vector<8x8xbf16>, vector<8x8xbf16>, vector<8x8xf32> -> vector<8x8xf32>
    %cst_101 = arith.constant 0.353553385 : f32
    %537 = vector.broadcast %cst_101 : f32 to vector<8x8xf32>
    %538 = arith.mulf %536, %537 : vector<8x8xf32>
    %cst_102 = arith.constant dense<0xFF800000> : vector<8xf32>
    %539 = vector.multi_reduction <maximumf>, %538, %cst_102 [1] : vector<8x8xf32> to vector<8xf32>
    %540 = vector.shape_cast %539 : vector<8xf32> to vector<8x1xf32>
    %541 = vector.broadcast %540 : vector<8x1xf32> to vector<8x8xf32>
    %542 = arith.subf %538, %541 : vector<8x8xf32>
    %543 = math.exp %542 : vector<8x8xf32>
    %cst_103 = arith.constant dense<0.000000e+00> : vector<8xf32>
    %544 = vector.multi_reduction <add>, %543, %cst_103 [1] : vector<8x8xf32> to vector<8xf32>
    %545 = vector.shape_cast %544 : vector<8xf32> to vector<8x1xf32>
    %546 = tpu.reciprocal %545 {approx = true} : vector<8x1xf32> -> vector<8x1xf32>
    %547 = vector.broadcast %546 : vector<8x1xf32> to vector<8x8xf32>
    %548 = arith.mulf %543, %547 : vector<8x8xf32>
    %549 = arith.truncf %548 : vector<8x8xf32> to vector<8x8xbf16>
    %cst_104 = arith.constant dense<0.000000e+00> : vector<8x8xf32>
    %550 = tpu.matmul %549, %535, %cst_104 {dimension_numbers = #tpu.dot_dimension_numbers<[1], [0], [0], [1], [0, 0, 1, 1], [], []>} : vector<8x8xbf16>, vector<8x8xbf16>, vector<8x8xf32> -> vector<8x8xf32>
    %551 = vector.extract_strided_slice %492 {offsets = [0, 24], sizes = [8, 8], strides = [1, 1]} : vector<8x32xbf16> to vector<8x8xbf16>
    %552 = vector.extract_strided_slice %494 {offsets = [0, 24], sizes = [8, 8], strides = [1, 1]} : vector<8x32xbf16> to vector<8x8xbf16>
    %553 = vector.extract_strided_slice %496 {offsets = [0, 24], sizes = [8, 8], strides = [1, 1]} : vector<8x32xbf16> to vector<8x8xbf16>
    %cst_105 = arith.constant dense<0.000000e+00> : vector<8x8xf32>
    %554 = tpu.matmul %551, %552, %cst_105 {dimension_numbers = #tpu.dot_dimension_numbers<[1], [1], [0], [0], [0, 0, 1, 0], [], []>} : vector<8x8xbf16>, vector<8x8xbf16>, vector<8x8xf32> -> vector<8x8xf32>
    %cst_106 = arith.constant 0.353553385 : f32
    %555 = vector.broadcast %cst_106 : f32 to vector<8x8xf32>
    %556 = arith.mulf %554, %555 : vector<8x8xf32>
    %cst_107 = arith.constant dense<0xFF800000> : vector<8xf32>
    %557 = vector.multi_reduction <maximumf>, %556, %cst_107 [1] : vector<8x8xf32> to vector<8xf32>
    %558 = vector.shape_cast %557 : vector<8xf32> to vector<8x1xf32>
    %559 = vector.broadcast %558 : vector<8x1xf32> to vector<8x8xf32>
    %560 = arith.subf %556, %559 : vector<8x8xf32>
    %561 = math.exp %560 : vector<8x8xf32>
    %cst_108 = arith.constant dense<0.000000e+00> : vector<8xf32>
    %562 = vector.multi_reduction <add>, %561, %cst_108 [1] : vector<8x8xf32> to vector<8xf32>
    %563 = vector.shape_cast %562 : vector<8xf32> to vector<8x1xf32>
    %564 = tpu.reciprocal %563 {approx = true} : vector<8x1xf32> -> vector<8x1xf32>
    %565 = vector.broadcast %564 : vector<8x1xf32> to vector<8x8xf32>
    %566 = arith.mulf %561, %565 : vector<8x8xf32>
    %567 = arith.truncf %566 : vector<8x8xf32> to vector<8x8xbf16>
    %cst_109 = arith.constant dense<0.000000e+00> : vector<8x8xf32>
    %568 = tpu.matmul %567, %553, %cst_109 {dimension_numbers = #tpu.dot_dimension_numbers<[1], [0], [0], [1], [0, 0, 1, 1], [], []>} : vector<8x8xbf16>, vector<8x8xbf16>, vector<8x8xf32> -> vector<8x8xf32>
    %569 = tpu.concatenate %514, %532, %550, %568 in 1 : vector<8x8xf32>, vector<8x8xf32>, vector<8x8xf32>, vector<8x8xf32> -> vector<8x32xf32>
    %570 = tpu.concatenate %489, %569 in 0 : vector<8x32xf32>, vector<8x32xf32> -> vector<16x32xf32>
    %571 = arith.truncf %570 : vector<16x32xf32> to vector<16x32xbf16>
    %c0_110 = arith.constant 0 : index
    %c0_111 = arith.constant 0 : index
    %572 = vector.load %arg7[%c0_110, %c0_111] : memref<32x32xbf16, #tpu.memory_space<vmem>>, vector<32x32xbf16>
    %cst_112 = arith.constant dense<0.000000e+00> : vector<16x32xf32>
    %573 = tpu.matmul %571, %572, %cst_112 {dimension_numbers = #tpu.dot_dimension_numbers<[1], [0], [0], [1], [0, 0, 1, 1], [], []>} : vector<16x32xbf16>, vector<32x32xbf16>, vector<16x32xf32> -> vector<16x32xf32>
    %c0_113 = arith.constant 0 : index
    %c0_114 = arith.constant 0 : index
    %574 = vector.load %arg8[%c0_113, %c0_114] : memref<1x32xf32, #tpu.memory_space<vmem>>, vector<1x32xf32>
    %575 = vector.broadcast %574 : vector<1x32xf32> to vector<16x32xf32>
    %576 = arith.addf %573, %575 : vector<16x32xf32>
    %577 = arith.extf %404 : vector<16x32xbf16> to vector<16x32xf32>
    %578 = arith.addf %577, %576 : vector<16x32xf32>
    %cst_115 = arith.constant dense<0.000000e+00> : vector<16xf32>
    %579 = vector.multi_reduction <add>, %578, %cst_115 [1] : vector<16x32xf32> to vector<16xf32>
    %580 = vector.shape_cast %579 : vector<16xf32> to vector<16x1xf32>
    %cst_116 = arith.constant 3.200000e+01 : f32
    %581 = vector.broadcast %cst_116 : f32 to vector<16x1xf32>
    %582 = arith.divf %580, %581 : vector<16x1xf32>
    %583 = vector.broadcast %582 : vector<16x1xf32> to vector<16x32xf32>
    %584 = arith.subf %578, %583 : vector<16x32xf32>
    %585 = arith.mulf %584, %584 : vector<16x32xf32>
    %cst_117 = arith.constant dense<0.000000e+00> : vector<16xf32>
    %586 = vector.multi_reduction <add>, %585, %cst_117 [1] : vector<16x32xf32> to vector<16xf32>
    %587 = vector.shape_cast %586 : vector<16xf32> to vector<16x1xf32>
    %cst_118 = arith.constant 3.200000e+01 : f32
    %588 = vector.broadcast %cst_118 : f32 to vector<16x1xf32>
    %589 = arith.divf %587, %588 : vector<16x1xf32>
    %590 = vector.broadcast %582 : vector<16x1xf32> to vector<16x32xf32>
    %591 = arith.subf %578, %590 : vector<16x32xf32>
    %cst_119 = arith.constant 9.99999974E-6 : f32
    %592 = vector.broadcast %cst_119 : f32 to vector<16x1xf32>
    %593 = arith.addf %589, %592 : vector<16x1xf32>
    %594 = math.rsqrt %593 : vector<16x1xf32>
    %595 = vector.broadcast %594 : vector<16x1xf32> to vector<16x32xf32>
    %596 = arith.mulf %591, %595 : vector<16x32xf32>
    %c0_120 = arith.constant 0 : index
    %c0_121 = arith.constant 0 : index
    %597 = vector.load %arg9[%c0_120, %c0_121] : memref<1x32xf32, #tpu.memory_space<vmem>>, vector<1x32xf32>
    %598 = vector.broadcast %597 : vector<1x32xf32> to vector<16x32xf32>
    %599 = arith.mulf %596, %598 : vector<16x32xf32>
    %c0_122 = arith.constant 0 : index
    %c0_123 = arith.constant 0 : index
    %600 = vector.load %arg10[%c0_122, %c0_123] : memref<1x32xf32, #tpu.memory_space<vmem>>, vector<1x32xf32>
    %601 = vector.broadcast %600 : vector<1x32xf32> to vector<16x32xf32>
    %602 = arith.addf %599, %601 : vector<16x32xf32>
    %603 = arith.truncf %602 : vector<16x32xf32> to vector<16x32xbf16>
    %c0_124 = arith.constant 0 : index
    %c0_125 = arith.constant 0 : index
    %604 = vector.load %arg11[%c0_124, %c0_125] : memref<32x128xbf16, #tpu.memory_space<vmem>>, vector<32x128xbf16>
    %cst_126 = arith.constant dense<0.000000e+00> : vector<16x128xf32>
    %605 = tpu.matmul %603, %604, %cst_126 {dimension_numbers = #tpu.dot_dimension_numbers<[1], [0], [0], [1], [0, 0, 1, 1], [], []>} : vector<16x32xbf16>, vector<32x128xbf16>, vector<16x128xf32> -> vector<16x128xf32>
    %c0_127 = arith.constant 0 : index
    %c0_128 = arith.constant 0 : index
    %606 = vector.load %arg13[%c0_127, %c0_128] : memref<1x128xf32, #tpu.memory_space<vmem>>, vector<1x128xf32>
    %607 = vector.broadcast %606 : vector<1x128xf32> to vector<16x128xf32>
    %608 = arith.addf %605, %607 : vector<16x128xf32>
    %609 = arith.truncf %608 : vector<16x128xf32> to vector<16x128xbf16>
    %c0_129 = arith.constant 0 : index
    %c0_130 = arith.constant 0 : index
    %610 = vector.load %arg12[%c0_129, %c0_130] : memref<32x128xbf16, #tpu.memory_space<vmem>>, vector<32x128xbf16>
    %611 = vector.extract_strided_slice %610 {offsets = [0, 0], sizes = [32, 32], strides = [1, 1]} : vector<32x128xbf16> to vector<32x32xbf16>
    %612 = vector.extract_strided_slice %610 {offsets = [0, 32], sizes = [32, 32], strides = [1, 1]} : vector<32x128xbf16> to vector<32x32xbf16>
    %613 = vector.extract_strided_slice %610 {offsets = [0, 64], sizes = [32, 32], strides = [1, 1]} : vector<32x128xbf16> to vector<32x32xbf16>
    %614 = vector.extract_strided_slice %610 {offsets = [0, 96], sizes = [32, 32], strides = [1, 1]} : vector<32x128xbf16> to vector<32x32xbf16>
    %615 = vector.extract_strided_slice %609 {offsets = [0, 0], sizes = [16, 32], strides = [1, 1]} : vector<16x128xbf16> to vector<16x32xbf16>
    %616 = vector.extract_strided_slice %609 {offsets = [0, 32], sizes = [16, 32], strides = [1, 1]} : vector<16x128xbf16> to vector<16x32xbf16>
    %617 = vector.extract_strided_slice %609 {offsets = [0, 64], sizes = [16, 32], strides = [1, 1]} : vector<16x128xbf16> to vector<16x32xbf16>
    %618 = vector.extract_strided_slice %609 {offsets = [0, 96], sizes = [16, 32], strides = [1, 1]} : vector<16x128xbf16> to vector<16x32xbf16>
    %cst_131 = arith.constant 0.000000e+00 : bf16
    %619 = vector.broadcast %cst_131 : bf16 to vector<2x32xbf16>
    %cst_132 = arith.constant 0.000000e+00 : f32
    %620 = vector.broadcast %cst_132 : f32 to vector<2x32xf32>
    %621 = vector.extract_strided_slice %615 {offsets = [0, 0], sizes = [1, 32], strides = [1, 1]} : vector<16x32xbf16> to vector<1x32xbf16>
    %622 = vector.extract_strided_slice %615 {offsets = [8, 0], sizes = [1, 32], strides = [1, 1]} : vector<16x32xbf16> to vector<1x32xbf16>
    %623 = tpu.concatenate %621, %622 in 0 : vector<1x32xbf16>, vector<1x32xbf16> -> vector<2x32xbf16>
    %cst_133 = arith.constant dense<0.000000e+00> : vector<2x32xf32>
    %624 = tpu.matmul %619, %611, %cst_133 {dimension_numbers = #tpu.dot_dimension_numbers<[1], [0], [0], [1], [0, 0, 1, 1], [], []>} : vector<2x32xbf16>, vector<32x32xbf16>, vector<2x32xf32> -> vector<2x32xf32>
    %625 = arith.extf %623 : vector<2x32xbf16> to vector<2x32xf32>
    %626 = arith.addf %625, %624 : vector<2x32xf32>
    %627 = vector.extract_strided_slice %616 {offsets = [0, 0], sizes = [1, 32], strides = [1, 1]} : vector<16x32xbf16> to vector<1x32xbf16>
    %628 = vector.extract_strided_slice %616 {offsets = [8, 0], sizes = [1, 32], strides = [1, 1]} : vector<16x32xbf16> to vector<1x32xbf16>
    %629 = tpu.concatenate %627, %628 in 0 : vector<1x32xbf16>, vector<1x32xbf16> -> vector<2x32xbf16>
    %cst_134 = arith.constant dense<0.000000e+00> : vector<2x32xf32>
    %630 = tpu.matmul %619, %612, %cst_134 {dimension_numbers = #tpu.dot_dimension_numbers<[1], [0], [0], [1], [0, 0, 1, 1], [], []>} : vector<2x32xbf16>, vector<32x32xbf16>, vector<2x32xf32> -> vector<2x32xf32>
    %631 = arith.extf %629 : vector<2x32xbf16> to vector<2x32xf32>
    %632 = arith.addf %631, %630 : vector<2x32xf32>
    %633 = vector.extract_strided_slice %617 {offsets = [0, 0], sizes = [1, 32], strides = [1, 1]} : vector<16x32xbf16> to vector<1x32xbf16>
    %634 = vector.extract_strided_slice %617 {offsets = [8, 0], sizes = [1, 32], strides = [1, 1]} : vector<16x32xbf16> to vector<1x32xbf16>
    %635 = tpu.concatenate %633, %634 in 0 : vector<1x32xbf16>, vector<1x32xbf16> -> vector<2x32xbf16>
    %cst_135 = arith.constant dense<0.000000e+00> : vector<2x32xf32>
    %636 = tpu.matmul %619, %613, %cst_135 {dimension_numbers = #tpu.dot_dimension_numbers<[1], [0], [0], [1], [0, 0, 1, 1], [], []>} : vector<2x32xbf16>, vector<32x32xbf16>, vector<2x32xf32> -> vector<2x32xf32>
    %637 = arith.extf %635 : vector<2x32xbf16> to vector<2x32xf32>
    %638 = arith.addf %637, %636 : vector<2x32xf32>
    %639 = vector.extract_strided_slice %618 {offsets = [0, 0], sizes = [1, 32], strides = [1, 1]} : vector<16x32xbf16> to vector<1x32xbf16>
    %640 = vector.extract_strided_slice %618 {offsets = [8, 0], sizes = [1, 32], strides = [1, 1]} : vector<16x32xbf16> to vector<1x32xbf16>
    %641 = tpu.concatenate %639, %640 in 0 : vector<1x32xbf16>, vector<1x32xbf16> -> vector<2x32xbf16>
    %cst_136 = arith.constant dense<0.000000e+00> : vector<2x32xf32>
    %642 = tpu.matmul %619, %614, %cst_136 {dimension_numbers = #tpu.dot_dimension_numbers<[1], [0], [0], [1], [0, 0, 1, 1], [], []>} : vector<2x32xbf16>, vector<32x32xbf16>, vector<2x32xf32> -> vector<2x32xf32>
    %643 = arith.extf %641 : vector<2x32xbf16> to vector<2x32xf32>
    %644 = arith.addf %643, %642 : vector<2x32xf32>
    %645 = arith.negf %626 : vector<2x32xf32>
    %646 = math.exp %645 : vector<2x32xf32>
    %cst_137 = arith.constant 1.000000e+00 : f32
    %647 = vector.broadcast %cst_137 : f32 to vector<2x32xf32>
    %648 = arith.addf %647, %646 : vector<2x32xf32>
    %649 = arith.divf %647, %648 : vector<2x32xf32>
    %650 = arith.negf %632 : vector<2x32xf32>
    %651 = math.exp %650 : vector<2x32xf32>
    %cst_138 = arith.constant 1.000000e+00 : f32
    %652 = vector.broadcast %cst_138 : f32 to vector<2x32xf32>
    %653 = arith.addf %652, %651 : vector<2x32xf32>
    %654 = arith.divf %652, %653 : vector<2x32xf32>
    %655 = math.tanh %638 : vector<2x32xf32>
    %656 = arith.negf %644 : vector<2x32xf32>
    %657 = math.exp %656 : vector<2x32xf32>
    %cst_139 = arith.constant 1.000000e+00 : f32
    %658 = vector.broadcast %cst_139 : f32 to vector<2x32xf32>
    %659 = arith.addf %658, %657 : vector<2x32xf32>
    %660 = arith.divf %658, %659 : vector<2x32xf32>
    %661 = arith.mulf %654, %620 : vector<2x32xf32>
    %662 = arith.mulf %649, %655 : vector<2x32xf32>
    %663 = arith.addf %661, %662 : vector<2x32xf32>
    %664 = math.tanh %663 : vector<2x32xf32>
    %665 = arith.mulf %660, %664 : vector<2x32xf32>
    %666 = arith.truncf %665 : vector<2x32xf32> to vector<2x32xbf16>
    %667 = vector.extract_strided_slice %615 {offsets = [1, 0], sizes = [1, 32], strides = [1, 1]} : vector<16x32xbf16> to vector<1x32xbf16>
    %668 = vector.extract_strided_slice %615 {offsets = [9, 0], sizes = [1, 32], strides = [1, 1]} : vector<16x32xbf16> to vector<1x32xbf16>
    %669 = tpu.concatenate %667, %668 in 0 : vector<1x32xbf16>, vector<1x32xbf16> -> vector<2x32xbf16>
    %cst_140 = arith.constant dense<0.000000e+00> : vector<2x32xf32>
    %670 = tpu.matmul %666, %611, %cst_140 {dimension_numbers = #tpu.dot_dimension_numbers<[1], [0], [0], [1], [0, 0, 1, 1], [], []>} : vector<2x32xbf16>, vector<32x32xbf16>, vector<2x32xf32> -> vector<2x32xf32>
    %671 = arith.extf %669 : vector<2x32xbf16> to vector<2x32xf32>
    %672 = arith.addf %671, %670 : vector<2x32xf32>
    %673 = vector.extract_strided_slice %616 {offsets = [1, 0], sizes = [1, 32], strides = [1, 1]} : vector<16x32xbf16> to vector<1x32xbf16>
    %674 = vector.extract_strided_slice %616 {offsets = [9, 0], sizes = [1, 32], strides = [1, 1]} : vector<16x32xbf16> to vector<1x32xbf16>
    %675 = tpu.concatenate %673, %674 in 0 : vector<1x32xbf16>, vector<1x32xbf16> -> vector<2x32xbf16>
    %cst_141 = arith.constant dense<0.000000e+00> : vector<2x32xf32>
    %676 = tpu.matmul %666, %612, %cst_141 {dimension_numbers = #tpu.dot_dimension_numbers<[1], [0], [0], [1], [0, 0, 1, 1], [], []>} : vector<2x32xbf16>, vector<32x32xbf16>, vector<2x32xf32> -> vector<2x32xf32>
    %677 = arith.extf %675 : vector<2x32xbf16> to vector<2x32xf32>
    %678 = arith.addf %677, %676 : vector<2x32xf32>
    %679 = vector.extract_strided_slice %617 {offsets = [1, 0], sizes = [1, 32], strides = [1, 1]} : vector<16x32xbf16> to vector<1x32xbf16>
    %680 = vector.extract_strided_slice %617 {offsets = [9, 0], sizes = [1, 32], strides = [1, 1]} : vector<16x32xbf16> to vector<1x32xbf16>
    %681 = tpu.concatenate %679, %680 in 0 : vector<1x32xbf16>, vector<1x32xbf16> -> vector<2x32xbf16>
    %cst_142 = arith.constant dense<0.000000e+00> : vector<2x32xf32>
    %682 = tpu.matmul %666, %613, %cst_142 {dimension_numbers = #tpu.dot_dimension_numbers<[1], [0], [0], [1], [0, 0, 1, 1], [], []>} : vector<2x32xbf16>, vector<32x32xbf16>, vector<2x32xf32> -> vector<2x32xf32>
    %683 = arith.extf %681 : vector<2x32xbf16> to vector<2x32xf32>
    %684 = arith.addf %683, %682 : vector<2x32xf32>
    %685 = vector.extract_strided_slice %618 {offsets = [1, 0], sizes = [1, 32], strides = [1, 1]} : vector<16x32xbf16> to vector<1x32xbf16>
    %686 = vector.extract_strided_slice %618 {offsets = [9, 0], sizes = [1, 32], strides = [1, 1]} : vector<16x32xbf16> to vector<1x32xbf16>
    %687 = tpu.concatenate %685, %686 in 0 : vector<1x32xbf16>, vector<1x32xbf16> -> vector<2x32xbf16>
    %cst_143 = arith.constant dense<0.000000e+00> : vector<2x32xf32>
    %688 = tpu.matmul %666, %614, %cst_143 {dimension_numbers = #tpu.dot_dimension_numbers<[1], [0], [0], [1], [0, 0, 1, 1], [], []>} : vector<2x32xbf16>, vector<32x32xbf16>, vector<2x32xf32> -> vector<2x32xf32>
    %689 = arith.extf %687 : vector<2x32xbf16> to vector<2x32xf32>
    %690 = arith.addf %689, %688 : vector<2x32xf32>
    %691 = arith.negf %672 : vector<2x32xf32>
    %692 = math.exp %691 : vector<2x32xf32>
    %cst_144 = arith.constant 1.000000e+00 : f32
    %693 = vector.broadcast %cst_144 : f32 to vector<2x32xf32>
    %694 = arith.addf %693, %692 : vector<2x32xf32>
    %695 = arith.divf %693, %694 : vector<2x32xf32>
    %696 = arith.negf %678 : vector<2x32xf32>
    %697 = math.exp %696 : vector<2x32xf32>
    %cst_145 = arith.constant 1.000000e+00 : f32
    %698 = vector.broadcast %cst_145 : f32 to vector<2x32xf32>
    %699 = arith.addf %698, %697 : vector<2x32xf32>
    %700 = arith.divf %698, %699 : vector<2x32xf32>
    %701 = math.tanh %684 : vector<2x32xf32>
    %702 = arith.negf %690 : vector<2x32xf32>
    %703 = math.exp %702 : vector<2x32xf32>
    %cst_146 = arith.constant 1.000000e+00 : f32
    %704 = vector.broadcast %cst_146 : f32 to vector<2x32xf32>
    %705 = arith.addf %704, %703 : vector<2x32xf32>
    %706 = arith.divf %704, %705 : vector<2x32xf32>
    %707 = arith.mulf %700, %663 : vector<2x32xf32>
    %708 = arith.mulf %695, %701 : vector<2x32xf32>
    %709 = arith.addf %707, %708 : vector<2x32xf32>
    %710 = math.tanh %709 : vector<2x32xf32>
    %711 = arith.mulf %706, %710 : vector<2x32xf32>
    %712 = arith.truncf %711 : vector<2x32xf32> to vector<2x32xbf16>
    %713 = vector.extract_strided_slice %615 {offsets = [2, 0], sizes = [1, 32], strides = [1, 1]} : vector<16x32xbf16> to vector<1x32xbf16>
    %714 = vector.extract_strided_slice %615 {offsets = [10, 0], sizes = [1, 32], strides = [1, 1]} : vector<16x32xbf16> to vector<1x32xbf16>
    %715 = tpu.concatenate %713, %714 in 0 : vector<1x32xbf16>, vector<1x32xbf16> -> vector<2x32xbf16>
    %cst_147 = arith.constant dense<0.000000e+00> : vector<2x32xf32>
    %716 = tpu.matmul %712, %611, %cst_147 {dimension_numbers = #tpu.dot_dimension_numbers<[1], [0], [0], [1], [0, 0, 1, 1], [], []>} : vector<2x32xbf16>, vector<32x32xbf16>, vector<2x32xf32> -> vector<2x32xf32>
    %717 = arith.extf %715 : vector<2x32xbf16> to vector<2x32xf32>
    %718 = arith.addf %717, %716 : vector<2x32xf32>
    %719 = vector.extract_strided_slice %616 {offsets = [2, 0], sizes = [1, 32], strides = [1, 1]} : vector<16x32xbf16> to vector<1x32xbf16>
    %720 = vector.extract_strided_slice %616 {offsets = [10, 0], sizes = [1, 32], strides = [1, 1]} : vector<16x32xbf16> to vector<1x32xbf16>
    %721 = tpu.concatenate %719, %720 in 0 : vector<1x32xbf16>, vector<1x32xbf16> -> vector<2x32xbf16>
    %cst_148 = arith.constant dense<0.000000e+00> : vector<2x32xf32>
    %722 = tpu.matmul %712, %612, %cst_148 {dimension_numbers = #tpu.dot_dimension_numbers<[1], [0], [0], [1], [0, 0, 1, 1], [], []>} : vector<2x32xbf16>, vector<32x32xbf16>, vector<2x32xf32> -> vector<2x32xf32>
    %723 = arith.extf %721 : vector<2x32xbf16> to vector<2x32xf32>
    %724 = arith.addf %723, %722 : vector<2x32xf32>
    %725 = vector.extract_strided_slice %617 {offsets = [2, 0], sizes = [1, 32], strides = [1, 1]} : vector<16x32xbf16> to vector<1x32xbf16>
    %726 = vector.extract_strided_slice %617 {offsets = [10, 0], sizes = [1, 32], strides = [1, 1]} : vector<16x32xbf16> to vector<1x32xbf16>
    %727 = tpu.concatenate %725, %726 in 0 : vector<1x32xbf16>, vector<1x32xbf16> -> vector<2x32xbf16>
    %cst_149 = arith.constant dense<0.000000e+00> : vector<2x32xf32>
    %728 = tpu.matmul %712, %613, %cst_149 {dimension_numbers = #tpu.dot_dimension_numbers<[1], [0], [0], [1], [0, 0, 1, 1], [], []>} : vector<2x32xbf16>, vector<32x32xbf16>, vector<2x32xf32> -> vector<2x32xf32>
    %729 = arith.extf %727 : vector<2x32xbf16> to vector<2x32xf32>
    %730 = arith.addf %729, %728 : vector<2x32xf32>
    %731 = vector.extract_strided_slice %618 {offsets = [2, 0], sizes = [1, 32], strides = [1, 1]} : vector<16x32xbf16> to vector<1x32xbf16>
    %732 = vector.extract_strided_slice %618 {offsets = [10, 0], sizes = [1, 32], strides = [1, 1]} : vector<16x32xbf16> to vector<1x32xbf16>
    %733 = tpu.concatenate %731, %732 in 0 : vector<1x32xbf16>, vector<1x32xbf16> -> vector<2x32xbf16>
    %cst_150 = arith.constant dense<0.000000e+00> : vector<2x32xf32>
    %734 = tpu.matmul %712, %614, %cst_150 {dimension_numbers = #tpu.dot_dimension_numbers<[1], [0], [0], [1], [0, 0, 1, 1], [], []>} : vector<2x32xbf16>, vector<32x32xbf16>, vector<2x32xf32> -> vector<2x32xf32>
    %735 = arith.extf %733 : vector<2x32xbf16> to vector<2x32xf32>
    %736 = arith.addf %735, %734 : vector<2x32xf32>
    %737 = arith.negf %718 : vector<2x32xf32>
    %738 = math.exp %737 : vector<2x32xf32>
    %cst_151 = arith.constant 1.000000e+00 : f32
    %739 = vector.broadcast %cst_151 : f32 to vector<2x32xf32>
    %740 = arith.addf %739, %738 : vector<2x32xf32>
    %741 = arith.divf %739, %740 : vector<2x32xf32>
    %742 = arith.negf %724 : vector<2x32xf32>
    %743 = math.exp %742 : vector<2x32xf32>
    %cst_152 = arith.constant 1.000000e+00 : f32
    %744 = vector.broadcast %cst_152 : f32 to vector<2x32xf32>
    %745 = arith.addf %744, %743 : vector<2x32xf32>
    %746 = arith.divf %744, %745 : vector<2x32xf32>
    %747 = math.tanh %730 : vector<2x32xf32>
    %748 = arith.negf %736 : vector<2x32xf32>
    %749 = math.exp %748 : vector<2x32xf32>
    %cst_153 = arith.constant 1.000000e+00 : f32
    %750 = vector.broadcast %cst_153 : f32 to vector<2x32xf32>
    %751 = arith.addf %750, %749 : vector<2x32xf32>
    %752 = arith.divf %750, %751 : vector<2x32xf32>
    %753 = arith.mulf %746, %709 : vector<2x32xf32>
    %754 = arith.mulf %741, %747 : vector<2x32xf32>
    %755 = arith.addf %753, %754 : vector<2x32xf32>
    %756 = math.tanh %755 : vector<2x32xf32>
    %757 = arith.mulf %752, %756 : vector<2x32xf32>
    %758 = arith.truncf %757 : vector<2x32xf32> to vector<2x32xbf16>
    %759 = vector.extract_strided_slice %615 {offsets = [3, 0], sizes = [1, 32], strides = [1, 1]} : vector<16x32xbf16> to vector<1x32xbf16>
    %760 = vector.extract_strided_slice %615 {offsets = [11, 0], sizes = [1, 32], strides = [1, 1]} : vector<16x32xbf16> to vector<1x32xbf16>
    %761 = tpu.concatenate %759, %760 in 0 : vector<1x32xbf16>, vector<1x32xbf16> -> vector<2x32xbf16>
    %cst_154 = arith.constant dense<0.000000e+00> : vector<2x32xf32>
    %762 = tpu.matmul %758, %611, %cst_154 {dimension_numbers = #tpu.dot_dimension_numbers<[1], [0], [0], [1], [0, 0, 1, 1], [], []>} : vector<2x32xbf16>, vector<32x32xbf16>, vector<2x32xf32> -> vector<2x32xf32>
    %763 = arith.extf %761 : vector<2x32xbf16> to vector<2x32xf32>
    %764 = arith.addf %763, %762 : vector<2x32xf32>
    %765 = vector.extract_strided_slice %616 {offsets = [3, 0], sizes = [1, 32], strides = [1, 1]} : vector<16x32xbf16> to vector<1x32xbf16>
    %766 = vector.extract_strided_slice %616 {offsets = [11, 0], sizes = [1, 32], strides = [1, 1]} : vector<16x32xbf16> to vector<1x32xbf16>
    %767 = tpu.concatenate %765, %766 in 0 : vector<1x32xbf16>, vector<1x32xbf16> -> vector<2x32xbf16>
    %cst_155 = arith.constant dense<0.000000e+00> : vector<2x32xf32>
    %768 = tpu.matmul %758, %612, %cst_155 {dimension_numbers = #tpu.dot_dimension_numbers<[1], [0], [0], [1], [0, 0, 1, 1], [], []>} : vector<2x32xbf16>, vector<32x32xbf16>, vector<2x32xf32> -> vector<2x32xf32>
    %769 = arith.extf %767 : vector<2x32xbf16> to vector<2x32xf32>
    %770 = arith.addf %769, %768 : vector<2x32xf32>
    %771 = vector.extract_strided_slice %617 {offsets = [3, 0], sizes = [1, 32], strides = [1, 1]} : vector<16x32xbf16> to vector<1x32xbf16>
    %772 = vector.extract_strided_slice %617 {offsets = [11, 0], sizes = [1, 32], strides = [1, 1]} : vector<16x32xbf16> to vector<1x32xbf16>
    %773 = tpu.concatenate %771, %772 in 0 : vector<1x32xbf16>, vector<1x32xbf16> -> vector<2x32xbf16>
    %cst_156 = arith.constant dense<0.000000e+00> : vector<2x32xf32>
    %774 = tpu.matmul %758, %613, %cst_156 {dimension_numbers = #tpu.dot_dimension_numbers<[1], [0], [0], [1], [0, 0, 1, 1], [], []>} : vector<2x32xbf16>, vector<32x32xbf16>, vector<2x32xf32> -> vector<2x32xf32>
    %775 = arith.extf %773 : vector<2x32xbf16> to vector<2x32xf32>
    %776 = arith.addf %775, %774 : vector<2x32xf32>
    %777 = vector.extract_strided_slice %618 {offsets = [3, 0], sizes = [1, 32], strides = [1, 1]} : vector<16x32xbf16> to vector<1x32xbf16>
    %778 = vector.extract_strided_slice %618 {offsets = [11, 0], sizes = [1, 32], strides = [1, 1]} : vector<16x32xbf16> to vector<1x32xbf16>
    %779 = tpu.concatenate %777, %778 in 0 : vector<1x32xbf16>, vector<1x32xbf16> -> vector<2x32xbf16>
    %cst_157 = arith.constant dense<0.000000e+00> : vector<2x32xf32>
    %780 = tpu.matmul %758, %614, %cst_157 {dimension_numbers = #tpu.dot_dimension_numbers<[1], [0], [0], [1], [0, 0, 1, 1], [], []>} : vector<2x32xbf16>, vector<32x32xbf16>, vector<2x32xf32> -> vector<2x32xf32>
    %781 = arith.extf %779 : vector<2x32xbf16> to vector<2x32xf32>
    %782 = arith.addf %781, %780 : vector<2x32xf32>
    %783 = arith.negf %764 : vector<2x32xf32>
    %784 = math.exp %783 : vector<2x32xf32>
    %cst_158 = arith.constant 1.000000e+00 : f32
    %785 = vector.broadcast %cst_158 : f32 to vector<2x32xf32>
    %786 = arith.addf %785, %784 : vector<2x32xf32>
    %787 = arith.divf %785, %786 : vector<2x32xf32>
    %788 = arith.negf %770 : vector<2x32xf32>
    %789 = math.exp %788 : vector<2x32xf32>
    %cst_159 = arith.constant 1.000000e+00 : f32
    %790 = vector.broadcast %cst_159 : f32 to vector<2x32xf32>
    %791 = arith.addf %790, %789 : vector<2x32xf32>
    %792 = arith.divf %790, %791 : vector<2x32xf32>
    %793 = math.tanh %776 : vector<2x32xf32>
    %794 = arith.negf %782 : vector<2x32xf32>
    %795 = math.exp %794 : vector<2x32xf32>
    %cst_160 = arith.constant 1.000000e+00 : f32
    %796 = vector.broadcast %cst_160 : f32 to vector<2x32xf32>
    %797 = arith.addf %796, %795 : vector<2x32xf32>
    %798 = arith.divf %796, %797 : vector<2x32xf32>
    %799 = arith.mulf %792, %755 : vector<2x32xf32>
    %800 = arith.mulf %787, %793 : vector<2x32xf32>
    %801 = arith.addf %799, %800 : vector<2x32xf32>
    %802 = math.tanh %801 : vector<2x32xf32>
    %803 = arith.mulf %798, %802 : vector<2x32xf32>
    %804 = arith.truncf %803 : vector<2x32xf32> to vector<2x32xbf16>
    %805 = vector.extract_strided_slice %615 {offsets = [4, 0], sizes = [1, 32], strides = [1, 1]} : vector<16x32xbf16> to vector<1x32xbf16>
    %806 = vector.extract_strided_slice %615 {offsets = [12, 0], sizes = [1, 32], strides = [1, 1]} : vector<16x32xbf16> to vector<1x32xbf16>
    %807 = tpu.concatenate %805, %806 in 0 : vector<1x32xbf16>, vector<1x32xbf16> -> vector<2x32xbf16>
    %cst_161 = arith.constant dense<0.000000e+00> : vector<2x32xf32>
    %808 = tpu.matmul %804, %611, %cst_161 {dimension_numbers = #tpu.dot_dimension_numbers<[1], [0], [0], [1], [0, 0, 1, 1], [], []>} : vector<2x32xbf16>, vector<32x32xbf16>, vector<2x32xf32> -> vector<2x32xf32>
    %809 = arith.extf %807 : vector<2x32xbf16> to vector<2x32xf32>
    %810 = arith.addf %809, %808 : vector<2x32xf32>
    %811 = vector.extract_strided_slice %616 {offsets = [4, 0], sizes = [1, 32], strides = [1, 1]} : vector<16x32xbf16> to vector<1x32xbf16>
    %812 = vector.extract_strided_slice %616 {offsets = [12, 0], sizes = [1, 32], strides = [1, 1]} : vector<16x32xbf16> to vector<1x32xbf16>
    %813 = tpu.concatenate %811, %812 in 0 : vector<1x32xbf16>, vector<1x32xbf16> -> vector<2x32xbf16>
    %cst_162 = arith.constant dense<0.000000e+00> : vector<2x32xf32>
    %814 = tpu.matmul %804, %612, %cst_162 {dimension_numbers = #tpu.dot_dimension_numbers<[1], [0], [0], [1], [0, 0, 1, 1], [], []>} : vector<2x32xbf16>, vector<32x32xbf16>, vector<2x32xf32> -> vector<2x32xf32>
    %815 = arith.extf %813 : vector<2x32xbf16> to vector<2x32xf32>
    %816 = arith.addf %815, %814 : vector<2x32xf32>
    %817 = vector.extract_strided_slice %617 {offsets = [4, 0], sizes = [1, 32], strides = [1, 1]} : vector<16x32xbf16> to vector<1x32xbf16>
    %818 = vector.extract_strided_slice %617 {offsets = [12, 0], sizes = [1, 32], strides = [1, 1]} : vector<16x32xbf16> to vector<1x32xbf16>
    %819 = tpu.concatenate %817, %818 in 0 : vector<1x32xbf16>, vector<1x32xbf16> -> vector<2x32xbf16>
    %cst_163 = arith.constant dense<0.000000e+00> : vector<2x32xf32>
    %820 = tpu.matmul %804, %613, %cst_163 {dimension_numbers = #tpu.dot_dimension_numbers<[1], [0], [0], [1], [0, 0, 1, 1], [], []>} : vector<2x32xbf16>, vector<32x32xbf16>, vector<2x32xf32> -> vector<2x32xf32>
    %821 = arith.extf %819 : vector<2x32xbf16> to vector<2x32xf32>
    %822 = arith.addf %821, %820 : vector<2x32xf32>
    %823 = vector.extract_strided_slice %618 {offsets = [4, 0], sizes = [1, 32], strides = [1, 1]} : vector<16x32xbf16> to vector<1x32xbf16>
    %824 = vector.extract_strided_slice %618 {offsets = [12, 0], sizes = [1, 32], strides = [1, 1]} : vector<16x32xbf16> to vector<1x32xbf16>
    %825 = tpu.concatenate %823, %824 in 0 : vector<1x32xbf16>, vector<1x32xbf16> -> vector<2x32xbf16>
    %cst_164 = arith.constant dense<0.000000e+00> : vector<2x32xf32>
    %826 = tpu.matmul %804, %614, %cst_164 {dimension_numbers = #tpu.dot_dimension_numbers<[1], [0], [0], [1], [0, 0, 1, 1], [], []>} : vector<2x32xbf16>, vector<32x32xbf16>, vector<2x32xf32> -> vector<2x32xf32>
    %827 = arith.extf %825 : vector<2x32xbf16> to vector<2x32xf32>
    %828 = arith.addf %827, %826 : vector<2x32xf32>
    %829 = arith.negf %810 : vector<2x32xf32>
    %830 = math.exp %829 : vector<2x32xf32>
    %cst_165 = arith.constant 1.000000e+00 : f32
    %831 = vector.broadcast %cst_165 : f32 to vector<2x32xf32>
    %832 = arith.addf %831, %830 : vector<2x32xf32>
    %833 = arith.divf %831, %832 : vector<2x32xf32>
    %834 = arith.negf %816 : vector<2x32xf32>
    %835 = math.exp %834 : vector<2x32xf32>
    %cst_166 = arith.constant 1.000000e+00 : f32
    %836 = vector.broadcast %cst_166 : f32 to vector<2x32xf32>
    %837 = arith.addf %836, %835 : vector<2x32xf32>
    %838 = arith.divf %836, %837 : vector<2x32xf32>
    %839 = math.tanh %822 : vector<2x32xf32>
    %840 = arith.negf %828 : vector<2x32xf32>
    %841 = math.exp %840 : vector<2x32xf32>
    %cst_167 = arith.constant 1.000000e+00 : f32
    %842 = vector.broadcast %cst_167 : f32 to vector<2x32xf32>
    %843 = arith.addf %842, %841 : vector<2x32xf32>
    %844 = arith.divf %842, %843 : vector<2x32xf32>
    %845 = arith.mulf %838, %801 : vector<2x32xf32>
    %846 = arith.mulf %833, %839 : vector<2x32xf32>
    %847 = arith.addf %845, %846 : vector<2x32xf32>
    %848 = math.tanh %847 : vector<2x32xf32>
    %849 = arith.mulf %844, %848 : vector<2x32xf32>
    %850 = arith.truncf %849 : vector<2x32xf32> to vector<2x32xbf16>
    %851 = vector.extract_strided_slice %615 {offsets = [5, 0], sizes = [1, 32], strides = [1, 1]} : vector<16x32xbf16> to vector<1x32xbf16>
    %852 = vector.extract_strided_slice %615 {offsets = [13, 0], sizes = [1, 32], strides = [1, 1]} : vector<16x32xbf16> to vector<1x32xbf16>
    %853 = tpu.concatenate %851, %852 in 0 : vector<1x32xbf16>, vector<1x32xbf16> -> vector<2x32xbf16>
    %cst_168 = arith.constant dense<0.000000e+00> : vector<2x32xf32>
    %854 = tpu.matmul %850, %611, %cst_168 {dimension_numbers = #tpu.dot_dimension_numbers<[1], [0], [0], [1], [0, 0, 1, 1], [], []>} : vector<2x32xbf16>, vector<32x32xbf16>, vector<2x32xf32> -> vector<2x32xf32>
    %855 = arith.extf %853 : vector<2x32xbf16> to vector<2x32xf32>
    %856 = arith.addf %855, %854 : vector<2x32xf32>
    %857 = vector.extract_strided_slice %616 {offsets = [5, 0], sizes = [1, 32], strides = [1, 1]} : vector<16x32xbf16> to vector<1x32xbf16>
    %858 = vector.extract_strided_slice %616 {offsets = [13, 0], sizes = [1, 32], strides = [1, 1]} : vector<16x32xbf16> to vector<1x32xbf16>
    %859 = tpu.concatenate %857, %858 in 0 : vector<1x32xbf16>, vector<1x32xbf16> -> vector<2x32xbf16>
    %cst_169 = arith.constant dense<0.000000e+00> : vector<2x32xf32>
    %860 = tpu.matmul %850, %612, %cst_169 {dimension_numbers = #tpu.dot_dimension_numbers<[1], [0], [0], [1], [0, 0, 1, 1], [], []>} : vector<2x32xbf16>, vector<32x32xbf16>, vector<2x32xf32> -> vector<2x32xf32>
    %861 = arith.extf %859 : vector<2x32xbf16> to vector<2x32xf32>
    %862 = arith.addf %861, %860 : vector<2x32xf32>
    %863 = vector.extract_strided_slice %617 {offsets = [5, 0], sizes = [1, 32], strides = [1, 1]} : vector<16x32xbf16> to vector<1x32xbf16>
    %864 = vector.extract_strided_slice %617 {offsets = [13, 0], sizes = [1, 32], strides = [1, 1]} : vector<16x32xbf16> to vector<1x32xbf16>
    %865 = tpu.concatenate %863, %864 in 0 : vector<1x32xbf16>, vector<1x32xbf16> -> vector<2x32xbf16>
    %cst_170 = arith.constant dense<0.000000e+00> : vector<2x32xf32>
    %866 = tpu.matmul %850, %613, %cst_170 {dimension_numbers = #tpu.dot_dimension_numbers<[1], [0], [0], [1], [0, 0, 1, 1], [], []>} : vector<2x32xbf16>, vector<32x32xbf16>, vector<2x32xf32> -> vector<2x32xf32>
    %867 = arith.extf %865 : vector<2x32xbf16> to vector<2x32xf32>
    %868 = arith.addf %867, %866 : vector<2x32xf32>
    %869 = vector.extract_strided_slice %618 {offsets = [5, 0], sizes = [1, 32], strides = [1, 1]} : vector<16x32xbf16> to vector<1x32xbf16>
    %870 = vector.extract_strided_slice %618 {offsets = [13, 0], sizes = [1, 32], strides = [1, 1]} : vector<16x32xbf16> to vector<1x32xbf16>
    %871 = tpu.concatenate %869, %870 in 0 : vector<1x32xbf16>, vector<1x32xbf16> -> vector<2x32xbf16>
    %cst_171 = arith.constant dense<0.000000e+00> : vector<2x32xf32>
    %872 = tpu.matmul %850, %614, %cst_171 {dimension_numbers = #tpu.dot_dimension_numbers<[1], [0], [0], [1], [0, 0, 1, 1], [], []>} : vector<2x32xbf16>, vector<32x32xbf16>, vector<2x32xf32> -> vector<2x32xf32>
    %873 = arith.extf %871 : vector<2x32xbf16> to vector<2x32xf32>
    %874 = arith.addf %873, %872 : vector<2x32xf32>
    %875 = arith.negf %856 : vector<2x32xf32>
    %876 = math.exp %875 : vector<2x32xf32>
    %cst_172 = arith.constant 1.000000e+00 : f32
    %877 = vector.broadcast %cst_172 : f32 to vector<2x32xf32>
    %878 = arith.addf %877, %876 : vector<2x32xf32>
    %879 = arith.divf %877, %878 : vector<2x32xf32>
    %880 = arith.negf %862 : vector<2x32xf32>
    %881 = math.exp %880 : vector<2x32xf32>
    %cst_173 = arith.constant 1.000000e+00 : f32
    %882 = vector.broadcast %cst_173 : f32 to vector<2x32xf32>
    %883 = arith.addf %882, %881 : vector<2x32xf32>
    %884 = arith.divf %882, %883 : vector<2x32xf32>
    %885 = math.tanh %868 : vector<2x32xf32>
    %886 = arith.negf %874 : vector<2x32xf32>
    %887 = math.exp %886 : vector<2x32xf32>
    %cst_174 = arith.constant 1.000000e+00 : f32
    %888 = vector.broadcast %cst_174 : f32 to vector<2x32xf32>
    %889 = arith.addf %888, %887 : vector<2x32xf32>
    %890 = arith.divf %888, %889 : vector<2x32xf32>
    %891 = arith.mulf %884, %847 : vector<2x32xf32>
    %892 = arith.mulf %879, %885 : vector<2x32xf32>
    %893 = arith.addf %891, %892 : vector<2x32xf32>
    %894 = math.tanh %893 : vector<2x32xf32>
    %895 = arith.mulf %890, %894 : vector<2x32xf32>
    %896 = arith.truncf %895 : vector<2x32xf32> to vector<2x32xbf16>
    %897 = vector.extract_strided_slice %615 {offsets = [6, 0], sizes = [1, 32], strides = [1, 1]} : vector<16x32xbf16> to vector<1x32xbf16>
    %898 = vector.extract_strided_slice %615 {offsets = [14, 0], sizes = [1, 32], strides = [1, 1]} : vector<16x32xbf16> to vector<1x32xbf16>
    %899 = tpu.concatenate %897, %898 in 0 : vector<1x32xbf16>, vector<1x32xbf16> -> vector<2x32xbf16>
    %cst_175 = arith.constant dense<0.000000e+00> : vector<2x32xf32>
    %900 = tpu.matmul %896, %611, %cst_175 {dimension_numbers = #tpu.dot_dimension_numbers<[1], [0], [0], [1], [0, 0, 1, 1], [], []>} : vector<2x32xbf16>, vector<32x32xbf16>, vector<2x32xf32> -> vector<2x32xf32>
    %901 = arith.extf %899 : vector<2x32xbf16> to vector<2x32xf32>
    %902 = arith.addf %901, %900 : vector<2x32xf32>
    %903 = vector.extract_strided_slice %616 {offsets = [6, 0], sizes = [1, 32], strides = [1, 1]} : vector<16x32xbf16> to vector<1x32xbf16>
    %904 = vector.extract_strided_slice %616 {offsets = [14, 0], sizes = [1, 32], strides = [1, 1]} : vector<16x32xbf16> to vector<1x32xbf16>
    %905 = tpu.concatenate %903, %904 in 0 : vector<1x32xbf16>, vector<1x32xbf16> -> vector<2x32xbf16>
    %cst_176 = arith.constant dense<0.000000e+00> : vector<2x32xf32>
    %906 = tpu.matmul %896, %612, %cst_176 {dimension_numbers = #tpu.dot_dimension_numbers<[1], [0], [0], [1], [0, 0, 1, 1], [], []>} : vector<2x32xbf16>, vector<32x32xbf16>, vector<2x32xf32> -> vector<2x32xf32>
    %907 = arith.extf %905 : vector<2x32xbf16> to vector<2x32xf32>
    %908 = arith.addf %907, %906 : vector<2x32xf32>
    %909 = vector.extract_strided_slice %617 {offsets = [6, 0], sizes = [1, 32], strides = [1, 1]} : vector<16x32xbf16> to vector<1x32xbf16>
    %910 = vector.extract_strided_slice %617 {offsets = [14, 0], sizes = [1, 32], strides = [1, 1]} : vector<16x32xbf16> to vector<1x32xbf16>
    %911 = tpu.concatenate %909, %910 in 0 : vector<1x32xbf16>, vector<1x32xbf16> -> vector<2x32xbf16>
    %cst_177 = arith.constant dense<0.000000e+00> : vector<2x32xf32>
    %912 = tpu.matmul %896, %613, %cst_177 {dimension_numbers = #tpu.dot_dimension_numbers<[1], [0], [0], [1], [0, 0, 1, 1], [], []>} : vector<2x32xbf16>, vector<32x32xbf16>, vector<2x32xf32> -> vector<2x32xf32>
    %913 = arith.extf %911 : vector<2x32xbf16> to vector<2x32xf32>
    %914 = arith.addf %913, %912 : vector<2x32xf32>
    %915 = vector.extract_strided_slice %618 {offsets = [6, 0], sizes = [1, 32], strides = [1, 1]} : vector<16x32xbf16> to vector<1x32xbf16>
    %916 = vector.extract_strided_slice %618 {offsets = [14, 0], sizes = [1, 32], strides = [1, 1]} : vector<16x32xbf16> to vector<1x32xbf16>
    %917 = tpu.concatenate %915, %916 in 0 : vector<1x32xbf16>, vector<1x32xbf16> -> vector<2x32xbf16>
    %cst_178 = arith.constant dense<0.000000e+00> : vector<2x32xf32>
    %918 = tpu.matmul %896, %614, %cst_178 {dimension_numbers = #tpu.dot_dimension_numbers<[1], [0], [0], [1], [0, 0, 1, 1], [], []>} : vector<2x32xbf16>, vector<32x32xbf16>, vector<2x32xf32> -> vector<2x32xf32>
    %919 = arith.extf %917 : vector<2x32xbf16> to vector<2x32xf32>
    %920 = arith.addf %919, %918 : vector<2x32xf32>
    %921 = arith.negf %902 : vector<2x32xf32>
    %922 = math.exp %921 : vector<2x32xf32>
    %cst_179 = arith.constant 1.000000e+00 : f32
    %923 = vector.broadcast %cst_179 : f32 to vector<2x32xf32>
    %924 = arith.addf %923, %922 : vector<2x32xf32>
    %925 = arith.divf %923, %924 : vector<2x32xf32>
    %926 = arith.negf %908 : vector<2x32xf32>
    %927 = math.exp %926 : vector<2x32xf32>
    %cst_180 = arith.constant 1.000000e+00 : f32
    %928 = vector.broadcast %cst_180 : f32 to vector<2x32xf32>
    %929 = arith.addf %928, %927 : vector<2x32xf32>
    %930 = arith.divf %928, %929 : vector<2x32xf32>
    %931 = math.tanh %914 : vector<2x32xf32>
    %932 = arith.negf %920 : vector<2x32xf32>
    %933 = math.exp %932 : vector<2x32xf32>
    %cst_181 = arith.constant 1.000000e+00 : f32
    %934 = vector.broadcast %cst_181 : f32 to vector<2x32xf32>
    %935 = arith.addf %934, %933 : vector<2x32xf32>
    %936 = arith.divf %934, %935 : vector<2x32xf32>
    %937 = arith.mulf %930, %893 : vector<2x32xf32>
    %938 = arith.mulf %925, %931 : vector<2x32xf32>
    %939 = arith.addf %937, %938 : vector<2x32xf32>
    %940 = math.tanh %939 : vector<2x32xf32>
    %941 = arith.mulf %936, %940 : vector<2x32xf32>
    %942 = arith.truncf %941 : vector<2x32xf32> to vector<2x32xbf16>
    %943 = vector.extract_strided_slice %615 {offsets = [7, 0], sizes = [1, 32], strides = [1, 1]} : vector<16x32xbf16> to vector<1x32xbf16>
    %944 = vector.extract_strided_slice %615 {offsets = [15, 0], sizes = [1, 32], strides = [1, 1]} : vector<16x32xbf16> to vector<1x32xbf16>
    %945 = tpu.concatenate %943, %944 in 0 : vector<1x32xbf16>, vector<1x32xbf16> -> vector<2x32xbf16>
    %cst_182 = arith.constant dense<0.000000e+00> : vector<2x32xf32>
    %946 = tpu.matmul %942, %611, %cst_182 {dimension_numbers = #tpu.dot_dimension_numbers<[1], [0], [0], [1], [0, 0, 1, 1], [], []>} : vector<2x32xbf16>, vector<32x32xbf16>, vector<2x32xf32> -> vector<2x32xf32>
    %947 = arith.extf %945 : vector<2x32xbf16> to vector<2x32xf32>
    %948 = arith.addf %947, %946 : vector<2x32xf32>
    %949 = vector.extract_strided_slice %616 {offsets = [7, 0], sizes = [1, 32], strides = [1, 1]} : vector<16x32xbf16> to vector<1x32xbf16>
    %950 = vector.extract_strided_slice %616 {offsets = [15, 0], sizes = [1, 32], strides = [1, 1]} : vector<16x32xbf16> to vector<1x32xbf16>
    %951 = tpu.concatenate %949, %950 in 0 : vector<1x32xbf16>, vector<1x32xbf16> -> vector<2x32xbf16>
    %cst_183 = arith.constant dense<0.000000e+00> : vector<2x32xf32>
    %952 = tpu.matmul %942, %612, %cst_183 {dimension_numbers = #tpu.dot_dimension_numbers<[1], [0], [0], [1], [0, 0, 1, 1], [], []>} : vector<2x32xbf16>, vector<32x32xbf16>, vector<2x32xf32> -> vector<2x32xf32>
    %953 = arith.extf %951 : vector<2x32xbf16> to vector<2x32xf32>
    %954 = arith.addf %953, %952 : vector<2x32xf32>
    %955 = vector.extract_strided_slice %617 {offsets = [7, 0], sizes = [1, 32], strides = [1, 1]} : vector<16x32xbf16> to vector<1x32xbf16>
    %956 = vector.extract_strided_slice %617 {offsets = [15, 0], sizes = [1, 32], strides = [1, 1]} : vector<16x32xbf16> to vector<1x32xbf16>
    %957 = tpu.concatenate %955, %956 in 0 : vector<1x32xbf16>, vector<1x32xbf16> -> vector<2x32xbf16>
    %cst_184 = arith.constant dense<0.000000e+00> : vector<2x32xf32>
    %958 = tpu.matmul %942, %613, %cst_184 {dimension_numbers = #tpu.dot_dimension_numbers<[1], [0], [0], [1], [0, 0, 1, 1], [], []>} : vector<2x32xbf16>, vector<32x32xbf16>, vector<2x32xf32> -> vector<2x32xf32>
    %959 = arith.extf %957 : vector<2x32xbf16> to vector<2x32xf32>
    %960 = arith.addf %959, %958 : vector<2x32xf32>
    %961 = vector.extract_strided_slice %618 {offsets = [7, 0], sizes = [1, 32], strides = [1, 1]} : vector<16x32xbf16> to vector<1x32xbf16>
    %962 = vector.extract_strided_slice %618 {offsets = [15, 0], sizes = [1, 32], strides = [1, 1]} : vector<16x32xbf16> to vector<1x32xbf16>
    %963 = tpu.concatenate %961, %962 in 0 : vector<1x32xbf16>, vector<1x32xbf16> -> vector<2x32xbf16>
    %cst_185 = arith.constant dense<0.000000e+00> : vector<2x32xf32>
    %964 = tpu.matmul %942, %614, %cst_185 {dimension_numbers = #tpu.dot_dimension_numbers<[1], [0], [0], [1], [0, 0, 1, 1], [], []>} : vector<2x32xbf16>, vector<32x32xbf16>, vector<2x32xf32> -> vector<2x32xf32>
    %965 = arith.extf %963 : vector<2x32xbf16> to vector<2x32xf32>
    %966 = arith.addf %965, %964 : vector<2x32xf32>
    %967 = arith.negf %948 : vector<2x32xf32>
    %968 = math.exp %967 : vector<2x32xf32>
    %cst_186 = arith.constant 1.000000e+00 : f32
    %969 = vector.broadcast %cst_186 : f32 to vector<2x32xf32>
    %970 = arith.addf %969, %968 : vector<2x32xf32>
    %971 = arith.divf %969, %970 : vector<2x32xf32>
    %972 = arith.negf %954 : vector<2x32xf32>
    %973 = math.exp %972 : vector<2x32xf32>
    %cst_187 = arith.constant 1.000000e+00 : f32
    %974 = vector.broadcast %cst_187 : f32 to vector<2x32xf32>
    %975 = arith.addf %974, %973 : vector<2x32xf32>
    %976 = arith.divf %974, %975 : vector<2x32xf32>
    %977 = math.tanh %960 : vector<2x32xf32>
    %978 = arith.negf %966 : vector<2x32xf32>
    %979 = math.exp %978 : vector<2x32xf32>
    %cst_188 = arith.constant 1.000000e+00 : f32
    %980 = vector.broadcast %cst_188 : f32 to vector<2x32xf32>
    %981 = arith.addf %980, %979 : vector<2x32xf32>
    %982 = arith.divf %980, %981 : vector<2x32xf32>
    %983 = arith.mulf %976, %939 : vector<2x32xf32>
    %984 = arith.mulf %971, %977 : vector<2x32xf32>
    %985 = arith.addf %983, %984 : vector<2x32xf32>
    %986 = math.tanh %985 : vector<2x32xf32>
    %987 = arith.mulf %982, %986 : vector<2x32xf32>
    %988 = arith.truncf %987 : vector<2x32xf32> to vector<2x32xbf16>
    %989 = vector.extract_strided_slice %666 {offsets = [0, 0], sizes = [1, 32], strides = [1, 1]} : vector<2x32xbf16> to vector<1x32xbf16>
    %990 = vector.extract_strided_slice %712 {offsets = [0, 0], sizes = [1, 32], strides = [1, 1]} : vector<2x32xbf16> to vector<1x32xbf16>
    %991 = vector.extract_strided_slice %758 {offsets = [0, 0], sizes = [1, 32], strides = [1, 1]} : vector<2x32xbf16> to vector<1x32xbf16>
    %992 = vector.extract_strided_slice %804 {offsets = [0, 0], sizes = [1, 32], strides = [1, 1]} : vector<2x32xbf16> to vector<1x32xbf16>
    %993 = vector.extract_strided_slice %850 {offsets = [0, 0], sizes = [1, 32], strides = [1, 1]} : vector<2x32xbf16> to vector<1x32xbf16>
    %994 = vector.extract_strided_slice %896 {offsets = [0, 0], sizes = [1, 32], strides = [1, 1]} : vector<2x32xbf16> to vector<1x32xbf16>
    %995 = vector.extract_strided_slice %942 {offsets = [0, 0], sizes = [1, 32], strides = [1, 1]} : vector<2x32xbf16> to vector<1x32xbf16>
    %996 = vector.extract_strided_slice %988 {offsets = [0, 0], sizes = [1, 32], strides = [1, 1]} : vector<2x32xbf16> to vector<1x32xbf16>
    %997 = tpu.concatenate %989, %990, %991, %992, %993, %994, %995, %996 in 0 : vector<1x32xbf16>, vector<1x32xbf16>, vector<1x32xbf16>, vector<1x32xbf16>, vector<1x32xbf16>, vector<1x32xbf16>, vector<1x32xbf16>, vector<1x32xbf16> -> vector<8x32xbf16>
    %998 = vector.extract_strided_slice %666 {offsets = [1, 0], sizes = [1, 32], strides = [1, 1]} : vector<2x32xbf16> to vector<1x32xbf16>
    %999 = vector.extract_strided_slice %712 {offsets = [1, 0], sizes = [1, 32], strides = [1, 1]} : vector<2x32xbf16> to vector<1x32xbf16>
    %1000 = vector.extract_strided_slice %758 {offsets = [1, 0], sizes = [1, 32], strides = [1, 1]} : vector<2x32xbf16> to vector<1x32xbf16>
    %1001 = vector.extract_strided_slice %804 {offsets = [1, 0], sizes = [1, 32], strides = [1, 1]} : vector<2x32xbf16> to vector<1x32xbf16>
    %1002 = vector.extract_strided_slice %850 {offsets = [1, 0], sizes = [1, 32], strides = [1, 1]} : vector<2x32xbf16> to vector<1x32xbf16>
    %1003 = vector.extract_strided_slice %896 {offsets = [1, 0], sizes = [1, 32], strides = [1, 1]} : vector<2x32xbf16> to vector<1x32xbf16>
    %1004 = vector.extract_strided_slice %942 {offsets = [1, 0], sizes = [1, 32], strides = [1, 1]} : vector<2x32xbf16> to vector<1x32xbf16>
    %1005 = vector.extract_strided_slice %988 {offsets = [1, 0], sizes = [1, 32], strides = [1, 1]} : vector<2x32xbf16> to vector<1x32xbf16>
    %1006 = tpu.concatenate %998, %999, %1000, %1001, %1002, %1003, %1004, %1005 in 0 : vector<1x32xbf16>, vector<1x32xbf16>, vector<1x32xbf16>, vector<1x32xbf16>, vector<1x32xbf16>, vector<1x32xbf16>, vector<1x32xbf16>, vector<1x32xbf16> -> vector<8x32xbf16>
    %1007 = tpu.concatenate %997, %1006 in 0 : vector<8x32xbf16>, vector<8x32xbf16> -> vector<16x32xbf16>
    %1008 = arith.extf %1007 : vector<16x32xbf16> to vector<16x32xf32>
    %cst_189 = arith.constant dense<0.000000e+00> : vector<16xf32>
    %1009 = vector.multi_reduction <add>, %1008, %cst_189 [1] : vector<16x32xf32> to vector<16xf32>
    %1010 = vector.shape_cast %1009 : vector<16xf32> to vector<16x1xf32>
    %cst_190 = arith.constant 3.200000e+01 : f32
    %1011 = vector.broadcast %cst_190 : f32 to vector<16x1xf32>
    %1012 = arith.divf %1010, %1011 : vector<16x1xf32>
    %1013 = vector.broadcast %1012 : vector<16x1xf32> to vector<16x32xf32>
    %1014 = arith.subf %1008, %1013 : vector<16x32xf32>
    %1015 = arith.mulf %1014, %1014 : vector<16x32xf32>
    %cst_191 = arith.constant dense<0.000000e+00> : vector<16xf32>
    %1016 = vector.multi_reduction <add>, %1015, %cst_191 [1] : vector<16x32xf32> to vector<16xf32>
    %1017 = vector.shape_cast %1016 : vector<16xf32> to vector<16x1xf32>
    %cst_192 = arith.constant 3.200000e+01 : f32
    %1018 = vector.broadcast %cst_192 : f32 to vector<16x1xf32>
    %1019 = arith.divf %1017, %1018 : vector<16x1xf32>
    %1020 = vector.broadcast %1012 : vector<16x1xf32> to vector<16x32xf32>
    %1021 = arith.subf %1008, %1020 : vector<16x32xf32>
    %cst_193 = arith.constant 9.99999974E-6 : f32
    %1022 = vector.broadcast %cst_193 : f32 to vector<16x1xf32>
    %1023 = arith.addf %1019, %1022 : vector<16x1xf32>
    %1024 = math.rsqrt %1023 : vector<16x1xf32>
    %1025 = vector.broadcast %1024 : vector<16x1xf32> to vector<16x32xf32>
    %1026 = arith.mulf %1021, %1025 : vector<16x32xf32>
    %c0_194 = arith.constant 0 : index
    %c0_195 = arith.constant 0 : index
    %1027 = vector.load %arg14[%c0_194, %c0_195] : memref<1x32xf32, #tpu.memory_space<vmem>>, vector<1x32xf32>
    %1028 = vector.broadcast %1027 : vector<1x32xf32> to vector<16x32xf32>
    %1029 = arith.mulf %1026, %1028 : vector<16x32xf32>
    %c0_196 = arith.constant 0 : index
    %c0_197 = arith.constant 0 : index
    %1030 = vector.load %arg15[%c0_196, %c0_197] : memref<1x32xf32, #tpu.memory_space<vmem>>, vector<1x32xf32>
    %1031 = vector.broadcast %1030 : vector<1x32xf32> to vector<16x32xf32>
    %1032 = arith.addf %1029, %1031 : vector<16x32xf32>
    %c0_198 = arith.constant 0 : index
    %c0_199 = arith.constant 0 : index
    %1033 = vector.load %arg16[%c0_198, %c0_199] : memref<1x32xf32, #tpu.memory_space<vmem>>, vector<1x32xf32>
    %1034 = vector.broadcast %1033 : vector<1x32xf32> to vector<16x32xf32>
    %1035 = arith.mulf %1032, %1034 : vector<16x32xf32>
    %cst_200 = arith.constant dense<0.000000e+00> : vector<16xf32>
    %1036 = vector.multi_reduction <add>, %1035, %cst_200 [1] : vector<16x32xf32> to vector<16xf32>
    %1037 = vector.shape_cast %1036 : vector<16xf32> to vector<16x1xf32>
    %c0_201 = arith.constant 0 : index
    %c0_202 = arith.constant 0 : index
    %1038 = vector.load %arg17[%c0_201, %c0_202] : memref<1x1xf32, #tpu.memory_space<vmem>>, vector<1x1xf32>
    %1039 = vector.broadcast %1038 : vector<1x1xf32> to vector<16x1xf32>
    %1040 = arith.addf %1037, %1039 : vector<16x1xf32>
    %c0_203 = arith.constant 0 : index
    %c0_204 = arith.constant 0 : index
    %1041 = vector.load %arg18[%c0_203, %c0_204] : memref<16x1xf32, #tpu.memory_space<vmem>>, vector<16x1xf32>
    tpu.vector_store %arg18[%c0_203, %c0_204], %1040 {strides = array<i32>} : memref<16x1xf32, #tpu.memory_space<vmem>>, vector<16x1xf32>,
    return
  }
  func.func @transform_0(%arg0: i32) -> (i32, i32) {
    %c0_i32 = arith.constant 0 : i32
    %c0_i32_0 = arith.constant 0 : i32
    return %arg0, %c0_i32 : i32, i32
  }
  func.func @transform_1(%arg0: i32) -> (i32, i32) {
    %c0_i32 = arith.constant 0 : i32
    %c0_i32_0 = arith.constant 0 : i32
    %c0_i32_1 = arith.constant 0 : i32
    return %c0_i32, %c0_i32_0 : i32, i32
  }
  func.func @transform_2(%arg0: i32) -> (i32, i32) {
    %c0_i32 = arith.constant 0 : i32
    %c0_i32_0 = arith.constant 0 : i32
    %c0_i32_1 = arith.constant 0 : i32
    return %c0_i32, %c0_i32_0 : i32, i32
  }
  func.func @transform_3(%arg0: i32) -> (i32, i32) {
    %c0_i32 = arith.constant 0 : i32
    %c0_i32_0 = arith.constant 0 : i32
    %c0_i32_1 = arith.constant 0 : i32
    return %c0_i32, %c0_i32_0 : i32, i32
  }
  func.func @transform_4(%arg0: i32) -> (i32, i32) {
    %c0_i32 = arith.constant 0 : i32
    %c0_i32_0 = arith.constant 0 : i32
    %c0_i32_1 = arith.constant 0 : i32
    return %c0_i32, %c0_i32_0 : i32, i32
  }
  func.func @transform_5(%arg0: i32) -> (i32, i32) {
    %c0_i32 = arith.constant 0 : i32
    %c0_i32_0 = arith.constant 0 : i32
    %c0_i32_1 = arith.constant 0 : i32
    return %c0_i32, %c0_i32_0 : i32, i32
  }
  func.func @transform_6(%arg0: i32) -> (i32, i32) {
    %c0_i32 = arith.constant 0 : i32
    %c0_i32_0 = arith.constant 0 : i32
    %c0_i32_1 = arith.constant 0 : i32
    return %c0_i32, %c0_i32_0 : i32, i32
  }
  func.func @transform_7(%arg0: i32) -> (i32, i32) {
    %c0_i32 = arith.constant 0 : i32
    %c0_i32_0 = arith.constant 0 : i32
    %c0_i32_1 = arith.constant 0 : i32
    return %c0_i32, %c0_i32_0 : i32, i32
  }
  func.func @transform_8(%arg0: i32) -> (i32, i32) {
    %c0_i32 = arith.constant 0 : i32
    %c0_i32_0 = arith.constant 0 : i32
    %c0_i32_1 = arith.constant 0 : i32
    return %c0_i32, %c0_i32_0 : i32, i32
  }
  func.func @transform_9(%arg0: i32) -> (i32, i32) {
    %c0_i32 = arith.constant 0 : i32
    %c0_i32_0 = arith.constant 0 : i32
    %c0_i32_1 = arith.constant 0 : i32
    return %c0_i32, %c0_i32_0 : i32, i32
  }
  func.func @transform_10(%arg0: i32) -> (i32, i32) {
    %c0_i32 = arith.constant 0 : i32
    %c0_i32_0 = arith.constant 0 : i32
    %c0_i32_1 = arith.constant 0 : i32
    return %c0_i32, %c0_i32_0 : i32, i32
  }
  func.func @transform_11(%arg0: i32) -> (i32, i32) {
    %c0_i32 = arith.constant 0 : i32
    %c0_i32_0 = arith.constant 0 : i32
    %c0_i32_1 = arith.constant 0 : i32
    return %c0_i32, %c0_i32_0 : i32, i32
  }
  func.func @transform_12(%arg0: i32) -> (i32, i32) {
    %c0_i32 = arith.constant 0 : i32
    %c0_i32_0 = arith.constant 0 : i32
    %c0_i32_1 = arith.constant 0 : i32
    return %c0_i32, %c0_i32_0 : i32, i32
  }
  func.func @transform_13(%arg0: i32) -> (i32, i32) {
    %c0_i32 = arith.constant 0 : i32
    %c0_i32_0 = arith.constant 0 : i32
    %c0_i32_1 = arith.constant 0 : i32
    return %c0_i32, %c0_i32_0 : i32, i32
  }
  func.func @transform_14(%arg0: i32) -> (i32, i32) {
    %c0_i32 = arith.constant 0 : i32
    %c0_i32_0 = arith.constant 0 : i32
    %c0_i32_1 = arith.constant 0 : i32
    return %c0_i32, %c0_i32_0 : i32, i32
  }
  func.func @transform_15(%arg0: i32) -> (i32, i32) {
    %c0_i32 = arith.constant 0 : i32
    %c0_i32_0 = arith.constant 0 : i32
    %c0_i32_1 = arith.constant 0 : i32
    return %c0_i32, %c0_i32_0 : i32, i32
  }
  func.func @transform_16(%arg0: i32) -> (i32, i32) {
    %c0_i32 = arith.constant 0 : i32
    %c0_i32_0 = arith.constant 0 : i32
    %c0_i32_1 = arith.constant 0 : i32
    return %c0_i32, %c0_i32_0 : i32, i32
  }
  func.func @transform_17(%arg0: i32) -> (i32, i32) {
    %c0_i32 = arith.constant 0 : i32
    %c0_i32_0 = arith.constant 0 : i32
    return %arg0, %c0_i32 : i32, i32
  }
}

</mosaic_0001>

<llo_original>
// kernel: tpu_custom_call.1
$region0: #{tpu_custom_call.1}
  #allocation0 [shape = 'u32[]', space=smem, size = 0x4, offset = 0x4, fixed_abs, tag = 'smem constant byte address 0x4 - core index']
  #allocation1 [shape = 'u32[144,128]{1,0:T(1,128)}', space=vmem, size = 0x12000, scoped, tag = 'internal scratch']
  #allocation2 [shape = 'f32[1,1]{1,0:T(1,128)S(1)}', space=vmem, size = 0x200, scoped, tag = 'scoped memory for tpu_custom_call.1']
  %s0 = inlined_call_operand.vmem [shape: bf16[16,8], index: 0, kind: input, shape index: {}]
  %s1 = inlined_call_operand.hbm [shape: bf16[8,128], index: 1, kind: input, shape index: {}]
  %s2 = inlined_call_operand.vmem [shape: bf16[32,128], index: 2, kind: input, shape index: {}]
  %s3 = inlined_call_operand.hbm [shape: f32[1,128], index: 3, kind: input, shape index: {}]
  %s4 = inlined_call_operand.hbm [shape: bf16[32,96], index: 4, kind: input, shape index: {}]
  %s5 = inlined_call_operand.hbm [shape: f32[1,96], index: 5, kind: input, shape index: {}]
  %s6 = inlined_call_operand.hbm [shape: bf16[32,32], index: 6, kind: input, shape index: {}]
  %s7 = inlined_call_operand.hbm [shape: f32[1,32], index: 7, kind: input, shape index: {}]
  %s8 = inlined_call_operand.hbm [shape: f32[1,32], index: 8, kind: input, shape index: {}]
  %s9 = inlined_call_operand.hbm [shape: f32[1,32], index: 9, kind: input, shape index: {}]
  %s10 = inlined_call_operand.vmem [shape: bf16[32,128], index: 10, kind: input, shape index: {}]
  %s11 = inlined_call_operand.hbm [shape: bf16[32,128], index: 11, kind: input, shape index: {}]
  %s12 = inlined_call_operand.vmem [shape: f32[1,128], index: 12, kind: input, shape index: {}]
  %s13 = inlined_call_operand.vmem [shape: f32[1,32], index: 13, kind: input, shape index: {}]
  %s14 = inlined_call_operand.vmem [shape: f32[1,32], index: 14, kind: input, shape index: {}]
  %s15 = inlined_call_operand.vmem [shape: f32[1,32], index: 15, kind: input, shape index: {}]
  %s16 = inlined_call_operand.<no memory space> [shape: f32[1,1], index: 16, kind: input, shape index: {}]
  %s17 = inlined_call_operand.vmem [shape: f32[16,1], index: 17, kind: output, shape index: {}]
  %s18 = sld [smem:[#allocation0]]
  $region114: #{tpu_custom_call.1} parent=0
    _
  %s20 = ssub.s32 1, %s18
  %s21 = scalar_select 0, %s20, %s18
  %v22 = vstv %s16
  %23 = vst [vmem:[#allocation2] sm:$0x1] %v22
  $region1: #{tpu_custom_call.1} parent=0
    #allocation3 [shape = 'u8[2048]{0}', space=vmem, size = 0x800, scoped, tag = 'input window, operand 1, single buffered']
    #allocation4 [shape = 's32[1]{0}', space=sflag, size = 0x4, scoped, tag = 'scoped memory for tpu_custom_call.1']
    #allocation5 [shape = 'u8[512]{0}', space=vmem, size = 0x400, scoped, tag = 'input window, operand 3, single buffered']
    #allocation6 [shape = 's32[1]{0}', space=sflag, size = 0x4, scoped, tag = 'scoped memory for tpu_custom_call.1']
    #allocation7 [shape = 'u8[8192]{0}', space=vmem, size = 0x2000, scoped, tag = 'input window, operand 4, single buffered']
    #allocation8 [shape = 'u8[512]{0}', space=vmem, size = 0x400, scoped, tag = 'input window, operand 5, single buffered']
    #allocation9 [shape = 's32[1]{0}', space=sflag, size = 0x4, scoped, tag = 'scoped memory for tpu_custom_call.1']
    #allocation10 [shape = 'u8[8192]{0}', space=vmem, size = 0x2000, scoped, tag = 'input window, operand 6, single buffered']
    #allocation11 [shape = 'u8[512]{0}', space=vmem, size = 0x400, scoped, tag = 'input window, operand 7, single buffered']
    #allocation12 [shape = 's32[1]{0}', space=sflag, size = 0x4, scoped, tag = 'scoped memory for tpu_custom_call.1']
    #allocation13 [shape = 'u8[512]{0}', space=vmem, size = 0x400, scoped, tag = 'input window, operand 8, single buffered']
    #allocation14 [shape = 'u8[512]{0}', space=vmem, size = 0x400, scoped, tag = 'input window, operand 9, single buffered']
    #allocation15 [shape = 's32[1]{0}', space=sflag, size = 0x4, scoped, tag = 'scoped memory for tpu_custom_call.1']
    #allocation16 [shape = 'u8[8192]{0}', space=vmem, size = 0x2000, scoped, tag = 'input window, operand 11, single buffered']
    %24 = vsyncpa [#allocation4], 0
    %25 = vsyncpa [#allocation6], 0
    %26 = vsyncpa [#allocation9], 0
    %27 = vsyncpa [#allocation12], 0
    %28 = vsyncpa [#allocation15], 0
    // Predicated region
    $region2: #{tpu_custom_call.1} parent=1 // pred_check
      _
    $region3: #{tpu_custom_call.1} parent=1 // pred_check_branch
      %30 = sbr.rel (0) target = $region5
    $region4: #{tpu_custom_call.1} parent=1 // pred_region
      _
    $region5: #{tpu_custom_call.1} parent=1 // pred_fallthru
      _
    // Predicated region
    $region6: #{tpu_custom_call.1} parent=1 // pred_check
      _
    $region7: #{tpu_custom_call.1} parent=1 // pred_check_branch
      %32 = sbr.rel (0) target = $region9
    $region8: #{tpu_custom_call.1} parent=1 // pred_region
      %s34 = ssub.s32 64, 64
      %35 = vsyncadd [#allocation4], %s34
      %s37 = sshll.u32 [#allocation3], 4
      %s38 = int_to_ptr.vmem [resolvable:$true] %s37
      %40 = dma.hbm_to_vmem [thread:$0]  %s1, 64, %s38, [#allocation4]
    $region9: #{tpu_custom_call.1} parent=1 // pred_fallthru
      _
    // Predicated region
    $region10: #{tpu_custom_call.1} parent=1 // pred_check
      _
    $region11: #{tpu_custom_call.1} parent=1 // pred_check_branch
      %42 = sbr.rel (0) target = $region13
    $region12: #{tpu_custom_call.1} parent=1 // pred_region
      _
    $region13: #{tpu_custom_call.1} parent=1 // pred_fallthru
      _
    // Predicated region
    $region14: #{tpu_custom_call.1} parent=1 // pred_check
      _
    $region15: #{tpu_custom_call.1} parent=1 // pred_check_branch
      %44 = sbr.rel (0) target = $region17
    $region16: #{tpu_custom_call.1} parent=1 // pred_region
      %s46 = ssub.s32 16, 16
      %47 = vsyncadd [#allocation6], %s46
      %s49 = sshll.u32 [#allocation5], 4
      %s50 = int_to_ptr.vmem [resolvable:$true] %s49
      %52 = dma.hbm_to_vmem [thread:$0]  %s3, 16, %s50, [#allocation6]
    $region17: #{tpu_custom_call.1} parent=1 // pred_fallthru
      _
    // Predicated region
    $region18: #{tpu_custom_call.1} parent=1 // pred_check
      _
    $region19: #{tpu_custom_call.1} parent=1 // pred_check_branch
      %54 = sbr.rel (0) target = $region21
    $region20: #{tpu_custom_call.1} parent=1 // pred_region
      %s56 = ssub.s32 256, 256
      %57 = vsyncadd [#allocation6], %s56
      %s58 = sshll.u32 [#allocation7], 4
      %s59 = int_to_ptr.vmem [resolvable:$true] %s58
      %64 = dma.hbm_to_vmem [thread:$0]  %s4, 256, %s59, [#allocation6], 64, 64, 4
    $region21: #{tpu_custom_call.1} parent=1 // pred_fallthru
      _
    // Predicated region
    $region22: #{tpu_custom_call.1} parent=1 // pred_check
      _
    $region23: #{tpu_custom_call.1} parent=1 // pred_check_branch
      %66 = sbr.rel (0) target = $region25
    $region24: #{tpu_custom_call.1} parent=1 // pred_region
      %s68 = ssub.s32 16, 16
      %69 = vsyncadd [#allocation9], %s68
      %s71 = sshll.u32 [#allocation8], 4
      %s72 = int_to_ptr.vmem [resolvable:$true] %s71
      %74 = dma.hbm_to_vmem [thread:$0]  %s5, 16, %s72, [#allocation9]
    $region25: #{tpu_custom_call.1} parent=1 // pred_fallthru
      _
    // Predicated region
    $region26: #{tpu_custom_call.1} parent=1 // pred_check
      _
    $region27: #{tpu_custom_call.1} parent=1 // pred_check_branch
      %76 = sbr.rel (0) target = $region29
    $region28: #{tpu_custom_call.1} parent=1 // pred_region
      %s78 = ssub.s32 256, 256
      %79 = vsyncadd [#allocation9], %s78
      %s80 = sshll.u32 [#allocation10], 4
      %s81 = int_to_ptr.vmem [resolvable:$true] %s80
      %86 = dma.hbm_to_vmem [thread:$0]  %s6, 256, %s81, [#allocation9], 64, 64, 4
    $region29: #{tpu_custom_call.1} parent=1 // pred_fallthru
      _
    // Predicated region
    $region30: #{tpu_custom_call.1} parent=1 // pred_check
      _
    $region31: #{tpu_custom_call.1} parent=1 // pred_check_branch
      %88 = sbr.rel (0) target = $region33
    $region32: #{tpu_custom_call.1} parent=1 // pred_region
      %s90 = ssub.s32 16, 16
      %91 = vsyncadd [#allocation12], %s90
      %s93 = sshll.u32 [#allocation11], 4
      %s94 = int_to_ptr.vmem [resolvable:$true] %s93
      %96 = dma.hbm_to_vmem [thread:$0]  %s7, 16, %s94, [#allocation12]
    $region33: #{tpu_custom_call.1} parent=1 // pred_fallthru
      _
    // Predicated region
    $region34: #{tpu_custom_call.1} parent=1 // pred_check
      _
    $region35: #{tpu_custom_call.1} parent=1 // pred_check_branch
      %98 = sbr.rel (0) target = $region37
    $region36: #{tpu_custom_call.1} parent=1 // pred_region
      %s100 = ssub.s32 16, 16
      %101 = vsyncadd [#allocation12], %s100
      %s103 = sshll.u32 [#allocation13], 4
      %s104 = int_to_ptr.vmem [resolvable:$true] %s103
      %106 = dma.hbm_to_vmem [thread:$0]  %s8, 16, %s104, [#allocation12]
    $region37: #{tpu_custom_call.1} parent=1 // pred_fallthru
      _
    // Predicated region
    $region38: #{tpu_custom_call.1} parent=1 // pred_check
      _
    $region39: #{tpu_custom_call.1} parent=1 // pred_check_branch
      %108 = sbr.rel (0) target = $region41
    $region40: #{tpu_custom_call.1} parent=1 // pred_region
      %s110 = ssub.s32 16, 16
      %111 = vsyncadd [#allocation15], %s110
      %s113 = sshll.u32 [#allocation14], 4
      %s114 = int_to_ptr.vmem [resolvable:$true] %s113
      %116 = dma.hbm_to_vmem [thread:$0]  %s9, 16, %s114, [#allocation15]
    $region41: #{tpu_custom_call.1} parent=1 // pred_fallthru
      _
    // Predicated region
    $region42: #{tpu_custom_call.1} parent=1 // pred_check
      _
    $region43: #{tpu_custom_call.1} parent=1 // pred_check_branch
      %118 = sbr.rel (0) target = $region45
    $region44: #{tpu_custom_call.1} parent=1 // pred_region
      _
    $region45: #{tpu_custom_call.1} parent=1 // pred_fallthru
      _
    // Predicated region
    $region46: #{tpu_custom_call.1} parent=1 // pred_check
      _
    $region47: #{tpu_custom_call.1} parent=1 // pred_check_branch
      %120 = sbr.rel (0) target = $region49
    $region48: #{tpu_custom_call.1} parent=1 // pred_region
      %s122 = ssub.s32 256, 256
      %123 = vsyncadd [#allocation15], %s122
      %s124 = sshll.u32 [#allocation16], 4
      %s125 = int_to_ptr.vmem [resolvable:$true] %s124
      %130 = dma.hbm_to_vmem [thread:$0]  %s11, 256, %s125, [#allocation15], 64, 64, 4
    $region49: #{tpu_custom_call.1} parent=1 // pred_fallthru
      _
    // Predicated region
    $region50: #{tpu_custom_call.1} parent=1 // pred_check
      _
    $region51: #{tpu_custom_call.1} parent=1 // pred_check_branch
      %132 = sbr.rel (0) target = $region53
    $region52: #{tpu_custom_call.1} parent=1 // pred_region
      _
    $region53: #{tpu_custom_call.1} parent=1 // pred_fallthru
      _
    // Predicated region
    $region54: #{tpu_custom_call.1} parent=1 // pred_check
      _
    $region55: #{tpu_custom_call.1} parent=1 // pred_check_branch
      %134 = sbr.rel (0) target = $region57
    $region56: #{tpu_custom_call.1} parent=1 // pred_region
      _
    $region57: #{tpu_custom_call.1} parent=1 // pred_fallthru
      _
    // Predicated region
    $region58: #{tpu_custom_call.1} parent=1 // pred_check
      _
    $region59: #{tpu_custom_call.1} parent=1 // pred_check_branch
      %136 = sbr.rel (0) target = $region61
    $region60: #{tpu_custom_call.1} parent=1 // pred_region
      _
    $region61: #{tpu_custom_call.1} parent=1 // pred_fallthru
      _
    // Predicated region
    $region62: #{tpu_custom_call.1} parent=1 // pred_check
      _
    $region63: #{tpu_custom_call.1} parent=1 // pred_check_branch
      %138 = sbr.rel (0) target = $region65
    $region64: #{tpu_custom_call.1} parent=1 // pred_region
      _
    $region65: #{tpu_custom_call.1} parent=1 // pred_fallthru
      _
    // Predicated region
    $region66: #{tpu_custom_call.1} parent=1 // pred_check
      _
    $region67: #{tpu_custom_call.1} parent=1 // pred_check_branch
      %140 = sbr.rel (0) target = $region69
    $region68: #{tpu_custom_call.1} parent=1 // pred_region
      _
    $region69: #{tpu_custom_call.1} parent=1 // pred_fallthru
      _
    // Predicated region
    $region70: #{tpu_custom_call.1} parent=1 // pred_check
      _
    $region71: #{tpu_custom_call.1} parent=1 // pred_check_branch
      %142 = sbr.rel (0) target = $region73
    $region72: #{tpu_custom_call.1} parent=1 // pred_region
      %143 = dma.done [#allocation4], 64
    $region73: #{tpu_custom_call.1} parent=1 // pred_fallthru
      _
    // Predicated region
    $region74: #{tpu_custom_call.1} parent=1 // pred_check
      _
    $region75: #{tpu_custom_call.1} parent=1 // pred_check_branch
      %145 = sbr.rel (0) target = $region77
    $region76: #{tpu_custom_call.1} parent=1 // pred_region
      %146 = dma.done [#allocation6], 16
    $region77: #{tpu_custom_call.1} parent=1 // pred_fallthru
      _
    // Predicated region
    $region78: #{tpu_custom_call.1} parent=1 // pred_check
      _
    $region79: #{tpu_custom_call.1} parent=1 // pred_check_branch
      %148 = sbr.rel (0) target = $region81
    $region80: #{tpu_custom_call.1} parent=1 // pred_region
      %149 = dma.done [#allocation6], 256
    $region81: #{tpu_custom_call.1} parent=1 // pred_fallthru
      _
    // Predicated region
    $region82: #{tpu_custom_call.1} parent=1 // pred_check
      _
    $region83: #{tpu_custom_call.1} parent=1 // pred_check_branch
      %151 = sbr.rel (0) target = $region85
    $region84: #{tpu_custom_call.1} parent=1 // pred_region
      %152 = dma.done [#allocation9], 16
    $region85: #{tpu_custom_call.1} parent=1 // pred_fallthru
      _
    // Predicated region
    $region86: #{tpu_custom_call.1} parent=1 // pred_check
      _
    $region87: #{tpu_custom_call.1} parent=1 // pred_check_branch
      %154 = sbr.rel (0) target = $region89
    $region88: #{tpu_custom_call.1} parent=1 // pred_region
      %155 = dma.done [#allocation9], 256
    $region89: #{tpu_custom_call.1} parent=1 // pred_fallthru
      _
    // Predicated region
    $region90: #{tpu_custom_call.1} parent=1 // pred_check
      _
    $region91: #{tpu_custom_call.1} parent=1 // pred_check_branch
      %157 = sbr.rel (0) target = $region93
    $region92: #{tpu_custom_call.1} parent=1 // pred_region
      %158 = dma.done [#allocation12], 16
    $region93: #{tpu_custom_call.1} parent=1 // pred_fallthru
      _
    // Predicated region
    $region94: #{tpu_custom_call.1} parent=1 // pred_check
      _
    $region95: #{tpu_custom_call.1} parent=1 // pred_check_branch
      %160 = sbr.rel (0) target = $region97
    $region96: #{tpu_custom_call.1} parent=1 // pred_region
      %161 = dma.done [#allocation12], 16
    $region97: #{tpu_custom_call.1} parent=1 // pred_fallthru
      _
    // Predicated region
    $region98: #{tpu_custom_call.1} parent=1 // pred_check
      _
    $region99: #{tpu_custom_call.1} parent=1 // pred_check_branch
      %163 = sbr.rel (0) target = $region101
    $region100: #{tpu_custom_call.1} parent=1 // pred_region
      %164 = dma.done [#allocation15], 16
    $region101: #{tpu_custom_call.1} parent=1 // pred_fallthru
      _
    // Predicated region
    $region102: #{tpu_custom_call.1} parent=1 // pred_check
      _
    $region103: #{tpu_custom_call.1} parent=1 // pred_check_branch
      %166 = sbr.rel (0) target = $region105
    $region104: #{tpu_custom_call.1} parent=1 // pred_region
      %167 = dma.done [#allocation15], 256
    $region105: #{tpu_custom_call.1} parent=1 // pred_fallthru
      _
    %v169 = vld [vmem:[%s0] sm:$0xf]
    %v170 = vld [vmem:[%s0 + $0x4] sm:$0xf]
    %v171 = vld [vmem:[#allocation3] sm:$0xf]
    %v172 = vld [vmem:[#allocation5] sm:$0x1]
    %v174 = vlaneseq
    %v175 = vshrl.u32 %v174, 7
    %v176 = vsub.s32 0, %v175
    %v177 = vrot.slane %v172, %v176
    %v181 = vunpack.c.l.b16 %v169
    %v182 = vunpack.c.l.b16 %v170
    %v183 = vpack.c.b16 %v182, %v181
    %vm184 = vcmask 64512
    %v186 = vsel %vm184, %v183, 0
    %vm188 = vcmask 1043456
    %v190 = vsel %vm188, %v171, 0
    %192 = vmatprep.subr.bf16.mxu0 0
    %193 = vmatpush1.bf16.msra.mxu0 0
    %194 = vmatprep.subr.bf16.mxu0 0
    %195 = vmatpush1.bf16.msra.mxu0 0
    %196 = vmatprep.subr.bf16.mxu0 0
    %197 = vmatpush1.bf16.msra.mxu0 0
    %198 = vmatprep.subr.bf16.mxu0 0
    %199 = vmatpush1.bf16.msra.mxu0 0
    %200 = vmatprep.subr.bf16.mxu0 0
    %201 = vmatpush1.bf16.msra.mxu0 0
    %202 = vmatprep.subr.bf16.mxu0 0
    %203 = vmatpush1.bf16.msra.mxu0 0
    %204 = vmatprep.subr.bf16.mxu0 0
    %205 = vmatpush1.bf16.msra.mxu0 0
    %206 = vmatprep.subr.bf16.mxu0 0
    %207 = vmatpush1.bf16.msra.mxu0 %v190
    %208 = vmatprep.subr.bf16.mxu0 0
    %209 = vmatpush2.bf16.msra.mxu0 0
    %210 = vmatprep.subr.bf16.mxu0 0
    %211 = vmatpush2.bf16.msra.mxu0 0
    %212 = vmatprep.subr.bf16.mxu0 0
    %213 = vmatpush2.bf16.msra.mxu0 0
    %214 = vmatprep.subr.bf16.mxu0 0
    %215 = vmatpush2.bf16.msra.mxu0 0
    %216 = vmatprep.subr.bf16.mxu0 0
    %217 = vmatpush2.bf16.msra.mxu0 0
    %218 = vmatprep.subr.bf16.mxu0 0
    %219 = vmatpush2.bf16.msra.mxu0 0
    %220 = vmatprep.subr.bf16.mxu0 0
    %221 = vmatpush2.bf16.msra.mxu0 0
    %222 = vmatprep.subr.bf16.mxu0 0
    %223 = vmatpush2.bf16.msra.mxu0 0
    %224 = vmatprep.mubr.bf16.mxu0 0
    %225 = vmatmul.mubr.bf16.gmra.mxu0 %v186
    %v226 = vpop.f32.mrf.mxu0
    %v227 = vadd.f32 %v177, %v226
    %v228 = vpop.f32.mrf.mxu0
    %v229 = vpop.f32.mrf.mxu0
    %v230 = vadd.f32 %v177, %v229
    %v231 = vpop.f32.mrf.mxu0
    %232 = vdwg.mxu0
    %v233 = vpack.c.bf16 %v230, %v227
    %v234 = vld [vmem:[%s2] sm:$0xf]
    %v235 = vld [vmem:[%s2 + $0x4] sm:$0xf]
    %v236 = vld [vmem:[%s2 + $0x8] sm:$0xf]
    %v237 = vld [vmem:[%s2 + $0xc] sm:$0xf]
    %v239 = vshll.u32 %v233, 16
    %v241 = vrot.slane %v239, 4
    %vm243 = vcmask 1040384
    %vm244 = vsmask.f32 256
    %vm245 = vmand %vm243, %vm244
    %v246 = vsel %vm245, %v233, %v241
    %v251 = vunpack.c.l.b16 %v234
    %v252 = vunpack.c.l.b16 %v235
    %v253 = vunpack.c.l.b16 %v236
    %v254 = vunpack.c.l.b16 %v237
    %v255 = vpack.c.b16 %v252, %v251
    %v256 = vpack.c.b16 %v254, %v253
    %vm259 = vcmask 261120
    %v261 = vsel %vm259, 0, 0
    %263 = vmatprep.subr.bf16.mxu0 0
    %264 = vmatpush1.bf16.msra.mxu0 0
    %265 = vmatprep.subr.bf16.mxu0 0
    %266 = vmatpush1.bf16.msra.mxu0 0
    %267 = vmatprep.subr.bf16.mxu0 0
    %268 = vmatpush1.bf16.msra.mxu0 0
    %269 = vmatprep.subr.bf16.mxu0 0
    %270 = vmatpush1.bf16.msra.mxu0 0
    %271 = vmatprep.subr.bf16.mxu0 0
    %272 = vmatpush1.bf16.msra.mxu0 0
    %273 = vmatprep.subr.bf16.mxu0 0
    %274 = vmatpush1.bf16.msra.mxu0 0
    %275 = vmatprep.subr.bf16.mxu0 0
    %276 = vmatpush1.bf16.msra.mxu0 %v256
    %277 = vmatprep.subr.bf16.mxu0 0
    %278 = vmatpush1.bf16.msra.mxu0 %v255
    %279 = vmatprep.subr.bf16.mxu0 0
    %280 = vmatpush2.bf16.msra.mxu0 0
    %281 = vmatprep.subr.bf16.mxu0 0
    %282 = vmatpush2.bf16.msra.mxu0 0
    %283 = vmatprep.subr.bf16.mxu0 0
    %284 = vmatpush2.bf16.msra.mxu0 0
    %285 = vmatprep.subr.bf16.mxu0 0
    %286 = vmatpush2.bf16.msra.mxu0 0
    %287 = vmatprep.subr.bf16.mxu0 0
    %288 = vmatpush2.bf16.msra.mxu0 0
    %289 = vmatprep.subr.bf16.mxu0 0
    %290 = vmatpush2.bf16.msra.mxu0 0
    %291 = vmatprep.subr.bf16.mxu0 0
    %292 = vmatpush2.bf16.msra.mxu0 0
    %293 = vmatprep.subr.bf16.mxu0 0
    %294 = vmatpush2.bf16.msra.mxu0 0
    %295 = vmatprep.mubr.bf16.mxu0 0
    %296 = vmatmul.mubr.bf16.gmra.mxu0 %v261
    %v297 = vpop.f32.mrf.mxu0
    %v298 = vadd.f32 0.0, %v297
    %v299 = vpop.f32.mrf.mxu0
    %v300 = vpop.f32.mrf.mxu0
    %v301 = vpop.f32.mrf.mxu0
    %302 = vdwg.mxu0
    %v303 = vunpack.c.l.bf16 %v246
    %v304 = vadd.f32 %v303, %v298
    %305 = vrot.lane.b32.xlu0 %v255, 96
    %v306 = vpop.permute.xlu0 %305
    %307 = vrot.lane.b32.xlu0 %v256, 96
    %v308 = vpop.permute.xlu0 %307
    %311 = vmatprep.subr.bf16.mxu0 0
    %312 = vmatpush1.bf16.msra.mxu0 0
    %313 = vmatprep.subr.bf16.mxu0 0
    %314 = vmatpush1.bf16.msra.mxu0 0
    %315 = vmatprep.subr.bf16.mxu0 0
    %316 = vmatpush1.bf16.msra.mxu0 0
    %317 = vmatprep.subr.bf16.mxu0 0
    %318 = vmatpush1.bf16.msra.mxu0 0
    %319 = vmatprep.subr.bf16.mxu0 0
    %320 = vmatpush1.bf16.msra.mxu0 0
    %321 = vmatprep.subr.bf16.mxu0 0
    %322 = vmatpush1.bf16.msra.mxu0 0
    %323 = vmatprep.subr.bf16.mxu0 0
    %324 = vmatpush1.bf16.msra.mxu0 %v308
    %325 = vmatprep.subr.bf16.mxu0 0
    %326 = vmatpush1.bf16.msra.mxu0 %v306
    %327 = vmatprep.subr.bf16.mxu0 0
    %328 = vmatpush2.bf16.msra.mxu0 0
    %329 = vmatprep.subr.bf16.mxu0 0
    %330 = vmatpush2.bf16.msra.mxu0 0
    %331 = vmatprep.subr.bf16.mxu0 0
    %332 = vmatpush2.bf16.msra.mxu0 0
    %333 = vmatprep.subr.bf16.mxu0 0
    %334 = vmatpush2.bf16.msra.mxu0 0
    %335 = vmatprep.subr.bf16.mxu0 0
    %336 = vmatpush2.bf16.msra.mxu0 0
    %337 = vmatprep.subr.bf16.mxu0 0
    %338 = vmatpush2.bf16.msra.mxu0 0
    %339 = vmatprep.subr.bf16.mxu0 0
    %340 = vmatpush2.bf16.msra.mxu0 0
    %341 = vmatprep.subr.bf16.mxu0 0
    %342 = vmatpush2.bf16.msra.mxu0 0
    %343 = vmatprep.mubr.bf16.mxu0 0
    %344 = vmatmul.mubr.bf16.gmra.mxu0 %v261
    %v345 = vpop.f32.mrf.mxu0
    %v346 = vadd.f32 0.0, %v345
    %v347 = vpop.f32.mrf.mxu0
    %v348 = vpop.f32.mrf.mxu0
    %v349 = vpop.f32.mrf.mxu0
    %350 = vdwg.mxu0
    %352 = vrot.lane.b32.xlu0 %v346, 32
    %v353 = vpop.permute.xlu0 %352
    %v355 = vadd.f32 %v303, %v353
    %356 = vrot.lane.b32.xlu0 %v255, 64
    %v357 = vpop.permute.xlu0 %356
    %358 = vrot.lane.b32.xlu0 %v256, 64
    %v359 = vpop.permute.xlu0 %358
    %362 = vmatprep.subr.bf16.mxu0 0
    %363 = vmatpush1.bf16.msra.mxu0 0
    %364 = vmatprep.subr.bf16.mxu0 0
    %365 = vmatpush1.bf16.msra.mxu0 0
    %366 = vmatprep.subr.bf16.mxu0 0
    %367 = vmatpush1.bf16.msra.mxu0 0
    %368 = vmatprep.subr.bf16.mxu0 0
    %369 = vmatpush1.bf16.msra.mxu0 0
    %370 = vmatprep.subr.bf16.mxu0 0
    %371 = vmatpush1.bf16.msra.mxu0 0
    %372 = vmatprep.subr.bf16.mxu0 0
    %373 = vmatpush1.bf16.msra.mxu0 0
    %374 = vmatprep.subr.bf16.mxu0 0
    %375 = vmatpush1.bf16.msra.mxu0 %v359
    %376 = vmatprep.subr.bf16.mxu0 0
    %377 = vmatpush1.bf16.msra.mxu0 %v357
    %378 = vmatprep.subr.bf16.mxu0 0
    %379 = vmatpush2.bf16.msra.mxu0 0
    %380 = vmatprep.subr.bf16.mxu0 0
    %381 = vmatpush2.bf16.msra.mxu0 0
    %382 = vmatprep.subr.bf16.mxu0 0
    %383 = vmatpush2.bf16.msra.mxu0 0
    %384 = vmatprep.subr.bf16.mxu0 0
    %385 = vmatpush2.bf16.msra.mxu0 0
    %386 = vmatprep.subr.bf16.mxu0 0
    %387 = vmatpush2.bf16.msra.mxu0 0
    %388 = vmatprep.subr.bf16.mxu0 0
    %389 = vmatpush2.bf16.msra.mxu0 0
    %390 = vmatprep.subr.bf16.mxu0 0
    %391 = vmatpush2.bf16.msra.mxu0 0
    %392 = vmatprep.subr.bf16.mxu0 0
    %393 = vmatpush2.bf16.msra.mxu0 0
    %394 = vmatprep.mubr.bf16.mxu0 0
    %395 = vmatmul.mubr.bf16.gmra.mxu0 %v261
    %v396 = vpop.f32.mrf.mxu0
    %v397 = vadd.f32 0.0, %v396
    %v398 = vpop.f32.mrf.mxu0
    %v399 = vpop.f32.mrf.mxu0
    %v400 = vpop.f32.mrf.mxu0
    %401 = vdwg.mxu0
    %403 = vrot.lane.b32.xlu0 %v397, 64
    %v404 = vpop.permute.xlu0 %403
    %v406 = vadd.f32 %v303, %v404
    %407 = vrot.lane.b32.xlu0 %v255, 32
    %v408 = vpop.permute.xlu0 %407
    %409 = vrot.lane.b32.xlu0 %v256, 32
    %v410 = vpop.permute.xlu0 %409
    %413 = vmatprep.subr.bf16.mxu0 0
    %414 = vmatpush1.bf16.msra.mxu0 0
    %415 = vmatprep.subr.bf16.mxu0 0
    %416 = vmatpush1.bf16.msra.mxu0 0
    %417 = vmatprep.subr.bf16.mxu0 0
    %418 = vmatpush1.bf16.msra.mxu0 0
    %419 = vmatprep.subr.bf16.mxu0 0
    %420 = vmatpush1.bf16.msra.mxu0 0
    %421 = vmatprep.subr.bf16.mxu0 0
    %422 = vmatpush1.bf16.msra.mxu0 0
    %423 = vmatprep.subr.bf16.mxu0 0
    %424 = vmatpush1.bf16.msra.mxu0 0
    %425 = vmatprep.subr.bf16.mxu0 0
    %426 = vmatpush1.bf16.msra.mxu0 %v410
    %427 = vmatprep.subr.bf16.mxu0 0
    %428 = vmatpush1.bf16.msra.mxu0 %v408
    %429 = vmatprep.subr.bf16.mxu0 0
    %430 = vmatpush2.bf16.msra.mxu0 0
    %431 = vmatprep.subr.bf16.mxu0 0
    %432 = vmatpush2.bf16.msra.mxu0 0
    %433 = vmatprep.subr.bf16.mxu0 0
    %434 = vmatpush2.bf16.msra.mxu0 0
    %435 = vmatprep.subr.bf16.mxu0 0
    %436 = vmatpush2.bf16.msra.mxu0 0
    %437 = vmatprep.subr.bf16.mxu0 0
    %438 = vmatpush2.bf16.msra.mxu0 0
    %439 = vmatprep.subr.bf16.mxu0 0
    %440 = vmatpush2.bf16.msra.mxu0 0
    %441 = vmatprep.subr.bf16.mxu0 0
    %442 = vmatpush2.bf16.msra.mxu0 0
    %443 = vmatprep.subr.bf16.mxu0 0
    %444 = vmatpush2.bf16.msra.mxu0 0
    %445 = vmatprep.mubr.bf16.mxu0 0
    %446 = vmatmul.mubr.bf16.gmra.mxu0 %v261
    %v447 = vpop.f32.mrf.mxu0
    %v448 = vadd.f32 0.0, %v447
    %v449 = vpop.f32.mrf.mxu0
    %v450 = vpop.f32.mrf.mxu0
    %v451 = vpop.f32.mrf.mxu0
    %452 = vdwg.mxu0
    %454 = vrot.lane.b32.xlu0 %v448, 96
    %v455 = vpop.permute.xlu0 %454
    %v457 = vadd.f32 %v303, %v455
    %v458 = vxor.u32 %v304, 2147483648
    %v459 = vmul.f32 %v458, 1.442695
    %v460 = vpow.pop %v459
    %v461 = vadd.f32 %v460, 1.0
    %v462 = vrcp.pop %v461
    %v463 = vmul.f32 1.0, %v462
    %v464 = vxor.u32 %v355, 2147483648
    %v465 = vmul.f32 %v464, 1.442695
    %v466 = vpow.pop %v465
    %v467 = vadd.f32 %v466, 1.0
    %v468 = vrcp.pop %v467
    %v469 = vmul.f32 1.0, %v468
    %v470 = vtanh.pop %v406
    %v471 = vxor.u32 %v457, 2147483648
    %v472 = vmul.f32 %v471, 1.442695
    %v473 = vpow.pop %v472
    %v474 = vadd.f32 %v473, 1.0
    %v475 = vrcp.pop %v474
    %v476 = vmul.f32 1.0, %v475
    %v477 = vmul.f32 %v469, 0.0
    %479 = vrot.lane.b32.xlu0 %v470, 64
    %v480 = vpop.permute.xlu0 %479
    %v482 = vmul.f32 %v463, %v480
    %484 = vrot.lane.b32.xlu0 %v482, 32
    %v485 = vpop.permute.xlu0 %484
    %v487 = vadd.f32 %v477, %v485
    %v488 = vtanh.pop %v487
    %490 = vrot.lane.b32.xlu0 %v488, 64
    %v491 = vpop.permute.xlu0 %490
    %v493 = vmul.f32 %v476, %v491
    %v494 = vpack.c.bf16 %v493, %v493
    %v495 = vshrl.u32 %v233, 16
    %v499 = vrot.slane %v233, 4
    %v501 = vsel %vm245, %v495, %v499
    %503 = vrot.lane.b32.xlu0 %v494, 32
    %v504 = vpop.permute.xlu0 %503
    %v506 = vsel %vm259, %v504, 0
    %508 = vmatprep.subr.bf16.mxu0 0
    %509 = vmatpush1.bf16.msra.mxu0 0
    %510 = vmatprep.subr.bf16.mxu0 0
    %511 = vmatpush1.bf16.msra.mxu0 0
    %512 = vmatprep.subr.bf16.mxu0 0
    %513 = vmatpush1.bf16.msra.mxu0 0
    %514 = vmatprep.subr.bf16.mxu0 0
    %515 = vmatpush1.bf16.msra.mxu0 0
    %516 = vmatprep.subr.bf16.mxu0 0
    %517 = vmatpush1.bf16.msra.mxu0 0
    %518 = vmatprep.subr.bf16.mxu0 0
    %519 = vmatpush1.bf16.msra.mxu0 0
    %520 = vmatprep.subr.bf16.mxu0 0
    %521 = vmatpush1.bf16.msra.mxu0 %v256
    %522 = vmatprep.subr.bf16.mxu0 0
    %523 = vmatpush1.bf16.msra.mxu0 %v255
    %524 = vmatprep.subr.bf16.mxu0 0
    %525 = vmatpush2.bf16.msra.mxu0 0
    %526 = vmatprep.subr.bf16.mxu0 0
    %527 = vmatpush2.bf16.msra.mxu0 0
    %528 = vmatprep.subr.bf16.mxu0 0
    %529 = vmatpush2.bf16.msra.mxu0 0
    %530 = vmatprep.subr.bf16.mxu0 0
    %531 = vmatpush2.bf16.msra.mxu0 0
    %532 = vmatprep.subr.bf16.mxu0 0
    %533 = vmatpush2.bf16.msra.mxu0 0
    %534 = vmatprep.subr.bf16.mxu0 0
    %535 = vmatpush2.bf16.msra.mxu0 0
    %536 = vmatprep.subr.bf16.mxu0 0
    %537 = vmatpush2.bf16.msra.mxu0 0
    %538 = vmatprep.subr.bf16.mxu0 0
    %539 = vmatpush2.bf16.msra.mxu0 0
    %540 = vmatprep.mubr.bf16.mxu0 0
    %541 = vmatmul.mubr.bf16.gmra.mxu0 %v506
    %v542 = vpop.f32.mrf.mxu0
    %v543 = vadd.f32 0.0, %v542
    %v544 = vpop.f32.mrf.mxu0
    %v545 = vpop.f32.mrf.mxu0
    %v546 = vpop.f32.mrf.mxu0
    %547 = vdwg.mxu0
    %v548 = vunpack.c.l.bf16 %v501
    %v549 = vadd.f32 %v548, %v543
    %550 = vmatprep.subr.bf16.mxu0 0
    %551 = vmatpush1.bf16.msra.mxu0 0
    %552 = vmatprep.subr.bf16.mxu0 0
    %553 = vmatpush1.bf16.msra.mxu0 0
    %554 = vmatprep.subr.bf16.mxu0 0
    %555 = vmatpush1.bf16.msra.mxu0 0
    %556 = vmatprep.subr.bf16.mxu0 0
    %557 = vmatpush1.bf16.msra.mxu0 0
    %558 = vmatprep.subr.bf16.mxu0 0
    %559 = vmatpush1.bf16.msra.mxu0 0
    %560 = vmatprep.subr.bf16.mxu0 0
    %561 = vmatpush1.bf16.msra.mxu0 0
    %562 = vmatprep.subr.bf16.mxu0 0
    %563 = vmatpush1.bf16.msra.mxu0 %v308
    %564 = vmatprep.subr.bf16.mxu0 0
    %565 = vmatpush1.bf16.msra.mxu0 %v306
    %566 = vmatprep.subr.bf16.mxu0 0
    %567 = vmatpush2.bf16.msra.mxu0 0
    %568 = vmatprep.subr.bf16.mxu0 0
    %569 = vmatpush2.bf16.msra.mxu0 0
    %570 = vmatprep.subr.bf16.mxu0 0
    %571 = vmatpush2.bf16.msra.mxu0 0
    %572 = vmatprep.subr.bf16.mxu0 0
    %573 = vmatpush2.bf16.msra.mxu0 0
    %574 = vmatprep.subr.bf16.mxu0 0
    %575 = vmatpush2.bf16.msra.mxu0 0
    %576 = vmatprep.subr.bf16.mxu0 0
    %577 = vmatpush2.bf16.msra.mxu0 0
    %578 = vmatprep.subr.bf16.mxu0 0
    %579 = vmatpush2.bf16.msra.mxu0 0
    %580 = vmatprep.subr.bf16.mxu0 0
    %581 = vmatpush2.bf16.msra.mxu0 0
    %582 = vmatprep.mubr.bf16.mxu0 0
    %583 = vmatmul.mubr.bf16.gmra.mxu0 %v506
    %v584 = vpop.f32.mrf.mxu0
    %v585 = vadd.f32 0.0, %v584
    %v586 = vpop.f32.mrf.mxu0
    %v587 = vpop.f32.mrf.mxu0
    %v588 = vpop.f32.mrf.mxu0
    %589 = vdwg.mxu0
    %591 = vrot.lane.b32.xlu0 %v585, 32
    %v592 = vpop.permute.xlu0 %591
    %v594 = vadd.f32 %v548, %v592
    %595 = vmatprep.subr.bf16.mxu0 0
    %596 = vmatpush1.bf16.msra.mxu0 0
    %597 = vmatprep.subr.bf16.mxu0 0
    %598 = vmatpush1.bf16.msra.mxu0 0
    %599 = vmatprep.subr.bf16.mxu0 0
    %600 = vmatpush1.bf16.msra.mxu0 0
    %601 = vmatprep.subr.bf16.mxu0 0
    %602 = vmatpush1.bf16.msra.mxu0 0
    %603 = vmatprep.subr.bf16.mxu0 0
    %604 = vmatpush1.bf16.msra.mxu0 0
    %605 = vmatprep.subr.bf16.mxu0 0
    %606 = vmatpush1.bf16.msra.mxu0 0
    %607 = vmatprep.subr.bf16.mxu0 0
    %608 = vmatpush1.bf16.msra.mxu0 %v359
    %609 = vmatprep.subr.bf16.mxu0 0
    %610 = vmatpush1.bf16.msra.mxu0 %v357
    %611 = vmatprep.subr.bf16.mxu0 0
    %612 = vmatpush2.bf16.msra.mxu0 0
    %613 = vmatprep.subr.bf16.mxu0 0
    %614 = vmatpush2.bf16.msra.mxu0 0
    %615 = vmatprep.subr.bf16.mxu0 0
    %616 = vmatpush2.bf16.msra.mxu0 0
    %617 = vmatprep.subr.bf16.mxu0 0
    %618 = vmatpush2.bf16.msra.mxu0 0
    %619 = vmatprep.subr.bf16.mxu0 0
    %620 = vmatpush2.bf16.msra.mxu0 0
    %621 = vmatprep.subr.bf16.mxu0 0
    %622 = vmatpush2.bf16.msra.mxu0 0
    %623 = vmatprep.subr.bf16.mxu0 0
    %624 = vmatpush2.bf16.msra.mxu0 0
    %625 = vmatprep.subr.bf16.mxu0 0
    %626 = vmatpush2.bf16.msra.mxu0 0
    %627 = vmatprep.mubr.bf16.mxu0 0
    %628 = vmatmul.mubr.bf16.gmra.mxu0 %v506
    %v629 = vpop.f32.mrf.mxu0
    %v630 = vadd.f32 0.0, %v629
    %v631 = vpop.f32.mrf.mxu0
    %v632 = vpop.f32.mrf.mxu0
    %v633 = vpop.f32.mrf.mxu0
    %634 = vdwg.mxu0
    %636 = vrot.lane.b32.xlu0 %v630, 64
    %v637 = vpop.permute.xlu0 %636
    %v639 = vadd.f32 %v548, %v637
    %640 = vmatprep.subr.bf16.mxu0 0
    %641 = vmatpush1.bf16.msra.mxu0 0
    %642 = vmatprep.subr.bf16.mxu0 0
    %643 = vmatpush1.bf16.msra.mxu0 0
    %644 = vmatprep.subr.bf16.mxu0 0
    %645 = vmatpush1.bf16.msra.mxu0 0
    %646 = vmatprep.subr.bf16.mxu0 0
    %647 = vmatpush1.bf16.msra.mxu0 0
    %648 = vmatprep.subr.bf16.mxu0 0
    %649 = vmatpush1.bf16.msra.mxu0 0
    %650 = vmatprep.subr.bf16.mxu0 0
    %651 = vmatpush1.bf16.msra.mxu0 0
    %652 = vmatprep.subr.bf16.mxu0 0
    %653 = vmatpush1.bf16.msra.mxu0 %v410
    %654 = vmatprep.subr.bf16.mxu0 0
    %655 = vmatpush1.bf16.msra.mxu0 %v408
    %656 = vmatprep.subr.bf16.mxu0 0
    %657 = vmatpush2.bf16.msra.mxu0 0
    %658 = vmatprep.subr.bf16.mxu0 0
    %659 = vmatpush2.bf16.msra.mxu0 0
    %660 = vmatprep.subr.bf16.mxu0 0
    %661 = vmatpush2.bf16.msra.mxu0 0
    %662 = vmatprep.subr.bf16.mxu0 0
    %663 = vmatpush2.bf16.msra.mxu0 0
    %664 = vmatprep.subr.bf16.mxu0 0
    %665 = vmatpush2.bf16.msra.mxu0 0
    %666 = vmatprep.subr.bf16.mxu0 0
    %667 = vmatpush2.bf16.msra.mxu0 0
    %668 = vmatprep.subr.bf16.mxu0 0
    %669 = vmatpush2.bf16.msra.mxu0 0
    %670 = vmatprep.subr.bf16.mxu0 0
    %671 = vmatpush2.bf16.msra.mxu0 0
    %672 = vmatprep.mubr.bf16.mxu0 0
    %673 = vmatmul.mubr.bf16.gmra.mxu0 %v506
    %v674 = vpop.f32.mrf.mxu0
    %v675 = vadd.f32 0.0, %v674
    %v676 = vpop.f32.mrf.mxu0
    %v677 = vpop.f32.mrf.mxu0
    %v678 = vpop.f32.mrf.mxu0
    %679 = vdwg.mxu0
    %681 = vrot.lane.b32.xlu0 %v675, 96
    %v682 = vpop.permute.xlu0 %681
    %v684 = vadd.f32 %v548, %v682
    %v685 = vxor.u32 %v549, 2147483648
    %v686 = vmul.f32 %v685, 1.442695
    %v687 = vpow.pop %v686
    %v688 = vadd.f32 %v687, 1.0
    %v689 = vrcp.pop %v688
    %v690 = vmul.f32 1.0, %v689
    %v691 = vxor.u32 %v594, 2147483648
    %v692 = vmul.f32 %v691, 1.442695
    %v693 = vpow.pop %v692
    %v694 = vadd.f32 %v693, 1.0
    %v695 = vrcp.pop %v694
    %v696 = vmul.f32 1.0, %v695
    %v697 = vtanh.pop %v639
    %v698 = vxor.u32 %v684, 2147483648
    %v699 = vmul.f32 %v698, 1.442695
    %v700 = vpow.pop %v699
    %v701 = vadd.f32 %v700, 1.0
    %v702 = vrcp.pop %v701
    %v703 = vmul.f32 1.0, %v702
    %v704 = vmul.f32 %v696, %v487
    %706 = vrot.lane.b32.xlu0 %v697, 64
    %v707 = vpop.permute.xlu0 %706
    %v709 = vmul.f32 %v690, %v707
    %711 = vrot.lane.b32.xlu0 %v709, 32
    %v712 = vpop.permute.xlu0 %711
    %v714 = vadd.f32 %v704, %v712
    %v715 = vtanh.pop %v714
    %717 = vrot.lane.b32.xlu0 %v715, 64
    %v718 = vpop.permute.xlu0 %717
    %v720 = vmul.f32 %v703, %v718
    %v721 = vpack.c.bf16 %v720, %v720
    %v722 = vrot.slane %v233, 1
    %v724 = vrot.slane %v239, 5
    %v726 = vsel %vm245, %v722, %v724
    %728 = vrot.lane.b32.xlu0 %v721, 32
    %v729 = vpop.permute.xlu0 %728
    %v731 = vsel %vm259, %v729, 0
    %733 = vmatprep.subr.bf16.mxu0 0
    %734 = vmatpush1.bf16.msra.mxu0 0
    %735 = vmatprep.subr.bf16.mxu0 0
    %736 = vmatpush1.bf16.msra.mxu0 0
    %737 = vmatprep.subr.bf16.mxu0 0
    %738 = vmatpush1.bf16.msra.mxu0 0
    %739 = vmatprep.subr.bf16.mxu0 0
    %740 = vmatpush1.bf16.msra.mxu0 0
    %741 = vmatprep.subr.bf16.mxu0 0
    %742 = vmatpush1.bf16.msra.mxu0 0
    %743 = vmatprep.subr.bf16.mxu0 0
    %744 = vmatpush1.bf16.msra.mxu0 0
    %745 = vmatprep.subr.bf16.mxu0 0
    %746 = vmatpush1.bf16.msra.mxu0 %v256
    %747 = vmatprep.subr.bf16.mxu0 0
    %748 = vmatpush1.bf16.msra.mxu0 %v255
    %749 = vmatprep.subr.bf16.mxu0 0
    %750 = vmatpush2.bf16.msra.mxu0 0
    %751 = vmatprep.subr.bf16.mxu0 0
    %752 = vmatpush2.bf16.msra.mxu0 0
    %753 = vmatprep.subr.bf16.mxu0 0
    %754 = vmatpush2.bf16.msra.mxu0 0
    %755 = vmatprep.subr.bf16.mxu0 0
    %756 = vmatpush2.bf16.msra.mxu0 0
    %757 = vmatprep.subr.bf16.mxu0 0
    %758 = vmatpush2.bf16.msra.mxu0 0
    %759 = vmatprep.subr.bf16.mxu0 0
    %760 = vmatpush2.bf16.msra.mxu0 0
    %761 = vmatprep.subr.bf16.mxu0 0
    %762 = vmatpush2.bf16.msra.mxu0 0
    %763 = vmatprep.subr.bf16.mxu0 0
    %764 = vmatpush2.bf16.msra.mxu0 0
    %765 = vmatprep.mubr.bf16.mxu0 0
    %766 = vmatmul.mubr.bf16.gmra.mxu0 %v731
    %v767 = vpop.f32.mrf.mxu0
    %v768 = vadd.f32 0.0, %v767
    %v769 = vpop.f32.mrf.mxu0
    %v770 = vpop.f32.mrf.mxu0
    %v771 = vpop.f32.mrf.mxu0
    %772 = vdwg.mxu0
    %v773 = vunpack.c.l.bf16 %v726
    %v774 = vadd.f32 %v773, %v768
    %775 = vmatprep.subr.bf16.mxu0 0
    %776 = vmatpush1.bf16.msra.mxu0 0
    %777 = vmatprep.subr.bf16.mxu0 0
    %778 = vmatpush1.bf16.msra.mxu0 0
    %779 = vmatprep.subr.bf16.mxu0 0
    %780 = vmatpush1.bf16.msra.mxu0 0
    %781 = vmatprep.subr.bf16.mxu0 0
    %782 = vmatpush1.bf16.msra.mxu0 0
    %783 = vmatprep.subr.bf16.mxu0 0
    %784 = vmatpush1.bf16.msra.mxu0 0
    %785 = vmatprep.subr.bf16.mxu0 0
    %786 = vmatpush1.bf16.msra.mxu0 0
    %787 = vmatprep.subr.bf16.mxu0 0
    %788 = vmatpush1.bf16.msra.mxu0 %v308
    %789 = vmatprep.subr.bf16.mxu0 0
    %790 = vmatpush1.bf16.msra.mxu0 %v306
    %791 = vmatprep.subr.bf16.mxu0 0
    %792 = vmatpush2.bf16.msra.mxu0 0
    %793 = vmatprep.subr.bf16.mxu0 0
    %794 = vmatpush2.bf16.msra.mxu0 0
    %795 = vmatprep.subr.bf16.mxu0 0
    %796 = vmatpush2.bf16.msra.mxu0 0
    %797 = vmatprep.subr.bf16.mxu0 0
    %798 = vmatpush2.bf16.msra.mxu0 0
    %799 = vmatprep.subr.bf16.mxu0 0
    %800 = vmatpush2.bf16.msra.mxu0 0
    %801 = vmatprep.subr.bf16.mxu0 0
    %802 = vmatpush2.bf16.msra.mxu0 0
    %803 = vmatprep.subr.bf16.mxu0 0
    %804 = vmatpush2.bf16.msra.mxu0 0
    %805 = vmatprep.subr.bf16.mxu0 0
    %806 = vmatpush2.bf16.msra.mxu0 0
    %807 = vmatprep.mubr.bf16.mxu0 0
    %808 = vmatmul.mubr.bf16.gmra.mxu0 %v731
    %v809 = vpop.f32.mrf.mxu0
    %v810 = vadd.f32 0.0, %v809
    %v811 = vpop.f32.mrf.mxu0
    %v812 = vpop.f32.mrf.mxu0
    %v813 = vpop.f32.mrf.mxu0
    %814 = vdwg.mxu0
    %816 = vrot.lane.b32.xlu0 %v810, 32
    %v817 = vpop.permute.xlu0 %816
    %v819 = vadd.f32 %v773, %v817
    %820 = vmatprep.subr.bf16.mxu0 0
    %821 = vmatpush1.bf16.msra.mxu0 0
    %822 = vmatprep.subr.bf16.mxu0 0
    %823 = vmatpush1.bf16.msra.mxu0 0
    %824 = vmatprep.subr.bf16.mxu0 0
    %825 = vmatpush1.bf16.msra.mxu0 0
    %826 = vmatprep.subr.bf16.mxu0 0
    %827 = vmatpush1.bf16.msra.mxu0 0
    %828 = vmatprep.subr.bf16.mxu0 0
    %829 = vmatpush1.bf16.msra.mxu0 0
    %830 = vmatprep.subr.bf16.mxu0 0
    %831 = vmatpush1.bf16.msra.mxu0 0
    %832 = vmatprep.subr.bf16.mxu0 0
    %833 = vmatpush1.bf16.msra.mxu0 %v359
    %834 = vmatprep.subr.bf16.mxu0 0
    %835 = vmatpush1.bf16.msra.mxu0 %v357
    %836 = vmatprep.subr.bf16.mxu0 0
    %837 = vmatpush2.bf16.msra.mxu0 0
    %838 = vmatprep.subr.bf16.mxu0 0
    %839 = vmatpush2.bf16.msra.mxu0 0
    %840 = vmatprep.subr.bf16.mxu0 0
    %841 = vmatpush2.bf16.msra.mxu0 0
    %842 = vmatprep.subr.bf16.mxu0 0
    %843 = vmatpush2.bf16.msra.mxu0 0
    %844 = vmatprep.subr.bf16.mxu0 0
    %845 = vmatpush2.bf16.msra.mxu0 0
    %846 = vmatprep.subr.bf16.mxu0 0
    %847 = vmatpush2.bf16.msra.mxu0 0
    %848 = vmatprep.subr.bf16.mxu0 0
    %849 = vmatpush2.bf16.msra.mxu0 0
    %850 = vmatprep.subr.bf16.mxu0 0
    %851 = vmatpush2.bf16.msra.mxu0 0
    %852 = vmatprep.mubr.bf16.mxu0 0
    %853 = vmatmul.mubr.bf16.gmra.mxu0 %v731
    %v854 = vpop.f32.mrf.mxu0
    %v855 = vadd.f32 0.0, %v854
    %v856 = vpop.f32.mrf.mxu0
    %v857 = vpop.f32.mrf.mxu0
    %v858 = vpop.f32.mrf.mxu0
    %859 = vdwg.mxu0
    %861 = vrot.lane.b32.xlu0 %v855, 64
    %v862 = vpop.permute.xlu0 %861
    %v864 = vadd.f32 %v773, %v862
    %865 = vmatprep.subr.bf16.mxu0 0
    %866 = vmatpush1.bf16.msra.mxu0 0
    %867 = vmatprep.subr.bf16.mxu0 0
    %868 = vmatpush1.bf16.msra.mxu0 0
    %869 = vmatprep.subr.bf16.mxu0 0
    %870 = vmatpush1.bf16.msra.mxu0 0
    %871 = vmatprep.subr.bf16.mxu0 0
    %872 = vmatpush1.bf16.msra.mxu0 0
    %873 = vmatprep.subr.bf16.mxu0 0
    %874 = vmatpush1.bf16.msra.mxu0 0
    %875 = vmatprep.subr.bf16.mxu0 0
    %876 = vmatpush1.bf16.msra.mxu0 0
    %877 = vmatprep.subr.bf16.mxu0 0
    %878 = vmatpush1.bf16.msra.mxu0 %v410
    %879 = vmatprep.subr.bf16.mxu0 0
    %880 = vmatpush1.bf16.msra.mxu0 %v408
    %881 = vmatprep.subr.bf16.mxu0 0
    %882 = vmatpush2.bf16.msra.mxu0 0
    %883 = vmatprep.subr.bf16.mxu0 0
    %884 = vmatpush2.bf16.msra.mxu0 0
    %885 = vmatprep.subr.bf16.mxu0 0
    %886 = vmatpush2.bf16.msra.mxu0 0
    %887 = vmatprep.subr.bf16.mxu0 0
    %888 = vmatpush2.bf16.msra.mxu0 0
    %889 = vmatprep.subr.bf16.mxu0 0
    %890 = vmatpush2.bf16.msra.mxu0 0
    %891 = vmatprep.subr.bf16.mxu0 0
    %892 = vmatpush2.bf16.msra.mxu0 0
    %893 = vmatprep.subr.bf16.mxu0 0
    %894 = vmatpush2.bf16.msra.mxu0 0
    %895 = vmatprep.subr.bf16.mxu0 0
    %896 = vmatpush2.bf16.msra.mxu0 0
    %897 = vmatprep.mubr.bf16.mxu0 0
    %898 = vmatmul.mubr.bf16.gmra.mxu0 %v731
    %v899 = vpop.f32.mrf.mxu0
    %v900 = vadd.f32 0.0, %v899
    %v901 = vpop.f32.mrf.mxu0
    %v902 = vpop.f32.mrf.mxu0
    %v903 = vpop.f32.mrf.mxu0
    %904 = vdwg.mxu0
    %906 = vrot.lane.b32.xlu0 %v900, 96
    %v907 = vpop.permute.xlu0 %906
    %v909 = vadd.f32 %v773, %v907
    %v910 = vxor.u32 %v774, 2147483648
    %v911 = vmul.f32 %v910, 1.442695
    %v912 = vpow.pop %v911
    %v913 = vadd.f32 %v912, 1.0
    %v914 = vrcp.pop %v913
    %v915 = vmul.f32 1.0, %v914
    %v916 = vxor.u32 %v819, 2147483648
    %v917 = vmul.f32 %v916, 1.442695
    %v918 = vpow.pop %v917
    %v919 = vadd.f32 %v918, 1.0
    %v920 = vrcp.pop %v919
    %v921 = vmul.f32 1.0, %v920
    %v922 = vtanh.pop %v864
    %v923 = vxor.u32 %v909, 2147483648
    %v924 = vmul.f32 %v923, 1.442695
    %v925 = vpow.pop %v924
    %v926 = vadd.f32 %v925, 1.0
    %v927 = vrcp.pop %v926
    %v928 = vmul.f32 1.0, %v927
    %v929 = vmul.f32 %v921, %v714
    %931 = vrot.lane.b32.xlu0 %v922, 64
    %v932 = vpop.permute.xlu0 %931
    %v934 = vmul.f32 %v915, %v932
    %936 = vrot.lane.b32.xlu0 %v934, 32
    %v937 = vpop.permute.xlu0 %936
    %v939 = vadd.f32 %v929, %v937
    %v940 = vtanh.pop %v939
    %942 = vrot.lane.b32.xlu0 %v940, 64
    %v943 = vpop.permute.xlu0 %942
    %v945 = vmul.f32 %v928, %v943
    %v946 = vpack.c.bf16 %v945, %v945
    %v947 = vrot.slane %v495, 1
    %v949 = vrot.slane %v233, 5
    %v951 = vsel %vm245, %v947, %v949
    %953 = vrot.lane.b32.xlu0 %v946, 32
    %v954 = vpop.permute.xlu0 %953
    %v956 = vsel %vm259, %v954, 0
    %958 = vmatprep.subr.bf16.mxu0 0
    %959 = vmatpush1.bf16.msra.mxu0 0
    %960 = vmatprep.subr.bf16.mxu0 0
    %961 = vmatpush1.bf16.msra.mxu0 0
    %962 = vmatprep.subr.bf16.mxu0 0
    %963 = vmatpush1.bf16.msra.mxu0 0
    %964 = vmatprep.subr.bf16.mxu0 0
    %965 = vmatpush1.bf16.msra.mxu0 0
    %966 = vmatprep.subr.bf16.mxu0 0
    %967 = vmatpush1.bf16.msra.mxu0 0
    %968 = vmatprep.subr.bf16.mxu0 0
    %969 = vmatpush1.bf16.msra.mxu0 0
    %970 = vmatprep.subr.bf16.mxu0 0
    %971 = vmatpush1.bf16.msra.mxu0 %v256
    %972 = vmatprep.subr.bf16.mxu0 0
    %973 = vmatpush1.bf16.msra.mxu0 %v255
    %974 = vmatprep.subr.bf16.mxu0 0
    %975 = vmatpush2.bf16.msra.mxu0 0
    %976 = vmatprep.subr.bf16.mxu0 0
    %977 = vmatpush2.bf16.msra.mxu0 0
    %978 = vmatprep.subr.bf16.mxu0 0
    %979 = vmatpush2.bf16.msra.mxu0 0
    %980 = vmatprep.subr.bf16.mxu0 0
    %981 = vmatpush2.bf16.msra.mxu0 0
    %982 = vmatprep.subr.bf16.mxu0 0
    %983 = vmatpush2.bf16.msra.mxu0 0
    %984 = vmatprep.subr.bf16.mxu0 0
    %985 = vmatpush2.bf16.msra.mxu0 0
    %986 = vmatprep.subr.bf16.mxu0 0
    %987 = vmatpush2.bf16.msra.mxu0 0
    %988 = vmatprep.subr.bf16.mxu0 0
    %989 = vmatpush2.bf16.msra.mxu0 0
    %990 = vmatprep.mubr.bf16.mxu0 0
    %991 = vmatmul.mubr.bf16.gmra.mxu0 %v956
    %v992 = vpop.f32.mrf.mxu0
    %v993 = vadd.f32 0.0, %v992
    %v994 = vpop.f32.mrf.mxu0
    %v995 = vpop.f32.mrf.mxu0
    %v996 = vpop.f32.mrf.mxu0
    %997 = vdwg.mxu0
    %v998 = vunpack.c.l.bf16 %v951
    %v999 = vadd.f32 %v998, %v993
    %1000 = vmatprep.subr.bf16.mxu0 0
    %1001 = vmatpush1.bf16.msra.mxu0 0
    %1002 = vmatprep.subr.bf16.mxu0 0
    %1003 = vmatpush1.bf16.msra.mxu0 0
    %1004 = vmatprep.subr.bf16.mxu0 0
    %1005 = vmatpush1.bf16.msra.mxu0 0
    %1006 = vmatprep.subr.bf16.mxu0 0
    %1007 = vmatpush1.bf16.msra.mxu0 0
    %1008 = vmatprep.subr.bf16.mxu0 0
    %1009 = vmatpush1.bf16.msra.mxu0 0
    %1010 = vmatprep.subr.bf16.mxu0 0
    %1011 = vmatpush1.bf16.msra.mxu0 0
    %1012 = vmatprep.subr.bf16.mxu0 0
    %1013 = vmatpush1.bf16.msra.mxu0 %v308
    %1014 = vmatprep.subr.bf16.mxu0 0
    %1015 = vmatpush1.bf16.msra.mxu0 %v306
    %1016 = vmatprep.subr.bf16.mxu0 0
    %1017 = vmatpush2.bf16.msra.mxu0 0
    %1018 = vmatprep.subr.bf16.mxu0 0
    %1019 = vmatpush2.bf16.msra.mxu0 0
    %1020 = vmatprep.subr.bf16.mxu0 0
    %1021 = vmatpush2.bf16.msra.mxu0 0
    %1022 = vmatprep.subr.bf16.mxu0 0
    %1023 = vmatpush2.bf16.msra.mxu0 0
    %1024 = vmatprep.subr.bf16.mxu0 0
    %1025 = vmatpush2.bf16.msra.mxu0 0
    %1026 = vmatprep.subr.bf16.mxu0 0
    %1027 = vmatpush2.bf16.msra.mxu0 0
    %1028 = vmatprep.subr.bf16.mxu0 0
    %1029 = vmatpush2.bf16.msra.mxu0 0
    %1030 = vmatprep.subr.bf16.mxu0 0
    %1031 = vmatpush2.bf16.msra.mxu0 0
    %1032 = vmatprep.mubr.bf16.mxu0 0
    %1033 = vmatmul.mubr.bf16.gmra.mxu0 %v956
    %v1034 = vpop.f32.mrf.mxu0
    %v1035 = vadd.f32 0.0, %v1034
    %v1036 = vpop.f32.mrf.mxu0
    %v1037 = vpop.f32.mrf.mxu0
    %v1038 = vpop.f32.mrf.mxu0
    %1039 = vdwg.mxu0
    %1041 = vrot.lane.b32.xlu0 %v1035, 32
    %v1042 = vpop.permute.xlu0 %1041
    %v1044 = vadd.f32 %v998, %v1042
    %1045 = vmatprep.subr.bf16.mxu0 0
    %1046 = vmatpush1.bf16.msra.mxu0 0
    %1047 = vmatprep.subr.bf16.mxu0 0
    %1048 = vmatpush1.bf16.msra.mxu0 0
    %1049 = vmatprep.subr.bf16.mxu0 0
    %1050 = vmatpush1.bf16.msra.mxu0 0
    %1051 = vmatprep.subr.bf16.mxu0 0
    %1052 = vmatpush1.bf16.msra.mxu0 0
    %1053 = vmatprep.subr.bf16.mxu0 0
    %1054 = vmatpush1.bf16.msra.mxu0 0
    %1055 = vmatprep.subr.bf16.mxu0 0
    %1056 = vmatpush1.bf16.msra.mxu0 0
    %1057 = vmatprep.subr.bf16.mxu0 0
    %1058 = vmatpush1.bf16.msra.mxu0 %v359
    %1059 = vmatprep.subr.bf16.mxu0 0
    %1060 = vmatpush1.bf16.msra.mxu0 %v357
    %1061 = vmatprep.subr.bf16.mxu0 0
    %1062 = vmatpush2.bf16.msra.mxu0 0
    %1063 = vmatprep.subr.bf16.mxu0 0
    %1064 = vmatpush2.bf16.msra.mxu0 0
    %1065 = vmatprep.subr.bf16.mxu0 0
    %1066 = vmatpush2.bf16.msra.mxu0 0
    %1067 = vmatprep.subr.bf16.mxu0 0
    %1068 = vmatpush2.bf16.msra.mxu0 0
    %1069 = vmatprep.subr.bf16.mxu0 0
    %1070 = vmatpush2.bf16.msra.mxu0 0
    %1071 = vmatprep.subr.bf16.mxu0 0
    %1072 = vmatpush2.bf16.msra.mxu0 0
    %1073 = vmatprep.subr.bf16.mxu0 0
    %1074 = vmatpush2.bf16.msra.mxu0 0
    %1075 = vmatprep.subr.bf16.mxu0 0
    %1076 = vmatpush2.bf16.msra.mxu0 0
    %1077 = vmatprep.mubr.bf16.mxu0 0
    %1078 = vmatmul.mubr.bf16.gmra.mxu0 %v956
    %v1079 = vpop.f32.mrf.mxu0
    %v1080 = vadd.f32 0.0, %v1079
    %v1081 = vpop.f32.mrf.mxu0
    %v1082 = vpop.f32.mrf.mxu0
    %v1083 = vpop.f32.mrf.mxu0
    %1084 = vdwg.mxu0
    %1086 = vrot.lane.b32.xlu0 %v1080, 64
    %v1087 = vpop.permute.xlu0 %1086
    %v1089 = vadd.f32 %v998, %v1087
    %1090 = vmatprep.subr.bf16.mxu0 0
    %1091 = vmatpush1.bf16.msra.mxu0 0
    %1092 = vmatprep.subr.bf16.mxu0 0
    %1093 = vmatpush1.bf16.msra.mxu0 0
    %1094 = vmatprep.subr.bf16.mxu0 0
    %1095 = vmatpush1.bf16.msra.mxu0 0
    %1096 = vmatprep.subr.bf16.mxu0 0
    %1097 = vmatpush1.bf16.msra.mxu0 0
    %1098 = vmatprep.subr.bf16.mxu0 0
    %1099 = vmatpush1.bf16.msra.mxu0 0
    %1100 = vmatprep.subr.bf16.mxu0 0
    %1101 = vmatpush1.bf16.msra.mxu0 0
    %1102 = vmatprep.subr.bf16.mxu0 0
    %1103 = vmatpush1.bf16.msra.mxu0 %v410
    %1104 = vmatprep.subr.bf16.mxu0 0
    %1105 = vmatpush1.bf16.msra.mxu0 %v408
    %1106 = vmatprep.subr.bf16.mxu0 0
    %1107 = vmatpush2.bf16.msra.mxu0 0
    %1108 = vmatprep.subr.bf16.mxu0 0
    %1109 = vmatpush2.bf16.msra.mxu0 0
    %1110 = vmatprep.subr.bf16.mxu0 0
    %1111 = vmatpush2.bf16.msra.mxu0 0
    %1112 = vmatprep.subr.bf16.mxu0 0
    %1113 = vmatpush2.bf16.msra.mxu0 0
    %1114 = vmatprep.subr.bf16.mxu0 0
    %1115 = vmatpush2.bf16.msra.mxu0 0
    %1116 = vmatprep.subr.bf16.mxu0 0
    %1117 = vmatpush2.bf16.msra.mxu0 0
    %1118 = vmatprep.subr.bf16.mxu0 0
    %1119 = vmatpush2.bf16.msra.mxu0 0
    %1120 = vmatprep.subr.bf16.mxu0 0
    %1121 = vmatpush2.bf16.msra.mxu0 0
    %1122 = vmatprep.mubr.bf16.mxu0 0
    %1123 = vmatmul.mubr.bf16.gmra.mxu0 %v956
    %v1124 = vpop.f32.mrf.mxu0
    %v1125 = vadd.f32 0.0, %v1124
    %v1126 = vpop.f32.mrf.mxu0
    %v1127 = vpop.f32.mrf.mxu0
    %v1128 = vpop.f32.mrf.mxu0
    %1129 = vdwg.mxu0
    %1131 = vrot.lane.b32.xlu0 %v1125, 96
    %v1132 = vpop.permute.xlu0 %1131
    %v1134 = vadd.f32 %v998, %v1132
    %v1135 = vxor.u32 %v999, 2147483648
    %v1136 = vmul.f32 %v1135, 1.442695
    %v1137 = vpow.pop %v1136
    %v1138 = vadd.f32 %v1137, 1.0
    %v1139 = vrcp.pop %v1138
    %v1140 = vmul.f32 1.0, %v1139
    %v1141 = vxor.u32 %v1044, 2147483648
    %v1142 = vmul.f32 %v1141, 1.442695
    %v1143 = vpow.pop %v1142
    %v1144 = vadd.f32 %v1143, 1.0
    %v1145 = vrcp.pop %v1144
    %v1146 = vmul.f32 1.0, %v1145
    %v1147 = vtanh.pop %v1089
    %v1148 = vxor.u32 %v1134, 2147483648
    %v1149 = vmul.f32 %v1148, 1.442695
    %v1150 = vpow.pop %v1149
    %v1151 = vadd.f32 %v1150, 1.0
    %v1152 = vrcp.pop %v1151
    %v1153 = vmul.f32 1.0, %v1152
    %v1154 = vmul.f32 %v1146, %v939
    %1156 = vrot.lane.b32.xlu0 %v1147, 64
    %v1157 = vpop.permute.xlu0 %1156
    %v1159 = vmul.f32 %v1140, %v1157
    %1161 = vrot.lane.b32.xlu0 %v1159, 32
    %v1162 = vpop.permute.xlu0 %1161
    %v1164 = vadd.f32 %v1154, %v1162
    %v1165 = vtanh.pop %v1164
    %1167 = vrot.lane.b32.xlu0 %v1165, 64
    %v1168 = vpop.permute.xlu0 %1167
    %v1170 = vmul.f32 %v1153, %v1168
    %v1171 = vpack.c.bf16 %v1170, %v1170
    %v1172 = vrot.slane %v233, 2
    %v1174 = vrot.slane %v239, 6
    %v1176 = vsel %vm245, %v1172, %v1174
    %1178 = vrot.lane.b32.xlu0 %v1171, 32
    %v1179 = vpop.permute.xlu0 %1178
    %v1181 = vsel %vm259, %v1179, 0
    %1183 = vmatprep.subr.bf16.mxu0 0
    %1184 = vmatpush1.bf16.msra.mxu0 0
    %1185 = vmatprep.subr.bf16.mxu0 0
    %1186 = vmatpush1.bf16.msra.mxu0 0
    %1187 = vmatprep.subr.bf16.mxu0 0
    %1188 = vmatpush1.bf16.msra.mxu0 0
    %1189 = vmatprep.subr.bf16.mxu0 0
    %1190 = vmatpush1.bf16.msra.mxu0 0
    %1191 = vmatprep.subr.bf16.mxu0 0
    %1192 = vmatpush1.bf16.msra.mxu0 0
    %1193 = vmatprep.subr.bf16.mxu0 0
    %1194 = vmatpush1.bf16.msra.mxu0 0
    %1195 = vmatprep.subr.bf16.mxu0 0
    %1196 = vmatpush1.bf16.msra.mxu0 %v256
    %1197 = vmatprep.subr.bf16.mxu0 0
    %1198 = vmatpush1.bf16.msra.mxu0 %v255
    %1199 = vmatprep.subr.bf16.mxu0 0
    %1200 = vmatpush2.bf16.msra.mxu0 0
    %1201 = vmatprep.subr.bf16.mxu0 0
    %1202 = vmatpush2.bf16.msra.mxu0 0
    %1203 = vmatprep.subr.bf16.mxu0 0
    %1204 = vmatpush2.bf16.msra.mxu0 0
    %1205 = vmatprep.subr.bf16.mxu0 0
    %1206 = vmatpush2.bf16.msra.mxu0 0
    %1207 = vmatprep.subr.bf16.mxu0 0
    %1208 = vmatpush2.bf16.msra.mxu0 0
    %1209 = vmatprep.subr.bf16.mxu0 0
    %1210 = vmatpush2.bf16.msra.mxu0 0
    %1211 = vmatprep.subr.bf16.mxu0 0
    %1212 = vmatpush2.bf16.msra.mxu0 0
    %1213 = vmatprep.subr.bf16.mxu0 0
    %1214 = vmatpush2.bf16.msra.mxu0 0
    %1215 = vmatprep.mubr.bf16.mxu0 0
    %1216 = vmatmul.mubr.bf16.gmra.mxu0 %v1181
    %v1217 = vpop.f32.mrf.mxu0
    %v1218 = vadd.f32 0.0, %v1217
    %v1219 = vpop.f32.mrf.mxu0
    %v1220 = vpop.f32.mrf.mxu0
    %v1221 = vpop.f32.mrf.mxu0
    %1222 = vdwg.mxu0
    %v1223 = vunpack.c.l.bf16 %v1176
    %v1224 = vadd.f32 %v1223, %v1218
    %1225 = vmatprep.subr.bf16.mxu0 0
    %1226 = vmatpush1.bf16.msra.mxu0 0
    %1227 = vmatprep.subr.bf16.mxu0 0
    %1228 = vmatpush1.bf16.msra.mxu0 0
    %1229 = vmatprep.subr.bf16.mxu0 0
    %1230 = vmatpush1.bf16.msra.mxu0 0
    %1231 = vmatprep.subr.bf16.mxu0 0
    %1232 = vmatpush1.bf16.msra.mxu0 0
    %1233 = vmatprep.subr.bf16.mxu0 0
    %1234 = vmatpush1.bf16.msra.mxu0 0
    %1235 = vmatprep.subr.bf16.mxu0 0
    %1236 = vmatpush1.bf16.msra.mxu0 0
    %1237 = vmatprep.subr.bf16.mxu0 0
    %1238 = vmatpush1.bf16.msra.mxu0 %v308
    %1239 = vmatprep.subr.bf16.mxu0 0
    %1240 = vmatpush1.bf16.msra.mxu0 %v306
    %1241 = vmatprep.subr.bf16.mxu0 0
    %1242 = vmatpush2.bf16.msra.mxu0 0
    %1243 = vmatprep.subr.bf16.mxu0 0
    %1244 = vmatpush2.bf16.msra.mxu0 0
    %1245 = vmatprep.subr.bf16.mxu0 0
    %1246 = vmatpush2.bf16.msra.mxu0 0
    %1247 = vmatprep.subr.bf16.mxu0 0
    %1248 = vmatpush2.bf16.msra.mxu0 0
    %1249 = vmatprep.subr.bf16.mxu0 0
    %1250 = vmatpush2.bf16.msra.mxu0 0
    %1251 = vmatprep.subr.bf16.mxu0 0
    %1252 = vmatpush2.bf16.msra.mxu0 0
    %1253 = vmatprep.subr.bf16.mxu0 0
    %1254 = vmatpush2.bf16.msra.mxu0 0
    %1255 = vmatprep.subr.bf16.mxu0 0
    %1256 = vmatpush2.bf16.msra.mxu0 0
    %1257 = vmatprep.mubr.bf16.mxu0 0
    %1258 = vmatmul.mubr.bf16.gmra.mxu0 %v1181
    %v1259 = vpop.f32.mrf.mxu0
    %v1260 = vadd.f32 0.0, %v1259
    %v1261 = vpop.f32.mrf.mxu0
    %v1262 = vpop.f32.mrf.mxu0
    %v1263 = vpop.f32.mrf.mxu0
    %1264 = vdwg.mxu0
    %1266 = vrot.lane.b32.xlu0 %v1260, 32
    %v1267 = vpop.permute.xlu0 %1266
    %v1269 = vadd.f32 %v1223, %v1267
    %1270 = vmatprep.subr.bf16.mxu0 0
    %1271 = vmatpush1.bf16.msra.mxu0 0
    %1272 = vmatprep.subr.bf16.mxu0 0
    %1273 = vmatpush1.bf16.msra.mxu0 0
    %1274 = vmatprep.subr.bf16.mxu0 0
    %1275 = vmatpush1.bf16.msra.mxu0 0
    %1276 = vmatprep.subr.bf16.mxu0 0
    %1277 = vmatpush1.bf16.msra.mxu0 0
    %1278 = vmatprep.subr.bf16.mxu0 0
    %1279 = vmatpush1.bf16.msra.mxu0 0
    %1280 = vmatprep.subr.bf16.mxu0 0
    %1281 = vmatpush1.bf16.msra.mxu0 0
    %1282 = vmatprep.subr.bf16.mxu0 0
    %1283 = vmatpush1.bf16.msra.mxu0 %v359
    %1284 = vmatprep.subr.bf16.mxu0 0
    %1285 = vmatpush1.bf16.msra.mxu0 %v357
    %1286 = vmatprep.subr.bf16.mxu0 0
    %1287 = vmatpush2.bf16.msra.mxu0 0
    %1288 = vmatprep.subr.bf16.mxu0 0
    %1289 = vmatpush2.bf16.msra.mxu0 0
    %1290 = vmatprep.subr.bf16.mxu0 0
    %1291 = vmatpush2.bf16.msra.mxu0 0
    %1292 = vmatprep.subr.bf16.mxu0 0
    %1293 = vmatpush2.bf16.msra.mxu0 0
    %1294 = vmatprep.subr.bf16.mxu0 0
    %1295 = vmatpush2.bf16.msra.mxu0 0
    %1296 = vmatprep.subr.bf16.mxu0 0
    %1297 = vmatpush2.bf16.msra.mxu0 0
    %1298 = vmatprep.subr.bf16.mxu0 0
    %1299 = vmatpush2.bf16.msra.mxu0 0
    %1300 = vmatprep.subr.bf16.mxu0 0
    %1301 = vmatpush2.bf16.msra.mxu0 0
    %1302 = vmatprep.mubr.bf16.mxu0 0
    %1303 = vmatmul.mubr.bf16.gmra.mxu0 %v1181
    %v1304 = vpop.f32.mrf.mxu0
    %v1305 = vadd.f32 0.0, %v1304
    %v1306 = vpop.f32.mrf.mxu0
    %v1307 = vpop.f32.mrf.mxu0
    %v1308 = vpop.f32.mrf.mxu0
    %1309 = vdwg.mxu0
    %1311 = vrot.lane.b32.xlu0 %v1305, 64
    %v1312 = vpop.permute.xlu0 %1311
    %v1314 = vadd.f32 %v1223, %v1312
    %1315 = vmatprep.subr.bf16.mxu0 0
    %1316 = vmatpush1.bf16.msra.mxu0 0
    %1317 = vmatprep.subr.bf16.mxu0 0
    %1318 = vmatpush1.bf16.msra.mxu0 0
    %1319 = vmatprep.subr.bf16.mxu0 0
    %1320 = vmatpush1.bf16.msra.mxu0 0
    %1321 = vmatprep.subr.bf16.mxu0 0
    %1322 = vmatpush1.bf16.msra.mxu0 0
    %1323 = vmatprep.subr.bf16.mxu0 0
    %1324 = vmatpush1.bf16.msra.mxu0 0
    %1325 = vmatprep.subr.bf16.mxu0 0
    %1326 = vmatpush1.bf16.msra.mxu0 0
    %1327 = vmatprep.subr.bf16.mxu0 0
    %1328 = vmatpush1.bf16.msra.mxu0 %v410
    %1329 = vmatprep.subr.bf16.mxu0 0
    %1330 = vmatpush1.bf16.msra.mxu0 %v408
    %1331 = vmatprep.subr.bf16.mxu0 0
    %1332 = vmatpush2.bf16.msra.mxu0 0
    %1333 = vmatprep.subr.bf16.mxu0 0
    %1334 = vmatpush2.bf16.msra.mxu0 0
    %1335 = vmatprep.subr.bf16.mxu0 0
    %1336 = vmatpush2.bf16.msra.mxu0 0
    %1337 = vmatprep.subr.bf16.mxu0 0
    %1338 = vmatpush2.bf16.msra.mxu0 0
    %1339 = vmatprep.subr.bf16.mxu0 0
    %1340 = vmatpush2.bf16.msra.mxu0 0
    %1341 = vmatprep.subr.bf16.mxu0 0
    %1342 = vmatpush2.bf16.msra.mxu0 0
    %1343 = vmatprep.subr.bf16.mxu0 0
    %1344 = vmatpush2.bf16.msra.mxu0 0
    %1345 = vmatprep.subr.bf16.mxu0 0
    %1346 = vmatpush2.bf16.msra.mxu0 0
    %1347 = vmatprep.mubr.bf16.mxu0 0
    %1348 = vmatmul.mubr.bf16.gmra.mxu0 %v1181
    %v1349 = vpop.f32.mrf.mxu0
    %v1350 = vadd.f32 0.0, %v1349
    %v1351 = vpop.f32.mrf.mxu0
    %v1352 = vpop.f32.mrf.mxu0
    %v1353 = vpop.f32.mrf.mxu0
    %1354 = vdwg.mxu0
    %1356 = vrot.lane.b32.xlu0 %v1350, 96
    %v1357 = vpop.permute.xlu0 %1356
    %v1359 = vadd.f32 %v1223, %v1357
    %v1360 = vxor.u32 %v1224, 2147483648
    %v1361 = vmul.f32 %v1360, 1.442695
    %v1362 = vpow.pop %v1361
    %v1363 = vadd.f32 %v1362, 1.0
    %v1364 = vrcp.pop %v1363
    %v1365 = vmul.f32 1.0, %v1364
    %v1366 = vxor.u32 %v1269, 2147483648
    %v1367 = vmul.f32 %v1366, 1.442695
    %v1368 = vpow.pop %v1367
    %v1369 = vadd.f32 %v1368, 1.0
    %v1370 = vrcp.pop %v1369
    %v1371 = vmul.f32 1.0, %v1370
    %v1372 = vtanh.pop %v1314
    %v1373 = vxor.u32 %v1359, 2147483648
    %v1374 = vmul.f32 %v1373, 1.442695
    %v1375 = vpow.pop %v1374
    %v1376 = vadd.f32 %v1375, 1.0
    %v1377 = vrcp.pop %v1376
    %v1378 = vmul.f32 1.0, %v1377
    %v1379 = vmul.f32 %v1371, %v1164
    %1381 = vrot.lane.b32.xlu0 %v1372, 64
    %v1382 = vpop.permute.xlu0 %1381
    %v1384 = vmul.f32 %v1365, %v1382
    %1386 = vrot.lane.b32.xlu0 %v1384, 32
    %v1387 = vpop.permute.xlu0 %1386
    %v1389 = vadd.f32 %v1379, %v1387
    %v1390 = vtanh.pop %v1389
    %1392 = vrot.lane.b32.xlu0 %v1390, 64
    %v1393 = vpop.permute.xlu0 %1392
    %v1395 = vmul.f32 %v1378, %v1393
    %v1396 = vpack.c.bf16 %v1395, %v1395
    %v1397 = vrot.slane %v495, 2
    %v1399 = vrot.slane %v233, 6
    %v1401 = vsel %vm245, %v1397, %v1399
    %1403 = vrot.lane.b32.xlu0 %v1396, 32
    %v1404 = vpop.permute.xlu0 %1403
    %v1406 = vsel %vm259, %v1404, 0
    %1408 = vmatprep.subr.bf16.mxu0 0
    %1409 = vmatpush1.bf16.msra.mxu0 0
    %1410 = vmatprep.subr.bf16.mxu0 0
    %1411 = vmatpush1.bf16.msra.mxu0 0
    %1412 = vmatprep.subr.bf16.mxu0 0
    %1413 = vmatpush1.bf16.msra.mxu0 0
    %1414 = vmatprep.subr.bf16.mxu0 0
    %1415 = vmatpush1.bf16.msra.mxu0 0
    %1416 = vmatprep.subr.bf16.mxu0 0
    %1417 = vmatpush1.bf16.msra.mxu0 0
    %1418 = vmatprep.subr.bf16.mxu0 0
    %1419 = vmatpush1.bf16.msra.mxu0 0
    %1420 = vmatprep.subr.bf16.mxu0 0
    %1421 = vmatpush1.bf16.msra.mxu0 %v256
    %1422 = vmatprep.subr.bf16.mxu0 0
    %1423 = vmatpush1.bf16.msra.mxu0 %v255
    %1424 = vmatprep.subr.bf16.mxu0 0
    %1425 = vmatpush2.bf16.msra.mxu0 0
    %1426 = vmatprep.subr.bf16.mxu0 0
    %1427 = vmatpush2.bf16.msra.mxu0 0
    %1428 = vmatprep.subr.bf16.mxu0 0
    %1429 = vmatpush2.bf16.msra.mxu0 0
    %1430 = vmatprep.subr.bf16.mxu0 0
    %1431 = vmatpush2.bf16.msra.mxu0 0
    %1432 = vmatprep.subr.bf16.mxu0 0
    %1433 = vmatpush2.bf16.msra.mxu0 0
    %1434 = vmatprep.subr.bf16.mxu0 0
    %1435 = vmatpush2.bf16.msra.mxu0 0
    %1436 = vmatprep.subr.bf16.mxu0 0
    %1437 = vmatpush2.bf16.msra.mxu0 0
    %1438 = vmatprep.subr.bf16.mxu0 0
    %1439 = vmatpush2.bf16.msra.mxu0 0
    %1440 = vmatprep.mubr.bf16.mxu0 0
    %1441 = vmatmul.mubr.bf16.gmra.mxu0 %v1406
    %v1442 = vpop.f32.mrf.mxu0
    %v1443 = vadd.f32 0.0, %v1442
    %v1444 = vpop.f32.mrf.mxu0
    %v1445 = vpop.f32.mrf.mxu0
    %v1446 = vpop.f32.mrf.mxu0
    %1447 = vdwg.mxu0
    %v1448 = vunpack.c.l.bf16 %v1401
    %v1449 = vadd.f32 %v1448, %v1443
    %1450 = vmatprep.subr.bf16.mxu0 0
    %1451 = vmatpush1.bf16.msra.mxu0 0
    %1452 = vmatprep.subr.bf16.mxu0 0
    %1453 = vmatpush1.bf16.msra.mxu0 0
    %1454 = vmatprep.subr.bf16.mxu0 0
    %1455 = vmatpush1.bf16.msra.mxu0 0
    %1456 = vmatprep.subr.bf16.mxu0 0
    %1457 = vmatpush1.bf16.msra.mxu0 0
    %1458 = vmatprep.subr.bf16.mxu0 0
    %1459 = vmatpush1.bf16.msra.mxu0 0
    %1460 = vmatprep.subr.bf16.mxu0 0
    %1461 = vmatpush1.bf16.msra.mxu0 0
    %1462 = vmatprep.subr.bf16.mxu0 0
    %1463 = vmatpush1.bf16.msra.mxu0 %v308
    %1464 = vmatprep.subr.bf16.mxu0 0
    %1465 = vmatpush1.bf16.msra.mxu0 %v306
    %1466 = vmatprep.subr.bf16.mxu0 0
    %1467 = vmatpush2.bf16.msra.mxu0 0
    %1468 = vmatprep.subr.bf16.mxu0 0
    %1469 = vmatpush2.bf16.msra.mxu0 0
    %1470 = vmatprep.subr.bf16.mxu0 0
    %1471 = vmatpush2.bf16.msra.mxu0 0
    %1472 = vmatprep.subr.bf16.mxu0 0
    %1473 = vmatpush2.bf16.msra.mxu0 0
    %1474 = vmatprep.subr.bf16.mxu0 0
    %1475 = vmatpush2.bf16.msra.mxu0 0
    %1476 = vmatprep.subr.bf16.mxu0 0
    %1477 = vmatpush2.bf16.msra.mxu0 0
    %1478 = vmatprep.subr.bf16.mxu0 0
    %1479 = vmatpush2.bf16.msra.mxu0 0
    %1480 = vmatprep.subr.bf16.mxu0 0
    %1481 = vmatpush2.bf16.msra.mxu0 0
    %1482 = vmatprep.mubr.bf16.mxu0 0
    %1483 = vmatmul.mubr.bf16.gmra.mxu0 %v1406
    %v1484 = vpop.f32.mrf.mxu0
    %v1485 = vadd.f32 0.0, %v1484
    %v1486 = vpop.f32.mrf.mxu0
    %v1487 = vpop.f32.mrf.mxu0
    %v1488 = vpop.f32.mrf.mxu0
    %1489 = vdwg.mxu0
    %1491 = vrot.lane.b32.xlu0 %v1485, 32
    %v1492 = vpop.permute.xlu0 %1491
    %v1494 = vadd.f32 %v1448, %v1492
    %1495 = vmatprep.subr.bf16.mxu0 0
    %1496 = vmatpush1.bf16.msra.mxu0 0
    %1497 = vmatprep.subr.bf16.mxu0 0
    %1498 = vmatpush1.bf16.msra.mxu0 0
    %1499 = vmatprep.subr.bf16.mxu0 0
    %1500 = vmatpush1.bf16.msra.mxu0 0
    %1501 = vmatprep.subr.bf16.mxu0 0
    %1502 = vmatpush1.bf16.msra.mxu0 0
    %1503 = vmatprep.subr.bf16.mxu0 0
    %1504 = vmatpush1.bf16.msra.mxu0 0
    %1505 = vmatprep.subr.bf16.mxu0 0
    %1506 = vmatpush1.bf16.msra.mxu0 0
    %1507 = vmatprep.subr.bf16.mxu0 0
    %1508 = vmatpush1.bf16.msra.mxu0 %v359
    %1509 = vmatprep.subr.bf16.mxu0 0
    %1510 = vmatpush1.bf16.msra.mxu0 %v357
    %1511 = vmatprep.subr.bf16.mxu0 0
    %1512 = vmatpush2.bf16.msra.mxu0 0
    %1513 = vmatprep.subr.bf16.mxu0 0
    %1514 = vmatpush2.bf16.msra.mxu0 0
    %1515 = vmatprep.subr.bf16.mxu0 0
    %1516 = vmatpush2.bf16.msra.mxu0 0
    %1517 = vmatprep.subr.bf16.mxu0 0
    %1518 = vmatpush2.bf16.msra.mxu0 0
    %1519 = vmatprep.subr.bf16.mxu0 0
    %1520 = vmatpush2.bf16.msra.mxu0 0
    %1521 = vmatprep.subr.bf16.mxu0 0
    %1522 = vmatpush2.bf16.msra.mxu0 0
    %1523 = vmatprep.subr.bf16.mxu0 0
    %1524 = vmatpush2.bf16.msra.mxu0 0
    %1525 = vmatprep.subr.bf16.mxu0 0
    %1526 = vmatpush2.bf16.msra.mxu0 0
    %1527 = vmatprep.mubr.bf16.mxu0 0
    %1528 = vmatmul.mubr.bf16.gmra.mxu0 %v1406
    %v1529 = vpop.f32.mrf.mxu0
    %v1530 = vadd.f32 0.0, %v1529
    %v1531 = vpop.f32.mrf.mxu0
    %v1532 = vpop.f32.mrf.mxu0
    %v1533 = vpop.f32.mrf.mxu0
    %1534 = vdwg.mxu0
    %1536 = vrot.lane.b32.xlu0 %v1530, 64
    %v1537 = vpop.permute.xlu0 %1536
    %v1539 = vadd.f32 %v1448, %v1537
    %1540 = vmatprep.subr.bf16.mxu0 0
    %1541 = vmatpush1.bf16.msra.mxu0 0
    %1542 = vmatprep.subr.bf16.mxu0 0
    %1543 = vmatpush1.bf16.msra.mxu0 0
    %1544 = vmatprep.subr.bf16.mxu0 0
    %1545 = vmatpush1.bf16.msra.mxu0 0
    %1546 = vmatprep.subr.bf16.mxu0 0
    %1547 = vmatpush1.bf16.msra.mxu0 0
    %1548 = vmatprep.subr.bf16.mxu0 0
    %1549 = vmatpush1.bf16.msra.mxu0 0
    %1550 = vmatprep.subr.bf16.mxu0 0
    %1551 = vmatpush1.bf16.msra.mxu0 0
    %1552 = vmatprep.subr.bf16.mxu0 0
    %1553 = vmatpush1.bf16.msra.mxu0 %v410
    %1554 = vmatprep.subr.bf16.mxu0 0
    %1555 = vmatpush1.bf16.msra.mxu0 %v408
    %1556 = vmatprep.subr.bf16.mxu0 0
    %1557 = vmatpush2.bf16.msra.mxu0 0
    %1558 = vmatprep.subr.bf16.mxu0 0
    %1559 = vmatpush2.bf16.msra.mxu0 0
    %1560 = vmatprep.subr.bf16.mxu0 0
    %1561 = vmatpush2.bf16.msra.mxu0 0
    %1562 = vmatprep.subr.bf16.mxu0 0
    %1563 = vmatpush2.bf16.msra.mxu0 0
    %1564 = vmatprep.subr.bf16.mxu0 0
    %1565 = vmatpush2.bf16.msra.mxu0 0
    %1566 = vmatprep.subr.bf16.mxu0 0
    %1567 = vmatpush2.bf16.msra.mxu0 0
    %1568 = vmatprep.subr.bf16.mxu0 0
    %1569 = vmatpush2.bf16.msra.mxu0 0
    %1570 = vmatprep.subr.bf16.mxu0 0
    %1571 = vmatpush2.bf16.msra.mxu0 0
    %1572 = vmatprep.mubr.bf16.mxu0 0
    %1573 = vmatmul.mubr.bf16.gmra.mxu0 %v1406
    %v1574 = vpop.f32.mrf.mxu0
    %v1575 = vadd.f32 0.0, %v1574
    %v1576 = vpop.f32.mrf.mxu0
    %v1577 = vpop.f32.mrf.mxu0
    %v1578 = vpop.f32.mrf.mxu0
    %1579 = vdwg.mxu0
    %1581 = vrot.lane.b32.xlu0 %v1575, 96
    %v1582 = vpop.permute.xlu0 %1581
    %v1584 = vadd.f32 %v1448, %v1582
    %v1585 = vxor.u32 %v1449, 2147483648
    %v1586 = vmul.f32 %v1585, 1.442695
    %v1587 = vpow.pop %v1586
    %v1588 = vadd.f32 %v1587, 1.0
    %v1589 = vrcp.pop %v1588
    %v1590 = vmul.f32 1.0, %v1589
    %v1591 = vxor.u32 %v1494, 2147483648
    %v1592 = vmul.f32 %v1591, 1.442695
    %v1593 = vpow.pop %v1592
    %v1594 = vadd.f32 %v1593, 1.0
    %v1595 = vrcp.pop %v1594
    %v1596 = vmul.f32 1.0, %v1595
    %v1597 = vtanh.pop %v1539
    %v1598 = vxor.u32 %v1584, 2147483648
    %v1599 = vmul.f32 %v1598, 1.442695
    %v1600 = vpow.pop %v1599
    %v1601 = vadd.f32 %v1600, 1.0
    %v1602 = vrcp.pop %v1601
    %v1603 = vmul.f32 1.0, %v1602
    %v1604 = vmul.f32 %v1596, %v1389
    %1606 = vrot.lane.b32.xlu0 %v1597, 64
    %v1607 = vpop.permute.xlu0 %1606
    %v1609 = vmul.f32 %v1590, %v1607
    %1611 = vrot.lane.b32.xlu0 %v1609, 32
    %v1612 = vpop.permute.xlu0 %1611
    %v1614 = vadd.f32 %v1604, %v1612
    %v1615 = vtanh.pop %v1614
    %1617 = vrot.lane.b32.xlu0 %v1615, 64
    %v1618 = vpop.permute.xlu0 %1617
    %v1620 = vmul.f32 %v1603, %v1618
    %v1621 = vpack.c.bf16 %v1620, %v1620
    %v1622 = vrot.slane %v233, 3
    %v1624 = vrot.slane %v239, 7
    %v1626 = vsel %vm245, %v1622, %v1624
    %1628 = vrot.lane.b32.xlu0 %v1621, 32
    %v1629 = vpop.permute.xlu0 %1628
    %v1631 = vsel %vm259, %v1629, 0
    %1633 = vmatprep.subr.bf16.mxu0 0
    %1634 = vmatpush1.bf16.msra.mxu0 0
    %1635 = vmatprep.subr.bf16.mxu0 0
    %1636 = vmatpush1.bf16.msra.mxu0 0
    %1637 = vmatprep.subr.bf16.mxu0 0
    %1638 = vmatpush1.bf16.msra.mxu0 0
    %1639 = vmatprep.subr.bf16.mxu0 0
    %1640 = vmatpush1.bf16.msra.mxu0 0
    %1641 = vmatprep.subr.bf16.mxu0 0
    %1642 = vmatpush1.bf16.msra.mxu0 0
    %1643 = vmatprep.subr.bf16.mxu0 0
    %1644 = vmatpush1.bf16.msra.mxu0 0
    %1645 = vmatprep.subr.bf16.mxu0 0
    %1646 = vmatpush1.bf16.msra.mxu0 %v256
    %1647 = vmatprep.subr.bf16.mxu0 0
    %1648 = vmatpush1.bf16.msra.mxu0 %v255
    %1649 = vmatprep.subr.bf16.mxu0 0
    %1650 = vmatpush2.bf16.msra.mxu0 0
    %1651 = vmatprep.subr.bf16.mxu0 0
    %1652 = vmatpush2.bf16.msra.mxu0 0
    %1653 = vmatprep.subr.bf16.mxu0 0
    %1654 = vmatpush2.bf16.msra.mxu0 0
    %1655 = vmatprep.subr.bf16.mxu0 0
    %1656 = vmatpush2.bf16.msra.mxu0 0
    %1657 = vmatprep.subr.bf16.mxu0 0
    %1658 = vmatpush2.bf16.msra.mxu0 0
    %1659 = vmatprep.subr.bf16.mxu0 0
    %1660 = vmatpush2.bf16.msra.mxu0 0
    %1661 = vmatprep.subr.bf16.mxu0 0
    %1662 = vmatpush2.bf16.msra.mxu0 0
    %1663 = vmatprep.subr.bf16.mxu0 0
    %1664 = vmatpush2.bf16.msra.mxu0 0
    %1665 = vmatprep.mubr.bf16.mxu0 0
    %1666 = vmatmul.mubr.bf16.gmra.mxu0 %v1631
    %v1667 = vpop.f32.mrf.mxu0
    %v1668 = vadd.f32 0.0, %v1667
    %v1669 = vpop.f32.mrf.mxu0
    %v1670 = vpop.f32.mrf.mxu0
    %v1671 = vpop.f32.mrf.mxu0
    %1672 = vdwg.mxu0
    %v1673 = vunpack.c.l.bf16 %v1626
    %v1674 = vadd.f32 %v1673, %v1668
    %1675 = vmatprep.subr.bf16.mxu0 0
    %1676 = vmatpush1.bf16.msra.mxu0 0
    %1677 = vmatprep.subr.bf16.mxu0 0
    %1678 = vmatpush1.bf16.msra.mxu0 0
    %1679 = vmatprep.subr.bf16.mxu0 0
    %1680 = vmatpush1.bf16.msra.mxu0 0
    %1681 = vmatprep.subr.bf16.mxu0 0
    %1682 = vmatpush1.bf16.msra.mxu0 0
    %1683 = vmatprep.subr.bf16.mxu0 0
    %1684 = vmatpush1.bf16.msra.mxu0 0
    %1685 = vmatprep.subr.bf16.mxu0 0
    %1686 = vmatpush1.bf16.msra.mxu0 0
    %1687 = vmatprep.subr.bf16.mxu0 0
    %1688 = vmatpush1.bf16.msra.mxu0 %v308
    %1689 = vmatprep.subr.bf16.mxu0 0
    %1690 = vmatpush1.bf16.msra.mxu0 %v306
    %1691 = vmatprep.subr.bf16.mxu0 0
    %1692 = vmatpush2.bf16.msra.mxu0 0
    %1693 = vmatprep.subr.bf16.mxu0 0
    %1694 = vmatpush2.bf16.msra.mxu0 0
    %1695 = vmatprep.subr.bf16.mxu0 0
    %1696 = vmatpush2.bf16.msra.mxu0 0
    %1697 = vmatprep.subr.bf16.mxu0 0
    %1698 = vmatpush2.bf16.msra.mxu0 0
    %1699 = vmatprep.subr.bf16.mxu0 0
    %1700 = vmatpush2.bf16.msra.mxu0 0
    %1701 = vmatprep.subr.bf16.mxu0 0
    %1702 = vmatpush2.bf16.msra.mxu0 0
    %1703 = vmatprep.subr.bf16.mxu0 0
    %1704 = vmatpush2.bf16.msra.mxu0 0
    %1705 = vmatprep.subr.bf16.mxu0 0
    %1706 = vmatpush2.bf16.msra.mxu0 0
    %1707 = vmatprep.mubr.bf16.mxu0 0
    %1708 = vmatmul.mubr.bf16.gmra.mxu0 %v1631
    %v1709 = vpop.f32.mrf.mxu0
    %v1710 = vadd.f32 0.0, %v1709
    %v1711 = vpop.f32.mrf.mxu0
    %v1712 = vpop.f32.mrf.mxu0
    %v1713 = vpop.f32.mrf.mxu0
    %1714 = vdwg.mxu0
    %1716 = vrot.lane.b32.xlu0 %v1710, 32
    %v1717 = vpop.permute.xlu0 %1716
    %v1719 = vadd.f32 %v1673, %v1717
    %1720 = vmatprep.subr.bf16.mxu0 0
    %1721 = vmatpush1.bf16.msra.mxu0 0
    %1722 = vmatprep.subr.bf16.mxu0 0
    %1723 = vmatpush1.bf16.msra.mxu0 0
    %1724 = vmatprep.subr.bf16.mxu0 0
    %1725 = vmatpush1.bf16.msra.mxu0 0
    %1726 = vmatprep.subr.bf16.mxu0 0
    %1727 = vmatpush1.bf16.msra.mxu0 0
    %1728 = vmatprep.subr.bf16.mxu0 0
    %1729 = vmatpush1.bf16.msra.mxu0 0
    %1730 = vmatprep.subr.bf16.mxu0 0
    %1731 = vmatpush1.bf16.msra.mxu0 0
    %1732 = vmatprep.subr.bf16.mxu0 0
    %1733 = vmatpush1.bf16.msra.mxu0 %v359
    %1734 = vmatprep.subr.bf16.mxu0 0
    %1735 = vmatpush1.bf16.msra.mxu0 %v357
    %1736 = vmatprep.subr.bf16.mxu0 0
    %1737 = vmatpush2.bf16.msra.mxu0 0
    %1738 = vmatprep.subr.bf16.mxu0 0
    %1739 = vmatpush2.bf16.msra.mxu0 0
    %1740 = vmatprep.subr.bf16.mxu0 0
    %1741 = vmatpush2.bf16.msra.mxu0 0
    %1742 = vmatprep.subr.bf16.mxu0 0
    %1743 = vmatpush2.bf16.msra.mxu0 0
    %1744 = vmatprep.subr.bf16.mxu0 0
    %1745 = vmatpush2.bf16.msra.mxu0 0
    %1746 = vmatprep.subr.bf16.mxu0 0
    %1747 = vmatpush2.bf16.msra.mxu0 0
    %1748 = vmatprep.subr.bf16.mxu0 0
    %1749 = vmatpush2.bf16.msra.mxu0 0
    %1750 = vmatprep.subr.bf16.mxu0 0
    %1751 = vmatpush2.bf16.msra.mxu0 0
    %1752 = vmatprep.mubr.bf16.mxu0 0
    %1753 = vmatmul.mubr.bf16.gmra.mxu0 %v1631
    %v1754 = vpop.f32.mrf.mxu0
    %v1755 = vadd.f32 0.0, %v1754
    %v1756 = vpop.f32.mrf.mxu0
    %v1757 = vpop.f32.mrf.mxu0
    %v1758 = vpop.f32.mrf.mxu0
    %1759 = vdwg.mxu0
    %1761 = vrot.lane.b32.xlu0 %v1755, 64
    %v1762 = vpop.permute.xlu0 %1761
    %v1764 = vadd.f32 %v1673, %v1762
    %1765 = vmatprep.subr.bf16.mxu0 0
    %1766 = vmatpush1.bf16.msra.mxu0 0
    %1767 = vmatprep.subr.bf16.mxu0 0
    %1768 = vmatpush1.bf16.msra.mxu0 0
    %1769 = vmatprep.subr.bf16.mxu0 0
    %1770 = vmatpush1.bf16.msra.mxu0 0
    %1771 = vmatprep.subr.bf16.mxu0 0
    %1772 = vmatpush1.bf16.msra.mxu0 0
    %1773 = vmatprep.subr.bf16.mxu0 0
    %1774 = vmatpush1.bf16.msra.mxu0 0
    %1775 = vmatprep.subr.bf16.mxu0 0
    %1776 = vmatpush1.bf16.msra.mxu0 0
    %1777 = vmatprep.subr.bf16.mxu0 0
    %1778 = vmatpush1.bf16.msra.mxu0 %v410
    %1779 = vmatprep.subr.bf16.mxu0 0
    %1780 = vmatpush1.bf16.msra.mxu0 %v408
    %1781 = vmatprep.subr.bf16.mxu0 0
    %1782 = vmatpush2.bf16.msra.mxu0 0
    %1783 = vmatprep.subr.bf16.mxu0 0
    %1784 = vmatpush2.bf16.msra.mxu0 0
    %1785 = vmatprep.subr.bf16.mxu0 0
    %1786 = vmatpush2.bf16.msra.mxu0 0
    %1787 = vmatprep.subr.bf16.mxu0 0
    %1788 = vmatpush2.bf16.msra.mxu0 0
    %1789 = vmatprep.subr.bf16.mxu0 0
    %1790 = vmatpush2.bf16.msra.mxu0 0
    %1791 = vmatprep.subr.bf16.mxu0 0
    %1792 = vmatpush2.bf16.msra.mxu0 0
    %1793 = vmatprep.subr.bf16.mxu0 0
    %1794 = vmatpush2.bf16.msra.mxu0 0
    %1795 = vmatprep.subr.bf16.mxu0 0
    %1796 = vmatpush2.bf16.msra.mxu0 0
    %1797 = vmatprep.mubr.bf16.mxu0 0
    %1798 = vmatmul.mubr.bf16.gmra.mxu0 %v1631
    %v1799 = vpop.f32.mrf.mxu0
    %v1800 = vadd.f32 0.0, %v1799
    %v1801 = vpop.f32.mrf.mxu0
    %v1802 = vpop.f32.mrf.mxu0
    %v1803 = vpop.f32.mrf.mxu0
    %1804 = vdwg.mxu0
    %1806 = vrot.lane.b32.xlu0 %v1800, 96
    %v1807 = vpop.permute.xlu0 %1806
    %v1809 = vadd.f32 %v1673, %v1807
    %v1810 = vxor.u32 %v1674, 2147483648
    %v1811 = vmul.f32 %v1810, 1.442695
    %v1812 = vpow.pop %v1811
    %v1813 = vadd.f32 %v1812, 1.0
    %v1814 = vrcp.pop %v1813
    %v1815 = vmul.f32 1.0, %v1814
    %v1816 = vxor.u32 %v1719, 2147483648
    %v1817 = vmul.f32 %v1816, 1.442695
    %v1818 = vpow.pop %v1817
    %v1819 = vadd.f32 %v1818, 1.0
    %v1820 = vrcp.pop %v1819
    %v1821 = vmul.f32 1.0, %v1820
    %v1822 = vtanh.pop %v1764
    %v1823 = vxor.u32 %v1809, 2147483648
    %v1824 = vmul.f32 %v1823, 1.442695
    %v1825 = vpow.pop %v1824
    %v1826 = vadd.f32 %v1825, 1.0
    %v1827 = vrcp.pop %v1826
    %v1828 = vmul.f32 1.0, %v1827
    %v1829 = vmul.f32 %v1821, %v1614
    %1831 = vrot.lane.b32.xlu0 %v1822, 64
    %v1832 = vpop.permute.xlu0 %1831
    %v1834 = vmul.f32 %v1815, %v1832
    %1836 = vrot.lane.b32.xlu0 %v1834, 32
    %v1837 = vpop.permute.xlu0 %1836
    %v1839 = vadd.f32 %v1829, %v1837
    %v1840 = vtanh.pop %v1839
    %1842 = vrot.lane.b32.xlu0 %v1840, 64
    %v1843 = vpop.permute.xlu0 %1842
    %v1845 = vmul.f32 %v1828, %v1843
    %v1846 = vpack.c.bf16 %v1845, %v1845
    %v1847 = vrot.slane %v495, 3
    %v1849 = vrot.slane %v233, 7
    %v1851 = vsel %vm245, %v1847, %v1849
    %1853 = vrot.lane.b32.xlu0 %v1846, 32
    %v1854 = vpop.permute.xlu0 %1853
    %v1856 = vsel %vm259, %v1854, 0
    %1858 = vmatprep.subr.bf16.mxu0 0
    %1859 = vmatpush1.bf16.msra.mxu0 0
    %1860 = vmatprep.subr.bf16.mxu0 0
    %1861 = vmatpush1.bf16.msra.mxu0 0
    %1862 = vmatprep.subr.bf16.mxu0 0
    %1863 = vmatpush1.bf16.msra.mxu0 0
    %1864 = vmatprep.subr.bf16.mxu0 0
    %1865 = vmatpush1.bf16.msra.mxu0 0
    %1866 = vmatprep.subr.bf16.mxu0 0
    %1867 = vmatpush1.bf16.msra.mxu0 0
    %1868 = vmatprep.subr.bf16.mxu0 0
    %1869 = vmatpush1.bf16.msra.mxu0 0
    %1870 = vmatprep.subr.bf16.mxu0 0
    %1871 = vmatpush1.bf16.msra.mxu0 %v256
    %1872 = vmatprep.subr.bf16.mxu0 0
    %1873 = vmatpush1.bf16.msra.mxu0 %v255
    %1874 = vmatprep.subr.bf16.mxu0 0
    %1875 = vmatpush2.bf16.msra.mxu0 0
    %1876 = vmatprep.subr.bf16.mxu0 0
    %1877 = vmatpush2.bf16.msra.mxu0 0
    %1878 = vmatprep.subr.bf16.mxu0 0
    %1879 = vmatpush2.bf16.msra.mxu0 0
    %1880 = vmatprep.subr.bf16.mxu0 0
    %1881 = vmatpush2.bf16.msra.mxu0 0
    %1882 = vmatprep.subr.bf16.mxu0 0
    %1883 = vmatpush2.bf16.msra.mxu0 0
    %1884 = vmatprep.subr.bf16.mxu0 0
    %1885 = vmatpush2.bf16.msra.mxu0 0
    %1886 = vmatprep.subr.bf16.mxu0 0
    %1887 = vmatpush2.bf16.msra.mxu0 0
    %1888 = vmatprep.subr.bf16.mxu0 0
    %1889 = vmatpush2.bf16.msra.mxu0 0
    %1890 = vmatprep.mubr.bf16.mxu0 0
    %1891 = vmatmul.mubr.bf16.gmra.mxu0 %v1856
    %v1892 = vpop.f32.mrf.mxu0
    %v1893 = vadd.f32 0.0, %v1892
    %v1894 = vpop.f32.mrf.mxu0
    %v1895 = vpop.f32.mrf.mxu0
    %v1896 = vpop.f32.mrf.mxu0
    %1897 = vdwg.mxu0
    %v1898 = vunpack.c.l.bf16 %v1851
    %v1899 = vadd.f32 %v1898, %v1893
    %1900 = vmatprep.subr.bf16.mxu0 0
    %1901 = vmatpush1.bf16.msra.mxu0 0
    %1902 = vmatprep.subr.bf16.mxu0 0
    %1903 = vmatpush1.bf16.msra.mxu0 0
    %1904 = vmatprep.subr.bf16.mxu0 0
    %1905 = vmatpush1.bf16.msra.mxu0 0
    %1906 = vmatprep.subr.bf16.mxu0 0
    %1907 = vmatpush1.bf16.msra.mxu0 0
    %1908 = vmatprep.subr.bf16.mxu0 0
    %1909 = vmatpush1.bf16.msra.mxu0 0
    %1910 = vmatprep.subr.bf16.mxu0 0
    %1911 = vmatpush1.bf16.msra.mxu0 0
    %1912 = vmatprep.subr.bf16.mxu0 0
    %1913 = vmatpush1.bf16.msra.mxu0 %v308
    %1914 = vmatprep.subr.bf16.mxu0 0
    %1915 = vmatpush1.bf16.msra.mxu0 %v306
    %1916 = vmatprep.subr.bf16.mxu0 0
    %1917 = vmatpush2.bf16.msra.mxu0 0
    %1918 = vmatprep.subr.bf16.mxu0 0
    %1919 = vmatpush2.bf16.msra.mxu0 0
    %1920 = vmatprep.subr.bf16.mxu0 0
    %1921 = vmatpush2.bf16.msra.mxu0 0
    %1922 = vmatprep.subr.bf16.mxu0 0
    %1923 = vmatpush2.bf16.msra.mxu0 0
    %1924 = vmatprep.subr.bf16.mxu0 0
    %1925 = vmatpush2.bf16.msra.mxu0 0
    %1926 = vmatprep.subr.bf16.mxu0 0
    %1927 = vmatpush2.bf16.msra.mxu0 0
    %1928 = vmatprep.subr.bf16.mxu0 0
    %1929 = vmatpush2.bf16.msra.mxu0 0
    %1930 = vmatprep.subr.bf16.mxu0 0
    %1931 = vmatpush2.bf16.msra.mxu0 0
    %1932 = vmatprep.mubr.bf16.mxu0 0
    %1933 = vmatmul.mubr.bf16.gmra.mxu0 %v1856
    %v1934 = vpop.f32.mrf.mxu0
    %v1935 = vadd.f32 0.0, %v1934
    %v1936 = vpop.f32.mrf.mxu0
    %v1937 = vpop.f32.mrf.mxu0
    %v1938 = vpop.f32.mrf.mxu0
    %1939 = vdwg.mxu0
    %1941 = vrot.lane.b32.xlu0 %v1935, 32
    %v1942 = vpop.permute.xlu0 %1941
    %v1944 = vadd.f32 %v1898, %v1942
    %1945 = vmatprep.subr.bf16.mxu0 0
    %1946 = vmatpush1.bf16.msra.mxu0 0
    %1947 = vmatprep.subr.bf16.mxu0 0
    %1948 = vmatpush1.bf16.msra.mxu0 0
    %1949 = vmatprep.subr.bf16.mxu0 0
    %1950 = vmatpush1.bf16.msra.mxu0 0
    %1951 = vmatprep.subr.bf16.mxu0 0
    %1952 = vmatpush1.bf16.msra.mxu0 0
    %1953 = vmatprep.subr.bf16.mxu0 0
    %1954 = vmatpush1.bf16.msra.mxu0 0
    %1955 = vmatprep.subr.bf16.mxu0 0
    %1956 = vmatpush1.bf16.msra.mxu0 0
    %1957 = vmatprep.subr.bf16.mxu0 0
    %1958 = vmatpush1.bf16.msra.mxu0 %v359
    %1959 = vmatprep.subr.bf16.mxu0 0
    %1960 = vmatpush1.bf16.msra.mxu0 %v357
    %1961 = vmatprep.subr.bf16.mxu0 0
    %1962 = vmatpush2.bf16.msra.mxu0 0
    %1963 = vmatprep.subr.bf16.mxu0 0
    %1964 = vmatpush2.bf16.msra.mxu0 0
    %1965 = vmatprep.subr.bf16.mxu0 0
    %1966 = vmatpush2.bf16.msra.mxu0 0
    %1967 = vmatprep.subr.bf16.mxu0 0
    %1968 = vmatpush2.bf16.msra.mxu0 0
    %1969 = vmatprep.subr.bf16.mxu0 0
    %1970 = vmatpush2.bf16.msra.mxu0 0
    %1971 = vmatprep.subr.bf16.mxu0 0
    %1972 = vmatpush2.bf16.msra.mxu0 0
    %1973 = vmatprep.subr.bf16.mxu0 0
    %1974 = vmatpush2.bf16.msra.mxu0 0
    %1975 = vmatprep.subr.bf16.mxu0 0
    %1976 = vmatpush2.bf16.msra.mxu0 0
    %1977 = vmatprep.mubr.bf16.mxu0 0
    %1978 = vmatmul.mubr.bf16.gmra.mxu0 %v1856
    %v1979 = vpop.f32.mrf.mxu0
    %v1980 = vadd.f32 0.0, %v1979
    %v1981 = vpop.f32.mrf.mxu0
    %v1982 = vpop.f32.mrf.mxu0
    %v1983 = vpop.f32.mrf.mxu0
    %1984 = vdwg.mxu0
    %1986 = vrot.lane.b32.xlu0 %v1980, 64
    %v1987 = vpop.permute.xlu0 %1986
    %v1989 = vadd.f32 %v1898, %v1987
    %1990 = vmatprep.subr.bf16.mxu0 0
    %1991 = vmatpush1.bf16.msra.mxu0 0
    %1992 = vmatprep.subr.bf16.mxu0 0
    %1993 = vmatpush1.bf16.msra.mxu0 0
    %1994 = vmatprep.subr.bf16.mxu0 0
    %1995 = vmatpush1.bf16.msra.mxu0 0
    %1996 = vmatprep.subr.bf16.mxu0 0
    %1997 = vmatpush1.bf16.msra.mxu0 0
    %1998 = vmatprep.subr.bf16.mxu0 0
    %1999 = vmatpush1.bf16.msra.mxu0 0
    %2000 = vmatprep.subr.bf16.mxu0 0
    %2001 = vmatpush1.bf16.msra.mxu0 0
    %2002 = vmatprep.subr.bf16.mxu0 0
    %2003 = vmatpush1.bf16.msra.mxu0 %v410
    %2004 = vmatprep.subr.bf16.mxu0 0
    %2005 = vmatpush1.bf16.msra.mxu0 %v408
    %2006 = vmatprep.subr.bf16.mxu0 0
    %2007 = vmatpush2.bf16.msra.mxu0 0
    %2008 = vmatprep.subr.bf16.mxu0 0
    %2009 = vmatpush2.bf16.msra.mxu0 0
    %2010 = vmatprep.subr.bf16.mxu0 0
    %2011 = vmatpush2.bf16.msra.mxu0 0
    %2012 = vmatprep.subr.bf16.mxu0 0
    %2013 = vmatpush2.bf16.msra.mxu0 0
    %2014 = vmatprep.subr.bf16.mxu0 0
    %2015 = vmatpush2.bf16.msra.mxu0 0
    %2016 = vmatprep.subr.bf16.mxu0 0
    %2017 = vmatpush2.bf16.msra.mxu0 0
    %2018 = vmatprep.subr.bf16.mxu0 0
    %2019 = vmatpush2.bf16.msra.mxu0 0
    %2020 = vmatprep.subr.bf16.mxu0 0
    %2021 = vmatpush2.bf16.msra.mxu0 0
    %2022 = vmatprep.mubr.bf16.mxu0 0
    %2023 = vmatmul.mubr.bf16.gmra.mxu0 %v1856
    %v2024 = vpop.f32.mrf.mxu0
    %v2025 = vadd.f32 0.0, %v2024
    %v2026 = vpop.f32.mrf.mxu0
    %v2027 = vpop.f32.mrf.mxu0
    %v2028 = vpop.f32.mrf.mxu0
    %2029 = vdwg.mxu0
    %2031 = vrot.lane.b32.xlu0 %v2025, 96
    %v2032 = vpop.permute.xlu0 %2031
    %v2034 = vadd.f32 %v1898, %v2032
    %v2035 = vxor.u32 %v1899, 2147483648
    %v2036 = vmul.f32 %v2035, 1.442695
    %v2037 = vpow.pop %v2036
    %v2038 = vadd.f32 %v2037, 1.0
    %v2039 = vrcp.pop %v2038
    %v2040 = vmul.f32 1.0, %v2039
    %v2041 = vxor.u32 %v1944, 2147483648
    %v2042 = vmul.f32 %v2041, 1.442695
    %v2043 = vpow.pop %v2042
    %v2044 = vadd.f32 %v2043, 1.0
    %v2045 = vrcp.pop %v2044
    %v2046 = vmul.f32 1.0, %v2045
    %v2047 = vtanh.pop %v1989
    %v2048 = vxor.u32 %v2034, 2147483648
    %v2049 = vmul.f32 %v2048, 1.442695
    %v2050 = vpow.pop %v2049
    %v2051 = vadd.f32 %v2050, 1.0
    %v2052 = vrcp.pop %v2051
    %v2053 = vmul.f32 1.0, %v2052
    %v2054 = vmul.f32 %v2046, %v1839
    %2056 = vrot.lane.b32.xlu0 %v2047, 64
    %v2057 = vpop.permute.xlu0 %2056
    %v2059 = vmul.f32 %v2040, %v2057
    %2061 = vrot.lane.b32.xlu0 %v2059, 32
    %v2062 = vpop.permute.xlu0 %2061
    %v2064 = vadd.f32 %v2054, %v2062
    %v2065 = vtanh.pop %v2064
    %2067 = vrot.lane.b32.xlu0 %v2065, 64
    %v2068 = vpop.permute.xlu0 %2067
    %v2070 = vmul.f32 %v2053, %v2068
    %v2071 = vpack.c.bf16 %v2070, %v2070
    %v2073 = vshll.u32 %v721, 16
    %v2076 = vrot.slane %v946, 7
    %v2078 = vshll.u32 %v1171, 16
    %v2080 = vrot.slane %v2078, 7
    %v2082 = vrot.slane %v1396, 6
    %v2084 = vshll.u32 %v1621, 16
    %v2086 = vrot.slane %v2084, 6
    %v2088 = vrot.slane %v1846, 5
    %v2090 = vshll.u32 %v2071, 16
    %v2092 = vrot.slane %v2090, 5
    %v2094 = vsel %vm245, %v494, %v2073
    %vm2095 = vcmask 1040384
    %v2098 = vsel %vm2095, %v2094, %v2076
    %vm2100 = vcmask 1041408
    %vm2101 = vsmask.f32 1280
    %vm2102 = vmand %vm2100, %vm2101
    %v2103 = vsel %vm2102, %v2098, %v2080
    %vm2104 = vcmask 1041408
    %v2107 = vsel %vm2104, %v2103, %v2082
    %vm2109 = vcmask 1042432
    %vm2110 = vsmask.f32 2304
    %vm2111 = vmand %vm2109, %vm2110
    %v2112 = vsel %vm2111, %v2107, %v2086
    %vm2113 = vcmask 1042432
    %v2116 = vsel %vm2113, %v2112, %v2088
    %vm2118 = vcmask 1043456
    %vm2119 = vsmask.f32 3328
    %vm2120 = vmand %vm2118, %vm2119
    %v2121 = vsel %vm2120, %v2116, %v2092
    %v2123 = vshrl.u32 %v494, 16
    %v2127 = vshrl.u32 %v946, 16
    %v2129 = vrot.slane %v2127, 7
    %v2130 = vrot.slane %v1171, 7
    %v2133 = vshrl.u32 %v1396, 16
    %v2135 = vrot.slane %v2133, 6
    %v2136 = vrot.slane %v1621, 6
    %v2139 = vshrl.u32 %v1846, 16
    %v2141 = vrot.slane %v2139, 5
    %v2143 = vrot.slane %v2071, 5
    %v2145 = vsel %vm245, %v2123, %v721
    %v2148 = vsel %vm2095, %v2145, %v2129
    %v2150 = vsel %vm2102, %v2148, %v2130
    %v2153 = vsel %vm2104, %v2150, %v2135
    %v2155 = vsel %vm2111, %v2153, %v2136
    %v2158 = vsel %vm2113, %v2155, %v2141
    %v2160 = vsel %vm2120, %v2158, %v2143
    %v2162 = vrot.slane %v2160, 4
    %v2165 = vsel %vm188, %v2121, %v2162
    %v2167 = vld [vmem:[#allocation7] sm:$0xf]
    %v2168 = vld [vmem:[#allocation7 + $0x4] sm:$0xf]
    %v2169 = vld [vmem:[#allocation7 + $0x8] sm:$0xf]
    %v2170 = vld [vmem:[#allocation7 + $0xc] sm:$0xf]
    %v2171 = vld [vmem:[#allocation8] sm:$0x1]
    %v2173 = vlaneseq
    %v2174 = vshrl.u32 %v2173, 7
    %v2175 = vsub.s32 0, %v2174
    %v2176 = vrot.slane %v2171, %v2175
    %2179 = vrot.lane.b32.xlu0 %v2165, 32
    %v2180 = vpop.permute.xlu0 %2179
    %v2185 = vunpack.c.l.b16 %v2167
    %v2186 = vunpack.c.l.b16 %v2168
    %v2187 = vunpack.c.l.b16 %v2169
    %v2188 = vunpack.c.l.b16 %v2170
    %v2189 = vpack.c.b16 %v2186, %v2185
    %v2190 = vpack.c.b16 %v2188, %v2187
    %v2194 = vsel %vm259, %v2180, 0
    %2196 = vmatprep.subr.bf16.mxu0 0
    %2197 = vmatpush1.bf16.msra.mxu0 0
    %2198 = vmatprep.subr.bf16.mxu0 0
    %2199 = vmatpush1.bf16.msra.mxu0 0
    %2200 = vmatprep.subr.bf16.mxu0 0
    %2201 = vmatpush1.bf16.msra.mxu0 0
    %2202 = vmatprep.subr.bf16.mxu0 0
    %2203 = vmatpush1.bf16.msra.mxu0 0
    %2204 = vmatprep.subr.bf16.mxu0 0
    %2205 = vmatpush1.bf16.msra.mxu0 0
    %2206 = vmatprep.subr.bf16.mxu0 0
    %2207 = vmatpush1.bf16.msra.mxu0 0
    %2208 = vmatprep.subr.bf16.mxu0 0
    %2209 = vmatpush1.bf16.msra.mxu0 %v2190
    %2210 = vmatprep.subr.bf16.mxu0 0
    %2211 = vmatpush1.bf16.msra.mxu0 %v2189
    %2212 = vmatprep.subr.bf16.mxu0 0
    %2213 = vmatpush2.bf16.msra.mxu0 0
    %2214 = vmatprep.subr.bf16.mxu0 0
    %2215 = vmatpush2.bf16.msra.mxu0 0
    %2216 = vmatprep.subr.bf16.mxu0 0
    %2217 = vmatpush2.bf16.msra.mxu0 0
    %2218 = vmatprep.subr.bf16.mxu0 0
    %2219 = vmatpush2.bf16.msra.mxu0 0
    %2220 = vmatprep.subr.bf16.mxu0 0
    %2221 = vmatpush2.bf16.msra.mxu0 0
    %2222 = vmatprep.subr.bf16.mxu0 0
    %2223 = vmatpush2.bf16.msra.mxu0 0
    %2224 = vmatprep.subr.bf16.mxu0 0
    %2225 = vmatpush2.bf16.msra.mxu0 0
    %2226 = vmatprep.subr.bf16.mxu0 0
    %2227 = vmatpush2.bf16.msra.mxu0 0
    %2228 = vmatprep.mubr.bf16.mxu0 0
    %2229 = vmatmul.mubr.bf16.gmra.mxu0 %v2194
    %v2230 = vpop.f32.mrf.mxu0
    %v2231 = vadd.f32 %v2176, %v2230
    %v2232 = vpop.f32.mrf.mxu0
    %v2233 = vpop.f32.mrf.mxu0
    %v2234 = vadd.f32 %v2176, %v2233
    %v2235 = vpop.f32.mrf.mxu0
    %2236 = vdwg.mxu0
    %v2237 = vpack.c.bf16 %v2231, %v2231
    %2239 = vrot.lane.b32.xlu0 %v2237, 96
    %v2240 = vpop.permute.xlu0 %2239
    %v2242 = vsel %vm184, %v2237, 0
    %v2245 = vsel %vm184, %v2240, 0
    %2247 = vmatprep.subr.bf16.mxu0 0
    %2248 = vmatpush1.bf16.xpose.msra.mxu0 0
    %2249 = vmatprep.subr.bf16.mxu0 0
    %2250 = vmatpush1.bf16.xpose.msra.mxu0 0
    %2251 = vmatprep.subr.bf16.mxu0 0
    %2252 = vmatpush1.bf16.xpose.msra.mxu0 0
    %2253 = vmatprep.subr.bf16.mxu0 0
    %2254 = vmatpush1.bf16.xpose.msra.mxu0 0
    %2255 = vmatprep.subr.bf16.mxu0 0
    %2256 = vmatpush1.bf16.xpose.msra.mxu0 0
    %2257 = vmatprep.subr.bf16.mxu0 0
    %2258 = vmatpush1.bf16.xpose.msra.mxu0 0
    %2259 = vmatprep.subr.bf16.mxu0 0
    %2260 = vmatpush1.bf16.xpose.msra.mxu0 0
    %2261 = vmatprep.subr.bf16.mxu0 0
    %2262 = vmatpush1.bf16.xpose.msra.mxu0 %v2245
    %2263 = vmatprep.subr.bf16.mxu0 0
    %2264 = vmatpush2.bf16.xpose.msra.mxu0 0
    %2265 = vmatprep.subr.bf16.mxu0 0
    %2266 = vmatpush2.bf16.xpose.msra.mxu0 0
    %2267 = vmatprep.subr.bf16.mxu0 0
    %2268 = vmatpush2.bf16.xpose.msra.mxu0 0
    %2269 = vmatprep.subr.bf16.mxu0 0
    %2270 = vmatpush2.bf16.xpose.msra.mxu0 0
    %2271 = vmatprep.subr.bf16.mxu0 0
    %2272 = vmatpush2.bf16.xpose.msra.mxu0 0
    %2273 = vmatprep.subr.bf16.mxu0 0
    %2274 = vmatpush2.bf16.xpose.msra.mxu0 0
    %2275 = vmatprep.subr.bf16.mxu0 0
    %2276 = vmatpush2.bf16.xpose.msra.mxu0 0
    %2277 = vmatprep.subr.bf16.mxu0 0
    %2278 = vmatpush2.bf16.xpose.msra.mxu0 0
    %2279 = vmatprep.mubr.bf16.mxu0 0
    %2280 = vmatmul.mubr.bf16.gmra.mxu0 %v2242
    %v2281 = vpop.f32.mrf.mxu0
    %v2282 = vadd.f32 0.0, %v2281
    %v2283 = vpop.f32.mrf.mxu0
    %v2284 = vpop.f32.mrf.mxu0
    %v2285 = vpop.f32.mrf.mxu0
    %2286 = vdwg.mxu0
    %v2287 = vmul.f32 %v2282, 0.35355338
    %v2288 = vsel %vm184, %v2287, -inf
    %2289 = vmax.xlane.f32.xlu0 %v2288
    %v2290 = vpop.xlane.xlu0 %2289
    %v2291 = vsub.f32 %v2287, %v2290
    %v2292 = vmul.f32 %v2291, 1.442695
    %v2293 = vpow.pop %v2292
    %v2294 = vsel %vm184, %v2293, 0.0
    %2295 = vadd.xlane.f32.xlu0 %v2294
    %v2296 = vpop.xlane.xlu0 %2295
    %v2297 = vrcp.pop %v2296
    %v2298 = vmul.f32 %v2293, %v2297
    %v2299 = vpack.c.bf16 %v2298, %v2298
    %2300 = vrot.lane.b32.xlu0 %v2237, 64
    %v2301 = vpop.permute.xlu0 %2300
    %v2303 = vsel %vm184, %v2299, 0
    %v2306 = vsel %vm188, %v2301, 0
    %2308 = vmatprep.subr.bf16.mxu0 0
    %2309 = vmatpush1.bf16.msra.mxu0 0
    %2310 = vmatprep.subr.bf16.mxu0 0
    %2311 = vmatpush1.bf16.msra.mxu0 0
    %2312 = vmatprep.subr.bf16.mxu0 0
    %2313 = vmatpush1.bf16.msra.mxu0 0
    %2314 = vmatprep.subr.bf16.mxu0 0
    %2315 = vmatpush1.bf16.msra.mxu0 0
    %2316 = vmatprep.subr.bf16.mxu0 0
    %2317 = vmatpush1.bf16.msra.mxu0 0
    %2318 = vmatprep.subr.bf16.mxu0 0
    %2319 = vmatpush1.bf16.msra.mxu0 0
    %2320 = vmatprep.subr.bf16.mxu0 0
    %2321 = vmatpush1.bf16.msra.mxu0 0
    %2322 = vmatprep.subr.bf16.mxu0 0
    %2323 = vmatpush1.bf16.msra.mxu0 %v2306
    %2324 = vmatprep.subr.bf16.mxu0 0
    %2325 = vmatpush2.bf16.msra.mxu0 0
    %2326 = vmatprep.subr.bf16.mxu0 0
    %2327 = vmatpush2.bf16.msra.mxu0 0
    %2328 = vmatprep.subr.bf16.mxu0 0
    %2329 = vmatpush2.bf16.msra.mxu0 0
    %2330 = vmatprep.subr.bf16.mxu0 0
    %2331 = vmatpush2.bf16.msra.mxu0 0
    %2332 = vmatprep.subr.bf16.mxu0 0
    %2333 = vmatpush2.bf16.msra.mxu0 0
    %2334 = vmatprep.subr.bf16.mxu0 0
    %2335 = vmatpush2.bf16.msra.mxu0 0
    %2336 = vmatprep.subr.bf16.mxu0 0
    %2337 = vmatpush2.bf16.msra.mxu0 0
    %2338 = vmatprep.subr.bf16.mxu0 0
    %2339 = vmatpush2.bf16.msra.mxu0 0
    %2340 = vmatprep.mubr.bf16.mxu0 0
    %2341 = vmatmul.mubr.bf16.gmra.mxu0 %v2303
    %v2342 = vpop.f32.mrf.mxu0
    %v2343 = vadd.f32 0.0, %v2342
    %v2344 = vpop.f32.mrf.mxu0
    %v2345 = vpop.f32.mrf.mxu0
    %v2346 = vpop.f32.mrf.mxu0
    %2347 = vdwg.mxu0
    %2348 = vrot.lane.b32.xlu0 %v2237, 120
    %v2349 = vpop.permute.xlu0 %2348
    %2350 = vrot.lane.b32.xlu0 %v2237, 88
    %v2351 = vpop.permute.xlu0 %2350
    %v2353 = vsel %vm184, %v2349, 0
    %v2356 = vsel %vm184, %v2351, 0
    %2358 = vmatprep.subr.bf16.mxu0 0
    %2359 = vmatpush1.bf16.xpose.msra.mxu0 0
    %2360 = vmatprep.subr.bf16.mxu0 0
    %2361 = vmatpush1.bf16.xpose.msra.mxu0 0
    %2362 = vmatprep.subr.bf16.mxu0 0
    %2363 = vmatpush1.bf16.xpose.msra.mxu0 0
    %2364 = vmatprep.subr.bf16.mxu0 0
    %2365 = vmatpush1.bf16.xpose.msra.mxu0 0
    %2366 = vmatprep.subr.bf16.mxu0 0
    %2367 = vmatpush1.bf16.xpose.msra.mxu0 0
    %2368 = vmatprep.subr.bf16.mxu0 0
    %2369 = vmatpush1.bf16.xpose.msra.mxu0 0
    %2370 = vmatprep.subr.bf16.mxu0 0
    %2371 = vmatpush1.bf16.xpose.msra.mxu0 0
    %2372 = vmatprep.subr.bf16.mxu0 0
    %2373 = vmatpush1.bf16.xpose.msra.mxu0 %v2356
    %2374 = vmatprep.subr.bf16.mxu0 0
    %2375 = vmatpush2.bf16.xpose.msra.mxu0 0
    %2376 = vmatprep.subr.bf16.mxu0 0
    %2377 = vmatpush2.bf16.xpose.msra.mxu0 0
    %2378 = vmatprep.subr.bf16.mxu0 0
    %2379 = vmatpush2.bf16.xpose.msra.mxu0 0
    %2380 = vmatprep.subr.bf16.mxu0 0
    %2381 = vmatpush2.bf16.xpose.msra.mxu0 0
    %2382 = vmatprep.subr.bf16.mxu0 0
    %2383 = vmatpush2.bf16.xpose.msra.mxu0 0
    %2384 = vmatprep.subr.bf16.mxu0 0
    %2385 = vmatpush2.bf16.xpose.msra.mxu0 0
    %2386 = vmatprep.subr.bf16.mxu0 0
    %2387 = vmatpush2.bf16.xpose.msra.mxu0 0
    %2388 = vmatprep.subr.bf16.mxu0 0
    %2389 = vmatpush2.bf16.xpose.msra.mxu0 0
    %2390 = vmatprep.mubr.bf16.mxu0 0
    %2391 = vmatmul.mubr.bf16.gmra.mxu0 %v2353
    %v2392 = vpop.f32.mrf.mxu0
    %v2393 = vadd.f32 0.0, %v2392
    %v2394 = vpop.f32.mrf.mxu0
    %v2395 = vpop.f32.mrf.mxu0
    %v2396 = vpop.f32.mrf.mxu0
    %2397 = vdwg.mxu0
    %v2398 = vmul.f32 %v2393, 0.35355338
    %v2399 = vsel %vm184, %v2398, -inf
    %2400 = vmax.xlane.f32.xlu0 %v2399
    %v2401 = vpop.xlane.xlu0 %2400
    %v2402 = vsub.f32 %v2398, %v2401
    %v2403 = vmul.f32 %v2402, 1.442695
    %v2404 = vpow.pop %v2403
    %v2405 = vsel %vm184, %v2404, 0.0
    %2406 = vadd.xlane.f32.xlu0 %v2405
    %v2407 = vpop.xlane.xlu0 %2406
    %v2408 = vrcp.pop %v2407
    %v2409 = vmul.f32 %v2404, %v2408
    %v2410 = vpack.c.bf16 %v2409, %v2409
    %2411 = vrot.lane.b32.xlu0 %v2237, 56
    %v2412 = vpop.permute.xlu0 %2411
    %v2414 = vsel %vm184, %v2410, 0
    %v2417 = vsel %vm188, %v2412, 0
    %2419 = vmatprep.subr.bf16.mxu0 0
    %2420 = vmatpush1.bf16.msra.mxu0 0
    %2421 = vmatprep.subr.bf16.mxu0 0
    %2422 = vmatpush1.bf16.msra.mxu0 0
    %2423 = vmatprep.subr.bf16.mxu0 0
    %2424 = vmatpush1.bf16.msra.mxu0 0
    %2425 = vmatprep.subr.bf16.mxu0 0
    %2426 = vmatpush1.bf16.msra.mxu0 0
    %2427 = vmatprep.subr.bf16.mxu0 0
    %2428 = vmatpush1.bf16.msra.mxu0 0
    %2429 = vmatprep.subr.bf16.mxu0 0
    %2430 = vmatpush1.bf16.msra.mxu0 0
    %2431 = vmatprep.subr.bf16.mxu0 0
    %2432 = vmatpush1.bf16.msra.mxu0 0
    %2433 = vmatprep.subr.bf16.mxu0 0
    %2434 = vmatpush1.bf16.msra.mxu0 %v2417
    %2435 = vmatprep.subr.bf16.mxu0 0
    %2436 = vmatpush2.bf16.msra.mxu0 0
    %2437 = vmatprep.subr.bf16.mxu0 0
    %2438 = vmatpush2.bf16.msra.mxu0 0
    %2439 = vmatprep.subr.bf16.mxu0 0
    %2440 = vmatpush2.bf16.msra.mxu0 0
    %2441 = vmatprep.subr.bf16.mxu0 0
    %2442 = vmatpush2.bf16.msra.mxu0 0
    %2443 = vmatprep.subr.bf16.mxu0 0
    %2444 = vmatpush2.bf16.msra.mxu0 0
    %2445 = vmatprep.subr.bf16.mxu0 0
    %2446 = vmatpush2.bf16.msra.mxu0 0
    %2447 = vmatprep.subr.bf16.mxu0 0
    %2448 = vmatpush2.bf16.msra.mxu0 0
    %2449 = vmatprep.subr.bf16.mxu0 0
    %2450 = vmatpush2.bf16.msra.mxu0 0
    %2451 = vmatprep.mubr.bf16.mxu0 0
    %2452 = vmatmul.mubr.bf16.gmra.mxu0 %v2414
    %v2453 = vpop.f32.mrf.mxu0
    %v2454 = vadd.f32 0.0, %v2453
    %v2455 = vpop.f32.mrf.mxu0
    %v2456 = vpop.f32.mrf.mxu0
    %v2457 = vpop.f32.mrf.mxu0
    %2458 = vdwg.mxu0
    %2459 = vrot.lane.b32.xlu0 %v2237, 112
    %v2460 = vpop.permute.xlu0 %2459
    %2461 = vrot.lane.b32.xlu0 %v2237, 80
    %v2462 = vpop.permute.xlu0 %2461
    %v2464 = vsel %vm184, %v2460, 0
    %v2467 = vsel %vm184, %v2462, 0
    %2469 = vmatprep.subr.bf16.mxu0 0
    %2470 = vmatpush1.bf16.xpose.msra.mxu0 0
    %2471 = vmatprep.subr.bf16.mxu0 0
    %2472 = vmatpush1.bf16.xpose.msra.mxu0 0
    %2473 = vmatprep.subr.bf16.mxu0 0
    %2474 = vmatpush1.bf16.xpose.msra.mxu0 0
    %2475 = vmatprep.subr.bf16.mxu0 0
    %2476 = vmatpush1.bf16.xpose.msra.mxu0 0
    %2477 = vmatprep.subr.bf16.mxu0 0
    %2478 = vmatpush1.bf16.xpose.msra.mxu0 0
    %2479 = vmatprep.subr.bf16.mxu0 0
    %2480 = vmatpush1.bf16.xpose.msra.mxu0 0
    %2481 = vmatprep.subr.bf16.mxu0 0
    %2482 = vmatpush1.bf16.xpose.msra.mxu0 0
    %2483 = vmatprep.subr.bf16.mxu0 0
    %2484 = vmatpush1.bf16.xpose.msra.mxu0 %v2467
    %2485 = vmatprep.subr.bf16.mxu0 0
    %2486 = vmatpush2.bf16.xpose.msra.mxu0 0
    %2487 = vmatprep.subr.bf16.mxu0 0
    %2488 = vmatpush2.bf16.xpose.msra.mxu0 0
    %2489 = vmatprep.subr.bf16.mxu0 0
    %2490 = vmatpush2.bf16.xpose.msra.mxu0 0
    %2491 = vmatprep.subr.bf16.mxu0 0
    %2492 = vmatpush2.bf16.xpose.msra.mxu0 0
    %2493 = vmatprep.subr.bf16.mxu0 0
    %2494 = vmatpush2.bf16.xpose.msra.mxu0 0
    %2495 = vmatprep.subr.bf16.mxu0 0
    %2496 = vmatpush2.bf16.xpose.msra.mxu0 0
    %2497 = vmatprep.subr.bf16.mxu0 0
    %2498 = vmatpush2.bf16.xpose.msra.mxu0 0
    %2499 = vmatprep.subr.bf16.mxu0 0
    %2500 = vmatpush2.bf16.xpose.msra.mxu0 0
    %2501 = vmatprep.mubr.bf16.mxu0 0
    %2502 = vmatmul.mubr.bf16.gmra.mxu0 %v2464
    %v2503 = vpop.f32.mrf.mxu0
    %v2504 = vadd.f32 0.0, %v2503
    %v2505 = vpop.f32.mrf.mxu0
    %v2506 = vpop.f32.mrf.mxu0
    %v2507 = vpop.f32.mrf.mxu0
    %2508 = vdwg.mxu0
    %v2509 = vmul.f32 %v2504, 0.35355338
    %v2510 = vsel %vm184, %v2509, -inf
    %2511 = vmax.xlane.f32.xlu0 %v2510
    %v2512 = vpop.xlane.xlu0 %2511
    %v2513 = vsub.f32 %v2509, %v2512
    %v2514 = vmul.f32 %v2513, 1.442695
    %v2515 = vpow.pop %v2514
    %v2516 = vsel %vm184, %v2515, 0.0
    %2517 = vadd.xlane.f32.xlu0 %v2516
    %v2518 = vpop.xlane.xlu0 %2517
    %v2519 = vrcp.pop %v2518
    %v2520 = vmul.f32 %v2515, %v2519
    %v2521 = vpack.c.bf16 %v2520, %v2520
    %2522 = vrot.lane.b32.xlu0 %v2237, 48
    %v2523 = vpop.permute.xlu0 %2522
    %v2525 = vsel %vm184, %v2521, 0
    %v2528 = vsel %vm188, %v2523, 0
    %2530 = vmatprep.subr.bf16.mxu0 0
    %2531 = vmatpush1.bf16.msra.mxu0 0
    %2532 = vmatprep.subr.bf16.mxu0 0
    %2533 = vmatpush1.bf16.msra.mxu0 0
    %2534 = vmatprep.subr.bf16.mxu0 0
    %2535 = vmatpush1.bf16.msra.mxu0 0
    %2536 = vmatprep.subr.bf16.mxu0 0
    %2537 = vmatpush1.bf16.msra.mxu0 0
    %2538 = vmatprep.subr.bf16.mxu0 0
    %2539 = vmatpush1.bf16.msra.mxu0 0
    %2540 = vmatprep.subr.bf16.mxu0 0
    %2541 = vmatpush1.bf16.msra.mxu0 0
    %2542 = vmatprep.subr.bf16.mxu0 0
    %2543 = vmatpush1.bf16.msra.mxu0 0
    %2544 = vmatprep.subr.bf16.mxu0 0
    %2545 = vmatpush1.bf16.msra.mxu0 %v2528
    %2546 = vmatprep.subr.bf16.mxu0 0
    %2547 = vmatpush2.bf16.msra.mxu0 0
    %2548 = vmatprep.subr.bf16.mxu0 0
    %2549 = vmatpush2.bf16.msra.mxu0 0
    %2550 = vmatprep.subr.bf16.mxu0 0
    %2551 = vmatpush2.bf16.msra.mxu0 0
    %2552 = vmatprep.subr.bf16.mxu0 0
    %2553 = vmatpush2.bf16.msra.mxu0 0
    %2554 = vmatprep.subr.bf16.mxu0 0
    %2555 = vmatpush2.bf16.msra.mxu0 0
    %2556 = vmatprep.subr.bf16.mxu0 0
    %2557 = vmatpush2.bf16.msra.mxu0 0
    %2558 = vmatprep.subr.bf16.mxu0 0
    %2559 = vmatpush2.bf16.msra.mxu0 0
    %2560 = vmatprep.subr.bf16.mxu0 0
    %2561 = vmatpush2.bf16.msra.mxu0 0
    %2562 = vmatprep.mubr.bf16.mxu0 0
    %2563 = vmatmul.mubr.bf16.gmra.mxu0 %v2525
    %v2564 = vpop.f32.mrf.mxu0
    %v2565 = vadd.f32 0.0, %v2564
    %v2566 = vpop.f32.mrf.mxu0
    %v2567 = vpop.f32.mrf.mxu0
    %v2568 = vpop.f32.mrf.mxu0
    %2569 = vdwg.mxu0
    %2570 = vrot.lane.b32.xlu0 %v2237, 104
    %v2571 = vpop.permute.xlu0 %2570
    %2572 = vrot.lane.b32.xlu0 %v2237, 72
    %v2573 = vpop.permute.xlu0 %2572
    %v2575 = vsel %vm184, %v2571, 0
    %v2578 = vsel %vm184, %v2573, 0
    %2580 = vmatprep.subr.bf16.mxu0 0
    %2581 = vmatpush1.bf16.xpose.msra.mxu0 0
    %2582 = vmatprep.subr.bf16.mxu0 0
    %2583 = vmatpush1.bf16.xpose.msra.mxu0 0
    %2584 = vmatprep.subr.bf16.mxu0 0
    %2585 = vmatpush1.bf16.xpose.msra.mxu0 0
    %2586 = vmatprep.subr.bf16.mxu0 0
    %2587 = vmatpush1.bf16.xpose.msra.mxu0 0
    %2588 = vmatprep.subr.bf16.mxu0 0
    %2589 = vmatpush1.bf16.xpose.msra.mxu0 0
    %2590 = vmatprep.subr.bf16.mxu0 0
    %2591 = vmatpush1.bf16.xpose.msra.mxu0 0
    %2592 = vmatprep.subr.bf16.mxu0 0
    %2593 = vmatpush1.bf16.xpose.msra.mxu0 0
    %2594 = vmatprep.subr.bf16.mxu0 0
    %2595 = vmatpush1.bf16.xpose.msra.mxu0 %v2578
    %2596 = vmatprep.subr.bf16.mxu0 0
    %2597 = vmatpush2.bf16.xpose.msra.mxu0 0
    %2598 = vmatprep.subr.bf16.mxu0 0
    %2599 = vmatpush2.bf16.xpose.msra.mxu0 0
    %2600 = vmatprep.subr.bf16.mxu0 0
    %2601 = vmatpush2.bf16.xpose.msra.mxu0 0
    %2602 = vmatprep.subr.bf16.mxu0 0
    %2603 = vmatpush2.bf16.xpose.msra.mxu0 0
    %2604 = vmatprep.subr.bf16.mxu0 0
    %2605 = vmatpush2.bf16.xpose.msra.mxu0 0
    %2606 = vmatprep.subr.bf16.mxu0 0
    %2607 = vmatpush2.bf16.xpose.msra.mxu0 0
    %2608 = vmatprep.subr.bf16.mxu0 0
    %2609 = vmatpush2.bf16.xpose.msra.mxu0 0
    %2610 = vmatprep.subr.bf16.mxu0 0
    %2611 = vmatpush2.bf16.xpose.msra.mxu0 0
    %2612 = vmatprep.mubr.bf16.mxu0 0
    %2613 = vmatmul.mubr.bf16.gmra.mxu0 %v2575
    %v2614 = vpop.f32.mrf.mxu0
    %v2615 = vadd.f32 0.0, %v2614
    %v2616 = vpop.f32.mrf.mxu0
    %v2617 = vpop.f32.mrf.mxu0
    %v2618 = vpop.f32.mrf.mxu0
    %2619 = vdwg.mxu0
    %v2620 = vmul.f32 %v2615, 0.35355338
    %v2621 = vsel %vm184, %v2620, -inf
    %2622 = vmax.xlane.f32.xlu0 %v2621
    %v2623 = vpop.xlane.xlu0 %2622
    %v2624 = vsub.f32 %v2620, %v2623
    %v2625 = vmul.f32 %v2624, 1.442695
    %v2626 = vpow.pop %v2625
    %v2627 = vsel %vm184, %v2626, 0.0
    %2628 = vadd.xlane.f32.xlu0 %v2627
    %v2629 = vpop.xlane.xlu0 %2628
    %v2630 = vrcp.pop %v2629
    %v2631 = vmul.f32 %v2626, %v2630
    %v2632 = vpack.c.bf16 %v2631, %v2631
    %2633 = vrot.lane.b32.xlu0 %v2237, 40
    %v2634 = vpop.permute.xlu0 %2633
    %v2636 = vsel %vm184, %v2632, 0
    %v2639 = vsel %vm188, %v2634, 0
    %2641 = vmatprep.subr.bf16.mxu0 0
    %2642 = vmatpush1.bf16.msra.mxu0 0
    %2643 = vmatprep.subr.bf16.mxu0 0
    %2644 = vmatpush1.bf16.msra.mxu0 0
    %2645 = vmatprep.subr.bf16.mxu0 0
    %2646 = vmatpush1.bf16.msra.mxu0 0
    %2647 = vmatprep.subr.bf16.mxu0 0
    %2648 = vmatpush1.bf16.msra.mxu0 0
    %2649 = vmatprep.subr.bf16.mxu0 0
    %2650 = vmatpush1.bf16.msra.mxu0 0
    %2651 = vmatprep.subr.bf16.mxu0 0
    %2652 = vmatpush1.bf16.msra.mxu0 0
    %2653 = vmatprep.subr.bf16.mxu0 0
    %2654 = vmatpush1.bf16.msra.mxu0 0
    %2655 = vmatprep.subr.bf16.mxu0 0
    %2656 = vmatpush1.bf16.msra.mxu0 %v2639
    %2657 = vmatprep.subr.bf16.mxu0 0
    %2658 = vmatpush2.bf16.msra.mxu0 0
    %2659 = vmatprep.subr.bf16.mxu0 0
    %2660 = vmatpush2.bf16.msra.mxu0 0
    %2661 = vmatprep.subr.bf16.mxu0 0
    %2662 = vmatpush2.bf16.msra.mxu0 0
    %2663 = vmatprep.subr.bf16.mxu0 0
    %2664 = vmatpush2.bf16.msra.mxu0 0
    %2665 = vmatprep.subr.bf16.mxu0 0
    %2666 = vmatpush2.bf16.msra.mxu0 0
    %2667 = vmatprep.subr.bf16.mxu0 0
    %2668 = vmatpush2.bf16.msra.mxu0 0
    %2669 = vmatprep.subr.bf16.mxu0 0
    %2670 = vmatpush2.bf16.msra.mxu0 0
    %2671 = vmatprep.subr.bf16.mxu0 0
    %2672 = vmatpush2.bf16.msra.mxu0 0
    %2673 = vmatprep.mubr.bf16.mxu0 0
    %2674 = vmatmul.mubr.bf16.gmra.mxu0 %v2636
    %v2675 = vpop.f32.mrf.mxu0
    %v2676 = vadd.f32 0.0, %v2675
    %v2677 = vpop.f32.mrf.mxu0
    %v2678 = vpop.f32.mrf.mxu0
    %v2679 = vpop.f32.mrf.mxu0
    %2680 = vdwg.mxu0
    %2682 = vrot.lane.b32.xlu0 %v2454, 8
    %v2683 = vpop.permute.xlu0 %2682
    %2686 = vrot.lane.b32.xlu0 %v2565, 16
    %v2687 = vpop.permute.xlu0 %2686
    %2690 = vrot.lane.b32.xlu0 %v2676, 24
    %v2691 = vpop.permute.xlu0 %2690
    %v2693 = vsel %vm184, %v2343, %v2683
    %vm2694 = vcmask 130048
    %v2695 = vsel %vm2694, %v2693, %v2687
    %vm2696 = vcmask 195584
    %v2697 = vsel %vm2696, %v2695, %v2691
    %v2698 = vpack.c.bf16 %v2234, %v2234
    %2700 = vrot.lane.b32.xlu0 %v2698, 96
    %v2701 = vpop.permute.xlu0 %2700
    %v2703 = vsel %vm184, %v2698, 0
    %v2706 = vsel %vm184, %v2701, 0
    %2708 = vmatprep.subr.bf16.mxu0 0
    %2709 = vmatpush1.bf16.xpose.msra.mxu0 0
    %2710 = vmatprep.subr.bf16.mxu0 0
    %2711 = vmatpush1.bf16.xpose.msra.mxu0 0
    %2712 = vmatprep.subr.bf16.mxu0 0
    %2713 = vmatpush1.bf16.xpose.msra.mxu0 0
    %2714 = vmatprep.subr.bf16.mxu0 0
    %2715 = vmatpush1.bf16.xpose.msra.mxu0 0
    %2716 = vmatprep.subr.bf16.mxu0 0
    %2717 = vmatpush1.bf16.xpose.msra.mxu0 0
    %2718 = vmatprep.subr.bf16.mxu0 0
    %2719 = vmatpush1.bf16.xpose.msra.mxu0 0
    %2720 = vmatprep.subr.bf16.mxu0 0
    %2721 = vmatpush1.bf16.xpose.msra.mxu0 0
    %2722 = vmatprep.subr.bf16.mxu0 0
    %2723 = vmatpush1.bf16.xpose.msra.mxu0 %v2706
    %2724 = vmatprep.subr.bf16.mxu0 0
    %2725 = vmatpush2.bf16.xpose.msra.mxu0 0
    %2726 = vmatprep.subr.bf16.mxu0 0
    %2727 = vmatpush2.bf16.xpose.msra.mxu0 0
    %2728 = vmatprep.subr.bf16.mxu0 0
    %2729 = vmatpush2.bf16.xpose.msra.mxu0 0
    %2730 = vmatprep.subr.bf16.mxu0 0
    %2731 = vmatpush2.bf16.xpose.msra.mxu0 0
    %2732 = vmatprep.subr.bf16.mxu0 0
    %2733 = vmatpush2.bf16.xpose.msra.mxu0 0
    %2734 = vmatprep.subr.bf16.mxu0 0
    %2735 = vmatpush2.bf16.xpose.msra.mxu0 0
    %2736 = vmatprep.subr.bf16.mxu0 0
    %2737 = vmatpush2.bf16.xpose.msra.mxu0 0
    %2738 = vmatprep.subr.bf16.mxu0 0
    %2739 = vmatpush2.bf16.xpose.msra.mxu0 0
    %2740 = vmatprep.mubr.bf16.mxu0 0
    %2741 = vmatmul.mubr.bf16.gmra.mxu0 %v2703
    %v2742 = vpop.f32.mrf.mxu0
    %v2743 = vadd.f32 0.0, %v2742
    %v2744 = vpop.f32.mrf.mxu0
    %v2745 = vpop.f32.mrf.mxu0
    %v2746 = vpop.f32.mrf.mxu0
    %2747 = vdwg.mxu0
    %v2748 = vmul.f32 %v2743, 0.35355338
    %v2749 = vsel %vm184, %v2748, -inf
    %2750 = vmax.xlane.f32.xlu0 %v2749
    %v2751 = vpop.xlane.xlu0 %2750
    %v2752 = vsub.f32 %v2748, %v2751
    %v2753 = vmul.f32 %v2752, 1.442695
    %v2754 = vpow.pop %v2753
    %v2755 = vsel %vm184, %v2754, 0.0
    %2756 = vadd.xlane.f32.xlu0 %v2755
    %v2757 = vpop.xlane.xlu0 %2756
    %v2758 = vrcp.pop %v2757
    %v2759 = vmul.f32 %v2754, %v2758
    %v2760 = vpack.c.bf16 %v2759, %v2759
    %2761 = vrot.lane.b32.xlu0 %v2698, 64
    %v2762 = vpop.permute.xlu0 %2761
    %v2764 = vsel %vm184, %v2760, 0
    %v2767 = vsel %vm188, %v2762, 0
    %2769 = vmatprep.subr.bf16.mxu0 0
    %2770 = vmatpush1.bf16.msra.mxu0 0
    %2771 = vmatprep.subr.bf16.mxu0 0
    %2772 = vmatpush1.bf16.msra.mxu0 0
    %2773 = vmatprep.subr.bf16.mxu0 0
    %2774 = vmatpush1.bf16.msra.mxu0 0
    %2775 = vmatprep.subr.bf16.mxu0 0
    %2776 = vmatpush1.bf16.msra.mxu0 0
    %2777 = vmatprep.subr.bf16.mxu0 0
    %2778 = vmatpush1.bf16.msra.mxu0 0
    %2779 = vmatprep.subr.bf16.mxu0 0
    %2780 = vmatpush1.bf16.msra.mxu0 0
    %2781 = vmatprep.subr.bf16.mxu0 0
    %2782 = vmatpush1.bf16.msra.mxu0 0
    %2783 = vmatprep.subr.bf16.mxu0 0
    %2784 = vmatpush1.bf16.msra.mxu0 %v2767
    %2785 = vmatprep.subr.bf16.mxu0 0
    %2786 = vmatpush2.bf16.msra.mxu0 0
    %2787 = vmatprep.subr.bf16.mxu0 0
    %2788 = vmatpush2.bf16.msra.mxu0 0
    %2789 = vmatprep.subr.bf16.mxu0 0
    %2790 = vmatpush2.bf16.msra.mxu0 0
    %2791 = vmatprep.subr.bf16.mxu0 0
    %2792 = vmatpush2.bf16.msra.mxu0 0
    %2793 = vmatprep.subr.bf16.mxu0 0
    %2794 = vmatpush2.bf16.msra.mxu0 0
    %2795 = vmatprep.subr.bf16.mxu0 0
    %2796 = vmatpush2.bf16.msra.mxu0 0
    %2797 = vmatprep.subr.bf16.mxu0 0
    %2798 = vmatpush2.bf16.msra.mxu0 0
    %2799 = vmatprep.subr.bf16.mxu0 0
    %2800 = vmatpush2.bf16.msra.mxu0 0
    %2801 = vmatprep.mubr.bf16.mxu0 0
    %2802 = vmatmul.mubr.bf16.gmra.mxu0 %v2764
    %v2803 = vpop.f32.mrf.mxu0
    %v2804 = vadd.f32 0.0, %v2803
    %v2805 = vpop.f32.mrf.mxu0
    %v2806 = vpop.f32.mrf.mxu0
    %v2807 = vpop.f32.mrf.mxu0
    %2808 = vdwg.mxu0
    %2809 = vrot.lane.b32.xlu0 %v2698, 120
    %v2810 = vpop.permute.xlu0 %2809
    %2811 = vrot.lane.b32.xlu0 %v2698, 88
    %v2812 = vpop.permute.xlu0 %2811
    %v2814 = vsel %vm184, %v2810, 0
    %v2817 = vsel %vm184, %v2812, 0
    %2819 = vmatprep.subr.bf16.mxu0 0
    %2820 = vmatpush1.bf16.xpose.msra.mxu0 0
    %2821 = vmatprep.subr.bf16.mxu0 0
    %2822 = vmatpush1.bf16.xpose.msra.mxu0 0
    %2823 = vmatprep.subr.bf16.mxu0 0
    %2824 = vmatpush1.bf16.xpose.msra.mxu0 0
    %2825 = vmatprep.subr.bf16.mxu0 0
    %2826 = vmatpush1.bf16.xpose.msra.mxu0 0
    %2827 = vmatprep.subr.bf16.mxu0 0
    %2828 = vmatpush1.bf16.xpose.msra.mxu0 0
    %2829 = vmatprep.subr.bf16.mxu0 0
    %2830 = vmatpush1.bf16.xpose.msra.mxu0 0
    %2831 = vmatprep.subr.bf16.mxu0 0
    %2832 = vmatpush1.bf16.xpose.msra.mxu0 0
    %2833 = vmatprep.subr.bf16.mxu0 0
    %2834 = vmatpush1.bf16.xpose.msra.mxu0 %v2817
    %2835 = vmatprep.subr.bf16.mxu0 0
    %2836 = vmatpush2.bf16.xpose.msra.mxu0 0
    %2837 = vmatprep.subr.bf16.mxu0 0
    %2838 = vmatpush2.bf16.xpose.msra.mxu0 0
    %2839 = vmatprep.subr.bf16.mxu0 0
    %2840 = vmatpush2.bf16.xpose.msra.mxu0 0
    %2841 = vmatprep.subr.bf16.mxu0 0
    %2842 = vmatpush2.bf16.xpose.msra.mxu0 0
    %2843 = vmatprep.subr.bf16.mxu0 0
    %2844 = vmatpush2.bf16.xpose.msra.mxu0 0
    %2845 = vmatprep.subr.bf16.mxu0 0
    %2846 = vmatpush2.bf16.xpose.msra.mxu0 0
    %2847 = vmatprep.subr.bf16.mxu0 0
    %2848 = vmatpush2.bf16.xpose.msra.mxu0 0
    %2849 = vmatprep.subr.bf16.mxu0 0
    %2850 = vmatpush2.bf16.xpose.msra.mxu0 0
    %2851 = vmatprep.mubr.bf16.mxu0 0
    %2852 = vmatmul.mubr.bf16.gmra.mxu0 %v2814
    %v2853 = vpop.f32.mrf.mxu0
    %v2854 = vadd.f32 0.0, %v2853
    %v2855 = vpop.f32.mrf.mxu0
    %v2856 = vpop.f32.mrf.mxu0
    %v2857 = vpop.f32.mrf.mxu0
    %2858 = vdwg.mxu0
    %v2859 = vmul.f32 %v2854, 0.35355338
    %v2860 = vsel %vm184, %v2859, -inf
    %2861 = vmax.xlane.f32.xlu0 %v2860
    %v2862 = vpop.xlane.xlu0 %2861
    %v2863 = vsub.f32 %v2859, %v2862
    %v2864 = vmul.f32 %v2863, 1.442695
    %v2865 = vpow.pop %v2864
    %v2866 = vsel %vm184, %v2865, 0.0
    %2867 = vadd.xlane.f32.xlu0 %v2866
    %v2868 = vpop.xlane.xlu0 %2867
    %v2869 = vrcp.pop %v2868
    %v2870 = vmul.f32 %v2865, %v2869
    %v2871 = vpack.c.bf16 %v2870, %v2870
    %2872 = vrot.lane.b32.xlu0 %v2698, 56
    %v2873 = vpop.permute.xlu0 %2872
    %v2875 = vsel %vm184, %v2871, 0
    %v2878 = vsel %vm188, %v2873, 0
    %2880 = vmatprep.subr.bf16.mxu0 0
    %2881 = vmatpush1.bf16.msra.mxu0 0
    %2882 = vmatprep.subr.bf16.mxu0 0
    %2883 = vmatpush1.bf16.msra.mxu0 0
    %2884 = vmatprep.subr.bf16.mxu0 0
    %2885 = vmatpush1.bf16.msra.mxu0 0
    %2886 = vmatprep.subr.bf16.mxu0 0
    %2887 = vmatpush1.bf16.msra.mxu0 0
    %2888 = vmatprep.subr.bf16.mxu0 0
    %2889 = vmatpush1.bf16.msra.mxu0 0
    %2890 = vmatprep.subr.bf16.mxu0 0
    %2891 = vmatpush1.bf16.msra.mxu0 0
    %2892 = vmatprep.subr.bf16.mxu0 0
    %2893 = vmatpush1.bf16.msra.mxu0 0
    %2894 = vmatprep.subr.bf16.mxu0 0
    %2895 = vmatpush1.bf16.msra.mxu0 %v2878
    %2896 = vmatprep.subr.bf16.mxu0 0
    %2897 = vmatpush2.bf16.msra.mxu0 0
    %2898 = vmatprep.subr.bf16.mxu0 0
    %2899 = vmatpush2.bf16.msra.mxu0 0
    %2900 = vmatprep.subr.bf16.mxu0 0
    %2901 = vmatpush2.bf16.msra.mxu0 0
    %2902 = vmatprep.subr.bf16.mxu0 0
    %2903 = vmatpush2.bf16.msra.mxu0 0
    %2904 = vmatprep.subr.bf16.mxu0 0
    %2905 = vmatpush2.bf16.msra.mxu0 0
    %2906 = vmatprep.subr.bf16.mxu0 0
    %2907 = vmatpush2.bf16.msra.mxu0 0
    %2908 = vmatprep.subr.bf16.mxu0 0
    %2909 = vmatpush2.bf16.msra.mxu0 0
    %2910 = vmatprep.subr.bf16.mxu0 0
    %2911 = vmatpush2.bf16.msra.mxu0 0
    %2912 = vmatprep.mubr.bf16.mxu0 0
    %2913 = vmatmul.mubr.bf16.gmra.mxu0 %v2875
    %v2914 = vpop.f32.mrf.mxu0
    %v2915 = vadd.f32 0.0, %v2914
    %v2916 = vpop.f32.mrf.mxu0
    %v2917 = vpop.f32.mrf.mxu0
    %v2918 = vpop.f32.mrf.mxu0
    %2919 = vdwg.mxu0
    %2920 = vrot.lane.b32.xlu0 %v2698, 112
    %v2921 = vpop.permute.xlu0 %2920
    %2922 = vrot.lane.b32.xlu0 %v2698, 80
    %v2923 = vpop.permute.xlu0 %2922
    %v2925 = vsel %vm184, %v2921, 0
    %v2928 = vsel %vm184, %v2923, 0
    %2930 = vmatprep.subr.bf16.mxu0 0
    %2931 = vmatpush1.bf16.xpose.msra.mxu0 0
    %2932 = vmatprep.subr.bf16.mxu0 0
    %2933 = vmatpush1.bf16.xpose.msra.mxu0 0
    %2934 = vmatprep.subr.bf16.mxu0 0
    %2935 = vmatpush1.bf16.xpose.msra.mxu0 0
    %2936 = vmatprep.subr.bf16.mxu0 0
    %2937 = vmatpush1.bf16.xpose.msra.mxu0 0
    %2938 = vmatprep.subr.bf16.mxu0 0
    %2939 = vmatpush1.bf16.xpose.msra.mxu0 0
    %2940 = vmatprep.subr.bf16.mxu0 0
    %2941 = vmatpush1.bf16.xpose.msra.mxu0 0
    %2942 = vmatprep.subr.bf16.mxu0 0
    %2943 = vmatpush1.bf16.xpose.msra.mxu0 0
    %2944 = vmatprep.subr.bf16.mxu0 0
    %2945 = vmatpush1.bf16.xpose.msra.mxu0 %v2928
    %2946 = vmatprep.subr.bf16.mxu0 0
    %2947 = vmatpush2.bf16.xpose.msra.mxu0 0
    %2948 = vmatprep.subr.bf16.mxu0 0
    %2949 = vmatpush2.bf16.xpose.msra.mxu0 0
    %2950 = vmatprep.subr.bf16.mxu0 0
    %2951 = vmatpush2.bf16.xpose.msra.mxu0 0
    %2952 = vmatprep.subr.bf16.mxu0 0
    %2953 = vmatpush2.bf16.xpose.msra.mxu0 0
    %2954 = vmatprep.subr.bf16.mxu0 0
    %2955 = vmatpush2.bf16.xpose.msra.mxu0 0
    %2956 = vmatprep.subr.bf16.mxu0 0
    %2957 = vmatpush2.bf16.xpose.msra.mxu0 0
    %2958 = vmatprep.subr.bf16.mxu0 0
    %2959 = vmatpush2.bf16.xpose.msra.mxu0 0
    %2960 = vmatprep.subr.bf16.mxu0 0
    %2961 = vmatpush2.bf16.xpose.msra.mxu0 0
    %2962 = vmatprep.mubr.bf16.mxu0 0
    %2963 = vmatmul.mubr.bf16.gmra.mxu0 %v2925
    %v2964 = vpop.f32.mrf.mxu0
    %v2965 = vadd.f32 0.0, %v2964
    %v2966 = vpop.f32.mrf.mxu0
    %v2967 = vpop.f32.mrf.mxu0
    %v2968 = vpop.f32.mrf.mxu0
    %2969 = vdwg.mxu0
    %v2970 = vmul.f32 %v2965, 0.35355338
    %v2971 = vsel %vm184, %v2970, -inf
    %2972 = vmax.xlane.f32.xlu0 %v2971
    %v2973 = vpop.xlane.xlu0 %2972
    %v2974 = vsub.f32 %v2970, %v2973
    %v2975 = vmul.f32 %v2974, 1.442695
    %v2976 = vpow.pop %v2975
    %v2977 = vsel %vm184, %v2976, 0.0
    %2978 = vadd.xlane.f32.xlu0 %v2977
    %v2979 = vpop.xlane.xlu0 %2978
    %v2980 = vrcp.pop %v2979
    %v2981 = vmul.f32 %v2976, %v2980
    %v2982 = vpack.c.bf16 %v2981, %v2981
    %2983 = vrot.lane.b32.xlu0 %v2698, 48
    %v2984 = vpop.permute.xlu0 %2983
    %v2986 = vsel %vm184, %v2982, 0
    %v2989 = vsel %vm188, %v2984, 0
    %2991 = vmatprep.subr.bf16.mxu0 0
    %2992 = vmatpush1.bf16.msra.mxu0 0
    %2993 = vmatprep.subr.bf16.mxu0 0
    %2994 = vmatpush1.bf16.msra.mxu0 0
    %2995 = vmatprep.subr.bf16.mxu0 0
    %2996 = vmatpush1.bf16.msra.mxu0 0
    %2997 = vmatprep.subr.bf16.mxu0 0
    %2998 = vmatpush1.bf16.msra.mxu0 0
    %2999 = vmatprep.subr.bf16.mxu0 0
    %3000 = vmatpush1.bf16.msra.mxu0 0
    %3001 = vmatprep.subr.bf16.mxu0 0
    %3002 = vmatpush1.bf16.msra.mxu0 0
    %3003 = vmatprep.subr.bf16.mxu0 0
    %3004 = vmatpush1.bf16.msra.mxu0 0
    %3005 = vmatprep.subr.bf16.mxu0 0
    %3006 = vmatpush1.bf16.msra.mxu0 %v2989
    %3007 = vmatprep.subr.bf16.mxu0 0
    %3008 = vmatpush2.bf16.msra.mxu0 0
    %3009 = vmatprep.subr.bf16.mxu0 0
    %3010 = vmatpush2.bf16.msra.mxu0 0
    %3011 = vmatprep.subr.bf16.mxu0 0
    %3012 = vmatpush2.bf16.msra.mxu0 0
    %3013 = vmatprep.subr.bf16.mxu0 0
    %3014 = vmatpush2.bf16.msra.mxu0 0
    %3015 = vmatprep.subr.bf16.mxu0 0
    %3016 = vmatpush2.bf16.msra.mxu0 0
    %3017 = vmatprep.subr.bf16.mxu0 0
    %3018 = vmatpush2.bf16.msra.mxu0 0
    %3019 = vmatprep.subr.bf16.mxu0 0
    %3020 = vmatpush2.bf16.msra.mxu0 0
    %3021 = vmatprep.subr.bf16.mxu0 0
    %3022 = vmatpush2.bf16.msra.mxu0 0
    %3023 = vmatprep.mubr.bf16.mxu0 0
    %3024 = vmatmul.mubr.bf16.gmra.mxu0 %v2986
    %v3025 = vpop.f32.mrf.mxu0
    %v3026 = vadd.f32 0.0, %v3025
    %v3027 = vpop.f32.mrf.mxu0
    %v3028 = vpop.f32.mrf.mxu0
    %v3029 = vpop.f32.mrf.mxu0
    %3030 = vdwg.mxu0
    %3031 = vrot.lane.b32.xlu0 %v2698, 104
    %v3032 = vpop.permute.xlu0 %3031
    %3033 = vrot.lane.b32.xlu0 %v2698, 72
    %v3034 = vpop.permute.xlu0 %3033
    %v3036 = vsel %vm184, %v3032, 0
    %v3039 = vsel %vm184, %v3034, 0
    %3041 = vmatprep.subr.bf16.mxu0 0
    %3042 = vmatpush1.bf16.xpose.msra.mxu0 0
    %3043 = vmatprep.subr.bf16.mxu0 0
    %3044 = vmatpush1.bf16.xpose.msra.mxu0 0
    %3045 = vmatprep.subr.bf16.mxu0 0
    %3046 = vmatpush1.bf16.xpose.msra.mxu0 0
    %3047 = vmatprep.subr.bf16.mxu0 0
    %3048 = vmatpush1.bf16.xpose.msra.mxu0 0
    %3049 = vmatprep.subr.bf16.mxu0 0
    %3050 = vmatpush1.bf16.xpose.msra.mxu0 0
    %3051 = vmatprep.subr.bf16.mxu0 0
    %3052 = vmatpush1.bf16.xpose.msra.mxu0 0
    %3053 = vmatprep.subr.bf16.mxu0 0
    %3054 = vmatpush1.bf16.xpose.msra.mxu0 0
    %3055 = vmatprep.subr.bf16.mxu0 0
    %3056 = vmatpush1.bf16.xpose.msra.mxu0 %v3039
    %3057 = vmatprep.subr.bf16.mxu0 0
    %3058 = vmatpush2.bf16.xpose.msra.mxu0 0
    %3059 = vmatprep.subr.bf16.mxu0 0
    %3060 = vmatpush2.bf16.xpose.msra.mxu0 0
    %3061 = vmatprep.subr.bf16.mxu0 0
    %3062 = vmatpush2.bf16.xpose.msra.mxu0 0
    %3063 = vmatprep.subr.bf16.mxu0 0
    %3064 = vmatpush2.bf16.xpose.msra.mxu0 0
    %3065 = vmatprep.subr.bf16.mxu0 0
    %3066 = vmatpush2.bf16.xpose.msra.mxu0 0
    %3067 = vmatprep.subr.bf16.mxu0 0
    %3068 = vmatpush2.bf16.xpose.msra.mxu0 0
    %3069 = vmatprep.subr.bf16.mxu0 0
    %3070 = vmatpush2.bf16.xpose.msra.mxu0 0
    %3071 = vmatprep.subr.bf16.mxu0 0
    %3072 = vmatpush2.bf16.xpose.msra.mxu0 0
    %3073 = vmatprep.mubr.bf16.mxu0 0
    %3074 = vmatmul.mubr.bf16.gmra.mxu0 %v3036
    %v3075 = vpop.f32.mrf.mxu0
    %v3076 = vadd.f32 0.0, %v3075
    %v3077 = vpop.f32.mrf.mxu0
    %v3078 = vpop.f32.mrf.mxu0
    %v3079 = vpop.f32.mrf.mxu0
    %3080 = vdwg.mxu0
    %v3081 = vmul.f32 %v3076, 0.35355338
    %v3082 = vsel %vm184, %v3081, -inf
    %3083 = vmax.xlane.f32.xlu0 %v3082
    %v3084 = vpop.xlane.xlu0 %3083
    %v3085 = vsub.f32 %v3081, %v3084
    %v3086 = vmul.f32 %v3085, 1.442695
    %v3087 = vpow.pop %v3086
    %v3088 = vsel %vm184, %v3087, 0.0
    %3089 = vadd.xlane.f32.xlu0 %v3088
    %v3090 = vpop.xlane.xlu0 %3089
    %v3091 = vrcp.pop %v3090
    %v3092 = vmul.f32 %v3087, %v3091
    %v3093 = vpack.c.bf16 %v3092, %v3092
    %3094 = vrot.lane.b32.xlu0 %v2698, 40
    %v3095 = vpop.permute.xlu0 %3094
    %v3097 = vsel %vm184, %v3093, 0
    %v3100 = vsel %vm188, %v3095, 0
    %3102 = vmatprep.subr.bf16.mxu0 0
    %3103 = vmatpush1.bf16.msra.mxu0 0
    %3104 = vmatprep.subr.bf16.mxu0 0
    %3105 = vmatpush1.bf16.msra.mxu0 0
    %3106 = vmatprep.subr.bf16.mxu0 0
    %3107 = vmatpush1.bf16.msra.mxu0 0
    %3108 = vmatprep.subr.bf16.mxu0 0
    %3109 = vmatpush1.bf16.msra.mxu0 0
    %3110 = vmatprep.subr.bf16.mxu0 0
    %3111 = vmatpush1.bf16.msra.mxu0 0
    %3112 = vmatprep.subr.bf16.mxu0 0
    %3113 = vmatpush1.bf16.msra.mxu0 0
    %3114 = vmatprep.subr.bf16.mxu0 0
    %3115 = vmatpush1.bf16.msra.mxu0 0
    %3116 = vmatprep.subr.bf16.mxu0 0
    %3117 = vmatpush1.bf16.msra.mxu0 %v3100
    %3118 = vmatprep.subr.bf16.mxu0 0
    %3119 = vmatpush2.bf16.msra.mxu0 0
    %3120 = vmatprep.subr.bf16.mxu0 0
    %3121 = vmatpush2.bf16.msra.mxu0 0
    %3122 = vmatprep.subr.bf16.mxu0 0
    %3123 = vmatpush2.bf16.msra.mxu0 0
    %3124 = vmatprep.subr.bf16.mxu0 0
    %3125 = vmatpush2.bf16.msra.mxu0 0
    %3126 = vmatprep.subr.bf16.mxu0 0
    %3127 = vmatpush2.bf16.msra.mxu0 0
    %3128 = vmatprep.subr.bf16.mxu0 0
    %3129 = vmatpush2.bf16.msra.mxu0 0
    %3130 = vmatprep.subr.bf16.mxu0 0
    %3131 = vmatpush2.bf16.msra.mxu0 0
    %3132 = vmatprep.subr.bf16.mxu0 0
    %3133 = vmatpush2.bf16.msra.mxu0 0
    %3134 = vmatprep.mubr.bf16.mxu0 0
    %3135 = vmatmul.mubr.bf16.gmra.mxu0 %v3097
    %v3136 = vpop.f32.mrf.mxu0
    %v3137 = vadd.f32 0.0, %v3136
    %v3138 = vpop.f32.mrf.mxu0
    %v3139 = vpop.f32.mrf.mxu0
    %v3140 = vpop.f32.mrf.mxu0
    %3141 = vdwg.mxu0
    %3143 = vrot.lane.b32.xlu0 %v2915, 8
    %v3144 = vpop.permute.xlu0 %3143
    %3147 = vrot.lane.b32.xlu0 %v3026, 16
    %v3148 = vpop.permute.xlu0 %3147
    %3151 = vrot.lane.b32.xlu0 %v3137, 24
    %v3152 = vpop.permute.xlu0 %3151
    %v3154 = vsel %vm184, %v2804, %v3144
    %v3155 = vsel %vm2694, %v3154, %v3148
    %v3156 = vsel %vm2696, %v3155, %v3152
    %v3157 = vpack.c.bf16 %v3156, %v2697
    %v3158 = vld [vmem:[#allocation10] sm:$0xf]
    %v3159 = vld [vmem:[#allocation10 + $0x4] sm:$0xf]
    %v3160 = vld [vmem:[#allocation10 + $0x8] sm:$0xf]
    %v3161 = vld [vmem:[#allocation10 + $0xc] sm:$0xf]
    %v3162 = vld [vmem:[#allocation11] sm:$0x1]
    %v3164 = vlaneseq
    %v3165 = vshrl.u32 %v3164, 7
    %v3166 = vsub.s32 0, %v3165
    %v3167 = vrot.slane %v3162, %v3166
    %v3173 = vunpack.c.l.b16 %v3158
    %v3174 = vunpack.c.l.b16 %v3159
    %v3175 = vunpack.c.l.b16 %v3160
    %v3176 = vunpack.c.l.b16 %v3161
    %v3177 = vpack.c.b16 %v3174, %v3173
    %v3178 = vpack.c.b16 %v3176, %v3175
    %v3182 = vsel %vm259, %v3157, 0
    %3184 = vmatprep.subr.bf16.mxu0 0
    %3185 = vmatpush1.bf16.msra.mxu0 0
    %3186 = vmatprep.subr.bf16.mxu0 0
    %3187 = vmatpush1.bf16.msra.mxu0 0
    %3188 = vmatprep.subr.bf16.mxu0 0
    %3189 = vmatpush1.bf16.msra.mxu0 0
    %3190 = vmatprep.subr.bf16.mxu0 0
    %3191 = vmatpush1.bf16.msra.mxu0 0
    %3192 = vmatprep.subr.bf16.mxu0 0
    %3193 = vmatpush1.bf16.msra.mxu0 0
    %3194 = vmatprep.subr.bf16.mxu0 0
    %3195 = vmatpush1.bf16.msra.mxu0 0
    %3196 = vmatprep.subr.bf16.mxu0 0
    %3197 = vmatpush1.bf16.msra.mxu0 %v3178
    %3198 = vmatprep.subr.bf16.mxu0 0
    %3199 = vmatpush1.bf16.msra.mxu0 %v3177
    %3200 = vmatprep.subr.bf16.mxu0 0
    %3201 = vmatpush2.bf16.msra.mxu0 0
    %3202 = vmatprep.subr.bf16.mxu0 0
    %3203 = vmatpush2.bf16.msra.mxu0 0
    %3204 = vmatprep.subr.bf16.mxu0 0
    %3205 = vmatpush2.bf16.msra.mxu0 0
    %3206 = vmatprep.subr.bf16.mxu0 0
    %3207 = vmatpush2.bf16.msra.mxu0 0
    %3208 = vmatprep.subr.bf16.mxu0 0
    %3209 = vmatpush2.bf16.msra.mxu0 0
    %3210 = vmatprep.subr.bf16.mxu0 0
    %3211 = vmatpush2.bf16.msra.mxu0 0
    %3212 = vmatprep.subr.bf16.mxu0 0
    %3213 = vmatpush2.bf16.msra.mxu0 0
    %3214 = vmatprep.subr.bf16.mxu0 0
    %3215 = vmatpush2.bf16.msra.mxu0 0
    %3216 = vmatprep.mubr.bf16.mxu0 0
    %3217 = vmatmul.mubr.bf16.gmra.mxu0 %v3182
    %v3218 = vpop.f32.mrf.mxu0
    %v3219 = vadd.f32 %v3167, %v3218
    %v3220 = vpop.f32.mrf.mxu0
    %v3221 = vpop.f32.mrf.mxu0
    %v3222 = vadd.f32 %v3167, %v3221
    %v3223 = vpop.f32.mrf.mxu0
    %3224 = vdwg.mxu0
    %v3225 = vunpack.c.l.bf16 %v2165
    %v3226 = vunpack.c.h.bf16 %v2165
    %3229 = vrot.lane.b32.xlu0 %v3219, 96
    %v3230 = vpop.permute.xlu0 %3229
    %3231 = vrot.lane.b32.xlu0 %v3222, 96
    %v3232 = vpop.permute.xlu0 %3231
    %v3235 = vadd.f32 %v3225, %v3230
    %v3236 = vadd.f32 %v3226, %v3232
    %3239 = vrot.lane.b32.xlu0 %v3235, 32
    %v3240 = vpop.permute.xlu0 %3239
    %3241 = vrot.lane.b32.xlu0 %v3236, 32
    %v3242 = vpop.permute.xlu0 %3241
    %v3245 = vsel %vm259, %v3240, 0.0
    %3246 = vadd.xlane.f32.xlu0 %v3245
    %v3247 = vpop.xlane.xlu0 %3246
    %v3248 = vsel %vm259, %v3242, 0.0
    %3249 = vadd.xlane.f32.xlu0 %v3248
    %v3250 = vpop.xlane.xlu0 %3249
    %v3251 = vrcp.pop 32.0
    %v3252 = vmul.f32 %v3247, %v3251
    %v3253 = vmul.f32 %v3250, %v3251
    %v3254 = vsub.f32 %v3235, %v3252
    %v3255 = vsub.f32 %v3236, %v3253
    %v3256 = vmul.f32 %v3254, %v3254
    %v3257 = vmul.f32 %v3255, %v3255
    %3260 = vrot.lane.b32.xlu0 %v3256, 32
    %v3261 = vpop.permute.xlu0 %3260
    %3262 = vrot.lane.b32.xlu0 %v3257, 32
    %v3263 = vpop.permute.xlu0 %3262
    %v3266 = vsel %vm259, %v3261, 0.0
    %3267 = vadd.xlane.f32.xlu0 %v3266
    %v3268 = vpop.xlane.xlu0 %3267
    %v3269 = vsel %vm259, %v3263, 0.0
    %3270 = vadd.xlane.f32.xlu0 %v3269
    %v3271 = vpop.xlane.xlu0 %3270
    %v3272 = vmul.f32 %v3268, %v3251
    %v3273 = vmul.f32 %v3271, %v3251
    %v3274 = vadd.f32 %v3272, 1e-05
    %v3275 = vadd.f32 %v3273, 1e-05
    %v3276 = vrsqrt.pop %v3274
    %v3277 = vrsqrt.pop %v3275
    %v3278 = vmul.f32 %v3254, %v3276
    %v3279 = vmul.f32 %v3255, %v3277
    %v3280 = vld [vmem:[#allocation13] sm:$0x1]
    %v3282 = vlaneseq
    %v3283 = vshrl.u32 %v3282, 7
    %v3284 = vsub.s32 0, %v3283
    %v3285 = vrot.slane %v3280, %v3284
    %3286 = vrot.lane.b32.xlu0 %v3285, 96
    %v3287 = vpop.permute.xlu0 %3286
    %v3289 = vmul.f32 %v3278, %v3287
    %v3290 = vmul.f32 %v3279, %v3287
    %v3291 = vld [vmem:[#allocation14] sm:$0x1]
    %v3293 = vlaneseq
    %v3294 = vshrl.u32 %v3293, 7
    %v3295 = vsub.s32 0, %v3294
    %v3296 = vrot.slane %v3291, %v3295
    %3297 = vrot.lane.b32.xlu0 %v3296, 96
    %v3298 = vpop.permute.xlu0 %3297
    %v3300 = vadd.f32 %v3289, %v3298
    %v3301 = vadd.f32 %v3290, %v3298
    %v3302 = vpack.c.bf16 %v3301, %v3300
    %v3303 = vld [vmem:[%s10] sm:$0xf]
    %v3304 = vld [vmem:[%s10 + $0x4] sm:$0xf]
    %v3305 = vld [vmem:[%s10 + $0x8] sm:$0xf]
    %v3306 = vld [vmem:[%s10 + $0xc] sm:$0xf]
    %v3307 = vld [vmem:[%s12] sm:$0x1]
    %v3309 = vlaneseq
    %v3310 = vshrl.u32 %v3309, 7
    %v3311 = vsub.s32 0, %v3310
    %v3312 = vrot.slane %v3307, %v3311
    %3315 = vrot.lane.b32.xlu0 %v3302, 32
    %v3316 = vpop.permute.xlu0 %3315
    %v3321 = vunpack.c.l.b16 %v3303
    %v3322 = vunpack.c.l.b16 %v3304
    %v3323 = vunpack.c.l.b16 %v3305
    %v3324 = vunpack.c.l.b16 %v3306
    %v3325 = vpack.c.b16 %v3322, %v3321
    %v3326 = vpack.c.b16 %v3324, %v3323
    %v3330 = vsel %vm259, %v3316, 0
    %3332 = vmatprep.subr.bf16.mxu0 0
    %3333 = vmatpush1.bf16.msra.mxu0 0
    %3334 = vmatprep.subr.bf16.mxu0 0
    %3335 = vmatpush1.bf16.msra.mxu0 0
    %3336 = vmatprep.subr.bf16.mxu0 0
    %3337 = vmatpush1.bf16.msra.mxu0 0
    %3338 = vmatprep.subr.bf16.mxu0 0
    %3339 = vmatpush1.bf16.msra.mxu0 0
    %3340 = vmatprep.subr.bf16.mxu0 0
    %3341 = vmatpush1.bf16.msra.mxu0 0
    %3342 = vmatprep.subr.bf16.mxu0 0
    %3343 = vmatpush1.bf16.msra.mxu0 0
    %3344 = vmatprep.subr.bf16.mxu0 0
    %3345 = vmatpush1.bf16.msra.mxu0 %v3326
    %3346 = vmatprep.subr.bf16.mxu0 0
    %3347 = vmatpush1.bf16.msra.mxu0 %v3325
    %3348 = vmatprep.subr.bf16.mxu0 0
    %3349 = vmatpush2.bf16.msra.mxu0 0
    %3350 = vmatprep.subr.bf16.mxu0 0
    %3351 = vmatpush2.bf16.msra.mxu0 0
    %3352 = vmatprep.subr.bf16.mxu0 0
    %3353 = vmatpush2.bf16.msra.mxu0 0
    %3354 = vmatprep.subr.bf16.mxu0 0
    %3355 = vmatpush2.bf16.msra.mxu0 0
    %3356 = vmatprep.subr.bf16.mxu0 0
    %3357 = vmatpush2.bf16.msra.mxu0 0
    %3358 = vmatprep.subr.bf16.mxu0 0
    %3359 = vmatpush2.bf16.msra.mxu0 0
    %3360 = vmatprep.subr.bf16.mxu0 0
    %3361 = vmatpush2.bf16.msra.mxu0 0
    %3362 = vmatprep.subr.bf16.mxu0 0
    %3363 = vmatpush2.bf16.msra.mxu0 0
    %3364 = vmatprep.mubr.bf16.mxu0 0
    %3365 = vmatmul.mubr.bf16.gmra.mxu0 %v3330
    %v3366 = vpop.f32.mrf.mxu0
    %v3367 = vadd.f32 %v3312, %v3366
    %v3368 = vpop.f32.mrf.mxu0
    %v3369 = vpop.f32.mrf.mxu0
    %v3370 = vadd.f32 %v3312, %v3369
    %v3371 = vpop.f32.mrf.mxu0
    %3372 = vdwg.mxu0
    %v3373 = vpack.c.bf16 %v3370, %v3367
    %v3374 = vld [vmem:[#allocation16] sm:$0xf]
    %v3375 = vld [vmem:[#allocation16 + $0x4] sm:$0xf]
    %v3376 = vld [vmem:[#allocation16 + $0x8] sm:$0xf]
    %v3377 = vld [vmem:[#allocation16 + $0xc] sm:$0xf]
    %v3379 = vshll.u32 %v3373, 16
    %v3381 = vrot.slane %v3379, 4
    %v3383 = vsel %vm245, %v3373, %v3381
    %v3388 = vunpack.c.l.b16 %v3374
    %v3389 = vunpack.c.l.b16 %v3375
    %v3390 = vunpack.c.l.b16 %v3376
    %v3391 = vunpack.c.l.b16 %v3377
    %v3392 = vpack.c.b16 %v3389, %v3388
    %v3393 = vpack.c.b16 %v3391, %v3390
    %3396 = vmatprep.subr.bf16.mxu0 0
    %3397 = vmatpush1.bf16.msra.mxu0 0
    %3398 = vmatprep.subr.bf16.mxu0 0
    %3399 = vmatpush1.bf16.msra.mxu0 0
    %3400 = vmatprep.subr.bf16.mxu0 0
    %3401 = vmatpush1.bf16.msra.mxu0 0
    %3402 = vmatprep.subr.bf16.mxu0 0
    %3403 = vmatpush1.bf16.msra.mxu0 0
    %3404 = vmatprep.subr.bf16.mxu0 0
    %3405 = vmatpush1.bf16.msra.mxu0 0
    %3406 = vmatprep.subr.bf16.mxu0 0
    %3407 = vmatpush1.bf16.msra.mxu0 0
    %3408 = vmatprep.subr.bf16.mxu0 0
    %3409 = vmatpush1.bf16.msra.mxu0 %v3393
    %3410 = vmatprep.subr.bf16.mxu0 0
    %3411 = vmatpush1.bf16.msra.mxu0 %v3392
    %3412 = vmatprep.subr.bf16.mxu0 0
    %3413 = vmatpush2.bf16.msra.mxu0 0
    %3414 = vmatprep.subr.bf16.mxu0 0
    %3415 = vmatpush2.bf16.msra.mxu0 0
    %3416 = vmatprep.subr.bf16.mxu0 0
    %3417 = vmatpush2.bf16.msra.mxu0 0
    %3418 = vmatprep.subr.bf16.mxu0 0
    %3419 = vmatpush2.bf16.msra.mxu0 0
    %3420 = vmatprep.subr.bf16.mxu0 0
    %3421 = vmatpush2.bf16.msra.mxu0 0
    %3422 = vmatprep.subr.bf16.mxu0 0
    %3423 = vmatpush2.bf16.msra.mxu0 0
    %3424 = vmatprep.subr.bf16.mxu0 0
    %3425 = vmatpush2.bf16.msra.mxu0 0
    %3426 = vmatprep.subr.bf16.mxu0 0
    %3427 = vmatpush2.bf16.msra.mxu0 0
    %3428 = vmatprep.mubr.bf16.mxu0 0
    %3429 = vmatmul.mubr.bf16.gmra.mxu0 %v261
    %v3430 = vpop.f32.mrf.mxu0
    %v3431 = vadd.f32 0.0, %v3430
    %v3432 = vpop.f32.mrf.mxu0
    %v3433 = vpop.f32.mrf.mxu0
    %v3434 = vpop.f32.mrf.mxu0
    %3435 = vdwg.mxu0
    %v3436 = vunpack.c.l.bf16 %v3383
    %v3437 = vadd.f32 %v3436, %v3431
    %3438 = vrot.lane.b32.xlu0 %v3392, 96
    %v3439 = vpop.permute.xlu0 %3438
    %3440 = vrot.lane.b32.xlu0 %v3393, 96
    %v3441 = vpop.permute.xlu0 %3440
    %3444 = vmatprep.subr.bf16.mxu0 0
    %3445 = vmatpush1.bf16.msra.mxu0 0
    %3446 = vmatprep.subr.bf16.mxu0 0
    %3447 = vmatpush1.bf16.msra.mxu0 0
    %3448 = vmatprep.subr.bf16.mxu0 0
    %3449 = vmatpush1.bf16.msra.mxu0 0
    %3450 = vmatprep.subr.bf16.mxu0 0
    %3451 = vmatpush1.bf16.msra.mxu0 0
    %3452 = vmatprep.subr.bf16.mxu0 0
    %3453 = vmatpush1.bf16.msra.mxu0 0
    %3454 = vmatprep.subr.bf16.mxu0 0
    %3455 = vmatpush1.bf16.msra.mxu0 0
    %3456 = vmatprep.subr.bf16.mxu0 0
    %3457 = vmatpush1.bf16.msra.mxu0 %v3441
    %3458 = vmatprep.subr.bf16.mxu0 0
    %3459 = vmatpush1.bf16.msra.mxu0 %v3439
    %3460 = vmatprep.subr.bf16.mxu0 0
    %3461 = vmatpush2.bf16.msra.mxu0 0
    %3462 = vmatprep.subr.bf16.mxu0 0
    %3463 = vmatpush2.bf16.msra.mxu0 0
    %3464 = vmatprep.subr.bf16.mxu0 0
    %3465 = vmatpush2.bf16.msra.mxu0 0
    %3466 = vmatprep.subr.bf16.mxu0 0
    %3467 = vmatpush2.bf16.msra.mxu0 0
    %3468 = vmatprep.subr.bf16.mxu0 0
    %3469 = vmatpush2.bf16.msra.mxu0 0
    %3470 = vmatprep.subr.bf16.mxu0 0
    %3471 = vmatpush2.bf16.msra.mxu0 0
    %3472 = vmatprep.subr.bf16.mxu0 0
    %3473 = vmatpush2.bf16.msra.mxu0 0
    %3474 = vmatprep.subr.bf16.mxu0 0
    %3475 = vmatpush2.bf16.msra.mxu0 0
    %3476 = vmatprep.mubr.bf16.mxu0 0
    %3477 = vmatmul.mubr.bf16.gmra.mxu0 %v261
    %v3478 = vpop.f32.mrf.mxu0
    %v3479 = vadd.f32 0.0, %v3478
    %v3480 = vpop.f32.mrf.mxu0
    %v3481 = vpop.f32.mrf.mxu0
    %v3482 = vpop.f32.mrf.mxu0
    %3483 = vdwg.mxu0
    %3485 = vrot.lane.b32.xlu0 %v3479, 32
    %v3486 = vpop.permute.xlu0 %3485
    %v3488 = vadd.f32 %v3436, %v3486
    %3489 = vrot.lane.b32.xlu0 %v3392, 64
    %v3490 = vpop.permute.xlu0 %3489
    %3491 = vrot.lane.b32.xlu0 %v3393, 64
    %v3492 = vpop.permute.xlu0 %3491
    %3495 = vmatprep.subr.bf16.mxu0 0
    %3496 = vmatpush1.bf16.msra.mxu0 0
    %3497 = vmatprep.subr.bf16.mxu0 0
    %3498 = vmatpush1.bf16.msra.mxu0 0
    %3499 = vmatprep.subr.bf16.mxu0 0
    %3500 = vmatpush1.bf16.msra.mxu0 0
    %3501 = vmatprep.subr.bf16.mxu0 0
    %3502 = vmatpush1.bf16.msra.mxu0 0
    %3503 = vmatprep.subr.bf16.mxu0 0
    %3504 = vmatpush1.bf16.msra.mxu0 0
    %3505 = vmatprep.subr.bf16.mxu0 0
    %3506 = vmatpush1.bf16.msra.mxu0 0
    %3507 = vmatprep.subr.bf16.mxu0 0
    %3508 = vmatpush1.bf16.msra.mxu0 %v3492
    %3509 = vmatprep.subr.bf16.mxu0 0
    %3510 = vmatpush1.bf16.msra.mxu0 %v3490
    %3511 = vmatprep.subr.bf16.mxu0 0
    %3512 = vmatpush2.bf16.msra.mxu0 0
    %3513 = vmatprep.subr.bf16.mxu0 0
    %3514 = vmatpush2.bf16.msra.mxu0 0
    %3515 = vmatprep.subr.bf16.mxu0 0
    %3516 = vmatpush2.bf16.msra.mxu0 0
    %3517 = vmatprep.subr.bf16.mxu0 0
    %3518 = vmatpush2.bf16.msra.mxu0 0
    %3519 = vmatprep.subr.bf16.mxu0 0
    %3520 = vmatpush2.bf16.msra.mxu0 0
    %3521 = vmatprep.subr.bf16.mxu0 0
    %3522 = vmatpush2.bf16.msra.mxu0 0
    %3523 = vmatprep.subr.bf16.mxu0 0
    %3524 = vmatpush2.bf16.msra.mxu0 0
    %3525 = vmatprep.subr.bf16.mxu0 0
    %3526 = vmatpush2.bf16.msra.mxu0 0
    %3527 = vmatprep.mubr.bf16.mxu0 0
    %3528 = vmatmul.mubr.bf16.gmra.mxu0 %v261
    %v3529 = vpop.f32.mrf.mxu0
    %v3530 = vadd.f32 0.0, %v3529
    %v3531 = vpop.f32.mrf.mxu0
    %v3532 = vpop.f32.mrf.mxu0
    %v3533 = vpop.f32.mrf.mxu0
    %3534 = vdwg.mxu0
    %3536 = vrot.lane.b32.xlu0 %v3530, 64
    %v3537 = vpop.permute.xlu0 %3536
    %v3539 = vadd.f32 %v3436, %v3537
    %3540 = vrot.lane.b32.xlu0 %v3392, 32
    %v3541 = vpop.permute.xlu0 %3540
    %3542 = vrot.lane.b32.xlu0 %v3393, 32
    %v3543 = vpop.permute.xlu0 %3542
    %3546 = vmatprep.subr.bf16.mxu0 0
    %3547 = vmatpush1.bf16.msra.mxu0 0
    %3548 = vmatprep.subr.bf16.mxu0 0
    %3549 = vmatpush1.bf16.msra.mxu0 0
    %3550 = vmatprep.subr.bf16.mxu0 0
    %3551 = vmatpush1.bf16.msra.mxu0 0
    %3552 = vmatprep.subr.bf16.mxu0 0
    %3553 = vmatpush1.bf16.msra.mxu0 0
    %3554 = vmatprep.subr.bf16.mxu0 0
    %3555 = vmatpush1.bf16.msra.mxu0 0
    %3556 = vmatprep.subr.bf16.mxu0 0
    %3557 = vmatpush1.bf16.msra.mxu0 0
    %3558 = vmatprep.subr.bf16.mxu0 0
    %3559 = vmatpush1.bf16.msra.mxu0 %v3543
    %3560 = vmatprep.subr.bf16.mxu0 0
    %3561 = vmatpush1.bf16.msra.mxu0 %v3541
    %3562 = vmatprep.subr.bf16.mxu0 0
    %3563 = vmatpush2.bf16.msra.mxu0 0
    %3564 = vmatprep.subr.bf16.mxu0 0
    %3565 = vmatpush2.bf16.msra.mxu0 0
    %3566 = vmatprep.subr.bf16.mxu0 0
    %3567 = vmatpush2.bf16.msra.mxu0 0
    %3568 = vmatprep.subr.bf16.mxu0 0
    %3569 = vmatpush2.bf16.msra.mxu0 0
    %3570 = vmatprep.subr.bf16.mxu0 0
    %3571 = vmatpush2.bf16.msra.mxu0 0
    %3572 = vmatprep.subr.bf16.mxu0 0
    %3573 = vmatpush2.bf16.msra.mxu0 0
    %3574 = vmatprep.subr.bf16.mxu0 0
    %3575 = vmatpush2.bf16.msra.mxu0 0
    %3576 = vmatprep.subr.bf16.mxu0 0
    %3577 = vmatpush2.bf16.msra.mxu0 0
    %3578 = vmatprep.mubr.bf16.mxu0 0
    %3579 = vmatmul.mubr.bf16.gmra.mxu0 %v261
    %v3580 = vpop.f32.mrf.mxu0
    %v3581 = vadd.f32 0.0, %v3580
    %v3582 = vpop.f32.mrf.mxu0
    %v3583 = vpop.f32.mrf.mxu0
    %v3584 = vpop.f32.mrf.mxu0
    %3585 = vdwg.mxu0
    %3587 = vrot.lane.b32.xlu0 %v3581, 96
    %v3588 = vpop.permute.xlu0 %3587
    %v3590 = vadd.f32 %v3436, %v3588
    %v3591 = vxor.u32 %v3437, 2147483648
    %v3592 = vmul.f32 %v3591, 1.442695
    %v3593 = vpow.pop %v3592
    %v3594 = vadd.f32 %v3593, 1.0
    %v3595 = vrcp.pop %v3594
    %v3596 = vmul.f32 1.0, %v3595
    %v3597 = vxor.u32 %v3488, 2147483648
    %v3598 = vmul.f32 %v3597, 1.442695
    %v3599 = vpow.pop %v3598
    %v3600 = vadd.f32 %v3599, 1.0
    %v3601 = vrcp.pop %v3600
    %v3602 = vmul.f32 1.0, %v3601
    %v3603 = vtanh.pop %v3539
    %v3604 = vxor.u32 %v3590, 2147483648
    %v3605 = vmul.f32 %v3604, 1.442695
    %v3606 = vpow.pop %v3605
    %v3607 = vadd.f32 %v3606, 1.0
    %v3608 = vrcp.pop %v3607
    %v3609 = vmul.f32 1.0, %v3608
    %v3610 = vmul.f32 %v3602, 0.0
    %3612 = vrot.lane.b32.xlu0 %v3603, 64
    %v3613 = vpop.permute.xlu0 %3612
    %v3615 = vmul.f32 %v3596, %v3613
    %3617 = vrot.lane.b32.xlu0 %v3615, 32
    %v3618 = vpop.permute.xlu0 %3617
    %v3620 = vadd.f32 %v3610, %v3618
    %v3621 = vtanh.pop %v3620
    %3623 = vrot.lane.b32.xlu0 %v3621, 64
    %v3624 = vpop.permute.xlu0 %3623
    %v3626 = vmul.f32 %v3609, %v3624
    %v3627 = vpack.c.bf16 %v3626, %v3626
    %v3628 = vshrl.u32 %v3373, 16
    %v3632 = vrot.slane %v3373, 4
    %v3634 = vsel %vm245, %v3628, %v3632
    %3636 = vrot.lane.b32.xlu0 %v3627, 32
    %v3637 = vpop.permute.xlu0 %3636
    %v3639 = vsel %vm259, %v3637, 0
    %3641 = vmatprep.subr.bf16.mxu0 0
    %3642 = vmatpush1.bf16.msra.mxu0 0
    %3643 = vmatprep.subr.bf16.mxu0 0
    %3644 = vmatpush1.bf16.msra.mxu0 0
    %3645 = vmatprep.subr.bf16.mxu0 0
    %3646 = vmatpush1.bf16.msra.mxu0 0
    %3647 = vmatprep.subr.bf16.mxu0 0
    %3648 = vmatpush1.bf16.msra.mxu0 0
    %3649 = vmatprep.subr.bf16.mxu0 0
    %3650 = vmatpush1.bf16.msra.mxu0 0
    %3651 = vmatprep.subr.bf16.mxu0 0
    %3652 = vmatpush1.bf16.msra.mxu0 0
    %3653 = vmatprep.subr.bf16.mxu0 0
    %3654 = vmatpush1.bf16.msra.mxu0 %v3393
    %3655 = vmatprep.subr.bf16.mxu0 0
    %3656 = vmatpush1.bf16.msra.mxu0 %v3392
    %3657 = vmatprep.subr.bf16.mxu0 0
    %3658 = vmatpush2.bf16.msra.mxu0 0
    %3659 = vmatprep.subr.bf16.mxu0 0
    %3660 = vmatpush2.bf16.msra.mxu0 0
    %3661 = vmatprep.subr.bf16.mxu0 0
    %3662 = vmatpush2.bf16.msra.mxu0 0
    %3663 = vmatprep.subr.bf16.mxu0 0
    %3664 = vmatpush2.bf16.msra.mxu0 0
    %3665 = vmatprep.subr.bf16.mxu0 0
    %3666 = vmatpush2.bf16.msra.mxu0 0
    %3667 = vmatprep.subr.bf16.mxu0 0
    %3668 = vmatpush2.bf16.msra.mxu0 0
    %3669 = vmatprep.subr.bf16.mxu0 0
    %3670 = vmatpush2.bf16.msra.mxu0 0
    %3671 = vmatprep.subr.bf16.mxu0 0
    %3672 = vmatpush2.bf16.msra.mxu0 0
    %3673 = vmatprep.mubr.bf16.mxu0 0
    %3674 = vmatmul.mubr.bf16.gmra.mxu0 %v3639
    %v3675 = vpop.f32.mrf.mxu0
    %v3676 = vadd.f32 0.0, %v3675
    %v3677 = vpop.f32.mrf.mxu0
    %v3678 = vpop.f32.mrf.mxu0
    %v3679 = vpop.f32.mrf.mxu0
    %3680 = vdwg.mxu0
    %v3681 = vunpack.c.l.bf16 %v3634
    %v3682 = vadd.f32 %v3681, %v3676
    %3683 = vmatprep.subr.bf16.mxu0 0
    %3684 = vmatpush1.bf16.msra.mxu0 0
    %3685 = vmatprep.subr.bf16.mxu0 0
    %3686 = vmatpush1.bf16.msra.mxu0 0
    %3687 = vmatprep.subr.bf16.mxu0 0
    %3688 = vmatpush1.bf16.msra.mxu0 0
    %3689 = vmatprep.subr.bf16.mxu0 0
    %3690 = vmatpush1.bf16.msra.mxu0 0
    %3691 = vmatprep.subr.bf16.mxu0 0
    %3692 = vmatpush1.bf16.msra.mxu0 0
    %3693 = vmatprep.subr.bf16.mxu0 0
    %3694 = vmatpush1.bf16.msra.mxu0 0
    %3695 = vmatprep.subr.bf16.mxu0 0
    %3696 = vmatpush1.bf16.msra.mxu0 %v3441
    %3697 = vmatprep.subr.bf16.mxu0 0
    %3698 = vmatpush1.bf16.msra.mxu0 %v3439
    %3699 = vmatprep.subr.bf16.mxu0 0
    %3700 = vmatpush2.bf16.msra.mxu0 0
    %3701 = vmatprep.subr.bf16.mxu0 0
    %3702 = vmatpush2.bf16.msra.mxu0 0
    %3703 = vmatprep.subr.bf16.mxu0 0
    %3704 = vmatpush2.bf16.msra.mxu0 0
    %3705 = vmatprep.subr.bf16.mxu0 0
    %3706 = vmatpush2.bf16.msra.mxu0 0
    %3707 = vmatprep.subr.bf16.mxu0 0
    %3708 = vmatpush2.bf16.msra.mxu0 0
    %3709 = vmatprep.subr.bf16.mxu0 0
    %3710 = vmatpush2.bf16.msra.mxu0 0
    %3711 = vmatprep.subr.bf16.mxu0 0
    %3712 = vmatpush2.bf16.msra.mxu0 0
    %3713 = vmatprep.subr.bf16.mxu0 0
    %3714 = vmatpush2.bf16.msra.mxu0 0
    %3715 = vmatprep.mubr.bf16.mxu0 0
    %3716 = vmatmul.mubr.bf16.gmra.mxu0 %v3639
    %v3717 = vpop.f32.mrf.mxu0
    %v3718 = vadd.f32 0.0, %v3717
    %v3719 = vpop.f32.mrf.mxu0
    %v3720 = vpop.f32.mrf.mxu0
    %v3721 = vpop.f32.mrf.mxu0
    %3722 = vdwg.mxu0
    %3724 = vrot.lane.b32.xlu0 %v3718, 32
    %v3725 = vpop.permute.xlu0 %3724
    %v3727 = vadd.f32 %v3681, %v3725
    %3728 = vmatprep.subr.bf16.mxu0 0
    %3729 = vmatpush1.bf16.msra.mxu0 0
    %3730 = vmatprep.subr.bf16.mxu0 0
    %3731 = vmatpush1.bf16.msra.mxu0 0
    %3732 = vmatprep.subr.bf16.mxu0 0
    %3733 = vmatpush1.bf16.msra.mxu0 0
    %3734 = vmatprep.subr.bf16.mxu0 0
    %3735 = vmatpush1.bf16.msra.mxu0 0
    %3736 = vmatprep.subr.bf16.mxu0 0
    %3737 = vmatpush1.bf16.msra.mxu0 0
    %3738 = vmatprep.subr.bf16.mxu0 0
    %3739 = vmatpush1.bf16.msra.mxu0 0
    %3740 = vmatprep.subr.bf16.mxu0 0
    %3741 = vmatpush1.bf16.msra.mxu0 %v3492
    %3742 = vmatprep.subr.bf16.mxu0 0
    %3743 = vmatpush1.bf16.msra.mxu0 %v3490
    %3744 = vmatprep.subr.bf16.mxu0 0
    %3745 = vmatpush2.bf16.msra.mxu0 0
    %3746 = vmatprep.subr.bf16.mxu0 0
    %3747 = vmatpush2.bf16.msra.mxu0 0
    %3748 = vmatprep.subr.bf16.mxu0 0
    %3749 = vmatpush2.bf16.msra.mxu0 0
    %3750 = vmatprep.subr.bf16.mxu0 0
    %3751 = vmatpush2.bf16.msra.mxu0 0
    %3752 = vmatprep.subr.bf16.mxu0 0
    %3753 = vmatpush2.bf16.msra.mxu0 0
    %3754 = vmatprep.subr.bf16.mxu0 0
    %3755 = vmatpush2.bf16.msra.mxu0 0
    %3756 = vmatprep.subr.bf16.mxu0 0
    %3757 = vmatpush2.bf16.msra.mxu0 0
    %3758 = vmatprep.subr.bf16.mxu0 0
    %3759 = vmatpush2.bf16.msra.mxu0 0
    %3760 = vmatprep.mubr.bf16.mxu0 0
    %3761 = vmatmul.mubr.bf16.gmra.mxu0 %v3639
    %v3762 = vpop.f32.mrf.mxu0
    %v3763 = vadd.f32 0.0, %v3762
    %v3764 = vpop.f32.mrf.mxu0
    %v3765 = vpop.f32.mrf.mxu0
    %v3766 = vpop.f32.mrf.mxu0
    %3767 = vdwg.mxu0
    %3769 = vrot.lane.b32.xlu0 %v3763, 64
    %v3770 = vpop.permute.xlu0 %3769
    %v3772 = vadd.f32 %v3681, %v3770
    %3773 = vmatprep.subr.bf16.mxu0 0
    %3774 = vmatpush1.bf16.msra.mxu0 0
    %3775 = vmatprep.subr.bf16.mxu0 0
    %3776 = vmatpush1.bf16.msra.mxu0 0
    %3777 = vmatprep.subr.bf16.mxu0 0
    %3778 = vmatpush1.bf16.msra.mxu0 0
    %3779 = vmatprep.subr.bf16.mxu0 0
    %3780 = vmatpush1.bf16.msra.mxu0 0
    %3781 = vmatprep.subr.bf16.mxu0 0
    %3782 = vmatpush1.bf16.msra.mxu0 0
    %3783 = vmatprep.subr.bf16.mxu0 0
    %3784 = vmatpush1.bf16.msra.mxu0 0
    %3785 = vmatprep.subr.bf16.mxu0 0
    %3786 = vmatpush1.bf16.msra.mxu0 %v3543
    %3787 = vmatprep.subr.bf16.mxu0 0
    %3788 = vmatpush1.bf16.msra.mxu0 %v3541
    %3789 = vmatprep.subr.bf16.mxu0 0
    %3790 = vmatpush2.bf16.msra.mxu0 0
    %3791 = vmatprep.subr.bf16.mxu0 0
    %3792 = vmatpush2.bf16.msra.mxu0 0
    %3793 = vmatprep.subr.bf16.mxu0 0
    %3794 = vmatpush2.bf16.msra.mxu0 0
    %3795 = vmatprep.subr.bf16.mxu0 0
    %3796 = vmatpush2.bf16.msra.mxu0 0
    %3797 = vmatprep.subr.bf16.mxu0 0
    %3798 = vmatpush2.bf16.msra.mxu0 0
    %3799 = vmatprep.subr.bf16.mxu0 0
    %3800 = vmatpush2.bf16.msra.mxu0 0
    %3801 = vmatprep.subr.bf16.mxu0 0
    %3802 = vmatpush2.bf16.msra.mxu0 0
    %3803 = vmatprep.subr.bf16.mxu0 0
    %3804 = vmatpush2.bf16.msra.mxu0 0
    %3805 = vmatprep.mubr.bf16.mxu0 0
    %3806 = vmatmul.mubr.bf16.gmra.mxu0 %v3639
    %v3807 = vpop.f32.mrf.mxu0
    %v3808 = vadd.f32 0.0, %v3807
    %v3809 = vpop.f32.mrf.mxu0
    %v3810 = vpop.f32.mrf.mxu0
    %v3811 = vpop.f32.mrf.mxu0
    %3812 = vdwg.mxu0
    %3814 = vrot.lane.b32.xlu0 %v3808, 96
    %v3815 = vpop.permute.xlu0 %3814
    %v3817 = vadd.f32 %v3681, %v3815
    %v3818 = vxor.u32 %v3682, 2147483648
    %v3819 = vmul.f32 %v3818, 1.442695
    %v3820 = vpow.pop %v3819
    %v3821 = vadd.f32 %v3820, 1.0
    %v3822 = vrcp.pop %v3821
    %v3823 = vmul.f32 1.0, %v3822
    %v3824 = vxor.u32 %v3727, 2147483648
    %v3825 = vmul.f32 %v3824, 1.442695
    %v3826 = vpow.pop %v3825
    %v3827 = vadd.f32 %v3826, 1.0
    %v3828 = vrcp.pop %v3827
    %v3829 = vmul.f32 1.0, %v3828
    %v3830 = vtanh.pop %v3772
    %v3831 = vxor.u32 %v3817, 2147483648
    %v3832 = vmul.f32 %v3831, 1.442695
    %v3833 = vpow.pop %v3832
    %v3834 = vadd.f32 %v3833, 1.0
    %v3835 = vrcp.pop %v3834
    %v3836 = vmul.f32 1.0, %v3835
    %v3837 = vmul.f32 %v3829, %v3620
    %3839 = vrot.lane.b32.xlu0 %v3830, 64
    %v3840 = vpop.permute.xlu0 %3839
    %v3842 = vmul.f32 %v3823, %v3840
    %3844 = vrot.lane.b32.xlu0 %v3842, 32
    %v3845 = vpop.permute.xlu0 %3844
    %v3847 = vadd.f32 %v3837, %v3845
    %v3848 = vtanh.pop %v3847
    %3850 = vrot.lane.b32.xlu0 %v3848, 64
    %v3851 = vpop.permute.xlu0 %3850
    %v3853 = vmul.f32 %v3836, %v3851
    %v3854 = vpack.c.bf16 %v3853, %v3853
    %v3855 = vrot.slane %v3373, 1
    %v3857 = vrot.slane %v3379, 5
    %v3859 = vsel %vm245, %v3855, %v3857
    %3861 = vrot.lane.b32.xlu0 %v3854, 32
    %v3862 = vpop.permute.xlu0 %3861
    %v3864 = vsel %vm259, %v3862, 0
    %3866 = vmatprep.subr.bf16.mxu0 0
    %3867 = vmatpush1.bf16.msra.mxu0 0
    %3868 = vmatprep.subr.bf16.mxu0 0
    %3869 = vmatpush1.bf16.msra.mxu0 0
    %3870 = vmatprep.subr.bf16.mxu0 0
    %3871 = vmatpush1.bf16.msra.mxu0 0
    %3872 = vmatprep.subr.bf16.mxu0 0
    %3873 = vmatpush1.bf16.msra.mxu0 0
    %3874 = vmatprep.subr.bf16.mxu0 0
    %3875 = vmatpush1.bf16.msra.mxu0 0
    %3876 = vmatprep.subr.bf16.mxu0 0
    %3877 = vmatpush1.bf16.msra.mxu0 0
    %3878 = vmatprep.subr.bf16.mxu0 0
    %3879 = vmatpush1.bf16.msra.mxu0 %v3393
    %3880 = vmatprep.subr.bf16.mxu0 0
    %3881 = vmatpush1.bf16.msra.mxu0 %v3392
    %3882 = vmatprep.subr.bf16.mxu0 0
    %3883 = vmatpush2.bf16.msra.mxu0 0
    %3884 = vmatprep.subr.bf16.mxu0 0
    %3885 = vmatpush2.bf16.msra.mxu0 0
    %3886 = vmatprep.subr.bf16.mxu0 0
    %3887 = vmatpush2.bf16.msra.mxu0 0
    %3888 = vmatprep.subr.bf16.mxu0 0
    %3889 = vmatpush2.bf16.msra.mxu0 0
    %3890 = vmatprep.subr.bf16.mxu0 0
    %3891 = vmatpush2.bf16.msra.mxu0 0
    %3892 = vmatprep.subr.bf16.mxu0 0
    %3893 = vmatpush2.bf16.msra.mxu0 0
    %3894 = vmatprep.subr.bf16.mxu0 0
    %3895 = vmatpush2.bf16.msra.mxu0 0
    %3896 = vmatprep.subr.bf16.mxu0 0
    %3897 = vmatpush2.bf16.msra.mxu0 0
    %3898 = vmatprep.mubr.bf16.mxu0 0
    %3899 = vmatmul.mubr.bf16.gmra.mxu0 %v3864
    %v3900 = vpop.f32.mrf.mxu0
    %v3901 = vadd.f32 0.0, %v3900
    %v3902 = vpop.f32.mrf.mxu0
    %v3903 = vpop.f32.mrf.mxu0
    %v3904 = vpop.f32.mrf.mxu0
    %3905 = vdwg.mxu0
    %v3906 = vunpack.c.l.bf16 %v3859
    %v3907 = vadd.f32 %v3906, %v3901
    %3908 = vmatprep.subr.bf16.mxu0 0
    %3909 = vmatpush1.bf16.msra.mxu0 0
    %3910 = vmatprep.subr.bf16.mxu0 0
    %3911 = vmatpush1.bf16.msra.mxu0 0
    %3912 = vmatprep.subr.bf16.mxu0 0
    %3913 = vmatpush1.bf16.msra.mxu0 0
    %3914 = vmatprep.subr.bf16.mxu0 0
    %3915 = vmatpush1.bf16.msra.mxu0 0
    %3916 = vmatprep.subr.bf16.mxu0 0
    %3917 = vmatpush1.bf16.msra.mxu0 0
    %3918 = vmatprep.subr.bf16.mxu0 0
    %3919 = vmatpush1.bf16.msra.mxu0 0
    %3920 = vmatprep.subr.bf16.mxu0 0
    %3921 = vmatpush1.bf16.msra.mxu0 %v3441
    %3922 = vmatprep.subr.bf16.mxu0 0
    %3923 = vmatpush1.bf16.msra.mxu0 %v3439
    %3924 = vmatprep.subr.bf16.mxu0 0
    %3925 = vmatpush2.bf16.msra.mxu0 0
    %3926 = vmatprep.subr.bf16.mxu0 0
    %3927 = vmatpush2.bf16.msra.mxu0 0
    %3928 = vmatprep.subr.bf16.mxu0 0
    %3929 = vmatpush2.bf16.msra.mxu0 0
    %3930 = vmatprep.subr.bf16.mxu0 0
    %3931 = vmatpush2.bf16.msra.mxu0 0
    %3932 = vmatprep.subr.bf16.mxu0 0
    %3933 = vmatpush2.bf16.msra.mxu0 0
    %3934 = vmatprep.subr.bf16.mxu0 0
    %3935 = vmatpush2.bf16.msra.mxu0 0
    %3936 = vmatprep.subr.bf16.mxu0 0
    %3937 = vmatpush2.bf16.msra.mxu0 0
    %3938 = vmatprep.subr.bf16.mxu0 0
    %3939 = vmatpush2.bf16.msra.mxu0 0
    %3940 = vmatprep.mubr.bf16.mxu0 0
    %3941 = vmatmul.mubr.bf16.gmra.mxu0 %v3864
    %v3942 = vpop.f32.mrf.mxu0
    %v3943 = vadd.f32 0.0, %v3942
    %v3944 = vpop.f32.mrf.mxu0
    %v3945 = vpop.f32.mrf.mxu0
    %v3946 = vpop.f32.mrf.mxu0
    %3947 = vdwg.mxu0
    %3949 = vrot.lane.b32.xlu0 %v3943, 32
    %v3950 = vpop.permute.xlu0 %3949
    %v3952 = vadd.f32 %v3906, %v3950
    %3953 = vmatprep.subr.bf16.mxu0 0
    %3954 = vmatpush1.bf16.msra.mxu0 0
    %3955 = vmatprep.subr.bf16.mxu0 0
    %3956 = vmatpush1.bf16.msra.mxu0 0
    %3957 = vmatprep.subr.bf16.mxu0 0
    %3958 = vmatpush1.bf16.msra.mxu0 0
    %3959 = vmatprep.subr.bf16.mxu0 0
    %3960 = vmatpush1.bf16.msra.mxu0 0
    %3961 = vmatprep.subr.bf16.mxu0 0
    %3962 = vmatpush1.bf16.msra.mxu0 0
    %3963 = vmatprep.subr.bf16.mxu0 0
    %3964 = vmatpush1.bf16.msra.mxu0 0
    %3965 = vmatprep.subr.bf16.mxu0 0
    %3966 = vmatpush1.bf16.msra.mxu0 %v3492
    %3967 = vmatprep.subr.bf16.mxu0 0
    %3968 = vmatpush1.bf16.msra.mxu0 %v3490
    %3969 = vmatprep.subr.bf16.mxu0 0
    %3970 = vmatpush2.bf16.msra.mxu0 0
    %3971 = vmatprep.subr.bf16.mxu0 0
    %3972 = vmatpush2.bf16.msra.mxu0 0
    %3973 = vmatprep.subr.bf16.mxu0 0
    %3974 = vmatpush2.bf16.msra.mxu0 0
    %3975 = vmatprep.subr.bf16.mxu0 0
    %3976 = vmatpush2.bf16.msra.mxu0 0
    %3977 = vmatprep.subr.bf16.mxu0 0
    %3978 = vmatpush2.bf16.msra.mxu0 0
    %3979 = vmatprep.subr.bf16.mxu0 0
    %3980 = vmatpush2.bf16.msra.mxu0 0
    %3981 = vmatprep.subr.bf16.mxu0 0
    %3982 = vmatpush2.bf16.msra.mxu0 0
    %3983 = vmatprep.subr.bf16.mxu0 0
    %3984 = vmatpush2.bf16.msra.mxu0 0
    %3985 = vmatprep.mubr.bf16.mxu0 0
    %3986 = vmatmul.mubr.bf16.gmra.mxu0 %v3864
    %v3987 = vpop.f32.mrf.mxu0
    %v3988 = vadd.f32 0.0, %v3987
    %v3989 = vpop.f32.mrf.mxu0
    %v3990 = vpop.f32.mrf.mxu0
    %v3991 = vpop.f32.mrf.mxu0
    %3992 = vdwg.mxu0
    %3994 = vrot.lane.b32.xlu0 %v3988, 64
    %v3995 = vpop.permute.xlu0 %3994
    %v3997 = vadd.f32 %v3906, %v3995
    %3998 = vmatprep.subr.bf16.mxu0 0
    %3999 = vmatpush1.bf16.msra.mxu0 0
    %4000 = vmatprep.subr.bf16.mxu0 0
    %4001 = vmatpush1.bf16.msra.mxu0 0
    %4002 = vmatprep.subr.bf16.mxu0 0
    %4003 = vmatpush1.bf16.msra.mxu0 0
    %4004 = vmatprep.subr.bf16.mxu0 0
    %4005 = vmatpush1.bf16.msra.mxu0 0
    %4006 = vmatprep.subr.bf16.mxu0 0
    %4007 = vmatpush1.bf16.msra.mxu0 0
    %4008 = vmatprep.subr.bf16.mxu0 0
    %4009 = vmatpush1.bf16.msra.mxu0 0
    %4010 = vmatprep.subr.bf16.mxu0 0
    %4011 = vmatpush1.bf16.msra.mxu0 %v3543
    %4012 = vmatprep.subr.bf16.mxu0 0
    %4013 = vmatpush1.bf16.msra.mxu0 %v3541
    %4014 = vmatprep.subr.bf16.mxu0 0
    %4015 = vmatpush2.bf16.msra.mxu0 0
    %4016 = vmatprep.subr.bf16.mxu0 0
    %4017 = vmatpush2.bf16.msra.mxu0 0
    %4018 = vmatprep.subr.bf16.mxu0 0
    %4019 = vmatpush2.bf16.msra.mxu0 0
    %4020 = vmatprep.subr.bf16.mxu0 0
    %4021 = vmatpush2.bf16.msra.mxu0 0
    %4022 = vmatprep.subr.bf16.mxu0 0
    %4023 = vmatpush2.bf16.msra.mxu0 0
    %4024 = vmatprep.subr.bf16.mxu0 0
    %4025 = vmatpush2.bf16.msra.mxu0 0
    %4026 = vmatprep.subr.bf16.mxu0 0
    %4027 = vmatpush2.bf16.msra.mxu0 0
    %4028 = vmatprep.subr.bf16.mxu0 0
    %4029 = vmatpush2.bf16.msra.mxu0 0
    %4030 = vmatprep.mubr.bf16.mxu0 0
    %4031 = vmatmul.mubr.bf16.gmra.mxu0 %v3864
    %v4032 = vpop.f32.mrf.mxu0
    %v4033 = vadd.f32 0.0, %v4032
    %v4034 = vpop.f32.mrf.mxu0
    %v4035 = vpop.f32.mrf.mxu0
    %v4036 = vpop.f32.mrf.mxu0
    %4037 = vdwg.mxu0
    %4039 = vrot.lane.b32.xlu0 %v4033, 96
    %v4040 = vpop.permute.xlu0 %4039
    %v4042 = vadd.f32 %v3906, %v4040
    %v4043 = vxor.u32 %v3907, 2147483648
    %v4044 = vmul.f32 %v4043, 1.442695
    %v4045 = vpow.pop %v4044
    %v4046 = vadd.f32 %v4045, 1.0
    %v4047 = vrcp.pop %v4046
    %v4048 = vmul.f32 1.0, %v4047
    %v4049 = vxor.u32 %v3952, 2147483648
    %v4050 = vmul.f32 %v4049, 1.442695
    %v4051 = vpow.pop %v4050
    %v4052 = vadd.f32 %v4051, 1.0
    %v4053 = vrcp.pop %v4052
    %v4054 = vmul.f32 1.0, %v4053
    %v4055 = vtanh.pop %v3997
    %v4056 = vxor.u32 %v4042, 2147483648
    %v4057 = vmul.f32 %v4056, 1.442695
    %v4058 = vpow.pop %v4057
    %v4059 = vadd.f32 %v4058, 1.0
    %v4060 = vrcp.pop %v4059
    %v4061 = vmul.f32 1.0, %v4060
    %v4062 = vmul.f32 %v4054, %v3847
    %4064 = vrot.lane.b32.xlu0 %v4055, 64
    %v4065 = vpop.permute.xlu0 %4064
    %v4067 = vmul.f32 %v4048, %v4065
    %4069 = vrot.lane.b32.xlu0 %v4067, 32
    %v4070 = vpop.permute.xlu0 %4069
    %v4072 = vadd.f32 %v4062, %v4070
    %v4073 = vtanh.pop %v4072
    %4075 = vrot.lane.b32.xlu0 %v4073, 64
    %v4076 = vpop.permute.xlu0 %4075
    %v4078 = vmul.f32 %v4061, %v4076
    %v4079 = vpack.c.bf16 %v4078, %v4078
    %v4080 = vrot.slane %v3628, 1
    %v4082 = vrot.slane %v3373, 5
    %v4084 = vsel %vm245, %v4080, %v4082
    %4086 = vrot.lane.b32.xlu0 %v4079, 32
    %v4087 = vpop.permute.xlu0 %4086
    %v4089 = vsel %vm259, %v4087, 0
    %4091 = vmatprep.subr.bf16.mxu0 0
    %4092 = vmatpush1.bf16.msra.mxu0 0
    %4093 = vmatprep.subr.bf16.mxu0 0
    %4094 = vmatpush1.bf16.msra.mxu0 0
    %4095 = vmatprep.subr.bf16.mxu0 0
    %4096 = vmatpush1.bf16.msra.mxu0 0
    %4097 = vmatprep.subr.bf16.mxu0 0
    %4098 = vmatpush1.bf16.msra.mxu0 0
    %4099 = vmatprep.subr.bf16.mxu0 0
    %4100 = vmatpush1.bf16.msra.mxu0 0
    %4101 = vmatprep.subr.bf16.mxu0 0
    %4102 = vmatpush1.bf16.msra.mxu0 0
    %4103 = vmatprep.subr.bf16.mxu0 0
    %4104 = vmatpush1.bf16.msra.mxu0 %v3393
    %4105 = vmatprep.subr.bf16.mxu0 0
    %4106 = vmatpush1.bf16.msra.mxu0 %v3392
    %4107 = vmatprep.subr.bf16.mxu0 0
    %4108 = vmatpush2.bf16.msra.mxu0 0
    %4109 = vmatprep.subr.bf16.mxu0 0
    %4110 = vmatpush2.bf16.msra.mxu0 0
    %4111 = vmatprep.subr.bf16.mxu0 0
    %4112 = vmatpush2.bf16.msra.mxu0 0
    %4113 = vmatprep.subr.bf16.mxu0 0
    %4114 = vmatpush2.bf16.msra.mxu0 0
    %4115 = vmatprep.subr.bf16.mxu0 0
    %4116 = vmatpush2.bf16.msra.mxu0 0
    %4117 = vmatprep.subr.bf16.mxu0 0
    %4118 = vmatpush2.bf16.msra.mxu0 0
    %4119 = vmatprep.subr.bf16.mxu0 0
    %4120 = vmatpush2.bf16.msra.mxu0 0
    %4121 = vmatprep.subr.bf16.mxu0 0
    %4122 = vmatpush2.bf16.msra.mxu0 0
    %4123 = vmatprep.mubr.bf16.mxu0 0
    %4124 = vmatmul.mubr.bf16.gmra.mxu0 %v4089
    %v4125 = vpop.f32.mrf.mxu0
    %v4126 = vadd.f32 0.0, %v4125
    %v4127 = vpop.f32.mrf.mxu0
    %v4128 = vpop.f32.mrf.mxu0
    %v4129 = vpop.f32.mrf.mxu0
    %4130 = vdwg.mxu0
    %v4131 = vunpack.c.l.bf16 %v4084
    %v4132 = vadd.f32 %v4131, %v4126
    %4133 = vmatprep.subr.bf16.mxu0 0
    %4134 = vmatpush1.bf16.msra.mxu0 0
    %4135 = vmatprep.subr.bf16.mxu0 0
    %4136 = vmatpush1.bf16.msra.mxu0 0
    %4137 = vmatprep.subr.bf16.mxu0 0
    %4138 = vmatpush1.bf16.msra.mxu0 0
    %4139 = vmatprep.subr.bf16.mxu0 0
    %4140 = vmatpush1.bf16.msra.mxu0 0
    %4141 = vmatprep.subr.bf16.mxu0 0
    %4142 = vmatpush1.bf16.msra.mxu0 0
    %4143 = vmatprep.subr.bf16.mxu0 0
    %4144 = vmatpush1.bf16.msra.mxu0 0
    %4145 = vmatprep.subr.bf16.mxu0 0
    %4146 = vmatpush1.bf16.msra.mxu0 %v3441
    %4147 = vmatprep.subr.bf16.mxu0 0
    %4148 = vmatpush1.bf16.msra.mxu0 %v3439
    %4149 = vmatprep.subr.bf16.mxu0 0
    %4150 = vmatpush2.bf16.msra.mxu0 0
    %4151 = vmatprep.subr.bf16.mxu0 0
    %4152 = vmatpush2.bf16.msra.mxu0 0
    %4153 = vmatprep.subr.bf16.mxu0 0
    %4154 = vmatpush2.bf16.msra.mxu0 0
    %4155 = vmatprep.subr.bf16.mxu0 0
    %4156 = vmatpush2.bf16.msra.mxu0 0
    %4157 = vmatprep.subr.bf16.mxu0 0
    %4158 = vmatpush2.bf16.msra.mxu0 0
    %4159 = vmatprep.subr.bf16.mxu0 0
    %4160 = vmatpush2.bf16.msra.mxu0 0
    %4161 = vmatprep.subr.bf16.mxu0 0
    %4162 = vmatpush2.bf16.msra.mxu0 0
    %4163 = vmatprep.subr.bf16.mxu0 0
    %4164 = vmatpush2.bf16.msra.mxu0 0
    %4165 = vmatprep.mubr.bf16.mxu0 0
    %4166 = vmatmul.mubr.bf16.gmra.mxu0 %v4089
    %v4167 = vpop.f32.mrf.mxu0
    %v4168 = vadd.f32 0.0, %v4167
    %v4169 = vpop.f32.mrf.mxu0
    %v4170 = vpop.f32.mrf.mxu0
    %v4171 = vpop.f32.mrf.mxu0
    %4172 = vdwg.mxu0
    %4174 = vrot.lane.b32.xlu0 %v4168, 32
    %v4175 = vpop.permute.xlu0 %4174
    %v4177 = vadd.f32 %v4131, %v4175
    %4178 = vmatprep.subr.bf16.mxu0 0
    %4179 = vmatpush1.bf16.msra.mxu0 0
    %4180 = vmatprep.subr.bf16.mxu0 0
    %4181 = vmatpush1.bf16.msra.mxu0 0
    %4182 = vmatprep.subr.bf16.mxu0 0
    %4183 = vmatpush1.bf16.msra.mxu0 0
    %4184 = vmatprep.subr.bf16.mxu0 0
    %4185 = vmatpush1.bf16.msra.mxu0 0
    %4186 = vmatprep.subr.bf16.mxu0 0
    %4187 = vmatpush1.bf16.msra.mxu0 0
    %4188 = vmatprep.subr.bf16.mxu0 0
    %4189 = vmatpush1.bf16.msra.mxu0 0
    %4190 = vmatprep.subr.bf16.mxu0 0
    %4191 = vmatpush1.bf16.msra.mxu0 %v3492
    %4192 = vmatprep.subr.bf16.mxu0 0
    %4193 = vmatpush1.bf16.msra.mxu0 %v3490
    %4194 = vmatprep.subr.bf16.mxu0 0
    %4195 = vmatpush2.bf16.msra.mxu0 0
    %4196 = vmatprep.subr.bf16.mxu0 0
    %4197 = vmatpush2.bf16.msra.mxu0 0
    %4198 = vmatprep.subr.bf16.mxu0 0
    %4199 = vmatpush2.bf16.msra.mxu0 0
    %4200 = vmatprep.subr.bf16.mxu0 0
    %4201 = vmatpush2.bf16.msra.mxu0 0
    %4202 = vmatprep.subr.bf16.mxu0 0
    %4203 = vmatpush2.bf16.msra.mxu0 0
    %4204 = vmatprep.subr.bf16.mxu0 0
    %4205 = vmatpush2.bf16.msra.mxu0 0
    %4206 = vmatprep.subr.bf16.mxu0 0
    %4207 = vmatpush2.bf16.msra.mxu0 0
    %4208 = vmatprep.subr.bf16.mxu0 0
    %4209 = vmatpush2.bf16.msra.mxu0 0
    %4210 = vmatprep.mubr.bf16.mxu0 0
    %4211 = vmatmul.mubr.bf16.gmra.mxu0 %v4089
    %v4212 = vpop.f32.mrf.mxu0
    %v4213 = vadd.f32 0.0, %v4212
    %v4214 = vpop.f32.mrf.mxu0
    %v4215 = vpop.f32.mrf.mxu0
    %v4216 = vpop.f32.mrf.mxu0
    %4217 = vdwg.mxu0
    %4219 = vrot.lane.b32.xlu0 %v4213, 64
    %v4220 = vpop.permute.xlu0 %4219
    %v4222 = vadd.f32 %v4131, %v4220
    %4223 = vmatprep.subr.bf16.mxu0 0
    %4224 = vmatpush1.bf16.msra.mxu0 0
    %4225 = vmatprep.subr.bf16.mxu0 0
    %4226 = vmatpush1.bf16.msra.mxu0 0
    %4227 = vmatprep.subr.bf16.mxu0 0
    %4228 = vmatpush1.bf16.msra.mxu0 0
    %4229 = vmatprep.subr.bf16.mxu0 0
    %4230 = vmatpush1.bf16.msra.mxu0 0
    %4231 = vmatprep.subr.bf16.mxu0 0
    %4232 = vmatpush1.bf16.msra.mxu0 0
    %4233 = vmatprep.subr.bf16.mxu0 0
    %4234 = vmatpush1.bf16.msra.mxu0 0
    %4235 = vmatprep.subr.bf16.mxu0 0
    %4236 = vmatpush1.bf16.msra.mxu0 %v3543
    %4237 = vmatprep.subr.bf16.mxu0 0
    %4238 = vmatpush1.bf16.msra.mxu0 %v3541
    %4239 = vmatprep.subr.bf16.mxu0 0
    %4240 = vmatpush2.bf16.msra.mxu0 0
    %4241 = vmatprep.subr.bf16.mxu0 0
    %4242 = vmatpush2.bf16.msra.mxu0 0
    %4243 = vmatprep.subr.bf16.mxu0 0
    %4244 = vmatpush2.bf16.msra.mxu0 0
    %4245 = vmatprep.subr.bf16.mxu0 0
    %4246 = vmatpush2.bf16.msra.mxu0 0
    %4247 = vmatprep.subr.bf16.mxu0 0
    %4248 = vmatpush2.bf16.msra.mxu0 0
    %4249 = vmatprep.subr.bf16.mxu0 0
    %4250 = vmatpush2.bf16.msra.mxu0 0
    %4251 = vmatprep.subr.bf16.mxu0 0
    %4252 = vmatpush2.bf16.msra.mxu0 0
    %4253 = vmatprep.subr.bf16.mxu0 0
    %4254 = vmatpush2.bf16.msra.mxu0 0
    %4255 = vmatprep.mubr.bf16.mxu0 0
    %4256 = vmatmul.mubr.bf16.gmra.mxu0 %v4089
    %v4257 = vpop.f32.mrf.mxu0
    %v4258 = vadd.f32 0.0, %v4257
    %v4259 = vpop.f32.mrf.mxu0
    %v4260 = vpop.f32.mrf.mxu0
    %v4261 = vpop.f32.mrf.mxu0
    %4262 = vdwg.mxu0
    %4264 = vrot.lane.b32.xlu0 %v4258, 96
    %v4265 = vpop.permute.xlu0 %4264
    %v4267 = vadd.f32 %v4131, %v4265
    %v4268 = vxor.u32 %v4132, 2147483648
    %v4269 = vmul.f32 %v4268, 1.442695
    %v4270 = vpow.pop %v4269
    %v4271 = vadd.f32 %v4270, 1.0
    %v4272 = vrcp.pop %v4271
    %v4273 = vmul.f32 1.0, %v4272
    %v4274 = vxor.u32 %v4177, 2147483648
    %v4275 = vmul.f32 %v4274, 1.442695
    %v4276 = vpow.pop %v4275
    %v4277 = vadd.f32 %v4276, 1.0
    %v4278 = vrcp.pop %v4277
    %v4279 = vmul.f32 1.0, %v4278
    %v4280 = vtanh.pop %v4222
    %v4281 = vxor.u32 %v4267, 2147483648
    %v4282 = vmul.f32 %v4281, 1.442695
    %v4283 = vpow.pop %v4282
    %v4284 = vadd.f32 %v4283, 1.0
    %v4285 = vrcp.pop %v4284
    %v4286 = vmul.f32 1.0, %v4285
    %v4287 = vmul.f32 %v4279, %v4072
    %4289 = vrot.lane.b32.xlu0 %v4280, 64
    %v4290 = vpop.permute.xlu0 %4289
    %v4292 = vmul.f32 %v4273, %v4290
    %4294 = vrot.lane.b32.xlu0 %v4292, 32
    %v4295 = vpop.permute.xlu0 %4294
    %v4297 = vadd.f32 %v4287, %v4295
    %v4298 = vtanh.pop %v4297
    %4300 = vrot.lane.b32.xlu0 %v4298, 64
    %v4301 = vpop.permute.xlu0 %4300
    %v4303 = vmul.f32 %v4286, %v4301
    %v4304 = vpack.c.bf16 %v4303, %v4303
    %v4305 = vrot.slane %v3373, 2
    %v4307 = vrot.slane %v3379, 6
    %v4309 = vsel %vm245, %v4305, %v4307
    %4311 = vrot.lane.b32.xlu0 %v4304, 32
    %v4312 = vpop.permute.xlu0 %4311
    %v4314 = vsel %vm259, %v4312, 0
    %4316 = vmatprep.subr.bf16.mxu0 0
    %4317 = vmatpush1.bf16.msra.mxu0 0
    %4318 = vmatprep.subr.bf16.mxu0 0
    %4319 = vmatpush1.bf16.msra.mxu0 0
    %4320 = vmatprep.subr.bf16.mxu0 0
    %4321 = vmatpush1.bf16.msra.mxu0 0
    %4322 = vmatprep.subr.bf16.mxu0 0
    %4323 = vmatpush1.bf16.msra.mxu0 0
    %4324 = vmatprep.subr.bf16.mxu0 0
    %4325 = vmatpush1.bf16.msra.mxu0 0
    %4326 = vmatprep.subr.bf16.mxu0 0
    %4327 = vmatpush1.bf16.msra.mxu0 0
    %4328 = vmatprep.subr.bf16.mxu0 0
    %4329 = vmatpush1.bf16.msra.mxu0 %v3393
    %4330 = vmatprep.subr.bf16.mxu0 0
    %4331 = vmatpush1.bf16.msra.mxu0 %v3392
    %4332 = vmatprep.subr.bf16.mxu0 0
    %4333 = vmatpush2.bf16.msra.mxu0 0
    %4334 = vmatprep.subr.bf16.mxu0 0
    %4335 = vmatpush2.bf16.msra.mxu0 0
    %4336 = vmatprep.subr.bf16.mxu0 0
    %4337 = vmatpush2.bf16.msra.mxu0 0
    %4338 = vmatprep.subr.bf16.mxu0 0
    %4339 = vmatpush2.bf16.msra.mxu0 0
    %4340 = vmatprep.subr.bf16.mxu0 0
    %4341 = vmatpush2.bf16.msra.mxu0 0
    %4342 = vmatprep.subr.bf16.mxu0 0
    %4343 = vmatpush2.bf16.msra.mxu0 0
    %4344 = vmatprep.subr.bf16.mxu0 0
    %4345 = vmatpush2.bf16.msra.mxu0 0
    %4346 = vmatprep.subr.bf16.mxu0 0
    %4347 = vmatpush2.bf16.msra.mxu0 0
    %4348 = vmatprep.mubr.bf16.mxu0 0
    %4349 = vmatmul.mubr.bf16.gmra.mxu0 %v4314
    %v4350 = vpop.f32.mrf.mxu0
    %v4351 = vadd.f32 0.0, %v4350
    %v4352 = vpop.f32.mrf.mxu0
    %v4353 = vpop.f32.mrf.mxu0
    %v4354 = vpop.f32.mrf.mxu0
    %4355 = vdwg.mxu0
    %v4356 = vunpack.c.l.bf16 %v4309
    %v4357 = vadd.f32 %v4356, %v4351
    %4358 = vmatprep.subr.bf16.mxu0 0
    %4359 = vmatpush1.bf16.msra.mxu0 0
    %4360 = vmatprep.subr.bf16.mxu0 0
    %4361 = vmatpush1.bf16.msra.mxu0 0
    %4362 = vmatprep.subr.bf16.mxu0 0
    %4363 = vmatpush1.bf16.msra.mxu0 0
    %4364 = vmatprep.subr.bf16.mxu0 0
    %4365 = vmatpush1.bf16.msra.mxu0 0
    %4366 = vmatprep.subr.bf16.mxu0 0
    %4367 = vmatpush1.bf16.msra.mxu0 0
    %4368 = vmatprep.subr.bf16.mxu0 0
    %4369 = vmatpush1.bf16.msra.mxu0 0
    %4370 = vmatprep.subr.bf16.mxu0 0
    %4371 = vmatpush1.bf16.msra.mxu0 %v3441
    %4372 = vmatprep.subr.bf16.mxu0 0
    %4373 = vmatpush1.bf16.msra.mxu0 %v3439
    %4374 = vmatprep.subr.bf16.mxu0 0
    %4375 = vmatpush2.bf16.msra.mxu0 0
    %4376 = vmatprep.subr.bf16.mxu0 0
    %4377 = vmatpush2.bf16.msra.mxu0 0
    %4378 = vmatprep.subr.bf16.mxu0 0
    %4379 = vmatpush2.bf16.msra.mxu0 0
    %4380 = vmatprep.subr.bf16.mxu0 0
    %4381 = vmatpush2.bf16.msra.mxu0 0
    %4382 = vmatprep.subr.bf16.mxu0 0
    %4383 = vmatpush2.bf16.msra.mxu0 0
    %4384 = vmatprep.subr.bf16.mxu0 0
    %4385 = vmatpush2.bf16.msra.mxu0 0
    %4386 = vmatprep.subr.bf16.mxu0 0
    %4387 = vmatpush2.bf16.msra.mxu0 0
    %4388 = vmatprep.subr.bf16.mxu0 0
    %4389 = vmatpush2.bf16.msra.mxu0 0
    %4390 = vmatprep.mubr.bf16.mxu0 0
    %4391 = vmatmul.mubr.bf16.gmra.mxu0 %v4314
    %v4392 = vpop.f32.mrf.mxu0
    %v4393 = vadd.f32 0.0, %v4392
    %v4394 = vpop.f32.mrf.mxu0
    %v4395 = vpop.f32.mrf.mxu0
    %v4396 = vpop.f32.mrf.mxu0
    %4397 = vdwg.mxu0
    %4399 = vrot.lane.b32.xlu0 %v4393, 32
    %v4400 = vpop.permute.xlu0 %4399
    %v4402 = vadd.f32 %v4356, %v4400
    %4403 = vmatprep.subr.bf16.mxu0 0
    %4404 = vmatpush1.bf16.msra.mxu0 0
    %4405 = vmatprep.subr.bf16.mxu0 0
    %4406 = vmatpush1.bf16.msra.mxu0 0
    %4407 = vmatprep.subr.bf16.mxu0 0
    %4408 = vmatpush1.bf16.msra.mxu0 0
    %4409 = vmatprep.subr.bf16.mxu0 0
    %4410 = vmatpush1.bf16.msra.mxu0 0
    %4411 = vmatprep.subr.bf16.mxu0 0
    %4412 = vmatpush1.bf16.msra.mxu0 0
    %4413 = vmatprep.subr.bf16.mxu0 0
    %4414 = vmatpush1.bf16.msra.mxu0 0
    %4415 = vmatprep.subr.bf16.mxu0 0
    %4416 = vmatpush1.bf16.msra.mxu0 %v3492
    %4417 = vmatprep.subr.bf16.mxu0 0
    %4418 = vmatpush1.bf16.msra.mxu0 %v3490
    %4419 = vmatprep.subr.bf16.mxu0 0
    %4420 = vmatpush2.bf16.msra.mxu0 0
    %4421 = vmatprep.subr.bf16.mxu0 0
    %4422 = vmatpush2.bf16.msra.mxu0 0
    %4423 = vmatprep.subr.bf16.mxu0 0
    %4424 = vmatpush2.bf16.msra.mxu0 0
    %4425 = vmatprep.subr.bf16.mxu0 0
    %4426 = vmatpush2.bf16.msra.mxu0 0
    %4427 = vmatprep.subr.bf16.mxu0 0
    %4428 = vmatpush2.bf16.msra.mxu0 0
    %4429 = vmatprep.subr.bf16.mxu0 0
    %4430 = vmatpush2.bf16.msra.mxu0 0
    %4431 = vmatprep.subr.bf16.mxu0 0
    %4432 = vmatpush2.bf16.msra.mxu0 0
    %4433 = vmatprep.subr.bf16.mxu0 0
    %4434 = vmatpush2.bf16.msra.mxu0 0
    %4435 = vmatprep.mubr.bf16.mxu0 0
    %4436 = vmatmul.mubr.bf16.gmra.mxu0 %v4314
    %v4437 = vpop.f32.mrf.mxu0
    %v4438 = vadd.f32 0.0, %v4437
    %v4439 = vpop.f32.mrf.mxu0
    %v4440 = vpop.f32.mrf.mxu0
    %v4441 = vpop.f32.mrf.mxu0
    %4442 = vdwg.mxu0
    %4444 = vrot.lane.b32.xlu0 %v4438, 64
    %v4445 = vpop.permute.xlu0 %4444
    %v4447 = vadd.f32 %v4356, %v4445
    %4448 = vmatprep.subr.bf16.mxu0 0
    %4449 = vmatpush1.bf16.msra.mxu0 0
    %4450 = vmatprep.subr.bf16.mxu0 0
    %4451 = vmatpush1.bf16.msra.mxu0 0
    %4452 = vmatprep.subr.bf16.mxu0 0
    %4453 = vmatpush1.bf16.msra.mxu0 0
    %4454 = vmatprep.subr.bf16.mxu0 0
    %4455 = vmatpush1.bf16.msra.mxu0 0
    %4456 = vmatprep.subr.bf16.mxu0 0
    %4457 = vmatpush1.bf16.msra.mxu0 0
    %4458 = vmatprep.subr.bf16.mxu0 0
    %4459 = vmatpush1.bf16.msra.mxu0 0
    %4460 = vmatprep.subr.bf16.mxu0 0
    %4461 = vmatpush1.bf16.msra.mxu0 %v3543
    %4462 = vmatprep.subr.bf16.mxu0 0
    %4463 = vmatpush1.bf16.msra.mxu0 %v3541
    %4464 = vmatprep.subr.bf16.mxu0 0
    %4465 = vmatpush2.bf16.msra.mxu0 0
    %4466 = vmatprep.subr.bf16.mxu0 0
    %4467 = vmatpush2.bf16.msra.mxu0 0
    %4468 = vmatprep.subr.bf16.mxu0 0
    %4469 = vmatpush2.bf16.msra.mxu0 0
    %4470 = vmatprep.subr.bf16.mxu0 0
    %4471 = vmatpush2.bf16.msra.mxu0 0
    %4472 = vmatprep.subr.bf16.mxu0 0
    %4473 = vmatpush2.bf16.msra.mxu0 0
    %4474 = vmatprep.subr.bf16.mxu0 0
    %4475 = vmatpush2.bf16.msra.mxu0 0
    %4476 = vmatprep.subr.bf16.mxu0 0
    %4477 = vmatpush2.bf16.msra.mxu0 0
    %4478 = vmatprep.subr.bf16.mxu0 0
    %4479 = vmatpush2.bf16.msra.mxu0 0
    %4480 = vmatprep.mubr.bf16.mxu0 0
    %4481 = vmatmul.mubr.bf16.gmra.mxu0 %v4314
    %v4482 = vpop.f32.mrf.mxu0
    %v4483 = vadd.f32 0.0, %v4482
    %v4484 = vpop.f32.mrf.mxu0
    %v4485 = vpop.f32.mrf.mxu0
    %v4486 = vpop.f32.mrf.mxu0
    %4487 = vdwg.mxu0
    %4489 = vrot.lane.b32.xlu0 %v4483, 96
    %v4490 = vpop.permute.xlu0 %4489
    %v4492 = vadd.f32 %v4356, %v4490
    %v4493 = vxor.u32 %v4357, 2147483648
    %v4494 = vmul.f32 %v4493, 1.442695
    %v4495 = vpow.pop %v4494
    %v4496 = vadd.f32 %v4495, 1.0
    %v4497 = vrcp.pop %v4496
    %v4498 = vmul.f32 1.0, %v4497
    %v4499 = vxor.u32 %v4402, 2147483648
    %v4500 = vmul.f32 %v4499, 1.442695
    %v4501 = vpow.pop %v4500
    %v4502 = vadd.f32 %v4501, 1.0
    %v4503 = vrcp.pop %v4502
    %v4504 = vmul.f32 1.0, %v4503
    %v4505 = vtanh.pop %v4447
    %v4506 = vxor.u32 %v4492, 2147483648
    %v4507 = vmul.f32 %v4506, 1.442695
    %v4508 = vpow.pop %v4507
    %v4509 = vadd.f32 %v4508, 1.0
    %v4510 = vrcp.pop %v4509
    %v4511 = vmul.f32 1.0, %v4510
    %v4512 = vmul.f32 %v4504, %v4297
    %4514 = vrot.lane.b32.xlu0 %v4505, 64
    %v4515 = vpop.permute.xlu0 %4514
    %v4517 = vmul.f32 %v4498, %v4515
    %4519 = vrot.lane.b32.xlu0 %v4517, 32
    %v4520 = vpop.permute.xlu0 %4519
    %v4522 = vadd.f32 %v4512, %v4520
    %v4523 = vtanh.pop %v4522
    %4525 = vrot.lane.b32.xlu0 %v4523, 64
    %v4526 = vpop.permute.xlu0 %4525
    %v4528 = vmul.f32 %v4511, %v4526
    %v4529 = vpack.c.bf16 %v4528, %v4528
    %v4530 = vrot.slane %v3628, 2
    %v4532 = vrot.slane %v3373, 6
    %v4534 = vsel %vm245, %v4530, %v4532
    %4536 = vrot.lane.b32.xlu0 %v4529, 32
    %v4537 = vpop.permute.xlu0 %4536
    %v4539 = vsel %vm259, %v4537, 0
    %4541 = vmatprep.subr.bf16.mxu0 0
    %4542 = vmatpush1.bf16.msra.mxu0 0
    %4543 = vmatprep.subr.bf16.mxu0 0
    %4544 = vmatpush1.bf16.msra.mxu0 0
    %4545 = vmatprep.subr.bf16.mxu0 0
    %4546 = vmatpush1.bf16.msra.mxu0 0
    %4547 = vmatprep.subr.bf16.mxu0 0
    %4548 = vmatpush1.bf16.msra.mxu0 0
    %4549 = vmatprep.subr.bf16.mxu0 0
    %4550 = vmatpush1.bf16.msra.mxu0 0
    %4551 = vmatprep.subr.bf16.mxu0 0
    %4552 = vmatpush1.bf16.msra.mxu0 0
    %4553 = vmatprep.subr.bf16.mxu0 0
    %4554 = vmatpush1.bf16.msra.mxu0 %v3393
    %4555 = vmatprep.subr.bf16.mxu0 0
    %4556 = vmatpush1.bf16.msra.mxu0 %v3392
    %4557 = vmatprep.subr.bf16.mxu0 0
    %4558 = vmatpush2.bf16.msra.mxu0 0
    %4559 = vmatprep.subr.bf16.mxu0 0
    %4560 = vmatpush2.bf16.msra.mxu0 0
    %4561 = vmatprep.subr.bf16.mxu0 0
    %4562 = vmatpush2.bf16.msra.mxu0 0
    %4563 = vmatprep.subr.bf16.mxu0 0
    %4564 = vmatpush2.bf16.msra.mxu0 0
    %4565 = vmatprep.subr.bf16.mxu0 0
    %4566 = vmatpush2.bf16.msra.mxu0 0
    %4567 = vmatprep.subr.bf16.mxu0 0
    %4568 = vmatpush2.bf16.msra.mxu0 0
    %4569 = vmatprep.subr.bf16.mxu0 0
    %4570 = vmatpush2.bf16.msra.mxu0 0
    %4571 = vmatprep.subr.bf16.mxu0 0
    %4572 = vmatpush2.bf16.msra.mxu0 0
    %4573 = vmatprep.mubr.bf16.mxu0 0
    %4574 = vmatmul.mubr.bf16.gmra.mxu0 %v4539
    %v4575 = vpop.f32.mrf.mxu0
    %v4576 = vadd.f32 0.0, %v4575
    %v4577 = vpop.f32.mrf.mxu0
    %v4578 = vpop.f32.mrf.mxu0
    %v4579 = vpop.f32.mrf.mxu0
    %4580 = vdwg.mxu0
    %v4581 = vunpack.c.l.bf16 %v4534
    %v4582 = vadd.f32 %v4581, %v4576
    %4583 = vmatprep.subr.bf16.mxu0 0
    %4584 = vmatpush1.bf16.msra.mxu0 0
    %4585 = vmatprep.subr.bf16.mxu0 0
    %4586 = vmatpush1.bf16.msra.mxu0 0
    %4587 = vmatprep.subr.bf16.mxu0 0
    %4588 = vmatpush1.bf16.msra.mxu0 0
    %4589 = vmatprep.subr.bf16.mxu0 0
    %4590 = vmatpush1.bf16.msra.mxu0 0
    %4591 = vmatprep.subr.bf16.mxu0 0
    %4592 = vmatpush1.bf16.msra.mxu0 0
    %4593 = vmatprep.subr.bf16.mxu0 0
    %4594 = vmatpush1.bf16.msra.mxu0 0
    %4595 = vmatprep.subr.bf16.mxu0 0
    %4596 = vmatpush1.bf16.msra.mxu0 %v3441
    %4597 = vmatprep.subr.bf16.mxu0 0
    %4598 = vmatpush1.bf16.msra.mxu0 %v3439
    %4599 = vmatprep.subr.bf16.mxu0 0
    %4600 = vmatpush2.bf16.msra.mxu0 0
    %4601 = vmatprep.subr.bf16.mxu0 0
    %4602 = vmatpush2.bf16.msra.mxu0 0
    %4603 = vmatprep.subr.bf16.mxu0 0
    %4604 = vmatpush2.bf16.msra.mxu0 0
    %4605 = vmatprep.subr.bf16.mxu0 0
    %4606 = vmatpush2.bf16.msra.mxu0 0
    %4607 = vmatprep.subr.bf16.mxu0 0
    %4608 = vmatpush2.bf16.msra.mxu0 0
    %4609 = vmatprep.subr.bf16.mxu0 0
    %4610 = vmatpush2.bf16.msra.mxu0 0
    %4611 = vmatprep.subr.bf16.mxu0 0
    %4612 = vmatpush2.bf16.msra.mxu0 0
    %4613 = vmatprep.subr.bf16.mxu0 0
    %4614 = vmatpush2.bf16.msra.mxu0 0
    %4615 = vmatprep.mubr.bf16.mxu0 0
    %4616 = vmatmul.mubr.bf16.gmra.mxu0 %v4539
    %v4617 = vpop.f32.mrf.mxu0
    %v4618 = vadd.f32 0.0, %v4617
    %v4619 = vpop.f32.mrf.mxu0
    %v4620 = vpop.f32.mrf.mxu0
    %v4621 = vpop.f32.mrf.mxu0
    %4622 = vdwg.mxu0
    %4624 = vrot.lane.b32.xlu0 %v4618, 32
    %v4625 = vpop.permute.xlu0 %4624
    %v4627 = vadd.f32 %v4581, %v4625
    %4628 = vmatprep.subr.bf16.mxu0 0
    %4629 = vmatpush1.bf16.msra.mxu0 0
    %4630 = vmatprep.subr.bf16.mxu0 0
    %4631 = vmatpush1.bf16.msra.mxu0 0
    %4632 = vmatprep.subr.bf16.mxu0 0
    %4633 = vmatpush1.bf16.msra.mxu0 0
    %4634 = vmatprep.subr.bf16.mxu0 0
    %4635 = vmatpush1.bf16.msra.mxu0 0
    %4636 = vmatprep.subr.bf16.mxu0 0
    %4637 = vmatpush1.bf16.msra.mxu0 0
    %4638 = vmatprep.subr.bf16.mxu0 0
    %4639 = vmatpush1.bf16.msra.mxu0 0
    %4640 = vmatprep.subr.bf16.mxu0 0
    %4641 = vmatpush1.bf16.msra.mxu0 %v3492
    %4642 = vmatprep.subr.bf16.mxu0 0
    %4643 = vmatpush1.bf16.msra.mxu0 %v3490
    %4644 = vmatprep.subr.bf16.mxu0 0
    %4645 = vmatpush2.bf16.msra.mxu0 0
    %4646 = vmatprep.subr.bf16.mxu0 0
    %4647 = vmatpush2.bf16.msra.mxu0 0
    %4648 = vmatprep.subr.bf16.mxu0 0
    %4649 = vmatpush2.bf16.msra.mxu0 0
    %4650 = vmatprep.subr.bf16.mxu0 0
    %4651 = vmatpush2.bf16.msra.mxu0 0
    %4652 = vmatprep.subr.bf16.mxu0 0
    %4653 = vmatpush2.bf16.msra.mxu0 0
    %4654 = vmatprep.subr.bf16.mxu0 0
    %4655 = vmatpush2.bf16.msra.mxu0 0
    %4656 = vmatprep.subr.bf16.mxu0 0
    %4657 = vmatpush2.bf16.msra.mxu0 0
    %4658 = vmatprep.subr.bf16.mxu0 0
    %4659 = vmatpush2.bf16.msra.mxu0 0
    %4660 = vmatprep.mubr.bf16.mxu0 0
    %4661 = vmatmul.mubr.bf16.gmra.mxu0 %v4539
    %v4662 = vpop.f32.mrf.mxu0
    %v4663 = vadd.f32 0.0, %v4662
    %v4664 = vpop.f32.mrf.mxu0
    %v4665 = vpop.f32.mrf.mxu0
    %v4666 = vpop.f32.mrf.mxu0
    %4667 = vdwg.mxu0
    %4669 = vrot.lane.b32.xlu0 %v4663, 64
    %v4670 = vpop.permute.xlu0 %4669
    %v4672 = vadd.f32 %v4581, %v4670
    %4673 = vmatprep.subr.bf16.mxu0 0
    %4674 = vmatpush1.bf16.msra.mxu0 0
    %4675 = vmatprep.subr.bf16.mxu0 0
    %4676 = vmatpush1.bf16.msra.mxu0 0
    %4677 = vmatprep.subr.bf16.mxu0 0
    %4678 = vmatpush1.bf16.msra.mxu0 0
    %4679 = vmatprep.subr.bf16.mxu0 0
    %4680 = vmatpush1.bf16.msra.mxu0 0
    %4681 = vmatprep.subr.bf16.mxu0 0
    %4682 = vmatpush1.bf16.msra.mxu0 0
    %4683 = vmatprep.subr.bf16.mxu0 0
    %4684 = vmatpush1.bf16.msra.mxu0 0
    %4685 = vmatprep.subr.bf16.mxu0 0
    %4686 = vmatpush1.bf16.msra.mxu0 %v3543
    %4687 = vmatprep.subr.bf16.mxu0 0
    %4688 = vmatpush1.bf16.msra.mxu0 %v3541
    %4689 = vmatprep.subr.bf16.mxu0 0
    %4690 = vmatpush2.bf16.msra.mxu0 0
    %4691 = vmatprep.subr.bf16.mxu0 0
    %4692 = vmatpush2.bf16.msra.mxu0 0
    %4693 = vmatprep.subr.bf16.mxu0 0
    %4694 = vmatpush2.bf16.msra.mxu0 0
    %4695 = vmatprep.subr.bf16.mxu0 0
    %4696 = vmatpush2.bf16.msra.mxu0 0
    %4697 = vmatprep.subr.bf16.mxu0 0
    %4698 = vmatpush2.bf16.msra.mxu0 0
    %4699 = vmatprep.subr.bf16.mxu0 0
    %4700 = vmatpush2.bf16.msra.mxu0 0
    %4701 = vmatprep.subr.bf16.mxu0 0
    %4702 = vmatpush2.bf16.msra.mxu0 0
    %4703 = vmatprep.subr.bf16.mxu0 0
    %4704 = vmatpush2.bf16.msra.mxu0 0
    %4705 = vmatprep.mubr.bf16.mxu0 0
    %4706 = vmatmul.mubr.bf16.gmra.mxu0 %v4539
    %v4707 = vpop.f32.mrf.mxu0
    %v4708 = vadd.f32 0.0, %v4707
    %v4709 = vpop.f32.mrf.mxu0
    %v4710 = vpop.f32.mrf.mxu0
    %v4711 = vpop.f32.mrf.mxu0
    %4712 = vdwg.mxu0
    %4714 = vrot.lane.b32.xlu0 %v4708, 96
    %v4715 = vpop.permute.xlu0 %4714
    %v4717 = vadd.f32 %v4581, %v4715
    %v4718 = vxor.u32 %v4582, 2147483648
    %v4719 = vmul.f32 %v4718, 1.442695
    %v4720 = vpow.pop %v4719
    %v4721 = vadd.f32 %v4720, 1.0
    %v4722 = vrcp.pop %v4721
    %v4723 = vmul.f32 1.0, %v4722
    %v4724 = vxor.u32 %v4627, 2147483648
    %v4725 = vmul.f32 %v4724, 1.442695
    %v4726 = vpow.pop %v4725
    %v4727 = vadd.f32 %v4726, 1.0
    %v4728 = vrcp.pop %v4727
    %v4729 = vmul.f32 1.0, %v4728
    %v4730 = vtanh.pop %v4672
    %v4731 = vxor.u32 %v4717, 2147483648
    %v4732 = vmul.f32 %v4731, 1.442695
    %v4733 = vpow.pop %v4732
    %v4734 = vadd.f32 %v4733, 1.0
    %v4735 = vrcp.pop %v4734
    %v4736 = vmul.f32 1.0, %v4735
    %v4737 = vmul.f32 %v4729, %v4522
    %4739 = vrot.lane.b32.xlu0 %v4730, 64
    %v4740 = vpop.permute.xlu0 %4739
    %v4742 = vmul.f32 %v4723, %v4740
    %4744 = vrot.lane.b32.xlu0 %v4742, 32
    %v4745 = vpop.permute.xlu0 %4744
    %v4747 = vadd.f32 %v4737, %v4745
    %v4748 = vtanh.pop %v4747
    %4750 = vrot.lane.b32.xlu0 %v4748, 64
    %v4751 = vpop.permute.xlu0 %4750
    %v4753 = vmul.f32 %v4736, %v4751
    %v4754 = vpack.c.bf16 %v4753, %v4753
    %v4755 = vrot.slane %v3373, 3
    %v4757 = vrot.slane %v3379, 7
    %v4759 = vsel %vm245, %v4755, %v4757
    %4761 = vrot.lane.b32.xlu0 %v4754, 32
    %v4762 = vpop.permute.xlu0 %4761
    %v4764 = vsel %vm259, %v4762, 0
    %4766 = vmatprep.subr.bf16.mxu0 0
    %4767 = vmatpush1.bf16.msra.mxu0 0
    %4768 = vmatprep.subr.bf16.mxu0 0
    %4769 = vmatpush1.bf16.msra.mxu0 0
    %4770 = vmatprep.subr.bf16.mxu0 0
    %4771 = vmatpush1.bf16.msra.mxu0 0
    %4772 = vmatprep.subr.bf16.mxu0 0
    %4773 = vmatpush1.bf16.msra.mxu0 0
    %4774 = vmatprep.subr.bf16.mxu0 0
    %4775 = vmatpush1.bf16.msra.mxu0 0
    %4776 = vmatprep.subr.bf16.mxu0 0
    %4777 = vmatpush1.bf16.msra.mxu0 0
    %4778 = vmatprep.subr.bf16.mxu0 0
    %4779 = vmatpush1.bf16.msra.mxu0 %v3393
    %4780 = vmatprep.subr.bf16.mxu0 0
    %4781 = vmatpush1.bf16.msra.mxu0 %v3392
    %4782 = vmatprep.subr.bf16.mxu0 0
    %4783 = vmatpush2.bf16.msra.mxu0 0
    %4784 = vmatprep.subr.bf16.mxu0 0
    %4785 = vmatpush2.bf16.msra.mxu0 0
    %4786 = vmatprep.subr.bf16.mxu0 0
    %4787 = vmatpush2.bf16.msra.mxu0 0
    %4788 = vmatprep.subr.bf16.mxu0 0
    %4789 = vmatpush2.bf16.msra.mxu0 0
    %4790 = vmatprep.subr.bf16.mxu0 0
    %4791 = vmatpush2.bf16.msra.mxu0 0
    %4792 = vmatprep.subr.bf16.mxu0 0
    %4793 = vmatpush2.bf16.msra.mxu0 0
    %4794 = vmatprep.subr.bf16.mxu0 0
    %4795 = vmatpush2.bf16.msra.mxu0 0
    %4796 = vmatprep.subr.bf16.mxu0 0
    %4797 = vmatpush2.bf16.msra.mxu0 0
    %4798 = vmatprep.mubr.bf16.mxu0 0
    %4799 = vmatmul.mubr.bf16.gmra.mxu0 %v4764
    %v4800 = vpop.f32.mrf.mxu0
    %v4801 = vadd.f32 0.0, %v4800
    %v4802 = vpop.f32.mrf.mxu0
    %v4803 = vpop.f32.mrf.mxu0
    %v4804 = vpop.f32.mrf.mxu0
    %4805 = vdwg.mxu0
    %v4806 = vunpack.c.l.bf16 %v4759
    %v4807 = vadd.f32 %v4806, %v4801
    %4808 = vmatprep.subr.bf16.mxu0 0
    %4809 = vmatpush1.bf16.msra.mxu0 0
    %4810 = vmatprep.subr.bf16.mxu0 0
    %4811 = vmatpush1.bf16.msra.mxu0 0
    %4812 = vmatprep.subr.bf16.mxu0 0
    %4813 = vmatpush1.bf16.msra.mxu0 0
    %4814 = vmatprep.subr.bf16.mxu0 0
    %4815 = vmatpush1.bf16.msra.mxu0 0
    %4816 = vmatprep.subr.bf16.mxu0 0
    %4817 = vmatpush1.bf16.msra.mxu0 0
    %4818 = vmatprep.subr.bf16.mxu0 0
    %4819 = vmatpush1.bf16.msra.mxu0 0
    %4820 = vmatprep.subr.bf16.mxu0 0
    %4821 = vmatpush1.bf16.msra.mxu0 %v3441
    %4822 = vmatprep.subr.bf16.mxu0 0
    %4823 = vmatpush1.bf16.msra.mxu0 %v3439
    %4824 = vmatprep.subr.bf16.mxu0 0
    %4825 = vmatpush2.bf16.msra.mxu0 0
    %4826 = vmatprep.subr.bf16.mxu0 0
    %4827 = vmatpush2.bf16.msra.mxu0 0
    %4828 = vmatprep.subr.bf16.mxu0 0
    %4829 = vmatpush2.bf16.msra.mxu0 0
    %4830 = vmatprep.subr.bf16.mxu0 0
    %4831 = vmatpush2.bf16.msra.mxu0 0
    %4832 = vmatprep.subr.bf16.mxu0 0
    %4833 = vmatpush2.bf16.msra.mxu0 0
    %4834 = vmatprep.subr.bf16.mxu0 0
    %4835 = vmatpush2.bf16.msra.mxu0 0
    %4836 = vmatprep.subr.bf16.mxu0 0
    %4837 = vmatpush2.bf16.msra.mxu0 0
    %4838 = vmatprep.subr.bf16.mxu0 0
    %4839 = vmatpush2.bf16.msra.mxu0 0
    %4840 = vmatprep.mubr.bf16.mxu0 0
    %4841 = vmatmul.mubr.bf16.gmra.mxu0 %v4764
    %v4842 = vpop.f32.mrf.mxu0
    %v4843 = vadd.f32 0.0, %v4842
    %v4844 = vpop.f32.mrf.mxu0
    %v4845 = vpop.f32.mrf.mxu0
    %v4846 = vpop.f32.mrf.mxu0
    %4847 = vdwg.mxu0
    %4849 = vrot.lane.b32.xlu0 %v4843, 32
    %v4850 = vpop.permute.xlu0 %4849
    %v4852 = vadd.f32 %v4806, %v4850
    %4853 = vmatprep.subr.bf16.mxu0 0
    %4854 = vmatpush1.bf16.msra.mxu0 0
    %4855 = vmatprep.subr.bf16.mxu0 0
    %4856 = vmatpush1.bf16.msra.mxu0 0
    %4857 = vmatprep.subr.bf16.mxu0 0
    %4858 = vmatpush1.bf16.msra.mxu0 0
    %4859 = vmatprep.subr.bf16.mxu0 0
    %4860 = vmatpush1.bf16.msra.mxu0 0
    %4861 = vmatprep.subr.bf16.mxu0 0
    %4862 = vmatpush1.bf16.msra.mxu0 0
    %4863 = vmatprep.subr.bf16.mxu0 0
    %4864 = vmatpush1.bf16.msra.mxu0 0
    %4865 = vmatprep.subr.bf16.mxu0 0
    %4866 = vmatpush1.bf16.msra.mxu0 %v3492
    %4867 = vmatprep.subr.bf16.mxu0 0
    %4868 = vmatpush1.bf16.msra.mxu0 %v3490
    %4869 = vmatprep.subr.bf16.mxu0 0
    %4870 = vmatpush2.bf16.msra.mxu0 0
    %4871 = vmatprep.subr.bf16.mxu0 0
    %4872 = vmatpush2.bf16.msra.mxu0 0
    %4873 = vmatprep.subr.bf16.mxu0 0
    %4874 = vmatpush2.bf16.msra.mxu0 0
    %4875 = vmatprep.subr.bf16.mxu0 0
    %4876 = vmatpush2.bf16.msra.mxu0 0
    %4877 = vmatprep.subr.bf16.mxu0 0
    %4878 = vmatpush2.bf16.msra.mxu0 0
    %4879 = vmatprep.subr.bf16.mxu0 0
    %4880 = vmatpush2.bf16.msra.mxu0 0
    %4881 = vmatprep.subr.bf16.mxu0 0
    %4882 = vmatpush2.bf16.msra.mxu0 0
    %4883 = vmatprep.subr.bf16.mxu0 0
    %4884 = vmatpush2.bf16.msra.mxu0 0
    %4885 = vmatprep.mubr.bf16.mxu0 0
    %4886 = vmatmul.mubr.bf16.gmra.mxu0 %v4764
    %v4887 = vpop.f32.mrf.mxu0
    %v4888 = vadd.f32 0.0, %v4887
    %v4889 = vpop.f32.mrf.mxu0
    %v4890 = vpop.f32.mrf.mxu0
    %v4891 = vpop.f32.mrf.mxu0
    %4892 = vdwg.mxu0
    %4894 = vrot.lane.b32.xlu0 %v4888, 64
    %v4895 = vpop.permute.xlu0 %4894
    %v4897 = vadd.f32 %v4806, %v4895
    %4898 = vmatprep.subr.bf16.mxu0 0
    %4899 = vmatpush1.bf16.msra.mxu0 0
    %4900 = vmatprep.subr.bf16.mxu0 0
    %4901 = vmatpush1.bf16.msra.mxu0 0
    %4902 = vmatprep.subr.bf16.mxu0 0
    %4903 = vmatpush1.bf16.msra.mxu0 0
    %4904 = vmatprep.subr.bf16.mxu0 0
    %4905 = vmatpush1.bf16.msra.mxu0 0
    %4906 = vmatprep.subr.bf16.mxu0 0
    %4907 = vmatpush1.bf16.msra.mxu0 0
    %4908 = vmatprep.subr.bf16.mxu0 0
    %4909 = vmatpush1.bf16.msra.mxu0 0
    %4910 = vmatprep.subr.bf16.mxu0 0
    %4911 = vmatpush1.bf16.msra.mxu0 %v3543
    %4912 = vmatprep.subr.bf16.mxu0 0
    %4913 = vmatpush1.bf16.msra.mxu0 %v3541
    %4914 = vmatprep.subr.bf16.mxu0 0
    %4915 = vmatpush2.bf16.msra.mxu0 0
    %4916 = vmatprep.subr.bf16.mxu0 0
    %4917 = vmatpush2.bf16.msra.mxu0 0
    %4918 = vmatprep.subr.bf16.mxu0 0
    %4919 = vmatpush2.bf16.msra.mxu0 0
    %4920 = vmatprep.subr.bf16.mxu0 0
    %4921 = vmatpush2.bf16.msra.mxu0 0
    %4922 = vmatprep.subr.bf16.mxu0 0
    %4923 = vmatpush2.bf16.msra.mxu0 0
    %4924 = vmatprep.subr.bf16.mxu0 0
    %4925 = vmatpush2.bf16.msra.mxu0 0
    %4926 = vmatprep.subr.bf16.mxu0 0
    %4927 = vmatpush2.bf16.msra.mxu0 0
    %4928 = vmatprep.subr.bf16.mxu0 0
    %4929 = vmatpush2.bf16.msra.mxu0 0
    %4930 = vmatprep.mubr.bf16.mxu0 0
    %4931 = vmatmul.mubr.bf16.gmra.mxu0 %v4764
    %v4932 = vpop.f32.mrf.mxu0
    %v4933 = vadd.f32 0.0, %v4932
    %v4934 = vpop.f32.mrf.mxu0
    %v4935 = vpop.f32.mrf.mxu0
    %v4936 = vpop.f32.mrf.mxu0
    %4937 = vdwg.mxu0
    %4939 = vrot.lane.b32.xlu0 %v4933, 96
    %v4940 = vpop.permute.xlu0 %4939
    %v4942 = vadd.f32 %v4806, %v4940
    %v4943 = vxor.u32 %v4807, 2147483648
    %v4944 = vmul.f32 %v4943, 1.442695
    %v4945 = vpow.pop %v4944
    %v4946 = vadd.f32 %v4945, 1.0
    %v4947 = vrcp.pop %v4946
    %v4948 = vmul.f32 1.0, %v4947
    %v4949 = vxor.u32 %v4852, 2147483648
    %v4950 = vmul.f32 %v4949, 1.442695
    %v4951 = vpow.pop %v4950
    %v4952 = vadd.f32 %v4951, 1.0
    %v4953 = vrcp.pop %v4952
    %v4954 = vmul.f32 1.0, %v4953
    %v4955 = vtanh.pop %v4897
    %v4956 = vxor.u32 %v4942, 2147483648
    %v4957 = vmul.f32 %v4956, 1.442695
    %v4958 = vpow.pop %v4957
    %v4959 = vadd.f32 %v4958, 1.0
    %v4960 = vrcp.pop %v4959
    %v4961 = vmul.f32 1.0, %v4960
    %v4962 = vmul.f32 %v4954, %v4747
    %4964 = vrot.lane.b32.xlu0 %v4955, 64
    %v4965 = vpop.permute.xlu0 %4964
    %v4967 = vmul.f32 %v4948, %v4965
    %4969 = vrot.lane.b32.xlu0 %v4967, 32
    %v4970 = vpop.permute.xlu0 %4969
    %v4972 = vadd.f32 %v4962, %v4970
    %v4973 = vtanh.pop %v4972
    %4975 = vrot.lane.b32.xlu0 %v4973, 64
    %v4976 = vpop.permute.xlu0 %4975
    %v4978 = vmul.f32 %v4961, %v4976
    %v4979 = vpack.c.bf16 %v4978, %v4978
    %v4980 = vrot.slane %v3628, 3
    %v4982 = vrot.slane %v3373, 7
    %v4984 = vsel %vm245, %v4980, %v4982
    %4986 = vrot.lane.b32.xlu0 %v4979, 32
    %v4987 = vpop.permute.xlu0 %4986
    %v4989 = vsel %vm259, %v4987, 0
    %4991 = vmatprep.subr.bf16.mxu0 0
    %4992 = vmatpush1.bf16.msra.mxu0 0
    %4993 = vmatprep.subr.bf16.mxu0 0
    %4994 = vmatpush1.bf16.msra.mxu0 0
    %4995 = vmatprep.subr.bf16.mxu0 0
    %4996 = vmatpush1.bf16.msra.mxu0 0
    %4997 = vmatprep.subr.bf16.mxu0 0
    %4998 = vmatpush1.bf16.msra.mxu0 0
    %4999 = vmatprep.subr.bf16.mxu0 0
    %5000 = vmatpush1.bf16.msra.mxu0 0
    %5001 = vmatprep.subr.bf16.mxu0 0
    %5002 = vmatpush1.bf16.msra.mxu0 0
    %5003 = vmatprep.subr.bf16.mxu0 0
    %5004 = vmatpush1.bf16.msra.mxu0 %v3393
    %5005 = vmatprep.subr.bf16.mxu0 0
    %5006 = vmatpush1.bf16.msra.mxu0 %v3392
    %5007 = vmatprep.subr.bf16.mxu0 0
    %5008 = vmatpush2.bf16.msra.mxu0 0
    %5009 = vmatprep.subr.bf16.mxu0 0
    %5010 = vmatpush2.bf16.msra.mxu0 0
    %5011 = vmatprep.subr.bf16.mxu0 0
    %5012 = vmatpush2.bf16.msra.mxu0 0
    %5013 = vmatprep.subr.bf16.mxu0 0
    %5014 = vmatpush2.bf16.msra.mxu0 0
    %5015 = vmatprep.subr.bf16.mxu0 0
    %5016 = vmatpush2.bf16.msra.mxu0 0
    %5017 = vmatprep.subr.bf16.mxu0 0
    %5018 = vmatpush2.bf16.msra.mxu0 0
    %5019 = vmatprep.subr.bf16.mxu0 0
    %5020 = vmatpush2.bf16.msra.mxu0 0
    %5021 = vmatprep.subr.bf16.mxu0 0
    %5022 = vmatpush2.bf16.msra.mxu0 0
    %5023 = vmatprep.mubr.bf16.mxu0 0
    %5024 = vmatmul.mubr.bf16.gmra.mxu0 %v4989
    %v5025 = vpop.f32.mrf.mxu0
    %v5026 = vadd.f32 0.0, %v5025
    %v5027 = vpop.f32.mrf.mxu0
    %v5028 = vpop.f32.mrf.mxu0
    %v5029 = vpop.f32.mrf.mxu0
    %5030 = vdwg.mxu0
    %v5031 = vunpack.c.l.bf16 %v4984
    %v5032 = vadd.f32 %v5031, %v5026
    %5033 = vmatprep.subr.bf16.mxu0 0
    %5034 = vmatpush1.bf16.msra.mxu0 0
    %5035 = vmatprep.subr.bf16.mxu0 0
    %5036 = vmatpush1.bf16.msra.mxu0 0
    %5037 = vmatprep.subr.bf16.mxu0 0
    %5038 = vmatpush1.bf16.msra.mxu0 0
    %5039 = vmatprep.subr.bf16.mxu0 0
    %5040 = vmatpush1.bf16.msra.mxu0 0
    %5041 = vmatprep.subr.bf16.mxu0 0
    %5042 = vmatpush1.bf16.msra.mxu0 0
    %5043 = vmatprep.subr.bf16.mxu0 0
    %5044 = vmatpush1.bf16.msra.mxu0 0
    %5045 = vmatprep.subr.bf16.mxu0 0
    %5046 = vmatpush1.bf16.msra.mxu0 %v3441
    %5047 = vmatprep.subr.bf16.mxu0 0
    %5048 = vmatpush1.bf16.msra.mxu0 %v3439
    %5049 = vmatprep.subr.bf16.mxu0 0
    %5050 = vmatpush2.bf16.msra.mxu0 0
    %5051 = vmatprep.subr.bf16.mxu0 0
    %5052 = vmatpush2.bf16.msra.mxu0 0
    %5053 = vmatprep.subr.bf16.mxu0 0
    %5054 = vmatpush2.bf16.msra.mxu0 0
    %5055 = vmatprep.subr.bf16.mxu0 0
    %5056 = vmatpush2.bf16.msra.mxu0 0
    %5057 = vmatprep.subr.bf16.mxu0 0
    %5058 = vmatpush2.bf16.msra.mxu0 0
    %5059 = vmatprep.subr.bf16.mxu0 0
    %5060 = vmatpush2.bf16.msra.mxu0 0
    %5061 = vmatprep.subr.bf16.mxu0 0
    %5062 = vmatpush2.bf16.msra.mxu0 0
    %5063 = vmatprep.subr.bf16.mxu0 0
    %5064 = vmatpush2.bf16.msra.mxu0 0
    %5065 = vmatprep.mubr.bf16.mxu0 0
    %5066 = vmatmul.mubr.bf16.gmra.mxu0 %v4989
    %v5067 = vpop.f32.mrf.mxu0
    %v5068 = vadd.f32 0.0, %v5067
    %v5069 = vpop.f32.mrf.mxu0
    %v5070 = vpop.f32.mrf.mxu0
    %v5071 = vpop.f32.mrf.mxu0
    %5072 = vdwg.mxu0
    %5074 = vrot.lane.b32.xlu0 %v5068, 32
    %v5075 = vpop.permute.xlu0 %5074
    %v5077 = vadd.f32 %v5031, %v5075
    %5078 = vmatprep.subr.bf16.mxu0 0
    %5079 = vmatpush1.bf16.msra.mxu0 0
    %5080 = vmatprep.subr.bf16.mxu0 0
    %5081 = vmatpush1.bf16.msra.mxu0 0
    %5082 = vmatprep.subr.bf16.mxu0 0
    %5083 = vmatpush1.bf16.msra.mxu0 0
    %5084 = vmatprep.subr.bf16.mxu0 0
    %5085 = vmatpush1.bf16.msra.mxu0 0
    %5086 = vmatprep.subr.bf16.mxu0 0
    %5087 = vmatpush1.bf16.msra.mxu0 0
    %5088 = vmatprep.subr.bf16.mxu0 0
    %5089 = vmatpush1.bf16.msra.mxu0 0
    %5090 = vmatprep.subr.bf16.mxu0 0
    %5091 = vmatpush1.bf16.msra.mxu0 %v3492
    %5092 = vmatprep.subr.bf16.mxu0 0
    %5093 = vmatpush1.bf16.msra.mxu0 %v3490
    %5094 = vmatprep.subr.bf16.mxu0 0
    %5095 = vmatpush2.bf16.msra.mxu0 0
    %5096 = vmatprep.subr.bf16.mxu0 0
    %5097 = vmatpush2.bf16.msra.mxu0 0
    %5098 = vmatprep.subr.bf16.mxu0 0
    %5099 = vmatpush2.bf16.msra.mxu0 0
    %5100 = vmatprep.subr.bf16.mxu0 0
    %5101 = vmatpush2.bf16.msra.mxu0 0
    %5102 = vmatprep.subr.bf16.mxu0 0
    %5103 = vmatpush2.bf16.msra.mxu0 0
    %5104 = vmatprep.subr.bf16.mxu0 0
    %5105 = vmatpush2.bf16.msra.mxu0 0
    %5106 = vmatprep.subr.bf16.mxu0 0
    %5107 = vmatpush2.bf16.msra.mxu0 0
    %5108 = vmatprep.subr.bf16.mxu0 0
    %5109 = vmatpush2.bf16.msra.mxu0 0
    %5110 = vmatprep.mubr.bf16.mxu0 0
    %5111 = vmatmul.mubr.bf16.gmra.mxu0 %v4989
    %v5112 = vpop.f32.mrf.mxu0
    %v5113 = vadd.f32 0.0, %v5112
    %v5114 = vpop.f32.mrf.mxu0
    %v5115 = vpop.f32.mrf.mxu0
    %v5116 = vpop.f32.mrf.mxu0
    %5117 = vdwg.mxu0
    %5119 = vrot.lane.b32.xlu0 %v5113, 64
    %v5120 = vpop.permute.xlu0 %5119
    %v5122 = vadd.f32 %v5031, %v5120
    %5123 = vmatprep.subr.bf16.mxu0 0
    %5124 = vmatpush1.bf16.msra.mxu0 0
    %5125 = vmatprep.subr.bf16.mxu0 0
    %5126 = vmatpush1.bf16.msra.mxu0 0
    %5127 = vmatprep.subr.bf16.mxu0 0
    %5128 = vmatpush1.bf16.msra.mxu0 0
    %5129 = vmatprep.subr.bf16.mxu0 0
    %5130 = vmatpush1.bf16.msra.mxu0 0
    %5131 = vmatprep.subr.bf16.mxu0 0
    %5132 = vmatpush1.bf16.msra.mxu0 0
    %5133 = vmatprep.subr.bf16.mxu0 0
    %5134 = vmatpush1.bf16.msra.mxu0 0
    %5135 = vmatprep.subr.bf16.mxu0 0
    %5136 = vmatpush1.bf16.msra.mxu0 %v3543
    %5137 = vmatprep.subr.bf16.mxu0 0
    %5138 = vmatpush1.bf16.msra.mxu0 %v3541
    %5139 = vmatprep.subr.bf16.mxu0 0
    %5140 = vmatpush2.bf16.msra.mxu0 0
    %5141 = vmatprep.subr.bf16.mxu0 0
    %5142 = vmatpush2.bf16.msra.mxu0 0
    %5143 = vmatprep.subr.bf16.mxu0 0
    %5144 = vmatpush2.bf16.msra.mxu0 0
    %5145 = vmatprep.subr.bf16.mxu0 0
    %5146 = vmatpush2.bf16.msra.mxu0 0
    %5147 = vmatprep.subr.bf16.mxu0 0
    %5148 = vmatpush2.bf16.msra.mxu0 0
    %5149 = vmatprep.subr.bf16.mxu0 0
    %5150 = vmatpush2.bf16.msra.mxu0 0
    %5151 = vmatprep.subr.bf16.mxu0 0
    %5152 = vmatpush2.bf16.msra.mxu0 0
    %5153 = vmatprep.subr.bf16.mxu0 0
    %5154 = vmatpush2.bf16.msra.mxu0 0
    %5155 = vmatprep.mubr.bf16.mxu0 0
    %5156 = vmatmul.mubr.bf16.gmra.mxu0 %v4989
    %v5157 = vpop.f32.mrf.mxu0
    %v5158 = vadd.f32 0.0, %v5157
    %v5159 = vpop.f32.mrf.mxu0
    %v5160 = vpop.f32.mrf.mxu0
    %v5161 = vpop.f32.mrf.mxu0
    %5162 = vdwg.mxu0
    %5164 = vrot.lane.b32.xlu0 %v5158, 96
    %v5165 = vpop.permute.xlu0 %5164
    %v5167 = vadd.f32 %v5031, %v5165
    %v5168 = vxor.u32 %v5032, 2147483648
    %v5169 = vmul.f32 %v5168, 1.442695
    %v5170 = vpow.pop %v5169
    %v5171 = vadd.f32 %v5170, 1.0
    %v5172 = vrcp.pop %v5171
    %v5173 = vmul.f32 1.0, %v5172
    %v5174 = vxor.u32 %v5077, 2147483648
    %v5175 = vmul.f32 %v5174, 1.442695
    %v5176 = vpow.pop %v5175
    %v5177 = vadd.f32 %v5176, 1.0
    %v5178 = vrcp.pop %v5177
    %v5179 = vmul.f32 1.0, %v5178
    %v5180 = vtanh.pop %v5122
    %v5181 = vxor.u32 %v5167, 2147483648
    %v5182 = vmul.f32 %v5181, 1.442695
    %v5183 = vpow.pop %v5182
    %v5184 = vadd.f32 %v5183, 1.0
    %v5185 = vrcp.pop %v5184
    %v5186 = vmul.f32 1.0, %v5185
    %v5187 = vmul.f32 %v5179, %v4972
    %5189 = vrot.lane.b32.xlu0 %v5180, 64
    %v5190 = vpop.permute.xlu0 %5189
    %v5192 = vmul.f32 %v5173, %v5190
    %5194 = vrot.lane.b32.xlu0 %v5192, 32
    %v5195 = vpop.permute.xlu0 %5194
    %v5197 = vadd.f32 %v5187, %v5195
    %v5198 = vtanh.pop %v5197
    %5200 = vrot.lane.b32.xlu0 %v5198, 64
    %v5201 = vpop.permute.xlu0 %5200
    %v5203 = vmul.f32 %v5186, %v5201
    %v5204 = vpack.c.bf16 %v5203, %v5203
    %v5206 = vshll.u32 %v3854, 16
    %v5209 = vrot.slane %v4079, 7
    %v5211 = vshll.u32 %v4304, 16
    %v5213 = vrot.slane %v5211, 7
    %v5215 = vrot.slane %v4529, 6
    %v5217 = vshll.u32 %v4754, 16
    %v5219 = vrot.slane %v5217, 6
    %v5221 = vrot.slane %v4979, 5
    %v5223 = vshll.u32 %v5204, 16
    %v5225 = vrot.slane %v5223, 5
    %v5227 = vsel %vm245, %v3627, %v5206
    %v5230 = vsel %vm2095, %v5227, %v5209
    %v5232 = vsel %vm2102, %v5230, %v5213
    %v5235 = vsel %vm2104, %v5232, %v5215
    %v5237 = vsel %vm2111, %v5235, %v5219
    %v5240 = vsel %vm2113, %v5237, %v5221
    %v5242 = vsel %vm2120, %v5240, %v5225
    %v5244 = vshrl.u32 %v3627, 16
    %v5248 = vshrl.u32 %v4079, 16
    %v5250 = vrot.slane %v5248, 7
    %v5251 = vrot.slane %v4304, 7
    %v5254 = vshrl.u32 %v4529, 16
    %v5256 = vrot.slane %v5254, 6
    %v5257 = vrot.slane %v4754, 6
    %v5260 = vshrl.u32 %v4979, 16
    %v5262 = vrot.slane %v5260, 5
    %v5264 = vrot.slane %v5204, 5
    %v5266 = vsel %vm245, %v5244, %v3854
    %v5269 = vsel %vm2095, %v5266, %v5250
    %v5271 = vsel %vm2102, %v5269, %v5251
    %v5274 = vsel %vm2104, %v5271, %v5256
    %v5276 = vsel %vm2111, %v5274, %v5257
    %v5279 = vsel %vm2113, %v5276, %v5262
    %v5281 = vsel %vm2120, %v5279, %v5264
    %v5283 = vrot.slane %v5281, 4
    %v5286 = vsel %vm188, %v5242, %v5283
    %v5288 = vunpack.c.l.bf16 %v5286
    %v5289 = vunpack.c.h.bf16 %v5286
    %5292 = vrot.lane.b32.xlu0 %v5288, 32
    %v5293 = vpop.permute.xlu0 %5292
    %5294 = vrot.lane.b32.xlu0 %v5289, 32
    %v5295 = vpop.permute.xlu0 %5294
    %v5298 = vsel %vm259, %v5293, 0.0
    %5299 = vadd.xlane.f32.xlu0 %v5298
    %v5300 = vpop.xlane.xlu0 %5299
    %v5301 = vsel %vm259, %v5295, 0.0
    %5302 = vadd.xlane.f32.xlu0 %v5301
    %v5303 = vpop.xlane.xlu0 %5302
    %v5304 = vmul.f32 %v5300, %v3251
    %v5305 = vmul.f32 %v5303, %v3251
    %v5306 = vsub.f32 %v5288, %v5304
    %v5307 = vsub.f32 %v5289, %v5305
    %v5308 = vmul.f32 %v5306, %v5306
    %v5309 = vmul.f32 %v5307, %v5307
    %5312 = vrot.lane.b32.xlu0 %v5308, 32
    %v5313 = vpop.permute.xlu0 %5312
    %5314 = vrot.lane.b32.xlu0 %v5309, 32
    %v5315 = vpop.permute.xlu0 %5314
    %v5318 = vsel %vm259, %v5313, 0.0
    %5319 = vadd.xlane.f32.xlu0 %v5318
    %v5320 = vpop.xlane.xlu0 %5319
    %v5321 = vsel %vm259, %v5315, 0.0
    %5322 = vadd.xlane.f32.xlu0 %v5321
    %v5323 = vpop.xlane.xlu0 %5322
    %v5324 = vmul.f32 %v5320, %v3251
    %v5325 = vmul.f32 %v5323, %v3251
    %v5326 = vadd.f32 %v5324, 1e-05
    %v5327 = vadd.f32 %v5325, 1e-05
    %v5328 = vrsqrt.pop %v5326
    %v5329 = vrsqrt.pop %v5327
    %v5330 = vmul.f32 %v5306, %v5328
    %v5331 = vmul.f32 %v5307, %v5329
    %v5332 = vld [vmem:[%s13] sm:$0x1]
    %v5334 = vlaneseq
    %v5335 = vshrl.u32 %v5334, 7
    %v5336 = vsub.s32 0, %v5335
    %v5337 = vrot.slane %v5332, %v5336
    %5338 = vrot.lane.b32.xlu0 %v5337, 96
    %v5339 = vpop.permute.xlu0 %5338
    %v5341 = vmul.f32 %v5330, %v5339
    %v5342 = vmul.f32 %v5331, %v5339
    %v5343 = vld [vmem:[%s14] sm:$0x1]
    %v5345 = vlaneseq
    %v5346 = vshrl.u32 %v5345, 7
    %v5347 = vsub.s32 0, %v5346
    %v5348 = vrot.slane %v5343, %v5347
    %5349 = vrot.lane.b32.xlu0 %v5348, 96
    %v5350 = vpop.permute.xlu0 %5349
    %v5352 = vadd.f32 %v5341, %v5350
    %v5353 = vadd.f32 %v5342, %v5350
    %v5354 = vld [vmem:[%s15] sm:$0x1]
    %v5356 = vlaneseq
    %v5357 = vshrl.u32 %v5356, 7
    %v5358 = vsub.s32 0, %v5357
    %v5359 = vrot.slane %v5354, %v5358
    %5360 = vrot.lane.b32.xlu0 %v5359, 96
    %v5361 = vpop.permute.xlu0 %5360
    %v5363 = vmul.f32 %v5352, %v5361
    %v5364 = vmul.f32 %v5353, %v5361
    %5367 = vrot.lane.b32.xlu0 %v5363, 32
    %v5368 = vpop.permute.xlu0 %5367
    %5369 = vrot.lane.b32.xlu0 %v5364, 32
    %v5370 = vpop.permute.xlu0 %5369
    %v5373 = vsel %vm259, %v5368, 0.0
    %5374 = vadd.xlane.f32.xlu0 %v5373
    %v5375 = vpop.xlane.xlu0 %5374
    %v5376 = vsel %vm259, %v5370, 0.0
    %5377 = vadd.xlane.f32.xlu0 %v5376
    %v5378 = vpop.xlane.xlu0 %5377
    %v5379 = vld [vmem:[#allocation2] sm:$0x1]
    %v5381 = vlaneseq
    %v5382 = vshrl.u32 %v5381, 7
    %v5383 = vsub.s32 0, %v5382
    %v5384 = vrot.slane %v5379, %v5383
    %v5386 = vadd.f32 %v5375, %v5384
    %v5387 = vadd.f32 %v5378, %v5384
    %vm5388 = vcmask 7168
    %5389 = vst.msk [vmem:[%s17] sm:$0xff] %vm5388, %v5386
    %5390 = vst.msk [vmem:[%s17 + $0x8] sm:$0xff] %vm5388, %v5387
    // Predicated region
    $region106: #{tpu_custom_call.1} parent=1 // pred_check
      _
    $region107: #{tpu_custom_call.1} parent=1 // pred_check_branch
      %5392 = sbr.rel (0) target = $region109
    $region108: #{tpu_custom_call.1} parent=1 // pred_region
      _
    $region109: #{tpu_custom_call.1} parent=1 // pred_fallthru
      _
    // Predicated region
    $region110: #{tpu_custom_call.1} parent=1 // pred_check
      _
    $region111: #{tpu_custom_call.1} parent=1 // pred_check_branch
      %5394 = sbr.rel (0) target = $region113
    $region112: #{tpu_custom_call.1} parent=1 // pred_region
      _
    $region113: #{tpu_custom_call.1} parent=1 // pred_fallthru
      _
    %5395 = vsyncpa [#allocation4], 1
    %5396 = vsyncpa [#allocation6], 1
    %5397 = vsyncpa [#allocation9], 1
    %5398 = vsyncpa [#allocation12], 1
    %5399 = vsyncpa [#allocation15], 1

</llo_original>
